<compile_context>
chip_gen: v6e
topology: v6e:2x2x1
jax: 0.10.0
libtpu: 0.0.40
codegen_flags: <defaults>
</compile_context>

<pallas_src>
import functools

import jax
import jax.numpy as jnp
from jax.experimental import pallas as pl
from jax.experimental.pallas import tpu as pltpu

LB = 8  # left halo width inside the padded scratches (keeps the interior sublane-aligned)


def _residual_block_kernel(x_ref, w1_ref, b1_ref, w2_ref, b2_ref, o_ref,
                           xpad_ref, mpad_ref, *, H, W, C, row_chunk):
    """Fused residual block for one NHWC image (C already lane-padded to 128).

    x_ref   : (1, H, W, C)   f32 input (also the residual)
    w*_ref  : (9, C, C)      bf16 per-tap weights (tap = 3*kh + kw), BN scale folded in
    b*_ref  : (1, C)         f32 folded-BN shift
    o_ref   : (1, H, W, C)   f32 output
    xpad_ref: (H+2, WP, C)   bf16 scratch; image interior at [1:H+1, LB:LB+W, :]
    mpad_ref: (H+2, WP, C)   bf16 scratch for the conv1 output (same framing)
    """
    # Zero ONLY the halo frame actually read by the 3x3 taps; interiors are fully
    # overwritten below / by conv1.  Done every step so the kernel never depends
    # on scratch state or on which core ran step 0 (megacore-safe).
    zrow = jnp.zeros((1, W + 2, C), jnp.bfloat16)
    zcol = jnp.zeros((H, 1, C), jnp.bfloat16)
    for pad_ref in (xpad_ref, mpad_ref):
        pad_ref[0:1, LB - 1:LB + W + 1, :] = zrow            # top halo row
        pad_ref[H + 1:H + 2, LB - 1:LB + W + 1, :] = zrow    # bottom halo row
        pad_ref[1:H + 1, LB - 1:LB, :] = zcol                # left halo column
        pad_ref[1:H + 1, LB + W:LB + W + 1, :] = zcol        # right halo column

    # Stage the input into the sublane-aligned interior, already in bf16 (the MXU
    # consumes bf16 operands anyway, so this is numerically identical and halves
    # the staging store traffic + scratch VMEM).
    xpad_ref[1:H + 1, LB:LB + W, :] = x_ref[0].astype(jnp.bfloat16)

    b1 = b1_ref[...]      # (1, C) f32, hoisted out of the row loops
    b2 = b2_ref[...]

    def conv3x3_rows(src_ref, w_ref, r0, rows):
        """3x3 conv for output rows [r0, r0+rows): 9 (M,C)x(C,C) MXU matmuls
        accumulated in f32 — no im2col concat / f32 patch materialization."""
        m = rows * W
        acc = jnp.zeros((m, C), jnp.float32)
        for kh in range(3):
            for kw in range(3):
                patch = src_ref[r0 + kh:r0 + kh + rows,
                                LB - 1 + kw:LB - 1 + kw + W, :]       # (rows, W, C) bf16
                acc = acc + jnp.dot(patch.reshape(m, C), w_ref[3 * kh + kw],
                                    preferred_element_type=jnp.float32)
        return acc                                                    # (m, C) f32

    # conv1 (+BN1 via folded scale / shift) -> ReLU, into the framed mid scratch.
    for r0 in range(0, H, row_chunk):
        rows = min(row_chunk, H - r0)
        y = jnp.maximum(conv3x3_rows(xpad_ref, w1_ref, r0, rows) + b1, 0.0)
        mpad_ref[1 + r0:1 + r0 + rows, LB:LB + W, :] = (
            y.reshape(rows, W, C).astype(jnp.bfloat16))

    # conv2 (+BN2) -> +residual -> ReLU.
    for r0 in range(0, H, row_chunk):
        rows = min(row_chunk, H - r0)
        y = conv3x3_rows(mpad_ref, w2_ref, r0, rows) + b2
        res = x_ref[0, r0:r0 + rows, :, :].reshape(rows * W, C)
        y = jnp.maximum(y + res, 0.0)
        o_ref[0, r0:r0 + rows, :, :] = y.reshape(rows, W, C).astype(o_ref.dtype)


def residual_block(x_nchw, w1_oihw, scale1, shift1, w2_oihw, scale2, shift2):
    """Forward pass of ResidualBlock. x_nchw: (N, C, H, W) float32."""
    # NCHW -> NHWC (interface glue; see TODO about an NHWC end-to-end pipeline).
    x = jnp.transpose(x_nchw, (0, 2, 3, 1)).astype(jnp.float32)
    N, H, W, C = x.shape
    CP = 128 * pl.cdiv(C, 128)                    # lane-pad channels to 128
    pc = CP - C
    WP = LB + 8 * pl.cdiv(W + 1, 8)               # padded width, interior at col LB
    row_chunk = max(1, min(H, pl.cdiv(256, W)))   # target M ~= 256 per MXU call

    xp = jnp.pad(x, ((0, 0), (0, 0), (0, 0), (0, pc)))

    def prep_w(w_oihw, scale):
        # OIHW -> HWIO, fold the BN scale into the output channels (exact: a
        # per-cout scale commutes with the conv), lane-pad, flatten taps, bf16.
        w = jnp.transpose(w_oihw, (2, 3, 1, 0)).astype(jnp.float32)   # (3,3,Cin,Cout)
        w = w * scale.astype(jnp.float32)[None, None, None, :]
        w = jnp.pad(w, ((0, 0), (0, 0), (0, pc), (0, pc)))
        return w.reshape(9, CP, CP).astype(jnp.bfloat16)

    def prep_v(v):
        return jnp.pad(v.astype(jnp.float32), (0, pc)).reshape(1, CP)

    w1 = prep_w(w1_oihw, scale1)
    w2 = prep_w(w2_oihw, scale2)
    b1, b2 = prep_v(shift1), prep_v(shift2)

    img_spec = pl.BlockSpec((1, H, W, CP), lambda n: (n, 0, 0, 0))
    w_spec = pl.BlockSpec((9, CP, CP), lambda n: (0, 0, 0))
    vec_spec = pl.BlockSpec((1, CP), lambda n: (0, 0))

    out = pl.pallas_call(
        functools.partial(_residual_block_kernel,
                          H=H, W=W, C=CP, row_chunk=row_chunk),
        out_shape=jax.ShapeDtypeStruct((N, H, W, CP), jnp.float32),
        grid=(N,),
        in_specs=[img_spec, w_spec, vec_spec, w_spec, vec_spec],
        out_specs=img_spec,
        scratch_shapes=[
            pltpu.VMEM((H + 2, WP, CP), jnp.bfloat16),   # framed padded input
            pltpu.VMEM((H + 2, WP, CP), jnp.bfloat16),   # framed conv1 output
        ],
        compiler_params=pltpu.CompilerParams(
            dimension_semantics=("parallel",),
            vmem_limit_bytes=32 * 1024 * 1024),
    )(xp, w1, b1, w2, b2)

    out = out[..., :C]
    return jnp.transpose(out, (0, 3, 1, 2))              # NHWC -> NCHW


def _reference(x, w1, scale1, shift1, w2, scale2, shift2):
    """Pure-JAX NCHW f32 reference for correctness checking."""
    def conv(v, w):
        return jax.lax.conv_general_dilated(
            v, w, window_strides=(1, 1), padding=((1, 1), (1, 1)),
            dimension_numbers=("NCHW", "OIHW", "NCHW"),
            precision=jax.lax.Precision.HIGHEST)

    y = conv(x, w1)
    y = y * scale1[None, :, None, None] + shift1[None, :, None, None]
    y = jnp.maximum(y, 0.0)
    y = conv(y, w2)
    y = y * scale2[None, :, None, None] + shift2[None, :, None, None]
    return jnp.maximum(y + x, 0.0)


if __name__ == "__main__":
    N, C, H, W = 2, 48, 16, 16                       # in_features=48 (module default)
    key = jax.random.PRNGKey(0)
    ks = jax.random.split(key, 11)

    x = jax.random.normal(ks[0], (N, C, H, W), jnp.float32)

    # Conv weights (OIHW, bias=False), deterministic synthetic init.
    w1 = jax.random.normal(ks[1], (C, C, 3, 3), jnp.float32) * 0.05
    w2 = jax.random.normal(ks[2], (C, C, 3, 3), jnp.float32) * 0.05

    # BatchNorm2d params (gamma, beta, running_mean, running_var), folded to scale/shift.
    eps = 1e-5
    gamma1 = 1.0 + 0.1 * jax.random.normal(ks[3], (C,), jnp.float32)
    beta1 = 0.1 * jax.random.normal(ks[4], (C,), jnp.float32)
    mean1 = 0.1 * jax.random.normal(ks[5], (C,), jnp.float32)
    var1 = jax.random.uniform(ks[6], (C,), jnp.float32, 0.5, 1.5)
    gamma2 = 1.0 + 0.1 * jax.random.normal(ks[7], (C,), jnp.float32)
    beta2 = 0.1 * jax.random.normal(ks[8], (C,), jnp.float32)
    mean2 = 0.1 * jax.random.normal(ks[9], (C,), jnp.float32)
    var2 = jax.random.uniform(ks[10], (C,), jnp.float32, 0.5, 1.5)

    scale1 = gamma1 / jnp.sqrt(var1 + eps)
    shift1 = beta1 - mean1 * scale1
    scale2 = gamma2 / jnp.sqrt(var2 + eps)
    shift2 = beta2 - mean2 * scale2

    out = jax.block_until_ready(
        residual_block(x, w1, scale1, shift1, w2, scale2, shift2))
    ref = _reference(x, w1, scale1, shift1, w2, scale2, shift2)

    assert out.shape == (N, C, H, W) and out.dtype == jnp.float32
    max_err = float(jnp.max(jnp.abs(out - ref)))
    # Kernel uses bf16 MXU operands (with BN scale folded into bf16 weights) and
    # f32 accumulation; reference is f32 HIGHEST, so allow a bf16-level tolerance.
    assert jnp.allclose(out, ref, atol=5e-2, rtol=5e-2), max_err

    print("KERNEL_OK")
</pallas_src>

<mosaic_0001>
module attributes {stable_mosaic.version = 11 : i64} {
  func.func @_residual_block_kernel(%arg0: i32, %arg1: memref<1x16x16x128xf32, #tpu.memory_space<vmem>>, %arg2: memref<9x128x128xbf16, #tpu.memory_space<vmem>>, %arg3: memref<1x128xf32, #tpu.memory_space<vmem>>, %arg4: memref<9x128x128xbf16, #tpu.memory_space<vmem>>, %arg5: memref<1x128xf32, #tpu.memory_space<vmem>>, %arg6: memref<1x16x16x128xf32, #tpu.memory_space<vmem>>, %arg7: memref<18x32x128xbf16, #tpu.memory_space<vmem>>, %arg8: memref<18x32x128xbf16, #tpu.memory_space<vmem>>) attributes {dimension_semantics = [#tpu.dimension_semantics<parallel>], iteration_bounds = array<i64: 2>, scalar_prefetch = 0 : i64, scratch_operands = 2 : i64, tpu.core_type = #tpu.core_type<tc>, window_params = [{transform_indices = @transform_0, window_bounds = array<i64: 1, 16, 16, 128>}, {pipeline_mode = #tpu.pipeline_mode<synchronous>, transform_indices = @transform_1, window_bounds = array<i64: 9, 128, 128>}, {pipeline_mode = #tpu.pipeline_mode<synchronous>, transform_indices = @transform_2, window_bounds = array<i64: 1, 128>}, {pipeline_mode = #tpu.pipeline_mode<synchronous>, transform_indices = @transform_3, window_bounds = array<i64: 9, 128, 128>}, {pipeline_mode = #tpu.pipeline_mode<synchronous>, transform_indices = @transform_4, window_bounds = array<i64: 1, 128>}, {transform_indices = @transform_5, window_bounds = array<i64: 1, 16, 16, 128>}]} {
    %cst = arith.constant 0.000000e+00 : bf16
    %0 = vector.broadcast %cst : bf16 to vector<1x18x128xbf16>
    %cst_0 = arith.constant 0.000000e+00 : bf16
    %1 = vector.broadcast %cst_0 : bf16 to vector<16x1x128xbf16>
    %c0 = arith.constant 0 : index
    %c7 = arith.constant 7 : index
    %c0_1 = arith.constant 0 : index
    %2 = vector.load %arg7[%c0, %c7, %c0_1] : memref<18x32x128xbf16, #tpu.memory_space<vmem>>, vector<1x18x128xbf16>
    tpu.vector_store %arg7[%c0, %c7, %c0_1], %0 {strides = array<i32>} : memref<18x32x128xbf16, #tpu.memory_space<vmem>>, vector<1x18x128xbf16>,
    %c17 = arith.constant 17 : index
    %c7_2 = arith.constant 7 : index
    %c0_3 = arith.constant 0 : index
    %3 = vector.load %arg7[%c17, %c7_2, %c0_3] : memref<18x32x128xbf16, #tpu.memory_space<vmem>>, vector<1x18x128xbf16>
    tpu.vector_store %arg7[%c17, %c7_2, %c0_3], %0 {strides = array<i32>} : memref<18x32x128xbf16, #tpu.memory_space<vmem>>, vector<1x18x128xbf16>,
    %c1 = arith.constant 1 : index
    %c7_4 = arith.constant 7 : index
    %c0_5 = arith.constant 0 : index
    %4 = vector.load %arg7[%c1, %c7_4, %c0_5] : memref<18x32x128xbf16, #tpu.memory_space<vmem>>, vector<16x1x128xbf16>
    tpu.vector_store %arg7[%c1, %c7_4, %c0_5], %1 {strides = array<i32>} : memref<18x32x128xbf16, #tpu.memory_space<vmem>>, vector<16x1x128xbf16>,
    %c1_6 = arith.constant 1 : index
    %c24 = arith.constant 24 : index
    %c0_7 = arith.constant 0 : index
    %5 = vector.load %arg7[%c1_6, %c24, %c0_7] : memref<18x32x128xbf16, #tpu.memory_space<vmem>>, vector<16x1x128xbf16>
    tpu.vector_store %arg7[%c1_6, %c24, %c0_7], %1 {strides = array<i32>} : memref<18x32x128xbf16, #tpu.memory_space<vmem>>, vector<16x1x128xbf16>,
    %c0_8 = arith.constant 0 : index
    %c7_9 = arith.constant 7 : index
    %c0_10 = arith.constant 0 : index
    %6 = vector.load %arg8[%c0_8, %c7_9, %c0_10] : memref<18x32x128xbf16, #tpu.memory_space<vmem>>, vector<1x18x128xbf16>
    tpu.vector_store %arg8[%c0_8, %c7_9, %c0_10], %0 {strides = array<i32>} : memref<18x32x128xbf16, #tpu.memory_space<vmem>>, vector<1x18x128xbf16>,
    %c17_11 = arith.constant 17 : index
    %c7_12 = arith.constant 7 : index
    %c0_13 = arith.constant 0 : index
    %7 = vector.load %arg8[%c17_11, %c7_12, %c0_13] : memref<18x32x128xbf16, #tpu.memory_space<vmem>>, vector<1x18x128xbf16>
    tpu.vector_store %arg8[%c17_11, %c7_12, %c0_13], %0 {strides = array<i32>} : memref<18x32x128xbf16, #tpu.memory_space<vmem>>, vector<1x18x128xbf16>,
    %c1_14 = arith.constant 1 : index
    %c7_15 = arith.constant 7 : index
    %c0_16 = arith.constant 0 : index
    %8 = vector.load %arg8[%c1_14, %c7_15, %c0_16] : memref<18x32x128xbf16, #tpu.memory_space<vmem>>, vector<16x1x128xbf16>
    tpu.vector_store %arg8[%c1_14, %c7_15, %c0_16], %1 {strides = array<i32>} : memref<18x32x128xbf16, #tpu.memory_space<vmem>>, vector<16x1x128xbf16>,
    %c1_17 = arith.constant 1 : index
    %c24_18 = arith.constant 24 : index
    %c0_19 = arith.constant 0 : index
    %9 = vector.load %arg8[%c1_17, %c24_18, %c0_19] : memref<18x32x128xbf16, #tpu.memory_space<vmem>>, vector<16x1x128xbf16>
    tpu.vector_store %arg8[%c1_17, %c24_18, %c0_19], %1 {strides = array<i32>} : memref<18x32x128xbf16, #tpu.memory_space<vmem>>, vector<16x1x128xbf16>,
    %c0_20 = arith.constant 0 : index
    %c0_21 = arith.constant 0 : index
    %c0_22 = arith.constant 0 : index
    %c0_23 = arith.constant 0 : index
    %10 = vector.load %arg1[%c0_20, %c0_21, %c0_22, %c0_23] : memref<1x16x16x128xf32, #tpu.memory_space<vmem>>, vector<1x16x16x128xf32>
    %11 = vector.shape_cast %10 : vector<1x16x16x128xf32> to vector<16x16x128xf32>
    %12 = arith.truncf %11 : vector<16x16x128xf32> to vector<16x16x128xbf16>
    %c1_24 = arith.constant 1 : index
    %c8 = arith.constant 8 : index
    %c0_25 = arith.constant 0 : index
    %13 = vector.load %arg7[%c1_24, %c8, %c0_25] : memref<18x32x128xbf16, #tpu.memory_space<vmem>>, vector<16x16x128xbf16>
    tpu.vector_store %arg7[%c1_24, %c8, %c0_25], %12 {strides = array<i32>} : memref<18x32x128xbf16, #tpu.memory_space<vmem>>, vector<16x16x128xbf16>,
    %c0_26 = arith.constant 0 : index
    %c0_27 = arith.constant 0 : index
    %14 = vector.load %arg3[%c0_26, %c0_27] : memref<1x128xf32, #tpu.memory_space<vmem>>, vector<1x128xf32>
    %c0_28 = arith.constant 0 : index
    %c0_29 = arith.constant 0 : index
    %15 = vector.load %arg5[%c0_28, %c0_29] : memref<1x128xf32, #tpu.memory_space<vmem>>, vector<1x128xf32>
    %cst_30 = arith.constant 0.000000e+00 : f32
    %16 = vector.broadcast %cst_30 : f32 to vector<256x128xf32>
    %c0_31 = arith.constant 0 : index
    %c7_32 = arith.constant 7 : index
    %c0_33 = arith.constant 0 : index
    %17 = vector.load %arg7[%c0_31, %c7_32, %c0_33] : memref<18x32x128xbf16, #tpu.memory_space<vmem>>, vector<16x16x128xbf16>
    %18 = vector.shape_cast %17 : vector<16x16x128xbf16> to vector<256x128xbf16>
    %c0_34 = arith.constant 0 : index
    %c0_35 = arith.constant 0 : index
    %c0_36 = arith.constant 0 : index
    %19 = vector.load %arg2[%c0_34, %c0_35, %c0_36] : memref<9x128x128xbf16, #tpu.memory_space<vmem>>, vector<1x128x128xbf16>
    %20 = vector.shape_cast %19 : vector<1x128x128xbf16> to vector<128x128xbf16>
    %cst_37 = arith.constant dense<0.000000e+00> : vector<256x128xf32>
    %21 = tpu.matmul %18, %20, %cst_37 {dimension_numbers = #tpu.dot_dimension_numbers<[1], [0], [0], [1], [0, 0, 1, 1], [], []>} : vector<256x128xbf16>, vector<128x128xbf16>, vector<256x128xf32> -> vector<256x128xf32>
    %22 = arith.addf %16, %21 : vector<256x128xf32>
    %c0_38 = arith.constant 0 : index
    %c8_39 = arith.constant 8 : index
    %c0_40 = arith.constant 0 : index
    %23 = vector.load %arg7[%c0_38, %c8_39, %c0_40] : memref<18x32x128xbf16, #tpu.memory_space<vmem>>, vector<16x16x128xbf16>
    %24 = vector.shape_cast %23 : vector<16x16x128xbf16> to vector<256x128xbf16>
    %c1_41 = arith.constant 1 : index
    %c0_42 = arith.constant 0 : index
    %c0_43 = arith.constant 0 : index
    %25 = vector.load %arg2[%c1_41, %c0_42, %c0_43] : memref<9x128x128xbf16, #tpu.memory_space<vmem>>, vector<1x128x128xbf16>
    %26 = vector.shape_cast %25 : vector<1x128x128xbf16> to vector<128x128xbf16>
    %cst_44 = arith.constant dense<0.000000e+00> : vector<256x128xf32>
    %27 = tpu.matmul %24, %26, %cst_44 {dimension_numbers = #tpu.dot_dimension_numbers<[1], [0], [0], [1], [0, 0, 1, 1], [], []>} : vector<256x128xbf16>, vector<128x128xbf16>, vector<256x128xf32> -> vector<256x128xf32>
    %28 = arith.addf %22, %27 : vector<256x128xf32>
    %c0_45 = arith.constant 0 : index
    %c9 = arith.constant 9 : index
    %c0_46 = arith.constant 0 : index
    %29 = vector.load %arg7[%c0_45, %c9, %c0_46] : memref<18x32x128xbf16, #tpu.memory_space<vmem>>, vector<16x16x128xbf16>
    %30 = vector.shape_cast %29 : vector<16x16x128xbf16> to vector<256x128xbf16>
    %c2 = arith.constant 2 : index
    %c0_47 = arith.constant 0 : index
    %c0_48 = arith.constant 0 : index
    %31 = vector.load %arg2[%c2, %c0_47, %c0_48] : memref<9x128x128xbf16, #tpu.memory_space<vmem>>, vector<1x128x128xbf16>
    %32 = vector.shape_cast %31 : vector<1x128x128xbf16> to vector<128x128xbf16>
    %cst_49 = arith.constant dense<0.000000e+00> : vector<256x128xf32>
    %33 = tpu.matmul %30, %32, %cst_49 {dimension_numbers = #tpu.dot_dimension_numbers<[1], [0], [0], [1], [0, 0, 1, 1], [], []>} : vector<256x128xbf16>, vector<128x128xbf16>, vector<256x128xf32> -> vector<256x128xf32>
    %34 = arith.addf %28, %33 : vector<256x128xf32>
    %c1_50 = arith.constant 1 : index
    %c7_51 = arith.constant 7 : index
    %c0_52 = arith.constant 0 : index
    %35 = vector.load %arg7[%c1_50, %c7_51, %c0_52] : memref<18x32x128xbf16, #tpu.memory_space<vmem>>, vector<16x16x128xbf16>
    %36 = vector.shape_cast %35 : vector<16x16x128xbf16> to vector<256x128xbf16>
    %c3 = arith.constant 3 : index
    %c0_53 = arith.constant 0 : index
    %c0_54 = arith.constant 0 : index
    %37 = vector.load %arg2[%c3, %c0_53, %c0_54] : memref<9x128x128xbf16, #tpu.memory_space<vmem>>, vector<1x128x128xbf16>
    %38 = vector.shape_cast %37 : vector<1x128x128xbf16> to vector<128x128xbf16>
    %cst_55 = arith.constant dense<0.000000e+00> : vector<256x128xf32>
    %39 = tpu.matmul %36, %38, %cst_55 {dimension_numbers = #tpu.dot_dimension_numbers<[1], [0], [0], [1], [0, 0, 1, 1], [], []>} : vector<256x128xbf16>, vector<128x128xbf16>, vector<256x128xf32> -> vector<256x128xf32>
    %40 = arith.addf %34, %39 : vector<256x128xf32>
    %c1_56 = arith.constant 1 : index
    %c8_57 = arith.constant 8 : index
    %c0_58 = arith.constant 0 : index
    %41 = vector.load %arg7[%c1_56, %c8_57, %c0_58] : memref<18x32x128xbf16, #tpu.memory_space<vmem>>, vector<16x16x128xbf16>
    %42 = vector.shape_cast %41 : vector<16x16x128xbf16> to vector<256x128xbf16>
    %c4 = arith.constant 4 : index
    %c0_59 = arith.constant 0 : index
    %c0_60 = arith.constant 0 : index
    %43 = vector.load %arg2[%c4, %c0_59, %c0_60] : memref<9x128x128xbf16, #tpu.memory_space<vmem>>, vector<1x128x128xbf16>
    %44 = vector.shape_cast %43 : vector<1x128x128xbf16> to vector<128x128xbf16>
    %cst_61 = arith.constant dense<0.000000e+00> : vector<256x128xf32>
    %45 = tpu.matmul %42, %44, %cst_61 {dimension_numbers = #tpu.dot_dimension_numbers<[1], [0], [0], [1], [0, 0, 1, 1], [], []>} : vector<256x128xbf16>, vector<128x128xbf16>, vector<256x128xf32> -> vector<256x128xf32>
    %46 = arith.addf %40, %45 : vector<256x128xf32>
    %c1_62 = arith.constant 1 : index
    %c9_63 = arith.constant 9 : index
    %c0_64 = arith.constant 0 : index
    %47 = vector.load %arg7[%c1_62, %c9_63, %c0_64] : memref<18x32x128xbf16, #tpu.memory_space<vmem>>, vector<16x16x128xbf16>
    %48 = vector.shape_cast %47 : vector<16x16x128xbf16> to vector<256x128xbf16>
    %c5 = arith.constant 5 : index
    %c0_65 = arith.constant 0 : index
    %c0_66 = arith.constant 0 : index
    %49 = vector.load %arg2[%c5, %c0_65, %c0_66] : memref<9x128x128xbf16, #tpu.memory_space<vmem>>, vector<1x128x128xbf16>
    %50 = vector.shape_cast %49 : vector<1x128x128xbf16> to vector<128x128xbf16>
    %cst_67 = arith.constant dense<0.000000e+00> : vector<256x128xf32>
    %51 = tpu.matmul %48, %50, %cst_67 {dimension_numbers = #tpu.dot_dimension_numbers<[1], [0], [0], [1], [0, 0, 1, 1], [], []>} : vector<256x128xbf16>, vector<128x128xbf16>, vector<256x128xf32> -> vector<256x128xf32>
    %52 = arith.addf %46, %51 : vector<256x128xf32>
    %c2_68 = arith.constant 2 : index
    %c7_69 = arith.constant 7 : index
    %c0_70 = arith.constant 0 : index
    %53 = vector.load %arg7[%c2_68, %c7_69, %c0_70] : memref<18x32x128xbf16, #tpu.memory_space<vmem>>, vector<16x16x128xbf16>
    %54 = vector.shape_cast %53 : vector<16x16x128xbf16> to vector<256x128xbf16>
    %c6 = arith.constant 6 : index
    %c0_71 = arith.constant 0 : index
    %c0_72 = arith.constant 0 : index
    %55 = vector.load %arg2[%c6, %c0_71, %c0_72] : memref<9x128x128xbf16, #tpu.memory_space<vmem>>, vector<1x128x128xbf16>
    %56 = vector.shape_cast %55 : vector<1x128x128xbf16> to vector<128x128xbf16>
    %cst_73 = arith.constant dense<0.000000e+00> : vector<256x128xf32>
    %57 = tpu.matmul %54, %56, %cst_73 {dimension_numbers = #tpu.dot_dimension_numbers<[1], [0], [0], [1], [0, 0, 1, 1], [], []>} : vector<256x128xbf16>, vector<128x128xbf16>, vector<256x128xf32> -> vector<256x128xf32>
    %58 = arith.addf %52, %57 : vector<256x128xf32>
    %c2_74 = arith.constant 2 : index
    %c8_75 = arith.constant 8 : index
    %c0_76 = arith.constant 0 : index
    %59 = vector.load %arg7[%c2_74, %c8_75, %c0_76] : memref<18x32x128xbf16, #tpu.memory_space<vmem>>, vector<16x16x128xbf16>
    %60 = vector.shape_cast %59 : vector<16x16x128xbf16> to vector<256x128xbf16>
    %c7_77 = arith.constant 7 : index
    %c0_78 = arith.constant 0 : index
    %c0_79 = arith.constant 0 : index
    %61 = vector.load %arg2[%c7_77, %c0_78, %c0_79] : memref<9x128x128xbf16, #tpu.memory_space<vmem>>, vector<1x128x128xbf16>
    %62 = vector.shape_cast %61 : vector<1x128x128xbf16> to vector<128x128xbf16>
    %cst_80 = arith.constant dense<0.000000e+00> : vector<256x128xf32>
    %63 = tpu.matmul %60, %62, %cst_80 {dimension_numbers = #tpu.dot_dimension_numbers<[1], [0], [0], [1], [0, 0, 1, 1], [], []>} : vector<256x128xbf16>, vector<128x128xbf16>, vector<256x128xf32> -> vector<256x128xf32>
    %64 = arith.addf %58, %63 : vector<256x128xf32>
    %c2_81 = arith.constant 2 : index
    %c9_82 = arith.constant 9 : index
    %c0_83 = arith.constant 0 : index
    %65 = vector.load %arg7[%c2_81, %c9_82, %c0_83] : memref<18x32x128xbf16, #tpu.memory_space<vmem>>, vector<16x16x128xbf16>
    %66 = vector.shape_cast %65 : vector<16x16x128xbf16> to vector<256x128xbf16>
    %c8_84 = arith.constant 8 : index
    %c0_85 = arith.constant 0 : index
    %c0_86 = arith.constant 0 : index
    %67 = vector.load %arg2[%c8_84, %c0_85, %c0_86] : memref<9x128x128xbf16, #tpu.memory_space<vmem>>, vector<1x128x128xbf16>
    %68 = vector.shape_cast %67 : vector<1x128x128xbf16> to vector<128x128xbf16>
    %cst_87 = arith.constant dense<0.000000e+00> : vector<256x128xf32>
    %69 = tpu.matmul %66, %68, %cst_87 {dimension_numbers = #tpu.dot_dimension_numbers<[1], [0], [0], [1], [0, 0, 1, 1], [], []>} : vector<256x128xbf16>, vector<128x128xbf16>, vector<256x128xf32> -> vector<256x128xf32>
    %70 = arith.addf %64, %69 : vector<256x128xf32>
    %71 = vector.broadcast %14 : vector<1x128xf32> to vector<256x128xf32>
    %72 = arith.addf %70, %71 : vector<256x128xf32>
    %cst_88 = arith.constant 0.000000e+00 : f32
    %73 = vector.broadcast %cst_88 : f32 to vector<256x128xf32>
    %74 = arith.maximumf %72, %73 : vector<256x128xf32>
    %75 = vector.shape_cast %74 : vector<256x128xf32> to vector<16x16x128xf32>
    %76 = arith.truncf %75 : vector<16x16x128xf32> to vector<16x16x128xbf16>
    %c1_89 = arith.constant 1 : index
    %c8_90 = arith.constant 8 : index
    %c0_91 = arith.constant 0 : index
    %77 = vector.load %arg8[%c1_89, %c8_90, %c0_91] : memref<18x32x128xbf16, #tpu.memory_space<vmem>>, vector<16x16x128xbf16>
    tpu.vector_store %arg8[%c1_89, %c8_90, %c0_91], %76 {strides = array<i32>} : memref<18x32x128xbf16, #tpu.memory_space<vmem>>, vector<16x16x128xbf16>,
    %cst_92 = arith.constant 0.000000e+00 : f32
    %78 = vector.broadcast %cst_92 : f32 to vector<256x128xf32>
    %c0_93 = arith.constant 0 : index
    %c7_94 = arith.constant 7 : index
    %c0_95 = arith.constant 0 : index
    %79 = vector.load %arg8[%c0_93, %c7_94, %c0_95] : memref<18x32x128xbf16, #tpu.memory_space<vmem>>, vector<16x16x128xbf16>
    %80 = vector.shape_cast %79 : vector<16x16x128xbf16> to vector<256x128xbf16>
    %c0_96 = arith.constant 0 : index
    %c0_97 = arith.constant 0 : index
    %c0_98 = arith.constant 0 : index
    %81 = vector.load %arg4[%c0_96, %c0_97, %c0_98] : memref<9x128x128xbf16, #tpu.memory_space<vmem>>, vector<1x128x128xbf16>
    %82 = vector.shape_cast %81 : vector<1x128x128xbf16> to vector<128x128xbf16>
    %cst_99 = arith.constant dense<0.000000e+00> : vector<256x128xf32>
    %83 = tpu.matmul %80, %82, %cst_99 {dimension_numbers = #tpu.dot_dimension_numbers<[1], [0], [0], [1], [0, 0, 1, 1], [], []>} : vector<256x128xbf16>, vector<128x128xbf16>, vector<256x128xf32> -> vector<256x128xf32>
    %84 = arith.addf %78, %83 : vector<256x128xf32>
    %c0_100 = arith.constant 0 : index
    %c8_101 = arith.constant 8 : index
    %c0_102 = arith.constant 0 : index
    %85 = vector.load %arg8[%c0_100, %c8_101, %c0_102] : memref<18x32x128xbf16, #tpu.memory_space<vmem>>, vector<16x16x128xbf16>
    %86 = vector.shape_cast %85 : vector<16x16x128xbf16> to vector<256x128xbf16>
    %c1_103 = arith.constant 1 : index
    %c0_104 = arith.constant 0 : index
    %c0_105 = arith.constant 0 : index
    %87 = vector.load %arg4[%c1_103, %c0_104, %c0_105] : memref<9x128x128xbf16, #tpu.memory_space<vmem>>, vector<1x128x128xbf16>
    %88 = vector.shape_cast %87 : vector<1x128x128xbf16> to vector<128x128xbf16>
    %cst_106 = arith.constant dense<0.000000e+00> : vector<256x128xf32>
    %89 = tpu.matmul %86, %88, %cst_106 {dimension_numbers = #tpu.dot_dimension_numbers<[1], [0], [0], [1], [0, 0, 1, 1], [], []>} : vector<256x128xbf16>, vector<128x128xbf16>, vector<256x128xf32> -> vector<256x128xf32>
    %90 = arith.addf %84, %89 : vector<256x128xf32>
    %c0_107 = arith.constant 0 : index
    %c9_108 = arith.constant 9 : index
    %c0_109 = arith.constant 0 : index
    %91 = vector.load %arg8[%c0_107, %c9_108, %c0_109] : memref<18x32x128xbf16, #tpu.memory_space<vmem>>, vector<16x16x128xbf16>
    %92 = vector.shape_cast %91 : vector<16x16x128xbf16> to vector<256x128xbf16>
    %c2_110 = arith.constant 2 : index
    %c0_111 = arith.constant 0 : index
    %c0_112 = arith.constant 0 : index
    %93 = vector.load %arg4[%c2_110, %c0_111, %c0_112] : memref<9x128x128xbf16, #tpu.memory_space<vmem>>, vector<1x128x128xbf16>
    %94 = vector.shape_cast %93 : vector<1x128x128xbf16> to vector<128x128xbf16>
    %cst_113 = arith.constant dense<0.000000e+00> : vector<256x128xf32>
    %95 = tpu.matmul %92, %94, %cst_113 {dimension_numbers = #tpu.dot_dimension_numbers<[1], [0], [0], [1], [0, 0, 1, 1], [], []>} : vector<256x128xbf16>, vector<128x128xbf16>, vector<256x128xf32> -> vector<256x128xf32>
    %96 = arith.addf %90, %95 : vector<256x128xf32>
    %c1_114 = arith.constant 1 : index
    %c7_115 = arith.constant 7 : index
    %c0_116 = arith.constant 0 : index
    %97 = vector.load %arg8[%c1_114, %c7_115, %c0_116] : memref<18x32x128xbf16, #tpu.memory_space<vmem>>, vector<16x16x128xbf16>
    %98 = vector.shape_cast %97 : vector<16x16x128xbf16> to vector<256x128xbf16>
    %c3_117 = arith.constant 3 : index
    %c0_118 = arith.constant 0 : index
    %c0_119 = arith.constant 0 : index
    %99 = vector.load %arg4[%c3_117, %c0_118, %c0_119] : memref<9x128x128xbf16, #tpu.memory_space<vmem>>, vector<1x128x128xbf16>
    %100 = vector.shape_cast %99 : vector<1x128x128xbf16> to vector<128x128xbf16>
    %cst_120 = arith.constant dense<0.000000e+00> : vector<256x128xf32>
    %101 = tpu.matmul %98, %100, %cst_120 {dimension_numbers = #tpu.dot_dimension_numbers<[1], [0], [0], [1], [0, 0, 1, 1], [], []>} : vector<256x128xbf16>, vector<128x128xbf16>, vector<256x128xf32> -> vector<256x128xf32>
    %102 = arith.addf %96, %101 : vector<256x128xf32>
    %c1_121 = arith.constant 1 : index
    %c8_122 = arith.constant 8 : index
    %c0_123 = arith.constant 0 : index
    %103 = vector.load %arg8[%c1_121, %c8_122, %c0_123] : memref<18x32x128xbf16, #tpu.memory_space<vmem>>, vector<16x16x128xbf16>
    %104 = vector.shape_cast %103 : vector<16x16x128xbf16> to vector<256x128xbf16>
    %c4_124 = arith.constant 4 : index
    %c0_125 = arith.constant 0 : index
    %c0_126 = arith.constant 0 : index
    %105 = vector.load %arg4[%c4_124, %c0_125, %c0_126] : memref<9x128x128xbf16, #tpu.memory_space<vmem>>, vector<1x128x128xbf16>
    %106 = vector.shape_cast %105 : vector<1x128x128xbf16> to vector<128x128xbf16>
    %cst_127 = arith.constant dense<0.000000e+00> : vector<256x128xf32>
    %107 = tpu.matmul %104, %106, %cst_127 {dimension_numbers = #tpu.dot_dimension_numbers<[1], [0], [0], [1], [0, 0, 1, 1], [], []>} : vector<256x128xbf16>, vector<128x128xbf16>, vector<256x128xf32> -> vector<256x128xf32>
    %108 = arith.addf %102, %107 : vector<256x128xf32>
    %c1_128 = arith.constant 1 : index
    %c9_129 = arith.constant 9 : index
    %c0_130 = arith.constant 0 : index
    %109 = vector.load %arg8[%c1_128, %c9_129, %c0_130] : memref<18x32x128xbf16, #tpu.memory_space<vmem>>, vector<16x16x128xbf16>
    %110 = vector.shape_cast %109 : vector<16x16x128xbf16> to vector<256x128xbf16>
    %c5_131 = arith.constant 5 : index
    %c0_132 = arith.constant 0 : index
    %c0_133 = arith.constant 0 : index
    %111 = vector.load %arg4[%c5_131, %c0_132, %c0_133] : memref<9x128x128xbf16, #tpu.memory_space<vmem>>, vector<1x128x128xbf16>
    %112 = vector.shape_cast %111 : vector<1x128x128xbf16> to vector<128x128xbf16>
    %cst_134 = arith.constant dense<0.000000e+00> : vector<256x128xf32>
    %113 = tpu.matmul %110, %112, %cst_134 {dimension_numbers = #tpu.dot_dimension_numbers<[1], [0], [0], [1], [0, 0, 1, 1], [], []>} : vector<256x128xbf16>, vector<128x128xbf16>, vector<256x128xf32> -> vector<256x128xf32>
    %114 = arith.addf %108, %113 : vector<256x128xf32>
    %c2_135 = arith.constant 2 : index
    %c7_136 = arith.constant 7 : index
    %c0_137 = arith.constant 0 : index
    %115 = vector.load %arg8[%c2_135, %c7_136, %c0_137] : memref<18x32x128xbf16, #tpu.memory_space<vmem>>, vector<16x16x128xbf16>
    %116 = vector.shape_cast %115 : vector<16x16x128xbf16> to vector<256x128xbf16>
    %c6_138 = arith.constant 6 : index
    %c0_139 = arith.constant 0 : index
    %c0_140 = arith.constant 0 : index
    %117 = vector.load %arg4[%c6_138, %c0_139, %c0_140] : memref<9x128x128xbf16, #tpu.memory_space<vmem>>, vector<1x128x128xbf16>
    %118 = vector.shape_cast %117 : vector<1x128x128xbf16> to vector<128x128xbf16>
    %cst_141 = arith.constant dense<0.000000e+00> : vector<256x128xf32>
    %119 = tpu.matmul %116, %118, %cst_141 {dimension_numbers = #tpu.dot_dimension_numbers<[1], [0], [0], [1], [0, 0, 1, 1], [], []>} : vector<256x128xbf16>, vector<128x128xbf16>, vector<256x128xf32> -> vector<256x128xf32>
    %120 = arith.addf %114, %119 : vector<256x128xf32>
    %c2_142 = arith.constant 2 : index
    %c8_143 = arith.constant 8 : index
    %c0_144 = arith.constant 0 : index
    %121 = vector.load %arg8[%c2_142, %c8_143, %c0_144] : memref<18x32x128xbf16, #tpu.memory_space<vmem>>, vector<16x16x128xbf16>
    %122 = vector.shape_cast %121 : vector<16x16x128xbf16> to vector<256x128xbf16>
    %c7_145 = arith.constant 7 : index
    %c0_146 = arith.constant 0 : index
    %c0_147 = arith.constant 0 : index
    %123 = vector.load %arg4[%c7_145, %c0_146, %c0_147] : memref<9x128x128xbf16, #tpu.memory_space<vmem>>, vector<1x128x128xbf16>
    %124 = vector.shape_cast %123 : vector<1x128x128xbf16> to vector<128x128xbf16>
    %cst_148 = arith.constant dense<0.000000e+00> : vector<256x128xf32>
    %125 = tpu.matmul %122, %124, %cst_148 {dimension_numbers = #tpu.dot_dimension_numbers<[1], [0], [0], [1], [0, 0, 1, 1], [], []>} : vector<256x128xbf16>, vector<128x128xbf16>, vector<256x128xf32> -> vector<256x128xf32>
    %126 = arith.addf %120, %125 : vector<256x128xf32>
    %c2_149 = arith.constant 2 : index
    %c9_150 = arith.constant 9 : index
    %c0_151 = arith.constant 0 : index
    %127 = vector.load %arg8[%c2_149, %c9_150, %c0_151] : memref<18x32x128xbf16, #tpu.memory_space<vmem>>, vector<16x16x128xbf16>
    %128 = vector.shape_cast %127 : vector<16x16x128xbf16> to vector<256x128xbf16>
    %c8_152 = arith.constant 8 : index
    %c0_153 = arith.constant 0 : index
    %c0_154 = arith.constant 0 : index
    %129 = vector.load %arg4[%c8_152, %c0_153, %c0_154] : memref<9x128x128xbf16, #tpu.memory_space<vmem>>, vector<1x128x128xbf16>
    %130 = vector.shape_cast %129 : vector<1x128x128xbf16> to vector<128x128xbf16>
    %cst_155 = arith.constant dense<0.000000e+00> : vector<256x128xf32>
    %131 = tpu.matmul %128, %130, %cst_155 {dimension_numbers = #tpu.dot_dimension_numbers<[1], [0], [0], [1], [0, 0, 1, 1], [], []>} : vector<256x128xbf16>, vector<128x128xbf16>, vector<256x128xf32> -> vector<256x128xf32>
    %132 = arith.addf %126, %131 : vector<256x128xf32>
    %133 = vector.broadcast %15 : vector<1x128xf32> to vector<256x128xf32>
    %134 = arith.addf %132, %133 : vector<256x128xf32>
    %c0_156 = arith.constant 0 : index
    %c0_157 = arith.constant 0 : index
    %c0_158 = arith.constant 0 : index
    %c0_159 = arith.constant 0 : index
    %135 = vector.load %arg1[%c0_156, %c0_157, %c0_158, %c0_159] : memref<1x16x16x128xf32, #tpu.memory_space<vmem>>, vector<1x16x16x128xf32>
    %136 = vector.shape_cast %135 : vector<1x16x16x128xf32> to vector<16x16x128xf32>
    %137 = vector.shape_cast %136 : vector<16x16x128xf32> to vector<256x128xf32>
    %138 = arith.addf %134, %137 : vector<256x128xf32>
    %cst_160 = arith.constant 0.000000e+00 : f32
    %139 = vector.broadcast %cst_160 : f32 to vector<256x128xf32>
    %140 = arith.maximumf %138, %139 : vector<256x128xf32>
    %141 = vector.shape_cast %140 : vector<256x128xf32> to vector<16x16x128xf32>
    %c0_161 = arith.constant 0 : index
    %c0_162 = arith.constant 0 : index
    %c0_163 = arith.constant 0 : index
    %c0_164 = arith.constant 0 : index
    %142 = vector.load %arg6[%c0_161, %c0_162, %c0_163, %c0_164] : memref<1x16x16x128xf32, #tpu.memory_space<vmem>>, vector<1x16x16x128xf32>
    %143 = vector.shape_cast %142 : vector<1x16x16x128xf32> to vector<16x16x128xf32>
    %144 = vector.shape_cast %141 : vector<16x16x128xf32> to vector<1x16x16x128xf32>
    tpu.vector_store %arg6[%c0_161, %c0_162, %c0_163, %c0_164], %144 {strides = array<i32>} : memref<1x16x16x128xf32, #tpu.memory_space<vmem>>, vector<1x16x16x128xf32>,
    return
  }
  func.func @transform_0(%arg0: i32) -> (i32, i32, i32, i32) {
    %c0_i32 = arith.constant 0 : i32
    %c0_i32_0 = arith.constant 0 : i32
    %c0_i32_1 = arith.constant 0 : i32
    %c0_i32_2 = arith.constant 0 : i32
    return %arg0, %c0_i32, %c0_i32_0, %c0_i32_1 : i32, i32, i32, i32
  }
  func.func @transform_1(%arg0: i32) -> (i32, i32, i32) {
    %c0_i32 = arith.constant 0 : i32
    %c0_i32_0 = arith.constant 0 : i32
    %c0_i32_1 = arith.constant 0 : i32
    %c0_i32_2 = arith.constant 0 : i32
    return %c0_i32, %c0_i32_0, %c0_i32_1 : i32, i32, i32
  }
  func.func @transform_2(%arg0: i32) -> (i32, i32) {
    %c0_i32 = arith.constant 0 : i32
    %c0_i32_0 = arith.constant 0 : i32
    %c0_i32_1 = arith.constant 0 : i32
    return %c0_i32, %c0_i32_0 : i32, i32
  }
  func.func @transform_3(%arg0: i32) -> (i32, i32, i32) {
    %c0_i32 = arith.constant 0 : i32
    %c0_i32_0 = arith.constant 0 : i32
    %c0_i32_1 = arith.constant 0 : i32
    %c0_i32_2 = arith.constant 0 : i32
    return %c0_i32, %c0_i32_0, %c0_i32_1 : i32, i32, i32
  }
  func.func @transform_4(%arg0: i32) -> (i32, i32) {
    %c0_i32 = arith.constant 0 : i32
    %c0_i32_0 = arith.constant 0 : i32
    %c0_i32_1 = arith.constant 0 : i32
    return %c0_i32, %c0_i32_0 : i32, i32
  }
  func.func @transform_5(%arg0: i32) -> (i32, i32, i32, i32) {
    %c0_i32 = arith.constant 0 : i32
    %c0_i32_0 = arith.constant 0 : i32
    %c0_i32_1 = arith.constant 0 : i32
    %c0_i32_2 = arith.constant 0 : i32
    return %arg0, %c0_i32, %c0_i32_0, %c0_i32_1 : i32, i32, i32, i32
  }
}

</mosaic_0001>

<llo_original>
// kernel: tpu_custom_call.1
$region0: #{tpu_custom_call.1}
  #allocation0 [shape = 'u32[]', space=smem, size = 0x4, offset = 0x4, fixed_abs, tag = 'smem constant byte address 0x4 - core index']
  #allocation1 [shape = 'u32[144,128]{1,0:T(1,128)}', space=vmem, size = 0x12000, scoped, tag = 'internal scratch']
  #allocation2 [shape = 'bf16[18,32,128]{2,1,0:T(8,128)(2,1)}', space=vmem, size = 0x24000, scoped, tag = 'scratch operand']
  #allocation3 [shape = 'bf16[18,32,128]{2,1,0:T(8,128)(2,1)}', space=vmem, size = 0x24000, scoped, tag = 'scratch operand']
  %s0 = inlined_call_operand.hbm [shape: f32[2,16,16,128], index: 0, kind: input, shape index: {}]
  %s1 = inlined_call_operand.hbm [shape: bf16[9,128,128], index: 1, kind: input, shape index: {}]
  %s2 = inlined_call_operand.vmem [shape: f32[1,128], index: 2, kind: input, shape index: {}]
  %s3 = inlined_call_operand.hbm [shape: bf16[9,128,128], index: 3, kind: input, shape index: {}]
  %s4 = inlined_call_operand.vmem [shape: f32[1,128], index: 4, kind: input, shape index: {}]
  %s5 = inlined_call_operand.hbm [shape: f32[2,16,16,128], index: 5, kind: output, shape index: {}]
  %s6 = sld [smem:[#allocation0]]
  $region65: #{tpu_custom_call.1} parent=0
    _
  %s8 = ssub.s32 1, %s6
  %s9 = scalar_select 0, %s8, %s6
  $region1: #{tpu_custom_call.1} parent=0
    #allocation4 [shape = 'u8[262144]{0}', space=vmem, size = 0x40000, scoped, tag = 'input window, operand 0']
    #allocation5 [shape = 's32[2]{0}', space=sflag, size = 0x8, scoped, tag = 'scoped memory for tpu_custom_call.1']
    #allocation6 [shape = 's32[2]{0}', space=sflag, size = 0x8, scoped, tag = 'scoped memory for tpu_custom_call.1']
    #allocation7 [shape = 'u8[294912]{0}', space=vmem, size = 0x48000, scoped, tag = 'input window, operand 1, single buffered']
    #allocation8 [shape = 's32[1]{0}', space=sflag, size = 0x4, scoped, tag = 'scoped memory for tpu_custom_call.1']
    #allocation9 [shape = 'u8[294912]{0}', space=vmem, size = 0x48000, scoped, tag = 'input window, operand 3, single buffered']
    #allocation10 [shape = 'u8[262144]{0}', space=vmem, size = 0x40000, scoped, tag = 'output window, operand 0']
    %10 = vsyncpa [#allocation5], 0
    %s11 = scalar_lea.sflag [#allocation5], 1
    %12 = vsyncpa %s11, 0
    %13 = vsyncpa [#allocation8], 0
    %14 = vsyncpa [#allocation6], 0
    %s15 = scalar_lea.sflag [#allocation6], 1
    %16 = vsyncpa %s15, 0
    loop: start=0, step=1, limit=4
    $region2: #{tpu_custom_call.1} parent=1 // loop_pre_header
      _
    $region3: #{tpu_custom_call.1} parent=1 // loop_header
      %s18 = sphi 0, %s22
      %p19 = scmp.ge.s32.totalorder %s18, 4
      %s28 = sphi 0, %s30
      %s31 = sphi 0, %s28
      %s32 = sphi 0, %s31
      %s48 = sphi 0, %s32
      %s52 = sphi 0, %s52
      %s54 = sphi 0, %s52
      %s55 = sphi 0, %s54
      %s69 = sphi 0, %s55
      %s73 = sphi 0, %s73
      %s75 = sphi 0, %s73
      %s76 = sphi 0, %s75
      %s90 = sphi 0, %s76
      %s94 = sphi 0, %s94
      %s96 = sphi 0, %s94
      %s97 = sphi 0, %s96
      %s111 = sphi 0, %s97
      %s115 = sphi 0, %s115
      %s117 = sphi 0, %s115
      %s118 = sphi 0, %s117
      %s132 = sphi 0, %s118
      %s138 = sphi 0, %s140
      %s141 = sphi 0, %s138
      %s142 = sphi 0, %s141
      %s158 = sphi 0, %s142
    $region4: #{tpu_custom_call.1} parent=1 // loop_header_branch
      %21 = sbr.rel (%p19) target = $region8
    $region5: #{tpu_custom_call.1} parent=1 // loop_body
      %s23 = ssub.s32 %s18, 1
      %s24 = ssub.s32 %s18, 2
      %s25 = sadd.s32 %s18, 1
      %s26 = ssub.s32 %s18, %s25
      %p27 = scmp.eq.s32.totalorder %s26, 0
      %s29 = sadd.s32 %s28, 1
      %s30 = scalar_select %p27, %s28, %s29
      %p33 = pneg %p27
      %p34 = scmp.eq.s32.totalorder %s18, 1
      %p35 = por %p33, %p34
      %p36 = scmp.ne.s32.totalorder %s28, %s31
      %p37 = scmp.eq.s32.totalorder %s18, 0
      %p38 = por %p36, %p37
      %p39 = scmp.ne.s32.totalorder %s28, %s31
      %p40 = scmp.eq.s32.totalorder %s23, 1
      %p41 = por %p39, %p40
      %p42 = scmp.ne.s32.totalorder %s31, %s32
      %p43 = scmp.eq.s32.totalorder %s23, 0
      %p44 = por %p42, %p43
      %p45 = scmp.ne.s32.totalorder %s31, %s32
      %p46 = scmp.eq.s32.totalorder %s24, 1
      %p47 = por %p45, %p46
      %p49 = scmp.ne.s32.totalorder %s32, %s48
      %p50 = scmp.eq.s32.totalorder %s24, 0
      %p51 = por %p49, %p50
      %s53 = sadd.s32 %s52, 1
      %p56 = scmp.eq.s32.totalorder %s18, 1
      %p57 = scmp.ne.s32.totalorder %s52, %s54
      %p58 = scmp.eq.s32.totalorder %s18, 0
      %p59 = por %p57, %p58
      %p60 = scmp.ne.s32.totalorder %s52, %s54
      %p61 = scmp.eq.s32.totalorder %s23, 1
      %p62 = por %p60, %p61
      %p63 = scmp.ne.s32.totalorder %s54, %s55
      %p64 = scmp.eq.s32.totalorder %s23, 0
      %p65 = por %p63, %p64
      %p66 = scmp.ne.s32.totalorder %s54, %s55
      %p67 = scmp.eq.s32.totalorder %s24, 1
      %p68 = por %p66, %p67
      %p70 = scmp.ne.s32.totalorder %s55, %s69
      %p71 = scmp.eq.s32.totalorder %s24, 0
      %p72 = por %p70, %p71
      %s74 = sadd.s32 %s73, 1
      %p77 = scmp.eq.s32.totalorder %s18, 1
      %p78 = scmp.ne.s32.totalorder %s73, %s75
      %p79 = scmp.eq.s32.totalorder %s18, 0
      %p80 = por %p78, %p79
      %p81 = scmp.ne.s32.totalorder %s73, %s75
      %p82 = scmp.eq.s32.totalorder %s23, 1
      %p83 = por %p81, %p82
      %p84 = scmp.ne.s32.totalorder %s75, %s76
      %p85 = scmp.eq.s32.totalorder %s23, 0
      %p86 = por %p84, %p85
      %p87 = scmp.ne.s32.totalorder %s75, %s76
      %p88 = scmp.eq.s32.totalorder %s24, 1
      %p89 = por %p87, %p88
      %p91 = scmp.ne.s32.totalorder %s76, %s90
      %p92 = scmp.eq.s32.totalorder %s24, 0
      %p93 = por %p91, %p92
      %s95 = sadd.s32 %s94, 1
      %p98 = scmp.eq.s32.totalorder %s18, 1
      %p99 = scmp.ne.s32.totalorder %s94, %s96
      %p100 = scmp.eq.s32.totalorder %s18, 0
      %p101 = por %p99, %p100
      %p102 = scmp.ne.s32.totalorder %s94, %s96
      %p103 = scmp.eq.s32.totalorder %s23, 1
      %p104 = por %p102, %p103
      %p105 = scmp.ne.s32.totalorder %s96, %s97
      %p106 = scmp.eq.s32.totalorder %s23, 0
      %p107 = por %p105, %p106
      %p108 = scmp.ne.s32.totalorder %s96, %s97
      %p109 = scmp.eq.s32.totalorder %s24, 1
      %p110 = por %p108, %p109
      %p112 = scmp.ne.s32.totalorder %s97, %s111
      %p113 = scmp.eq.s32.totalorder %s24, 0
      %p114 = por %p112, %p113
      %s116 = sadd.s32 %s115, 1
      %p119 = scmp.eq.s32.totalorder %s18, 1
      %p120 = scmp.ne.s32.totalorder %s115, %s117
      %p121 = scmp.eq.s32.totalorder %s18, 0
      %p122 = por %p120, %p121
      %p123 = scmp.ne.s32.totalorder %s115, %s117
      %p124 = scmp.eq.s32.totalorder %s23, 1
      %p125 = por %p123, %p124
      %p126 = scmp.ne.s32.totalorder %s117, %s118
      %p127 = scmp.eq.s32.totalorder %s23, 0
      %p128 = por %p126, %p127
      %p129 = scmp.ne.s32.totalorder %s117, %s118
      %p130 = scmp.eq.s32.totalorder %s24, 1
      %p131 = por %p129, %p130
      %p133 = scmp.ne.s32.totalorder %s118, %s132
      %p134 = scmp.eq.s32.totalorder %s24, 0
      %p135 = por %p133, %p134
      %s136 = ssub.s32 %s18, %s25
      %p137 = scmp.eq.s32.totalorder %s136, 0
      %s139 = sadd.s32 %s138, 1
      %s140 = scalar_select %p137, %s138, %s139
      %p143 = pneg %p137
      %p144 = scmp.eq.s32.totalorder %s18, 1
      %p145 = por %p143, %p144
      %p146 = scmp.ne.s32.totalorder %s138, %s141
      %p147 = scmp.eq.s32.totalorder %s18, 0
      %p148 = por %p146, %p147
      %p149 = scmp.ne.s32.totalorder %s138, %s141
      %p150 = scmp.eq.s32.totalorder %s23, 1
      %p151 = por %p149, %p150
      %p152 = scmp.ne.s32.totalorder %s141, %s142
      %p153 = scmp.eq.s32.totalorder %s23, 0
      %p154 = por %p152, %p153
      %p155 = scmp.ne.s32.totalorder %s141, %s142
      %p156 = scmp.eq.s32.totalorder %s24, 1
      %p157 = por %p155, %p156
      %p159 = scmp.ne.s32.totalorder %s142, %s158
      %p160 = scmp.eq.s32.totalorder %s24, 0
      %p161 = por %p159, %p160
      %p162 = scmp.le.s32.totalorder 1, %s18
      %p163 = scmp.lt.s32.totalorder %s18, 3
      %p164 = pnand %p162, %p163
      %p165 = pneg %p164
      // Predicated region
      $region9: #{tpu_custom_call.1} parent=5 // pred_check
        _
      $region10: #{tpu_custom_call.1} parent=5 // pred_check_branch
        %167 = sbr.rel (%p164) target = $region12
      $region11: #{tpu_custom_call.1} parent=5 // pred_region
        %s168 = ssub.s32 %s18, 1
        // Predicated region
        $region13: #{tpu_custom_call.1} parent=11 // pred_check
          %p169 = pneg %p65
        $region14: #{tpu_custom_call.1} parent=11 // pred_check_branch
          %171 = sbr.rel (%p169) target = $region16
        $region15: #{tpu_custom_call.1} parent=11 // pred_region
          %s173 = ssub.s32 9216, 9216
          %174 = vsyncadd [#allocation8], %s173
          %s175 = sshll.u32 [#allocation7], 4
          %s176 = int_to_ptr.vmem [resolvable:$true] %s175
          %181 = dma.hbm_to_vmem [thread:$0]  %s1, 9216, %s176, [#allocation8], 64, 64, 4
        $region16: #{tpu_custom_call.1} parent=11 // pred_fallthru
          _
        // Predicated region
        $region17: #{tpu_custom_call.1} parent=11 // pred_check
          %p182 = pneg %p86
        $region18: #{tpu_custom_call.1} parent=11 // pred_check_branch
          %184 = sbr.rel (%p182) target = $region20
        $region19: #{tpu_custom_call.1} parent=11 // pred_region
          _
        $region20: #{tpu_custom_call.1} parent=11 // pred_fallthru
          _
        // Predicated region
        $region21: #{tpu_custom_call.1} parent=11 // pred_check
          %p185 = pneg %p107
        $region22: #{tpu_custom_call.1} parent=11 // pred_check_branch
          %187 = sbr.rel (%p185) target = $region24
        $region23: #{tpu_custom_call.1} parent=11 // pred_region
          %s189 = ssub.s32 9216, 9216
          %190 = vsyncadd [#allocation8], %s189
          %s191 = sshll.u32 [#allocation9], 4
          %s192 = int_to_ptr.vmem [resolvable:$true] %s191
          %197 = dma.hbm_to_vmem [thread:$0]  %s3, 9216, %s192, [#allocation8], 64, 64, 4
        $region24: #{tpu_custom_call.1} parent=11 // pred_fallthru
          _
        // Predicated region
        $region25: #{tpu_custom_call.1} parent=11 // pred_check
          %p198 = pneg %p128
        $region26: #{tpu_custom_call.1} parent=11 // pred_check_branch
          %200 = sbr.rel (%p198) target = $region28
        $region27: #{tpu_custom_call.1} parent=11 // pred_region
          _
        $region28: #{tpu_custom_call.1} parent=11 // pred_fallthru
          _
      $region12: #{tpu_custom_call.1} parent=5 // pred_fallthru
        _
      %p201 = scmp.lt.s32.totalorder %s18, 2
      // Predicated region
      $region29: #{tpu_custom_call.1} parent=5 // pred_check
        %p202 = pneg %p201
      $region30: #{tpu_custom_call.1} parent=5 // pred_check_branch
        %204 = sbr.rel (%p202) target = $region32
      $region31: #{tpu_custom_call.1} parent=5 // pred_region
        // Predicated region
        $region33: #{tpu_custom_call.1} parent=31 // pred_check
          %p205 = pneg %p38
        $region34: #{tpu_custom_call.1} parent=31 // pred_check_branch
          %207 = sbr.rel (%p205) target = $region36
        $region35: #{tpu_custom_call.1} parent=31 // pred_region
          %s208 = sand.u32 %s28, 1
          %s209 = scalar_lea.sflag [#allocation5], %s208
          %s210 = sand.u32 %s28, 1
          %s211 = smul.addr %s210, 256
          %s212 = scalar_lea.vmem [#allocation4], %s211
          %s214 = ssub.s32 4096, 4096
          %215 = vsyncadd %s209, %s214
          %s216 = smul.addr %s18, 32
          %s217 = smul.addr %s216, 128
          %s218 = scalar_lea.hbm %s0, %s217
          %s219 = sshll.u32 %s212, 4
          %s220 = int_to_ptr.vmem [resolvable:$true] %s219
          %225 = dma.hbm_to_vmem [thread:$0]  %s218, 4096, %s220, %s209, 128, 128, 8
        $region36: #{tpu_custom_call.1} parent=31 // pred_fallthru
          _
      $region32: #{tpu_custom_call.1} parent=5 // pred_fallthru
        _
      %p226 = scmp.le.s32.totalorder 1, %s18
      %p227 = scmp.lt.s32.totalorder %s18, 3
      %p228 = pnand %p226, %p227
      %p229 = pneg %p228
      // Predicated region
      $region37: #{tpu_custom_call.1} parent=5 // pred_check
        _
      $region38: #{tpu_custom_call.1} parent=5 // pred_check_branch
        %231 = sbr.rel (%p228) target = $region40
      $region39: #{tpu_custom_call.1} parent=5 // pred_region
        %s232 = ssub.s32 %s18, 1
        %s233 = sand.u32 %s31, 1
        %s234 = scalar_lea.sflag [#allocation5], %s233
        %s235 = sand.u32 %s31, 1
        %s236 = smul.addr %s235, 256
        %s237 = scalar_lea.vmem [#allocation4], %s236
        // Predicated region
        $region41: #{tpu_custom_call.1} parent=39 // pred_check
          %p238 = pneg %p44
        $region42: #{tpu_custom_call.1} parent=39 // pred_check_branch
          %240 = sbr.rel (%p238) target = $region44
        $region43: #{tpu_custom_call.1} parent=39 // pred_region
          %241 = dma.done %s234, 4096
        $region44: #{tpu_custom_call.1} parent=39 // pred_fallthru
          _
        // Predicated region
        $region45: #{tpu_custom_call.1} parent=39 // pred_check
          %p242 = pneg %p65
        $region46: #{tpu_custom_call.1} parent=39 // pred_check_branch
          %244 = sbr.rel (%p242) target = $region48
        $region47: #{tpu_custom_call.1} parent=39 // pred_region
          %245 = dma.done [#allocation8], 9216
        $region48: #{tpu_custom_call.1} parent=39 // pred_fallthru
          _
        // Predicated region
        $region49: #{tpu_custom_call.1} parent=39 // pred_check
          %p246 = pneg %p107
        $region50: #{tpu_custom_call.1} parent=39 // pred_check_branch
          %248 = sbr.rel (%p246) target = $region52
        $region51: #{tpu_custom_call.1} parent=39 // pred_region
          %249 = dma.done [#allocation8], 9216
        $region52: #{tpu_custom_call.1} parent=39 // pred_fallthru
          _
        %s250 = sand.u32 %s31, 1
        %s251 = scalar_lea.sflag [#allocation5], %s250
        %s252 = sand.u32 %s31, 1
        %s253 = smul.addr %s252, 256
        %s254 = scalar_lea.vmem [#allocation4], %s253
        %p255 = pneg %p44
        %p256 = pneg %p41
        %p257 = pneg %p65
        %p258 = pneg %p62
        %p259 = pneg %p86
        %p260 = pneg %p83
        %p261 = pneg %p107
        %p262 = pneg %p104
        %p263 = pneg %p128
        %p264 = pneg %p125
        %p265 = pneg %p154
        %p266 = pneg %p151
        %s267 = sand.u32 %s141, 1
        %s268 = scalar_lea.sflag [#allocation6], %s267
        %s269 = sand.u32 %s141, 1
        %s270 = smul.addr %s269, 256
        %s271 = scalar_lea.vmem [#allocation10], %s270
        %vm273 = vcmask 1043459
        %vm274 = vsmask.f32 7950
        %vm275 = vmand %vm273, %vm274
        %v276 = vld [vmem:[#allocation2] sm:$0x8]
        %v277 = vsel %vm275, 0, %v276
        %278 = vst [vmem:[#allocation2] sm:$0x8] %v277
        %279 = vst [vmem:[#allocation2 + $0x4] sm:$0xf] 0
        %280 = vst [vmem:[#allocation2 + $0x8] sm:$0xf] 0
        %vm281 = vcmask 1040384
        %vm282 = vsmask.f32 256
        %vm283 = vmand %vm281, %vm282
        %v284 = vld [vmem:[#allocation2 + $0xc] sm:$0x1]
        %v285 = vsel %vm283, 0, %v284
        %286 = vst [vmem:[#allocation2 + $0xc] sm:$0x1] %v285
        %s287 = scalar_lea.vmem [#allocation2], 272
        %v288 = vld [vmem:[%s287] sm:$0x8]
        %v289 = vsel %vm275, 0, %v288
        %290 = vst [vmem:[%s287] sm:$0x8] %v289
        %291 = vst [vmem:[%s287 + $0x4] sm:$0xf] 0
        %292 = vst [vmem:[%s287 + $0x8] sm:$0xf] 0
        %v293 = vld [vmem:[%s287 + $0xc] sm:$0x1]
        %v294 = vsel %vm283, 0, %v293
        %295 = vst [vmem:[%s287 + $0xc] sm:$0x1] %v294
        %s296 = scalar_lea.vmem [#allocation2], 16
        %v297 = vld [vmem:[%s296] sm:$0x8]
        %v298 = vsel %vm275, 0, %v297
        %299 = vst [vmem:[%s296] sm:$0x8] %v298
        %v300 = vld [vmem:[%s296 + $0x10] sm:$0x8]
        %v301 = vsel %vm275, 0, %v300
        %302 = vst [vmem:[%s296 + $0x10] sm:$0x8] %v301
        %v303 = vld [vmem:[%s296 + $0x20] sm:$0x8]
        %v304 = vsel %vm275, 0, %v303
        %305 = vst [vmem:[%s296 + $0x20] sm:$0x8] %v304
        %v306 = vld [vmem:[%s296 + $0x30] sm:$0x8]
        %v307 = vsel %vm275, 0, %v306
        %308 = vst [vmem:[%s296 + $0x30] sm:$0x8] %v307
        %v309 = vld [vmem:[%s296 + $0x40] sm:$0x8]
        %v310 = vsel %vm275, 0, %v309
        %311 = vst [vmem:[%s296 + $0x40] sm:$0x8] %v310
        %v312 = vld [vmem:[%s296 + $0x50] sm:$0x8]
        %v313 = vsel %vm275, 0, %v312
        %314 = vst [vmem:[%s296 + $0x50] sm:$0x8] %v313
        %v315 = vld [vmem:[%s296 + $0x60] sm:$0x8]
        %v316 = vsel %vm275, 0, %v315
        %317 = vst [vmem:[%s296 + $0x60] sm:$0x8] %v316
        %v318 = vld [vmem:[%s296 + $0x70] sm:$0x8]
        %v319 = vsel %vm275, 0, %v318
        %320 = vst [vmem:[%s296 + $0x70] sm:$0x8] %v319
        %v321 = vld [vmem:[%s296 + $0x80] sm:$0x8]
        %v322 = vsel %vm275, 0, %v321
        %323 = vst [vmem:[%s296 + $0x80] sm:$0x8] %v322
        %v324 = vld [vmem:[%s296 + $0x90] sm:$0x8]
        %v325 = vsel %vm275, 0, %v324
        %326 = vst [vmem:[%s296 + $0x90] sm:$0x8] %v325
        %v327 = vld [vmem:[%s296 + $0xa0] sm:$0x8]
        %v328 = vsel %vm275, 0, %v327
        %329 = vst [vmem:[%s296 + $0xa0] sm:$0x8] %v328
        %v330 = vld [vmem:[%s296 + $0xb0] sm:$0x8]
        %v331 = vsel %vm275, 0, %v330
        %332 = vst [vmem:[%s296 + $0xb0] sm:$0x8] %v331
        %v333 = vld [vmem:[%s296 + $0xc0] sm:$0x8]
        %v334 = vsel %vm275, 0, %v333
        %335 = vst [vmem:[%s296 + $0xc0] sm:$0x8] %v334
        %v336 = vld [vmem:[%s296 + $0xd0] sm:$0x8]
        %v337 = vsel %vm275, 0, %v336
        %338 = vst [vmem:[%s296 + $0xd0] sm:$0x8] %v337
        %v339 = vld [vmem:[%s296 + $0xe0] sm:$0x8]
        %v340 = vsel %vm275, 0, %v339
        %341 = vst [vmem:[%s296 + $0xe0] sm:$0x8] %v340
        %v342 = vld [vmem:[%s296 + $0xf0] sm:$0x8]
        %v343 = vsel %vm275, 0, %v342
        %344 = vst [vmem:[%s296 + $0xf0] sm:$0x8] %v343
        %v345 = vld [vmem:[%s296 + $0xc] sm:$0x1]
        %v346 = vsel %vm283, 0, %v345
        %347 = vst [vmem:[%s296 + $0xc] sm:$0x1] %v346
        %v348 = vld [vmem:[%s296 + $0x1c] sm:$0x1]
        %v349 = vsel %vm283, 0, %v348
        %350 = vst [vmem:[%s296 + $0x1c] sm:$0x1] %v349
        %v351 = vld [vmem:[%s296 + $0x2c] sm:$0x1]
        %v352 = vsel %vm283, 0, %v351
        %353 = vst [vmem:[%s296 + $0x2c] sm:$0x1] %v352
        %v354 = vld [vmem:[%s296 + $0x3c] sm:$0x1]
        %v355 = vsel %vm283, 0, %v354
        %356 = vst [vmem:[%s296 + $0x3c] sm:$0x1] %v355
        %v357 = vld [vmem:[%s296 + $0x4c] sm:$0x1]
        %v358 = vsel %vm283, 0, %v357
        %359 = vst [vmem:[%s296 + $0x4c] sm:$0x1] %v358
        %v360 = vld [vmem:[%s296 + $0x5c] sm:$0x1]
        %v361 = vsel %vm283, 0, %v360
        %362 = vst [vmem:[%s296 + $0x5c] sm:$0x1] %v361
        %v363 = vld [vmem:[%s296 + $0x6c] sm:$0x1]
        %v364 = vsel %vm283, 0, %v363
        %365 = vst [vmem:[%s296 + $0x6c] sm:$0x1] %v364
        %v366 = vld [vmem:[%s296 + $0x7c] sm:$0x1]
        %v367 = vsel %vm283, 0, %v366
        %368 = vst [vmem:[%s296 + $0x7c] sm:$0x1] %v367
        %v369 = vld [vmem:[%s296 + $0x8c] sm:$0x1]
        %v370 = vsel %vm283, 0, %v369
        %371 = vst [vmem:[%s296 + $0x8c] sm:$0x1] %v370
        %v372 = vld [vmem:[%s296 + $0x9c] sm:$0x1]
        %v373 = vsel %vm283, 0, %v372
        %374 = vst [vmem:[%s296 + $0x9c] sm:$0x1] %v373
        %v375 = vld [vmem:[%s296 + $0xac] sm:$0x1]
        %v376 = vsel %vm283, 0, %v375
        %377 = vst [vmem:[%s296 + $0xac] sm:$0x1] %v376
        %v378 = vld [vmem:[%s296 + $0xbc] sm:$0x1]
        %v379 = vsel %vm283, 0, %v378
        %380 = vst [vmem:[%s296 + $0xbc] sm:$0x1] %v379
        %v381 = vld [vmem:[%s296 + $0xcc] sm:$0x1]
        %v382 = vsel %vm283, 0, %v381
        %383 = vst [vmem:[%s296 + $0xcc] sm:$0x1] %v382
        %v384 = vld [vmem:[%s296 + $0xdc] sm:$0x1]
        %v385 = vsel %vm283, 0, %v384
        %386 = vst [vmem:[%s296 + $0xdc] sm:$0x1] %v385
        %v387 = vld [vmem:[%s296 + $0xec] sm:$0x1]
        %v388 = vsel %vm283, 0, %v387
        %389 = vst [vmem:[%s296 + $0xec] sm:$0x1] %v388
        %v390 = vld [vmem:[%s296 + $0xfc] sm:$0x1]
        %v391 = vsel %vm283, 0, %v390
        %392 = vst [vmem:[%s296 + $0xfc] sm:$0x1] %v391
        %v393 = vld [vmem:[#allocation3] sm:$0x8]
        %v394 = vsel %vm275, 0, %v393
        %395 = vst [vmem:[#allocation3] sm:$0x8] %v394
        %396 = vst [vmem:[#allocation3 + $0x4] sm:$0xf] 0
        %397 = vst [vmem:[#allocation3 + $0x8] sm:$0xf] 0
        %v398 = vld [vmem:[#allocation3 + $0xc] sm:$0x1]
        %v399 = vsel %vm283, 0, %v398
        %400 = vst [vmem:[#allocation3 + $0xc] sm:$0x1] %v399
        %s401 = scalar_lea.vmem [#allocation3], 272
        %v402 = vld [vmem:[%s401] sm:$0x8]
        %v403 = vsel %vm275, 0, %v402
        %404 = vst [vmem:[%s401] sm:$0x8] %v403
        %405 = vst [vmem:[%s401 + $0x4] sm:$0xf] 0
        %406 = vst [vmem:[%s401 + $0x8] sm:$0xf] 0
        %v407 = vld [vmem:[%s401 + $0xc] sm:$0x1]
        %v408 = vsel %vm283, 0, %v407
        %409 = vst [vmem:[%s401 + $0xc] sm:$0x1] %v408
        %s410 = scalar_lea.vmem [#allocation3], 16
        %v411 = vld [vmem:[%s410] sm:$0x8]
        %v412 = vsel %vm275, 0, %v411
        %413 = vst [vmem:[%s410] sm:$0x8] %v412
        %v414 = vld [vmem:[%s410 + $0x10] sm:$0x8]
        %v415 = vsel %vm275, 0, %v414
        %416 = vst [vmem:[%s410 + $0x10] sm:$0x8] %v415
        %v417 = vld [vmem:[%s410 + $0x20] sm:$0x8]
        %v418 = vsel %vm275, 0, %v417
        %419 = vst [vmem:[%s410 + $0x20] sm:$0x8] %v418
        %v420 = vld [vmem:[%s410 + $0x30] sm:$0x8]
        %v421 = vsel %vm275, 0, %v420
        %422 = vst [vmem:[%s410 + $0x30] sm:$0x8] %v421
        %v423 = vld [vmem:[%s410 + $0x40] sm:$0x8]
        %v424 = vsel %vm275, 0, %v423
        %425 = vst [vmem:[%s410 + $0x40] sm:$0x8] %v424
        %v426 = vld [vmem:[%s410 + $0x50] sm:$0x8]
        %v427 = vsel %vm275, 0, %v426
        %428 = vst [vmem:[%s410 + $0x50] sm:$0x8] %v427
        %v429 = vld [vmem:[%s410 + $0x60] sm:$0x8]
        %v430 = vsel %vm275, 0, %v429
        %431 = vst [vmem:[%s410 + $0x60] sm:$0x8] %v430
        %v432 = vld [vmem:[%s410 + $0x70] sm:$0x8]
        %v433 = vsel %vm275, 0, %v432
        %434 = vst [vmem:[%s410 + $0x70] sm:$0x8] %v433
        %v435 = vld [vmem:[%s410 + $0x80] sm:$0x8]
        %v436 = vsel %vm275, 0, %v435
        %437 = vst [vmem:[%s410 + $0x80] sm:$0x8] %v436
        %v438 = vld [vmem:[%s410 + $0x90] sm:$0x8]
        %v439 = vsel %vm275, 0, %v438
        %440 = vst [vmem:[%s410 + $0x90] sm:$0x8] %v439
        %v441 = vld [vmem:[%s410 + $0xa0] sm:$0x8]
        %v442 = vsel %vm275, 0, %v441
        %443 = vst [vmem:[%s410 + $0xa0] sm:$0x8] %v442
        %v444 = vld [vmem:[%s410 + $0xb0] sm:$0x8]
        %v445 = vsel %vm275, 0, %v444
        %446 = vst [vmem:[%s410 + $0xb0] sm:$0x8] %v445
        %v447 = vld [vmem:[%s410 + $0xc0] sm:$0x8]
        %v448 = vsel %vm275, 0, %v447
        %449 = vst [vmem:[%s410 + $0xc0] sm:$0x8] %v448
        %v450 = vld [vmem:[%s410 + $0xd0] sm:$0x8]
        %v451 = vsel %vm275, 0, %v450
        %452 = vst [vmem:[%s410 + $0xd0] sm:$0x8] %v451
        %v453 = vld [vmem:[%s410 + $0xe0] sm:$0x8]
        %v454 = vsel %vm275, 0, %v453
        %455 = vst [vmem:[%s410 + $0xe0] sm:$0x8] %v454
        %v456 = vld [vmem:[%s410 + $0xf0] sm:$0x8]
        %v457 = vsel %vm275, 0, %v456
        %458 = vst [vmem:[%s410 + $0xf0] sm:$0x8] %v457
        %v459 = vld [vmem:[%s410 + $0xc] sm:$0x1]
        %v460 = vsel %vm283, 0, %v459
        %461 = vst [vmem:[%s410 + $0xc] sm:$0x1] %v460
        %v462 = vld [vmem:[%s410 + $0x1c] sm:$0x1]
        %v463 = vsel %vm283, 0, %v462
        %464 = vst [vmem:[%s410 + $0x1c] sm:$0x1] %v463
        %v465 = vld [vmem:[%s410 + $0x2c] sm:$0x1]
        %v466 = vsel %vm283, 0, %v465
        %467 = vst [vmem:[%s410 + $0x2c] sm:$0x1] %v466
        %v468 = vld [vmem:[%s410 + $0x3c] sm:$0x1]
        %v469 = vsel %vm283, 0, %v468
        %470 = vst [vmem:[%s410 + $0x3c] sm:$0x1] %v469
        %v471 = vld [vmem:[%s410 + $0x4c] sm:$0x1]
        %v472 = vsel %vm283, 0, %v471
        %473 = vst [vmem:[%s410 + $0x4c] sm:$0x1] %v472
        %v474 = vld [vmem:[%s410 + $0x5c] sm:$0x1]
        %v475 = vsel %vm283, 0, %v474
        %476 = vst [vmem:[%s410 + $0x5c] sm:$0x1] %v475
        %v477 = vld [vmem:[%s410 + $0x6c] sm:$0x1]
        %v478 = vsel %vm283, 0, %v477
        %479 = vst [vmem:[%s410 + $0x6c] sm:$0x1] %v478
        %v480 = vld [vmem:[%s410 + $0x7c] sm:$0x1]
        %v481 = vsel %vm283, 0, %v480
        %482 = vst [vmem:[%s410 + $0x7c] sm:$0x1] %v481
        %v483 = vld [vmem:[%s410 + $0x8c] sm:$0x1]
        %v484 = vsel %vm283, 0, %v483
        %485 = vst [vmem:[%s410 + $0x8c] sm:$0x1] %v484
        %v486 = vld [vmem:[%s410 + $0x9c] sm:$0x1]
        %v487 = vsel %vm283, 0, %v486
        %488 = vst [vmem:[%s410 + $0x9c] sm:$0x1] %v487
        %v489 = vld [vmem:[%s410 + $0xac] sm:$0x1]
        %v490 = vsel %vm283, 0, %v489
        %491 = vst [vmem:[%s410 + $0xac] sm:$0x1] %v490
        %v492 = vld [vmem:[%s410 + $0xbc] sm:$0x1]
        %v493 = vsel %vm283, 0, %v492
        %494 = vst [vmem:[%s410 + $0xbc] sm:$0x1] %v493
        %v495 = vld [vmem:[%s410 + $0xcc] sm:$0x1]
        %v496 = vsel %vm283, 0, %v495
        %497 = vst [vmem:[%s410 + $0xcc] sm:$0x1] %v496
        %v498 = vld [vmem:[%s410 + $0xdc] sm:$0x1]
        %v499 = vsel %vm283, 0, %v498
        %500 = vst [vmem:[%s410 + $0xdc] sm:$0x1] %v499
        %v501 = vld [vmem:[%s410 + $0xec] sm:$0x1]
        %v502 = vsel %vm283, 0, %v501
        %503 = vst [vmem:[%s410 + $0xec] sm:$0x1] %v502
        %v504 = vld [vmem:[%s410 + $0xfc] sm:$0x1]
        %v505 = vsel %vm283, 0, %v504
        %506 = vst [vmem:[%s410 + $0xfc] sm:$0x1] %v505
        %v507 = vld [vmem:[%s237] sm:$0xff]
        %v508 = vld [vmem:[%s237 + $0x8] sm:$0xff]
        %v509 = vld [vmem:[%s237 + $0x10] sm:$0xff]
        %v510 = vld [vmem:[%s237 + $0x18] sm:$0xff]
        %v511 = vld [vmem:[%s237 + $0x20] sm:$0xff]
        %v512 = vld [vmem:[%s237 + $0x28] sm:$0xff]
        %v513 = vld [vmem:[%s237 + $0x30] sm:$0xff]
        %v514 = vld [vmem:[%s237 + $0x38] sm:$0xff]
        %v515 = vld [vmem:[%s237 + $0x40] sm:$0xff]
        %v516 = vld [vmem:[%s237 + $0x48] sm:$0xff]
        %v517 = vld [vmem:[%s237 + $0x50] sm:$0xff]
        %v518 = vld [vmem:[%s237 + $0x58] sm:$0xff]
        %v519 = vld [vmem:[%s237 + $0x60] sm:$0xff]
        %v520 = vld [vmem:[%s237 + $0x68] sm:$0xff]
        %v521 = vld [vmem:[%s237 + $0x70] sm:$0xff]
        %v522 = vld [vmem:[%s237 + $0x78] sm:$0xff]
        %v523 = vld [vmem:[%s237 + $0x80] sm:$0xff]
        %v524 = vld [vmem:[%s237 + $0x88] sm:$0xff]
        %v525 = vld [vmem:[%s237 + $0x90] sm:$0xff]
        %v526 = vld [vmem:[%s237 + $0x98] sm:$0xff]
        %v527 = vld [vmem:[%s237 + $0xa0] sm:$0xff]
        %v528 = vld [vmem:[%s237 + $0xa8] sm:$0xff]
        %v529 = vld [vmem:[%s237 + $0xb0] sm:$0xff]
        %v530 = vld [vmem:[%s237 + $0xb8] sm:$0xff]
        %v531 = vld [vmem:[%s237 + $0xc0] sm:$0xff]
        %v532 = vld [vmem:[%s237 + $0xc8] sm:$0xff]
        %v533 = vld [vmem:[%s237 + $0xd0] sm:$0xff]
        %v534 = vld [vmem:[%s237 + $0xd8] sm:$0xff]
        %v535 = vld [vmem:[%s237 + $0xe0] sm:$0xff]
        %v536 = vld [vmem:[%s237 + $0xe8] sm:$0xff]
        %v537 = vld [vmem:[%s237 + $0xf0] sm:$0xff]
        %v538 = vld [vmem:[%s237 + $0xf8] sm:$0xff]
        %v539 = vpack.c.bf16 %v508, %v507
        %v540 = vpack.c.bf16 %v510, %v509
        %v541 = vpack.c.bf16 %v512, %v511
        %v542 = vpack.c.bf16 %v514, %v513
        %v543 = vpack.c.bf16 %v516, %v515
        %v544 = vpack.c.bf16 %v518, %v517
        %v545 = vpack.c.bf16 %v520, %v519
        %v546 = vpack.c.bf16 %v522, %v521
        %v547 = vpack.c.bf16 %v524, %v523
        %v548 = vpack.c.bf16 %v526, %v525
        %v549 = vpack.c.bf16 %v528, %v527
        %v550 = vpack.c.bf16 %v530, %v529
        %v551 = vpack.c.bf16 %v532, %v531
        %v552 = vpack.c.bf16 %v534, %v533
        %v553 = vpack.c.bf16 %v536, %v535
        %v554 = vpack.c.bf16 %v538, %v537
        %v571 = vunpack.c.l.b16 %v539
        %v572 = vunpack.c.h.b16 %v539
        %v573 = vunpack.c.l.b16 %v540
        %v574 = vunpack.c.h.b16 %v540
        %v575 = vunpack.c.l.b16 %v541
        %v576 = vunpack.c.h.b16 %v541
        %v577 = vunpack.c.l.b16 %v542
        %v578 = vunpack.c.h.b16 %v542
        %v579 = vunpack.c.l.b16 %v543
        %v580 = vunpack.c.h.b16 %v543
        %v581 = vunpack.c.l.b16 %v544
        %v582 = vunpack.c.h.b16 %v544
        %v583 = vunpack.c.l.b16 %v545
        %v584 = vunpack.c.h.b16 %v545
        %v585 = vunpack.c.l.b16 %v546
        %v586 = vunpack.c.h.b16 %v546
        %v587 = vunpack.c.l.b16 %v547
        %v588 = vunpack.c.h.b16 %v547
        %v589 = vunpack.c.l.b16 %v548
        %v590 = vunpack.c.h.b16 %v548
        %v591 = vunpack.c.l.b16 %v549
        %v592 = vunpack.c.h.b16 %v549
        %v593 = vunpack.c.l.b16 %v550
        %v594 = vunpack.c.h.b16 %v550
        %v595 = vunpack.c.l.b16 %v551
        %v596 = vunpack.c.h.b16 %v551
        %v597 = vunpack.c.l.b16 %v552
        %v598 = vunpack.c.h.b16 %v552
        %v599 = vunpack.c.l.b16 %v553
        %v600 = vunpack.c.h.b16 %v553
        %v601 = vunpack.c.l.b16 %v554
        %v602 = vunpack.c.h.b16 %v554
        %v603 = vpack.c.b16 %v571, %v571
        %v604 = vpack.c.b16 %v572, %v572
        %v605 = vpack.c.b16 %v573, %v573
        %v606 = vpack.c.b16 %v574, %v574
        %v607 = vpack.c.b16 %v575, %v575
        %v608 = vpack.c.b16 %v576, %v576
        %v609 = vpack.c.b16 %v577, %v577
        %v610 = vpack.c.b16 %v578, %v578
        %v611 = vpack.c.b16 %v579, %v579
        %v612 = vpack.c.b16 %v580, %v580
        %v613 = vpack.c.b16 %v581, %v581
        %v614 = vpack.c.b16 %v582, %v582
        %v615 = vpack.c.b16 %v583, %v583
        %v616 = vpack.c.b16 %v584, %v584
        %v617 = vpack.c.b16 %v585, %v585
        %v618 = vpack.c.b16 %v586, %v586
        %v619 = vpack.c.b16 %v587, %v587
        %v620 = vpack.c.b16 %v588, %v588
        %v621 = vpack.c.b16 %v589, %v589
        %v622 = vpack.c.b16 %v590, %v590
        %v623 = vpack.c.b16 %v591, %v591
        %v624 = vpack.c.b16 %v592, %v592
        %v625 = vpack.c.b16 %v593, %v593
        %v626 = vpack.c.b16 %v594, %v594
        %v627 = vpack.c.b16 %v595, %v595
        %v628 = vpack.c.b16 %v596, %v596
        %v629 = vpack.c.b16 %v597, %v597
        %v630 = vpack.c.b16 %v598, %v598
        %v631 = vpack.c.b16 %v599, %v599
        %v632 = vpack.c.b16 %v600, %v600
        %v633 = vpack.c.b16 %v601, %v601
        %v634 = vpack.c.b16 %v602, %v602
        %667 = vst [vmem:[%s296 + $0x4] sm:$0xf] %v603
        %668 = vst [vmem:[%s296 + $0x8] sm:$0xf] %v604
        %669 = vst [vmem:[%s296 + $0x14] sm:$0xf] %v605
        %670 = vst [vmem:[%s296 + $0x18] sm:$0xf] %v606
        %671 = vst [vmem:[%s296 + $0x24] sm:$0xf] %v607
        %672 = vst [vmem:[%s296 + $0x28] sm:$0xf] %v608
        %673 = vst [vmem:[%s296 + $0x34] sm:$0xf] %v609
        %674 = vst [vmem:[%s296 + $0x38] sm:$0xf] %v610
        %675 = vst [vmem:[%s296 + $0x44] sm:$0xf] %v611
        %676 = vst [vmem:[%s296 + $0x48] sm:$0xf] %v612
        %677 = vst [vmem:[%s296 + $0x54] sm:$0xf] %v613
        %678 = vst [vmem:[%s296 + $0x58] sm:$0xf] %v614
        %679 = vst [vmem:[%s296 + $0x64] sm:$0xf] %v615
        %680 = vst [vmem:[%s296 + $0x68] sm:$0xf] %v616
        %681 = vst [vmem:[%s296 + $0x74] sm:$0xf] %v617
        %682 = vst [vmem:[%s296 + $0x78] sm:$0xf] %v618
        %683 = vst [vmem:[%s296 + $0x84] sm:$0xf] %v619
        %684 = vst [vmem:[%s296 + $0x88] sm:$0xf] %v620
        %685 = vst [vmem:[%s296 + $0x94] sm:$0xf] %v621
        %686 = vst [vmem:[%s296 + $0x98] sm:$0xf] %v622
        %687 = vst [vmem:[%s296 + $0xa4] sm:$0xf] %v623
        %688 = vst [vmem:[%s296 + $0xa8] sm:$0xf] %v624
        %689 = vst [vmem:[%s296 + $0xb4] sm:$0xf] %v625
        %690 = vst [vmem:[%s296 + $0xb8] sm:$0xf] %v626
        %691 = vst [vmem:[%s296 + $0xc4] sm:$0xf] %v627
        %692 = vst [vmem:[%s296 + $0xc8] sm:$0xf] %v628
        %693 = vst [vmem:[%s296 + $0xd4] sm:$0xf] %v629
        %694 = vst [vmem:[%s296 + $0xd8] sm:$0xf] %v630
        %695 = vst [vmem:[%s296 + $0xe4] sm:$0xf] %v631
        %696 = vst [vmem:[%s296 + $0xe8] sm:$0xf] %v632
        %697 = vst [vmem:[%s296 + $0xf4] sm:$0xf] %v633
        %698 = vst [vmem:[%s296 + $0xf8] sm:$0xf] %v634
        %v699 = vld [vmem:[%s2] sm:$0x1]
        %v700 = vld [vmem:[%s4] sm:$0x1]
        %v701 = vld [vmem:[#allocation2] sm:$0x8]
        %v702 = vld [vmem:[#allocation2 + $0x4] sm:$0xf]
        %v703 = vld [vmem:[#allocation2 + $0x8] sm:$0xf]
        %v704 = vld [vmem:[#allocation2 + $0x10] sm:$0x8]
        %v705 = vld [vmem:[#allocation2 + $0x14] sm:$0xf]
        %v706 = vld [vmem:[#allocation2 + $0x18] sm:$0xf]
        %v707 = vld [vmem:[#allocation2 + $0x20] sm:$0x8]
        %v708 = vld [vmem:[#allocation2 + $0x24] sm:$0xf]
        %v709 = vld [vmem:[#allocation2 + $0x28] sm:$0xf]
        %v710 = vld [vmem:[#allocation2 + $0x30] sm:$0x8]
        %v711 = vld [vmem:[#allocation2 + $0x34] sm:$0xf]
        %v712 = vld [vmem:[#allocation2 + $0x38] sm:$0xf]
        %v713 = vld [vmem:[#allocation2 + $0x40] sm:$0x8]
        %v714 = vld [vmem:[#allocation2 + $0x44] sm:$0xf]
        %v715 = vld [vmem:[#allocation2 + $0x48] sm:$0xf]
        %v716 = vld [vmem:[#allocation2 + $0x50] sm:$0x8]
        %v717 = vld [vmem:[#allocation2 + $0x54] sm:$0xf]
        %v718 = vld [vmem:[#allocation2 + $0x58] sm:$0xf]
        %v719 = vld [vmem:[#allocation2 + $0x60] sm:$0x8]
        %v720 = vld [vmem:[#allocation2 + $0x64] sm:$0xf]
        %v721 = vld [vmem:[#allocation2 + $0x68] sm:$0xf]
        %v722 = vld [vmem:[#allocation2 + $0x70] sm:$0x8]
        %v723 = vld [vmem:[#allocation2 + $0x74] sm:$0xf]
        %v724 = vld [vmem:[#allocation2 + $0x78] sm:$0xf]
        %v725 = vld [vmem:[#allocation2 + $0x80] sm:$0x8]
        %v726 = vld [vmem:[#allocation2 + $0x84] sm:$0xf]
        %v727 = vld [vmem:[#allocation2 + $0x88] sm:$0xf]
        %v728 = vld [vmem:[#allocation2 + $0x90] sm:$0x8]
        %v729 = vld [vmem:[#allocation2 + $0x94] sm:$0xf]
        %v730 = vld [vmem:[#allocation2 + $0x98] sm:$0xf]
        %v731 = vld [vmem:[#allocation2 + $0xa0] sm:$0x8]
        %v732 = vld [vmem:[#allocation2 + $0xa4] sm:$0xf]
        %v733 = vld [vmem:[#allocation2 + $0xa8] sm:$0xf]
        %v734 = vld [vmem:[#allocation2 + $0xb0] sm:$0x8]
        %v735 = vld [vmem:[#allocation2 + $0xb4] sm:$0xf]
        %v736 = vld [vmem:[#allocation2 + $0xb8] sm:$0xf]
        %v737 = vld [vmem:[#allocation2 + $0xc0] sm:$0x8]
        %v738 = vld [vmem:[#allocation2 + $0xc4] sm:$0xf]
        %v739 = vld [vmem:[#allocation2 + $0xc8] sm:$0xf]
        %v740 = vld [vmem:[#allocation2 + $0xd0] sm:$0x8]
        %v741 = vld [vmem:[#allocation2 + $0xd4] sm:$0xf]
        %v742 = vld [vmem:[#allocation2 + $0xd8] sm:$0xf]
        %v743 = vld [vmem:[#allocation2 + $0xe0] sm:$0x8]
        %v744 = vld [vmem:[#allocation2 + $0xe4] sm:$0xf]
        %v745 = vld [vmem:[#allocation2 + $0xe8] sm:$0xf]
        %v746 = vld [vmem:[#allocation2 + $0xf0] sm:$0x8]
        %v747 = vld [vmem:[#allocation2 + $0xf4] sm:$0xf]
        %v748 = vld [vmem:[#allocation2 + $0xf8] sm:$0xf]
        %vm749 = vsmask.f32 4368
        %vm750 = vmor %vm282, %vm749
        %v752 = vshrl.u32 %v701, 16
        %v754 = vrot.slane %v752, 7
        %v755 = vrot.slane %v754, 4
        %v757 = vshrl.u32 %v702, 16
        %v759 = vrot.slane %v757, 7
        %v760 = vshll.u32 %v702, 16
        %v762 = vor.u32 %v759, %v760
        %v763 = vsel %vm750, %v755, %v762
        %v764 = vrot.slane %v759, 4
        %v766 = vshrl.u32 %v703, 16
        %v768 = vrot.slane %v766, 7
        %v769 = vshll.u32 %v703, 16
        %v771 = vor.u32 %v768, %v769
        %v772 = vsel %vm750, %v764, %v771
        %v774 = vshrl.u32 %v704, 16
        %v776 = vrot.slane %v774, 7
        %v777 = vrot.slane %v776, 4
        %v779 = vshrl.u32 %v705, 16
        %v781 = vrot.slane %v779, 7
        %v782 = vshll.u32 %v705, 16
        %v784 = vor.u32 %v781, %v782
        %v785 = vsel %vm750, %v777, %v784
        %v786 = vrot.slane %v781, 4
        %v788 = vshrl.u32 %v706, 16
        %v790 = vrot.slane %v788, 7
        %v791 = vshll.u32 %v706, 16
        %v793 = vor.u32 %v790, %v791
        %v794 = vsel %vm750, %v786, %v793
        %v796 = vshrl.u32 %v707, 16
        %v798 = vrot.slane %v796, 7
        %v799 = vrot.slane %v798, 4
        %v801 = vshrl.u32 %v708, 16
        %v803 = vrot.slane %v801, 7
        %v804 = vshll.u32 %v708, 16
        %v806 = vor.u32 %v803, %v804
        %v807 = vsel %vm750, %v799, %v806
        %v808 = vrot.slane %v803, 4
        %v810 = vshrl.u32 %v709, 16
        %v812 = vrot.slane %v810, 7
        %v813 = vshll.u32 %v709, 16
        %v815 = vor.u32 %v812, %v813
        %v816 = vsel %vm750, %v808, %v815
        %v818 = vshrl.u32 %v710, 16
        %v820 = vrot.slane %v818, 7
        %v821 = vrot.slane %v820, 4
        %v823 = vshrl.u32 %v711, 16
        %v825 = vrot.slane %v823, 7
        %v826 = vshll.u32 %v711, 16
        %v828 = vor.u32 %v825, %v826
        %v829 = vsel %vm750, %v821, %v828
        %v830 = vrot.slane %v825, 4
        %v832 = vshrl.u32 %v712, 16
        %v834 = vrot.slane %v832, 7
        %v835 = vshll.u32 %v712, 16
        %v837 = vor.u32 %v834, %v835
        %v838 = vsel %vm750, %v830, %v837
        %v840 = vshrl.u32 %v713, 16
        %v842 = vrot.slane %v840, 7
        %v843 = vrot.slane %v842, 4
        %v845 = vshrl.u32 %v714, 16
        %v847 = vrot.slane %v845, 7
        %v848 = vshll.u32 %v714, 16
        %v850 = vor.u32 %v847, %v848
        %v851 = vsel %vm750, %v843, %v850
        %v852 = vrot.slane %v847, 4
        %v854 = vshrl.u32 %v715, 16
        %v856 = vrot.slane %v854, 7
        %v857 = vshll.u32 %v715, 16
        %v859 = vor.u32 %v856, %v857
        %v860 = vsel %vm750, %v852, %v859
        %v862 = vshrl.u32 %v716, 16
        %v864 = vrot.slane %v862, 7
        %v865 = vrot.slane %v864, 4
        %v867 = vshrl.u32 %v717, 16
        %v869 = vrot.slane %v867, 7
        %v870 = vshll.u32 %v717, 16
        %v872 = vor.u32 %v869, %v870
        %v873 = vsel %vm750, %v865, %v872
        %v874 = vrot.slane %v869, 4
        %v876 = vshrl.u32 %v718, 16
        %v878 = vrot.slane %v876, 7
        %v879 = vshll.u32 %v718, 16
        %v881 = vor.u32 %v878, %v879
        %v882 = vsel %vm750, %v874, %v881
        %v884 = vshrl.u32 %v719, 16
        %v886 = vrot.slane %v884, 7
        %v887 = vrot.slane %v886, 4
        %v889 = vshrl.u32 %v720, 16
        %v891 = vrot.slane %v889, 7
        %v892 = vshll.u32 %v720, 16
        %v894 = vor.u32 %v891, %v892
        %v895 = vsel %vm750, %v887, %v894
        %v896 = vrot.slane %v891, 4
        %v898 = vshrl.u32 %v721, 16
        %v900 = vrot.slane %v898, 7
        %v901 = vshll.u32 %v721, 16
        %v903 = vor.u32 %v900, %v901
        %v904 = vsel %vm750, %v896, %v903
        %v906 = vshrl.u32 %v722, 16
        %v908 = vrot.slane %v906, 7
        %v909 = vrot.slane %v908, 4
        %v911 = vshrl.u32 %v723, 16
        %v913 = vrot.slane %v911, 7
        %v914 = vshll.u32 %v723, 16
        %v916 = vor.u32 %v913, %v914
        %v917 = vsel %vm750, %v909, %v916
        %v918 = vrot.slane %v913, 4
        %v920 = vshrl.u32 %v724, 16
        %v922 = vrot.slane %v920, 7
        %v923 = vshll.u32 %v724, 16
        %v925 = vor.u32 %v922, %v923
        %v926 = vsel %vm750, %v918, %v925
        %v928 = vshrl.u32 %v725, 16
        %v930 = vrot.slane %v928, 7
        %v931 = vrot.slane %v930, 4
        %v933 = vshrl.u32 %v726, 16
        %v935 = vrot.slane %v933, 7
        %v936 = vshll.u32 %v726, 16
        %v938 = vor.u32 %v935, %v936
        %v939 = vsel %vm750, %v931, %v938
        %v940 = vrot.slane %v935, 4
        %v942 = vshrl.u32 %v727, 16
        %v944 = vrot.slane %v942, 7
        %v945 = vshll.u32 %v727, 16
        %v947 = vor.u32 %v944, %v945
        %v948 = vsel %vm750, %v940, %v947
        %v950 = vshrl.u32 %v728, 16
        %v952 = vrot.slane %v950, 7
        %v953 = vrot.slane %v952, 4
        %v955 = vshrl.u32 %v729, 16
        %v957 = vrot.slane %v955, 7
        %v958 = vshll.u32 %v729, 16
        %v960 = vor.u32 %v957, %v958
        %v961 = vsel %vm750, %v953, %v960
        %v962 = vrot.slane %v957, 4
        %v964 = vshrl.u32 %v730, 16
        %v966 = vrot.slane %v964, 7
        %v967 = vshll.u32 %v730, 16
        %v969 = vor.u32 %v966, %v967
        %v970 = vsel %vm750, %v962, %v969
        %v972 = vshrl.u32 %v731, 16
        %v974 = vrot.slane %v972, 7
        %v975 = vrot.slane %v974, 4
        %v977 = vshrl.u32 %v732, 16
        %v979 = vrot.slane %v977, 7
        %v980 = vshll.u32 %v732, 16
        %v982 = vor.u32 %v979, %v980
        %v983 = vsel %vm750, %v975, %v982
        %v984 = vrot.slane %v979, 4
        %v986 = vshrl.u32 %v733, 16
        %v988 = vrot.slane %v986, 7
        %v989 = vshll.u32 %v733, 16
        %v991 = vor.u32 %v988, %v989
        %v992 = vsel %vm750, %v984, %v991
        %v994 = vshrl.u32 %v734, 16
        %v996 = vrot.slane %v994, 7
        %v997 = vrot.slane %v996, 4
        %v999 = vshrl.u32 %v735, 16
        %v1001 = vrot.slane %v999, 7
        %v1002 = vshll.u32 %v735, 16
        %v1004 = vor.u32 %v1001, %v1002
        %v1005 = vsel %vm750, %v997, %v1004
        %v1006 = vrot.slane %v1001, 4
        %v1008 = vshrl.u32 %v736, 16
        %v1010 = vrot.slane %v1008, 7
        %v1011 = vshll.u32 %v736, 16
        %v1013 = vor.u32 %v1010, %v1011
        %v1014 = vsel %vm750, %v1006, %v1013
        %v1016 = vshrl.u32 %v737, 16
        %v1018 = vrot.slane %v1016, 7
        %v1019 = vrot.slane %v1018, 4
        %v1021 = vshrl.u32 %v738, 16
        %v1023 = vrot.slane %v1021, 7
        %v1024 = vshll.u32 %v738, 16
        %v1026 = vor.u32 %v1023, %v1024
        %v1027 = vsel %vm750, %v1019, %v1026
        %v1028 = vrot.slane %v1023, 4
        %v1030 = vshrl.u32 %v739, 16
        %v1032 = vrot.slane %v1030, 7
        %v1033 = vshll.u32 %v739, 16
        %v1035 = vor.u32 %v1032, %v1033
        %v1036 = vsel %vm750, %v1028, %v1035
        %v1038 = vshrl.u32 %v740, 16
        %v1040 = vrot.slane %v1038, 7
        %v1041 = vrot.slane %v1040, 4
        %v1043 = vshrl.u32 %v741, 16
        %v1045 = vrot.slane %v1043, 7
        %v1046 = vshll.u32 %v741, 16
        %v1048 = vor.u32 %v1045, %v1046
        %v1049 = vsel %vm750, %v1041, %v1048
        %v1050 = vrot.slane %v1045, 4
        %v1052 = vshrl.u32 %v742, 16
        %v1054 = vrot.slane %v1052, 7
        %v1055 = vshll.u32 %v742, 16
        %v1057 = vor.u32 %v1054, %v1055
        %v1058 = vsel %vm750, %v1050, %v1057
        %v1060 = vshrl.u32 %v743, 16
        %v1062 = vrot.slane %v1060, 7
        %v1063 = vrot.slane %v1062, 4
        %v1065 = vshrl.u32 %v744, 16
        %v1067 = vrot.slane %v1065, 7
        %v1068 = vshll.u32 %v744, 16
        %v1070 = vor.u32 %v1067, %v1068
        %v1071 = vsel %vm750, %v1063, %v1070
        %v1072 = vrot.slane %v1067, 4
        %v1074 = vshrl.u32 %v745, 16
        %v1076 = vrot.slane %v1074, 7
        %v1077 = vshll.u32 %v745, 16
        %v1079 = vor.u32 %v1076, %v1077
        %v1080 = vsel %vm750, %v1072, %v1079
        %v1082 = vshrl.u32 %v746, 16
        %v1084 = vrot.slane %v1082, 7
        %v1085 = vrot.slane %v1084, 4
        %v1087 = vshrl.u32 %v747, 16
        %v1089 = vrot.slane %v1087, 7
        %v1090 = vshll.u32 %v747, 16
        %v1092 = vor.u32 %v1089, %v1090
        %v1093 = vsel %vm750, %v1085, %v1092
        %v1094 = vrot.slane %v1089, 4
        %v1096 = vshrl.u32 %v748, 16
        %v1098 = vrot.slane %v1096, 7
        %v1099 = vshll.u32 %v748, 16
        %v1101 = vor.u32 %v1098, %v1099
        %v1102 = vsel %vm750, %v1094, %v1101
        %v1103 = vld [vmem:[#allocation7] sm:$0xf]
        %v1104 = vld [vmem:[#allocation7 + $0x4] sm:$0xf]
        %v1105 = vld [vmem:[#allocation7 + $0x8] sm:$0xf]
        %v1106 = vld [vmem:[#allocation7 + $0xc] sm:$0xf]
        %v1107 = vld [vmem:[#allocation7 + $0x10] sm:$0xf]
        %v1108 = vld [vmem:[#allocation7 + $0x14] sm:$0xf]
        %v1109 = vld [vmem:[#allocation7 + $0x18] sm:$0xf]
        %v1110 = vld [vmem:[#allocation7 + $0x1c] sm:$0xf]
        %v1111 = vld [vmem:[#allocation7 + $0x20] sm:$0xf]
        %v1112 = vld [vmem:[#allocation7 + $0x24] sm:$0xf]
        %v1113 = vld [vmem:[#allocation7 + $0x28] sm:$0xf]
        %v1114 = vld [vmem:[#allocation7 + $0x2c] sm:$0xf]
        %v1115 = vld [vmem:[#allocation7 + $0x30] sm:$0xf]
        %v1116 = vld [vmem:[#allocation7 + $0x34] sm:$0xf]
        %v1117 = vld [vmem:[#allocation7 + $0x38] sm:$0xf]
        %v1118 = vld [vmem:[#allocation7 + $0x3c] sm:$0xf]
        %s1119 = scalar_lea.vmem [#allocation7], 64
        %v1120 = vld [vmem:[%s1119] sm:$0xf]
        %v1121 = vld [vmem:[%s1119 + $0x4] sm:$0xf]
        %v1122 = vld [vmem:[%s1119 + $0x8] sm:$0xf]
        %v1123 = vld [vmem:[%s1119 + $0xc] sm:$0xf]
        %v1124 = vld [vmem:[%s1119 + $0x10] sm:$0xf]
        %v1125 = vld [vmem:[%s1119 + $0x14] sm:$0xf]
        %v1126 = vld [vmem:[%s1119 + $0x18] sm:$0xf]
        %v1127 = vld [vmem:[%s1119 + $0x1c] sm:$0xf]
        %v1128 = vld [vmem:[%s1119 + $0x20] sm:$0xf]
        %v1129 = vld [vmem:[%s1119 + $0x24] sm:$0xf]
        %v1130 = vld [vmem:[%s1119 + $0x28] sm:$0xf]
        %v1131 = vld [vmem:[%s1119 + $0x2c] sm:$0xf]
        %v1132 = vld [vmem:[%s1119 + $0x30] sm:$0xf]
        %v1133 = vld [vmem:[%s1119 + $0x34] sm:$0xf]
        %v1134 = vld [vmem:[%s1119 + $0x38] sm:$0xf]
        %v1135 = vld [vmem:[%s1119 + $0x3c] sm:$0xf]
        %v1168 = vunpack.c.l.b16 %v702
        %v1169 = vunpack.c.l.b16 %v703
        %v1170 = vunpack.c.l.b16 %v705
        %v1171 = vunpack.c.l.b16 %v706
        %v1172 = vunpack.c.l.b16 %v708
        %v1173 = vunpack.c.l.b16 %v709
        %v1174 = vunpack.c.l.b16 %v711
        %v1175 = vunpack.c.l.b16 %v712
        %v1176 = vunpack.c.l.b16 %v714
        %v1177 = vunpack.c.l.b16 %v715
        %v1178 = vunpack.c.l.b16 %v717
        %v1179 = vunpack.c.l.b16 %v718
        %v1180 = vunpack.c.l.b16 %v720
        %v1181 = vunpack.c.l.b16 %v721
        %v1182 = vunpack.c.l.b16 %v723
        %v1183 = vunpack.c.l.b16 %v724
        %v1184 = vunpack.c.l.b16 %v726
        %v1185 = vunpack.c.l.b16 %v727
        %v1186 = vunpack.c.l.b16 %v729
        %v1187 = vunpack.c.l.b16 %v730
        %v1188 = vunpack.c.l.b16 %v732
        %v1189 = vunpack.c.l.b16 %v733
        %v1190 = vunpack.c.l.b16 %v735
        %v1191 = vunpack.c.l.b16 %v736
        %v1192 = vunpack.c.l.b16 %v738
        %v1193 = vunpack.c.l.b16 %v739
        %v1194 = vunpack.c.l.b16 %v741
        %v1195 = vunpack.c.l.b16 %v742
        %v1196 = vunpack.c.l.b16 %v744
        %v1197 = vunpack.c.l.b16 %v745
        %v1198 = vunpack.c.l.b16 %v747
        %v1199 = vunpack.c.l.b16 %v748
        %v1200 = vpack.c.b16 %v1169, %v1168
        %v1201 = vpack.c.b16 %v1171, %v1170
        %v1202 = vpack.c.b16 %v1173, %v1172
        %v1203 = vpack.c.b16 %v1175, %v1174
        %v1204 = vpack.c.b16 %v1177, %v1176
        %v1205 = vpack.c.b16 %v1179, %v1178
        %v1206 = vpack.c.b16 %v1181, %v1180
        %v1207 = vpack.c.b16 %v1183, %v1182
        %v1208 = vpack.c.b16 %v1185, %v1184
        %v1209 = vpack.c.b16 %v1187, %v1186
        %v1210 = vpack.c.b16 %v1189, %v1188
        %v1211 = vpack.c.b16 %v1191, %v1190
        %v1212 = vpack.c.b16 %v1193, %v1192
        %v1213 = vpack.c.b16 %v1195, %v1194
        %v1214 = vpack.c.b16 %v1197, %v1196
        %v1215 = vpack.c.b16 %v1199, %v1198
        %v1248 = vunpack.c.l.b16 %v1120
        %v1249 = vunpack.c.l.b16 %v1121
        %v1250 = vunpack.c.l.b16 %v1122
        %v1251 = vunpack.c.l.b16 %v1123
        %v1252 = vunpack.c.l.b16 %v1124
        %v1253 = vunpack.c.l.b16 %v1125
        %v1254 = vunpack.c.l.b16 %v1126
        %v1255 = vunpack.c.l.b16 %v1127
        %v1256 = vunpack.c.l.b16 %v1128
        %v1257 = vunpack.c.l.b16 %v1129
        %v1258 = vunpack.c.l.b16 %v1130
        %v1259 = vunpack.c.l.b16 %v1131
        %v1260 = vunpack.c.l.b16 %v1132
        %v1261 = vunpack.c.l.b16 %v1133
        %v1262 = vunpack.c.l.b16 %v1134
        %v1263 = vunpack.c.l.b16 %v1135
        %v1264 = vpack.c.b16 %v1249, %v1248
        %v1265 = vpack.c.b16 %v1251, %v1250
        %v1266 = vpack.c.b16 %v1253, %v1252
        %v1267 = vpack.c.b16 %v1255, %v1254
        %v1268 = vpack.c.b16 %v1257, %v1256
        %v1269 = vpack.c.b16 %v1259, %v1258
        %v1270 = vpack.c.b16 %v1261, %v1260
        %v1271 = vpack.c.b16 %v1263, %v1262
        %1280 = vmatprep.subr.bf16.mxu0 0
        %1281 = vmatpush1.bf16.msra.mxu0 %v1271
        %1282 = vmatprep.subr.bf16.mxu0 0
        %1283 = vmatpush1.bf16.msra.mxu0 %v1270
        %1284 = vmatprep.subr.bf16.mxu0 0
        %1285 = vmatpush1.bf16.msra.mxu0 %v1269
        %1286 = vmatprep.subr.bf16.mxu0 0
        %1287 = vmatpush1.bf16.msra.mxu0 %v1268
        %1288 = vmatprep.subr.bf16.mxu0 0
        %1289 = vmatpush1.bf16.msra.mxu0 %v1267
        %1290 = vmatprep.subr.bf16.mxu0 0
        %1291 = vmatpush1.bf16.msra.mxu0 %v1266
        %1292 = vmatprep.subr.bf16.mxu0 0
        %1293 = vmatpush1.bf16.msra.mxu0 %v1265
        %1294 = vmatprep.subr.bf16.mxu0 0
        %1295 = vmatpush1.bf16.msra.mxu0 %v1264
        %1296 = vmatprep.subr.bf16.mxu0 0
        %1297 = vmatpush2.bf16.msra.mxu0 0
        %1298 = vmatprep.subr.bf16.mxu0 0
        %1299 = vmatpush2.bf16.msra.mxu0 0
        %1300 = vmatprep.subr.bf16.mxu0 0
        %1301 = vmatpush2.bf16.msra.mxu0 0
        %1302 = vmatprep.subr.bf16.mxu0 0
        %1303 = vmatpush2.bf16.msra.mxu0 0
        %1304 = vmatprep.subr.bf16.mxu0 0
        %1305 = vmatpush2.bf16.msra.mxu0 0
        %1306 = vmatprep.subr.bf16.mxu0 0
        %1307 = vmatpush2.bf16.msra.mxu0 0
        %1308 = vmatprep.subr.bf16.mxu0 0
        %1309 = vmatpush2.bf16.msra.mxu0 0
        %1310 = vmatprep.subr.bf16.mxu0 0
        %1311 = vmatpush2.bf16.msra.mxu0 0
        %1312 = vmatprep.mubr.bf16.mxu0 0
        %1313 = vmatmul.mubr.bf16.gmra.mxu0 %v1200
        %v1314 = vpop.f32.mrf.mxu0
        %v1315 = vadd.f32 0.0, %v1314
        %v1316 = vpop.f32.mrf.mxu0
        %v1317 = vpop.f32.mrf.mxu0
        %v1318 = vadd.f32 0.0, %v1317
        %v1319 = vpop.f32.mrf.mxu0
        %1320 = vmatprep.mubr.bf16.mxu0 0
        %1321 = vmatmul.mubr.bf16.gmra.mxu0 %v1201
        %v1322 = vpop.f32.mrf.mxu0
        %v1323 = vadd.f32 0.0, %v1322
        %v1324 = vpop.f32.mrf.mxu0
        %v1325 = vpop.f32.mrf.mxu0
        %v1326 = vadd.f32 0.0, %v1325
        %v1327 = vpop.f32.mrf.mxu0
        %1328 = vmatprep.mubr.bf16.mxu0 0
        %1329 = vmatmul.mubr.bf16.gmra.mxu0 %v1202
        %v1330 = vpop.f32.mrf.mxu0
        %v1331 = vadd.f32 0.0, %v1330
        %v1332 = vpop.f32.mrf.mxu0
        %v1333 = vpop.f32.mrf.mxu0
        %v1334 = vadd.f32 0.0, %v1333
        %v1335 = vpop.f32.mrf.mxu0
        %1336 = vmatprep.mubr.bf16.mxu0 0
        %1337 = vmatmul.mubr.bf16.gmra.mxu0 %v1203
        %v1338 = vpop.f32.mrf.mxu0
        %v1339 = vadd.f32 0.0, %v1338
        %v1340 = vpop.f32.mrf.mxu0
        %v1341 = vpop.f32.mrf.mxu0
        %v1342 = vadd.f32 0.0, %v1341
        %v1343 = vpop.f32.mrf.mxu0
        %1344 = vmatprep.mubr.bf16.mxu0 0
        %1345 = vmatmul.mubr.bf16.gmra.mxu0 %v1204
        %v1346 = vpop.f32.mrf.mxu0
        %v1347 = vadd.f32 0.0, %v1346
        %v1348 = vpop.f32.mrf.mxu0
        %v1349 = vpop.f32.mrf.mxu0
        %v1350 = vadd.f32 0.0, %v1349
        %v1351 = vpop.f32.mrf.mxu0
        %1352 = vmatprep.mubr.bf16.mxu0 0
        %1353 = vmatmul.mubr.bf16.gmra.mxu0 %v1205
        %v1354 = vpop.f32.mrf.mxu0
        %v1355 = vadd.f32 0.0, %v1354
        %v1356 = vpop.f32.mrf.mxu0
        %v1357 = vpop.f32.mrf.mxu0
        %v1358 = vadd.f32 0.0, %v1357
        %v1359 = vpop.f32.mrf.mxu0
        %1360 = vmatprep.mubr.bf16.mxu0 0
        %1361 = vmatmul.mubr.bf16.gmra.mxu0 %v1206
        %v1362 = vpop.f32.mrf.mxu0
        %v1363 = vadd.f32 0.0, %v1362
        %v1364 = vpop.f32.mrf.mxu0
        %v1365 = vpop.f32.mrf.mxu0
        %v1366 = vadd.f32 0.0, %v1365
        %v1367 = vpop.f32.mrf.mxu0
        %1368 = vmatprep.mubr.bf16.mxu0 0
        %1369 = vmatmul.mubr.bf16.gmra.mxu0 %v1207
        %v1370 = vpop.f32.mrf.mxu0
        %v1371 = vadd.f32 0.0, %v1370
        %v1372 = vpop.f32.mrf.mxu0
        %v1373 = vpop.f32.mrf.mxu0
        %v1374 = vadd.f32 0.0, %v1373
        %v1375 = vpop.f32.mrf.mxu0
        %1376 = vmatprep.mubr.bf16.mxu0 0
        %1377 = vmatmul.mubr.bf16.gmra.mxu0 %v1208
        %v1378 = vpop.f32.mrf.mxu0
        %v1379 = vadd.f32 0.0, %v1378
        %v1380 = vpop.f32.mrf.mxu0
        %v1381 = vpop.f32.mrf.mxu0
        %v1382 = vadd.f32 0.0, %v1381
        %v1383 = vpop.f32.mrf.mxu0
        %1384 = vmatprep.mubr.bf16.mxu0 0
        %1385 = vmatmul.mubr.bf16.gmra.mxu0 %v1209
        %v1386 = vpop.f32.mrf.mxu0
        %v1387 = vadd.f32 0.0, %v1386
        %v1388 = vpop.f32.mrf.mxu0
        %v1389 = vpop.f32.mrf.mxu0
        %v1390 = vadd.f32 0.0, %v1389
        %v1391 = vpop.f32.mrf.mxu0
        %1392 = vmatprep.mubr.bf16.mxu0 0
        %1393 = vmatmul.mubr.bf16.gmra.mxu0 %v1210
        %v1394 = vpop.f32.mrf.mxu0
        %v1395 = vadd.f32 0.0, %v1394
        %v1396 = vpop.f32.mrf.mxu0
        %v1397 = vpop.f32.mrf.mxu0
        %v1398 = vadd.f32 0.0, %v1397
        %v1399 = vpop.f32.mrf.mxu0
        %1400 = vmatprep.mubr.bf16.mxu0 0
        %1401 = vmatmul.mubr.bf16.gmra.mxu0 %v1211
        %v1402 = vpop.f32.mrf.mxu0
        %v1403 = vadd.f32 0.0, %v1402
        %v1404 = vpop.f32.mrf.mxu0
        %v1405 = vpop.f32.mrf.mxu0
        %v1406 = vadd.f32 0.0, %v1405
        %v1407 = vpop.f32.mrf.mxu0
        %1408 = vmatprep.mubr.bf16.mxu0 0
        %1409 = vmatmul.mubr.bf16.gmra.mxu0 %v1212
        %v1410 = vpop.f32.mrf.mxu0
        %v1411 = vadd.f32 0.0, %v1410
        %v1412 = vpop.f32.mrf.mxu0
        %v1413 = vpop.f32.mrf.mxu0
        %v1414 = vadd.f32 0.0, %v1413
        %v1415 = vpop.f32.mrf.mxu0
        %1416 = vmatprep.mubr.bf16.mxu0 0
        %1417 = vmatmul.mubr.bf16.gmra.mxu0 %v1213
        %v1418 = vpop.f32.mrf.mxu0
        %v1419 = vadd.f32 0.0, %v1418
        %v1420 = vpop.f32.mrf.mxu0
        %v1421 = vpop.f32.mrf.mxu0
        %v1422 = vadd.f32 0.0, %v1421
        %v1423 = vpop.f32.mrf.mxu0
        %1424 = vmatprep.mubr.bf16.mxu0 0
        %1425 = vmatmul.mubr.bf16.gmra.mxu0 %v1214
        %v1426 = vpop.f32.mrf.mxu0
        %v1427 = vadd.f32 0.0, %v1426
        %v1428 = vpop.f32.mrf.mxu0
        %v1429 = vpop.f32.mrf.mxu0
        %v1430 = vadd.f32 0.0, %v1429
        %v1431 = vpop.f32.mrf.mxu0
        %1432 = vmatprep.mubr.bf16.mxu0 0
        %1433 = vmatmul.mubr.bf16.gmra.mxu0 %v1215
        %v1434 = vpop.f32.mrf.mxu0
        %v1435 = vadd.f32 0.0, %v1434
        %v1436 = vpop.f32.mrf.mxu0
        %v1437 = vpop.f32.mrf.mxu0
        %v1438 = vadd.f32 0.0, %v1437
        %v1439 = vpop.f32.mrf.mxu0
        %1440 = vdwg.mxu0
        %v1441 = vunpack.c.l.b16 %v763
        %v1442 = vunpack.c.l.b16 %v772
        %v1443 = vunpack.c.l.b16 %v785
        %v1444 = vunpack.c.l.b16 %v794
        %v1445 = vunpack.c.l.b16 %v807
        %v1446 = vunpack.c.l.b16 %v816
        %v1447 = vunpack.c.l.b16 %v829
        %v1448 = vunpack.c.l.b16 %v838
        %v1449 = vunpack.c.l.b16 %v851
        %v1450 = vunpack.c.l.b16 %v860
        %v1451 = vunpack.c.l.b16 %v873
        %v1452 = vunpack.c.l.b16 %v882
        %v1453 = vunpack.c.l.b16 %v895
        %v1454 = vunpack.c.l.b16 %v904
        %v1455 = vunpack.c.l.b16 %v917
        %v1456 = vunpack.c.l.b16 %v926
        %v1457 = vunpack.c.l.b16 %v939
        %v1458 = vunpack.c.l.b16 %v948
        %v1459 = vunpack.c.l.b16 %v961
        %v1460 = vunpack.c.l.b16 %v970
        %v1461 = vunpack.c.l.b16 %v983
        %v1462 = vunpack.c.l.b16 %v992
        %v1463 = vunpack.c.l.b16 %v1005
        %v1464 = vunpack.c.l.b16 %v1014
        %v1465 = vunpack.c.l.b16 %v1027
        %v1466 = vunpack.c.l.b16 %v1036
        %v1467 = vunpack.c.l.b16 %v1049
        %v1468 = vunpack.c.l.b16 %v1058
        %v1469 = vunpack.c.l.b16 %v1071
        %v1470 = vunpack.c.l.b16 %v1080
        %v1471 = vunpack.c.l.b16 %v1093
        %v1472 = vunpack.c.l.b16 %v1102
        %v1473 = vpack.c.b16 %v1442, %v1441
        %v1474 = vpack.c.b16 %v1444, %v1443
        %v1475 = vpack.c.b16 %v1446, %v1445
        %v1476 = vpack.c.b16 %v1448, %v1447
        %v1477 = vpack.c.b16 %v1450, %v1449
        %v1478 = vpack.c.b16 %v1452, %v1451
        %v1479 = vpack.c.b16 %v1454, %v1453
        %v1480 = vpack.c.b16 %v1456, %v1455
        %v1481 = vpack.c.b16 %v1458, %v1457
        %v1482 = vpack.c.b16 %v1460, %v1459
        %v1483 = vpack.c.b16 %v1462, %v1461
        %v1484 = vpack.c.b16 %v1464, %v1463
        %v1485 = vpack.c.b16 %v1466, %v1465
        %v1486 = vpack.c.b16 %v1468, %v1467
        %v1487 = vpack.c.b16 %v1470, %v1469
        %v1488 = vpack.c.b16 %v1472, %v1471
        %v1521 = vunpack.c.l.b16 %v1103
        %v1522 = vunpack.c.l.b16 %v1104
        %v1523 = vunpack.c.l.b16 %v1105
        %v1524 = vunpack.c.l.b16 %v1106
        %v1525 = vunpack.c.l.b16 %v1107
        %v1526 = vunpack.c.l.b16 %v1108
        %v1527 = vunpack.c.l.b16 %v1109
        %v1528 = vunpack.c.l.b16 %v1110
        %v1529 = vunpack.c.l.b16 %v1111
        %v1530 = vunpack.c.l.b16 %v1112
        %v1531 = vunpack.c.l.b16 %v1113
        %v1532 = vunpack.c.l.b16 %v1114
        %v1533 = vunpack.c.l.b16 %v1115
        %v1534 = vunpack.c.l.b16 %v1116
        %v1535 = vunpack.c.l.b16 %v1117
        %v1536 = vunpack.c.l.b16 %v1118
        %v1537 = vpack.c.b16 %v1522, %v1521
        %v1538 = vpack.c.b16 %v1524, %v1523
        %v1539 = vpack.c.b16 %v1526, %v1525
        %v1540 = vpack.c.b16 %v1528, %v1527
        %v1541 = vpack.c.b16 %v1530, %v1529
        %v1542 = vpack.c.b16 %v1532, %v1531
        %v1543 = vpack.c.b16 %v1534, %v1533
        %v1544 = vpack.c.b16 %v1536, %v1535
        %1553 = vmatprep.subr.bf16.mxu0 0
        %1554 = vmatpush1.bf16.msra.mxu0 %v1544
        %1555 = vmatprep.subr.bf16.mxu0 0
        %1556 = vmatpush1.bf16.msra.mxu0 %v1543
        %1557 = vmatprep.subr.bf16.mxu0 0
        %1558 = vmatpush1.bf16.msra.mxu0 %v1542
        %1559 = vmatprep.subr.bf16.mxu0 0
        %1560 = vmatpush1.bf16.msra.mxu0 %v1541
        %1561 = vmatprep.subr.bf16.mxu0 0
        %1562 = vmatpush1.bf16.msra.mxu0 %v1540
        %1563 = vmatprep.subr.bf16.mxu0 0
        %1564 = vmatpush1.bf16.msra.mxu0 %v1539
        %1565 = vmatprep.subr.bf16.mxu0 0
        %1566 = vmatpush1.bf16.msra.mxu0 %v1538
        %1567 = vmatprep.subr.bf16.mxu0 0
        %1568 = vmatpush1.bf16.msra.mxu0 %v1537
        %1569 = vmatprep.subr.bf16.mxu0 0
        %1570 = vmatpush2.bf16.msra.mxu0 0
        %1571 = vmatprep.subr.bf16.mxu0 0
        %1572 = vmatpush2.bf16.msra.mxu0 0
        %1573 = vmatprep.subr.bf16.mxu0 0
        %1574 = vmatpush2.bf16.msra.mxu0 0
        %1575 = vmatprep.subr.bf16.mxu0 0
        %1576 = vmatpush2.bf16.msra.mxu0 0
        %1577 = vmatprep.subr.bf16.mxu0 0
        %1578 = vmatpush2.bf16.msra.mxu0 0
        %1579 = vmatprep.subr.bf16.mxu0 0
        %1580 = vmatpush2.bf16.msra.mxu0 0
        %1581 = vmatprep.subr.bf16.mxu0 0
        %1582 = vmatpush2.bf16.msra.mxu0 0
        %1583 = vmatprep.subr.bf16.mxu0 0
        %1584 = vmatpush2.bf16.msra.mxu0 0
        %1585 = vmatprep.mubr.bf16.mxu0 0
        %1586 = vmatmul.mubr.bf16.gmra.mxu0 %v1473
        %v1587 = vpop.f32.mrf.mxu0
        %v1588 = vadd.f32 %v1315, %v1587
        %v1589 = vpop.f32.mrf.mxu0
        %v1590 = vpop.f32.mrf.mxu0
        %v1591 = vadd.f32 %v1318, %v1590
        %v1592 = vpop.f32.mrf.mxu0
        %1593 = vmatprep.mubr.bf16.mxu0 0
        %1594 = vmatmul.mubr.bf16.gmra.mxu0 %v1474
        %v1595 = vpop.f32.mrf.mxu0
        %v1596 = vadd.f32 %v1323, %v1595
        %v1597 = vpop.f32.mrf.mxu0
        %v1598 = vpop.f32.mrf.mxu0
        %v1599 = vadd.f32 %v1326, %v1598
        %v1600 = vpop.f32.mrf.mxu0
        %1601 = vmatprep.mubr.bf16.mxu0 0
        %1602 = vmatmul.mubr.bf16.gmra.mxu0 %v1475
        %v1603 = vpop.f32.mrf.mxu0
        %v1604 = vadd.f32 %v1331, %v1603
        %v1605 = vpop.f32.mrf.mxu0
        %v1606 = vpop.f32.mrf.mxu0
        %v1607 = vadd.f32 %v1334, %v1606
        %v1608 = vpop.f32.mrf.mxu0
        %1609 = vmatprep.mubr.bf16.mxu0 0
        %1610 = vmatmul.mubr.bf16.gmra.mxu0 %v1476
        %v1611 = vpop.f32.mrf.mxu0
        %v1612 = vadd.f32 %v1339, %v1611
        %v1613 = vpop.f32.mrf.mxu0
        %v1614 = vpop.f32.mrf.mxu0
        %v1615 = vadd.f32 %v1342, %v1614
        %v1616 = vpop.f32.mrf.mxu0
        %1617 = vmatprep.mubr.bf16.mxu0 0
        %1618 = vmatmul.mubr.bf16.gmra.mxu0 %v1477
        %v1619 = vpop.f32.mrf.mxu0
        %v1620 = vadd.f32 %v1347, %v1619
        %v1621 = vpop.f32.mrf.mxu0
        %v1622 = vpop.f32.mrf.mxu0
        %v1623 = vadd.f32 %v1350, %v1622
        %v1624 = vpop.f32.mrf.mxu0
        %1625 = vmatprep.mubr.bf16.mxu0 0
        %1626 = vmatmul.mubr.bf16.gmra.mxu0 %v1478
        %v1627 = vpop.f32.mrf.mxu0
        %v1628 = vadd.f32 %v1355, %v1627
        %v1629 = vpop.f32.mrf.mxu0
        %v1630 = vpop.f32.mrf.mxu0
        %v1631 = vadd.f32 %v1358, %v1630
        %v1632 = vpop.f32.mrf.mxu0
        %1633 = vmatprep.mubr.bf16.mxu0 0
        %1634 = vmatmul.mubr.bf16.gmra.mxu0 %v1479
        %v1635 = vpop.f32.mrf.mxu0
        %v1636 = vadd.f32 %v1363, %v1635
        %v1637 = vpop.f32.mrf.mxu0
        %v1638 = vpop.f32.mrf.mxu0
        %v1639 = vadd.f32 %v1366, %v1638
        %v1640 = vpop.f32.mrf.mxu0
        %1641 = vmatprep.mubr.bf16.mxu0 0
        %1642 = vmatmul.mubr.bf16.gmra.mxu0 %v1480
        %v1643 = vpop.f32.mrf.mxu0
        %v1644 = vadd.f32 %v1371, %v1643
        %v1645 = vpop.f32.mrf.mxu0
        %v1646 = vpop.f32.mrf.mxu0
        %v1647 = vadd.f32 %v1374, %v1646
        %v1648 = vpop.f32.mrf.mxu0
        %1649 = vmatprep.mubr.bf16.mxu0 0
        %1650 = vmatmul.mubr.bf16.gmra.mxu0 %v1481
        %v1651 = vpop.f32.mrf.mxu0
        %v1652 = vadd.f32 %v1379, %v1651
        %v1653 = vpop.f32.mrf.mxu0
        %v1654 = vpop.f32.mrf.mxu0
        %v1655 = vadd.f32 %v1382, %v1654
        %v1656 = vpop.f32.mrf.mxu0
        %1657 = vmatprep.mubr.bf16.mxu0 0
        %1658 = vmatmul.mubr.bf16.gmra.mxu0 %v1482
        %v1659 = vpop.f32.mrf.mxu0
        %v1660 = vadd.f32 %v1387, %v1659
        %v1661 = vpop.f32.mrf.mxu0
        %v1662 = vpop.f32.mrf.mxu0
        %v1663 = vadd.f32 %v1390, %v1662
        %v1664 = vpop.f32.mrf.mxu0
        %1665 = vmatprep.mubr.bf16.mxu0 0
        %1666 = vmatmul.mubr.bf16.gmra.mxu0 %v1483
        %v1667 = vpop.f32.mrf.mxu0
        %v1668 = vadd.f32 %v1395, %v1667
        %v1669 = vpop.f32.mrf.mxu0
        %v1670 = vpop.f32.mrf.mxu0
        %v1671 = vadd.f32 %v1398, %v1670
        %v1672 = vpop.f32.mrf.mxu0
        %1673 = vmatprep.mubr.bf16.mxu0 0
        %1674 = vmatmul.mubr.bf16.gmra.mxu0 %v1484
        %v1675 = vpop.f32.mrf.mxu0
        %v1676 = vadd.f32 %v1403, %v1675
        %v1677 = vpop.f32.mrf.mxu0
        %v1678 = vpop.f32.mrf.mxu0
        %v1679 = vadd.f32 %v1406, %v1678
        %v1680 = vpop.f32.mrf.mxu0
        %1681 = vmatprep.mubr.bf16.mxu0 0
        %1682 = vmatmul.mubr.bf16.gmra.mxu0 %v1485
        %v1683 = vpop.f32.mrf.mxu0
        %v1684 = vadd.f32 %v1411, %v1683
        %v1685 = vpop.f32.mrf.mxu0
        %v1686 = vpop.f32.mrf.mxu0
        %v1687 = vadd.f32 %v1414, %v1686
        %v1688 = vpop.f32.mrf.mxu0
        %1689 = vmatprep.mubr.bf16.mxu0 0
        %1690 = vmatmul.mubr.bf16.gmra.mxu0 %v1486
        %v1691 = vpop.f32.mrf.mxu0
        %v1692 = vadd.f32 %v1419, %v1691
        %v1693 = vpop.f32.mrf.mxu0
        %v1694 = vpop.f32.mrf.mxu0
        %v1695 = vadd.f32 %v1422, %v1694
        %v1696 = vpop.f32.mrf.mxu0
        %1697 = vmatprep.mubr.bf16.mxu0 0
        %1698 = vmatmul.mubr.bf16.gmra.mxu0 %v1487
        %v1699 = vpop.f32.mrf.mxu0
        %v1700 = vadd.f32 %v1427, %v1699
        %v1701 = vpop.f32.mrf.mxu0
        %v1702 = vpop.f32.mrf.mxu0
        %v1703 = vadd.f32 %v1430, %v1702
        %v1704 = vpop.f32.mrf.mxu0
        %1705 = vmatprep.mubr.bf16.mxu0 0
        %1706 = vmatmul.mubr.bf16.gmra.mxu0 %v1488
        %v1707 = vpop.f32.mrf.mxu0
        %v1708 = vadd.f32 %v1435, %v1707
        %v1709 = vpop.f32.mrf.mxu0
        %v1710 = vpop.f32.mrf.mxu0
        %v1711 = vadd.f32 %v1438, %v1710
        %v1712 = vpop.f32.mrf.mxu0
        %1713 = vdwg.mxu0
        %v1714 = vld [vmem:[#allocation2 + $0x4] sm:$0xf]
        %v1715 = vld [vmem:[#allocation2 + $0x8] sm:$0xf]
        %v1716 = vld [vmem:[#allocation2 + $0xc] sm:$0x1]
        %v1717 = vld [vmem:[#allocation2 + $0x14] sm:$0xf]
        %v1718 = vld [vmem:[#allocation2 + $0x18] sm:$0xf]
        %v1719 = vld [vmem:[#allocation2 + $0x1c] sm:$0x1]
        %v1720 = vld [vmem:[#allocation2 + $0x24] sm:$0xf]
        %v1721 = vld [vmem:[#allocation2 + $0x28] sm:$0xf]
        %v1722 = vld [vmem:[#allocation2 + $0x2c] sm:$0x1]
        %v1723 = vld [vmem:[#allocation2 + $0x34] sm:$0xf]
        %v1724 = vld [vmem:[#allocation2 + $0x38] sm:$0xf]
        %v1725 = vld [vmem:[#allocation2 + $0x3c] sm:$0x1]
        %v1726 = vld [vmem:[#allocation2 + $0x44] sm:$0xf]
        %v1727 = vld [vmem:[#allocation2 + $0x48] sm:$0xf]
        %v1728 = vld [vmem:[#allocation2 + $0x4c] sm:$0x1]
        %v1729 = vld [vmem:[#allocation2 + $0x54] sm:$0xf]
        %v1730 = vld [vmem:[#allocation2 + $0x58] sm:$0xf]
        %v1731 = vld [vmem:[#allocation2 + $0x5c] sm:$0x1]
        %v1732 = vld [vmem:[#allocation2 + $0x64] sm:$0xf]
        %v1733 = vld [vmem:[#allocation2 + $0x68] sm:$0xf]
        %v1734 = vld [vmem:[#allocation2 + $0x6c] sm:$0x1]
        %v1735 = vld [vmem:[#allocation2 + $0x74] sm:$0xf]
        %v1736 = vld [vmem:[#allocation2 + $0x78] sm:$0xf]
        %v1737 = vld [vmem:[#allocation2 + $0x7c] sm:$0x1]
        %v1738 = vld [vmem:[#allocation2 + $0x84] sm:$0xf]
        %v1739 = vld [vmem:[#allocation2 + $0x88] sm:$0xf]
        %v1740 = vld [vmem:[#allocation2 + $0x8c] sm:$0x1]
        %v1741 = vld [vmem:[#allocation2 + $0x94] sm:$0xf]
        %v1742 = vld [vmem:[#allocation2 + $0x98] sm:$0xf]
        %v1743 = vld [vmem:[#allocation2 + $0x9c] sm:$0x1]
        %v1744 = vld [vmem:[#allocation2 + $0xa4] sm:$0xf]
        %v1745 = vld [vmem:[#allocation2 + $0xa8] sm:$0xf]
        %v1746 = vld [vmem:[#allocation2 + $0xac] sm:$0x1]
        %v1747 = vld [vmem:[#allocation2 + $0xb4] sm:$0xf]
        %v1748 = vld [vmem:[#allocation2 + $0xb8] sm:$0xf]
        %v1749 = vld [vmem:[#allocation2 + $0xbc] sm:$0x1]
        %v1750 = vld [vmem:[#allocation2 + $0xc4] sm:$0xf]
        %v1751 = vld [vmem:[#allocation2 + $0xc8] sm:$0xf]
        %v1752 = vld [vmem:[#allocation2 + $0xcc] sm:$0x1]
        %v1753 = vld [vmem:[#allocation2 + $0xd4] sm:$0xf]
        %v1754 = vld [vmem:[#allocation2 + $0xd8] sm:$0xf]
        %v1755 = vld [vmem:[#allocation2 + $0xdc] sm:$0x1]
        %v1756 = vld [vmem:[#allocation2 + $0xe4] sm:$0xf]
        %v1757 = vld [vmem:[#allocation2 + $0xe8] sm:$0xf]
        %v1758 = vld [vmem:[#allocation2 + $0xec] sm:$0x1]
        %v1759 = vld [vmem:[#allocation2 + $0xf4] sm:$0xf]
        %v1760 = vld [vmem:[#allocation2 + $0xf8] sm:$0xf]
        %v1761 = vld [vmem:[#allocation2 + $0xfc] sm:$0x1]
        %vm1762 = vsmask.f32 3328
        %vm1763 = vsmask.f32 7440
        %vm1764 = vmor %vm1762, %vm1763
        %v1766 = vshrl.u32 %v1714, 16
        %v1768 = vrot.slane %v1766, 4
        %v1769 = vshll.u32 %v1714, 16
        %v1771 = vrot.slane %v1769, 5
        %v1772 = vor.u32 %v1768, %v1771
        %v1773 = vrot.slane %v1772, 4
        %v1775 = vshll.u32 %v1715, 16
        %v1777 = vrot.slane %v1775, 5
        %v1778 = vsel %vm1764, %v1773, %v1777
        %v1779 = vshrl.u32 %v1715, 16
        %v1781 = vrot.slane %v1779, 4
        %v1782 = vor.u32 %v1781, %v1777
        %v1783 = vrot.slane %v1782, 4
        %v1785 = vshll.u32 %v1716, 16
        %v1787 = vrot.slane %v1785, 5
        %v1788 = vsel %vm1764, %v1783, %v1787
        %v1790 = vshrl.u32 %v1717, 16
        %v1792 = vrot.slane %v1790, 4
        %v1793 = vshll.u32 %v1717, 16
        %v1795 = vrot.slane %v1793, 5
        %v1796 = vor.u32 %v1792, %v1795
        %v1797 = vrot.slane %v1796, 4
        %v1799 = vshll.u32 %v1718, 16
        %v1801 = vrot.slane %v1799, 5
        %v1802 = vsel %vm1764, %v1797, %v1801
        %v1803 = vshrl.u32 %v1718, 16
        %v1805 = vrot.slane %v1803, 4
        %v1806 = vor.u32 %v1805, %v1801
        %v1807 = vrot.slane %v1806, 4
        %v1809 = vshll.u32 %v1719, 16
        %v1811 = vrot.slane %v1809, 5
        %v1812 = vsel %vm1764, %v1807, %v1811
        %v1814 = vshrl.u32 %v1720, 16
        %v1816 = vrot.slane %v1814, 4
        %v1817 = vshll.u32 %v1720, 16
        %v1819 = vrot.slane %v1817, 5
        %v1820 = vor.u32 %v1816, %v1819
        %v1821 = vrot.slane %v1820, 4
        %v1823 = vshll.u32 %v1721, 16
        %v1825 = vrot.slane %v1823, 5
        %v1826 = vsel %vm1764, %v1821, %v1825
        %v1827 = vshrl.u32 %v1721, 16
        %v1829 = vrot.slane %v1827, 4
        %v1830 = vor.u32 %v1829, %v1825
        %v1831 = vrot.slane %v1830, 4
        %v1833 = vshll.u32 %v1722, 16
        %v1835 = vrot.slane %v1833, 5
        %v1836 = vsel %vm1764, %v1831, %v1835
        %v1838 = vshrl.u32 %v1723, 16
        %v1840 = vrot.slane %v1838, 4
        %v1841 = vshll.u32 %v1723, 16
        %v1843 = vrot.slane %v1841, 5
        %v1844 = vor.u32 %v1840, %v1843
        %v1845 = vrot.slane %v1844, 4
        %v1847 = vshll.u32 %v1724, 16
        %v1849 = vrot.slane %v1847, 5
        %v1850 = vsel %vm1764, %v1845, %v1849
        %v1851 = vshrl.u32 %v1724, 16
        %v1853 = vrot.slane %v1851, 4
        %v1854 = vor.u32 %v1853, %v1849
        %v1855 = vrot.slane %v1854, 4
        %v1857 = vshll.u32 %v1725, 16
        %v1859 = vrot.slane %v1857, 5
        %v1860 = vsel %vm1764, %v1855, %v1859
        %v1862 = vshrl.u32 %v1726, 16
        %v1864 = vrot.slane %v1862, 4
        %v1865 = vshll.u32 %v1726, 16
        %v1867 = vrot.slane %v1865, 5
        %v1868 = vor.u32 %v1864, %v1867
        %v1869 = vrot.slane %v1868, 4
        %v1871 = vshll.u32 %v1727, 16
        %v1873 = vrot.slane %v1871, 5
        %v1874 = vsel %vm1764, %v1869, %v1873
        %v1875 = vshrl.u32 %v1727, 16
        %v1877 = vrot.slane %v1875, 4
        %v1878 = vor.u32 %v1877, %v1873
        %v1879 = vrot.slane %v1878, 4
        %v1881 = vshll.u32 %v1728, 16
        %v1883 = vrot.slane %v1881, 5
        %v1884 = vsel %vm1764, %v1879, %v1883
        %v1886 = vshrl.u32 %v1729, 16
        %v1888 = vrot.slane %v1886, 4
        %v1889 = vshll.u32 %v1729, 16
        %v1891 = vrot.slane %v1889, 5
        %v1892 = vor.u32 %v1888, %v1891
        %v1893 = vrot.slane %v1892, 4
        %v1895 = vshll.u32 %v1730, 16
        %v1897 = vrot.slane %v1895, 5
        %v1898 = vsel %vm1764, %v1893, %v1897
        %v1899 = vshrl.u32 %v1730, 16
        %v1901 = vrot.slane %v1899, 4
        %v1902 = vor.u32 %v1901, %v1897
        %v1903 = vrot.slane %v1902, 4
        %v1905 = vshll.u32 %v1731, 16
        %v1907 = vrot.slane %v1905, 5
        %v1908 = vsel %vm1764, %v1903, %v1907
        %v1910 = vshrl.u32 %v1732, 16
        %v1912 = vrot.slane %v1910, 4
        %v1913 = vshll.u32 %v1732, 16
        %v1915 = vrot.slane %v1913, 5
        %v1916 = vor.u32 %v1912, %v1915
        %v1917 = vrot.slane %v1916, 4
        %v1919 = vshll.u32 %v1733, 16
        %v1921 = vrot.slane %v1919, 5
        %v1922 = vsel %vm1764, %v1917, %v1921
        %v1923 = vshrl.u32 %v1733, 16
        %v1925 = vrot.slane %v1923, 4
        %v1926 = vor.u32 %v1925, %v1921
        %v1927 = vrot.slane %v1926, 4
        %v1929 = vshll.u32 %v1734, 16
        %v1931 = vrot.slane %v1929, 5
        %v1932 = vsel %vm1764, %v1927, %v1931
        %v1934 = vshrl.u32 %v1735, 16
        %v1936 = vrot.slane %v1934, 4
        %v1937 = vshll.u32 %v1735, 16
        %v1939 = vrot.slane %v1937, 5
        %v1940 = vor.u32 %v1936, %v1939
        %v1941 = vrot.slane %v1940, 4
        %v1943 = vshll.u32 %v1736, 16
        %v1945 = vrot.slane %v1943, 5
        %v1946 = vsel %vm1764, %v1941, %v1945
        %v1947 = vshrl.u32 %v1736, 16
        %v1949 = vrot.slane %v1947, 4
        %v1950 = vor.u32 %v1949, %v1945
        %v1951 = vrot.slane %v1950, 4
        %v1953 = vshll.u32 %v1737, 16
        %v1955 = vrot.slane %v1953, 5
        %v1956 = vsel %vm1764, %v1951, %v1955
        %v1958 = vshrl.u32 %v1738, 16
        %v1960 = vrot.slane %v1958, 4
        %v1961 = vshll.u32 %v1738, 16
        %v1963 = vrot.slane %v1961, 5
        %v1964 = vor.u32 %v1960, %v1963
        %v1965 = vrot.slane %v1964, 4
        %v1967 = vshll.u32 %v1739, 16
        %v1969 = vrot.slane %v1967, 5
        %v1970 = vsel %vm1764, %v1965, %v1969
        %v1971 = vshrl.u32 %v1739, 16
        %v1973 = vrot.slane %v1971, 4
        %v1974 = vor.u32 %v1973, %v1969
        %v1975 = vrot.slane %v1974, 4
        %v1977 = vshll.u32 %v1740, 16
        %v1979 = vrot.slane %v1977, 5
        %v1980 = vsel %vm1764, %v1975, %v1979
        %v1982 = vshrl.u32 %v1741, 16
        %v1984 = vrot.slane %v1982, 4
        %v1985 = vshll.u32 %v1741, 16
        %v1987 = vrot.slane %v1985, 5
        %v1988 = vor.u32 %v1984, %v1987
        %v1989 = vrot.slane %v1988, 4
        %v1991 = vshll.u32 %v1742, 16
        %v1993 = vrot.slane %v1991, 5
        %v1994 = vsel %vm1764, %v1989, %v1993
        %v1995 = vshrl.u32 %v1742, 16
        %v1997 = vrot.slane %v1995, 4
        %v1998 = vor.u32 %v1997, %v1993
        %v1999 = vrot.slane %v1998, 4
        %v2001 = vshll.u32 %v1743, 16
        %v2003 = vrot.slane %v2001, 5
        %v2004 = vsel %vm1764, %v1999, %v2003
        %v2006 = vshrl.u32 %v1744, 16
        %v2008 = vrot.slane %v2006, 4
        %v2009 = vshll.u32 %v1744, 16
        %v2011 = vrot.slane %v2009, 5
        %v2012 = vor.u32 %v2008, %v2011
        %v2013 = vrot.slane %v2012, 4
        %v2015 = vshll.u32 %v1745, 16
        %v2017 = vrot.slane %v2015, 5
        %v2018 = vsel %vm1764, %v2013, %v2017
        %v2019 = vshrl.u32 %v1745, 16
        %v2021 = vrot.slane %v2019, 4
        %v2022 = vor.u32 %v2021, %v2017
        %v2023 = vrot.slane %v2022, 4
        %v2025 = vshll.u32 %v1746, 16
        %v2027 = vrot.slane %v2025, 5
        %v2028 = vsel %vm1764, %v2023, %v2027
        %v2030 = vshrl.u32 %v1747, 16
        %v2032 = vrot.slane %v2030, 4
        %v2033 = vshll.u32 %v1747, 16
        %v2035 = vrot.slane %v2033, 5
        %v2036 = vor.u32 %v2032, %v2035
        %v2037 = vrot.slane %v2036, 4
        %v2039 = vshll.u32 %v1748, 16
        %v2041 = vrot.slane %v2039, 5
        %v2042 = vsel %vm1764, %v2037, %v2041
        %v2043 = vshrl.u32 %v1748, 16
        %v2045 = vrot.slane %v2043, 4
        %v2046 = vor.u32 %v2045, %v2041
        %v2047 = vrot.slane %v2046, 4
        %v2049 = vshll.u32 %v1749, 16
        %v2051 = vrot.slane %v2049, 5
        %v2052 = vsel %vm1764, %v2047, %v2051
        %v2054 = vshrl.u32 %v1750, 16
        %v2056 = vrot.slane %v2054, 4
        %v2057 = vshll.u32 %v1750, 16
        %v2059 = vrot.slane %v2057, 5
        %v2060 = vor.u32 %v2056, %v2059
        %v2061 = vrot.slane %v2060, 4
        %v2063 = vshll.u32 %v1751, 16
        %v2065 = vrot.slane %v2063, 5
        %v2066 = vsel %vm1764, %v2061, %v2065
        %v2067 = vshrl.u32 %v1751, 16
        %v2069 = vrot.slane %v2067, 4
        %v2070 = vor.u32 %v2069, %v2065
        %v2071 = vrot.slane %v2070, 4
        %v2073 = vshll.u32 %v1752, 16
        %v2075 = vrot.slane %v2073, 5
        %v2076 = vsel %vm1764, %v2071, %v2075
        %v2078 = vshrl.u32 %v1753, 16
        %v2080 = vrot.slane %v2078, 4
        %v2081 = vshll.u32 %v1753, 16
        %v2083 = vrot.slane %v2081, 5
        %v2084 = vor.u32 %v2080, %v2083
        %v2085 = vrot.slane %v2084, 4
        %v2087 = vshll.u32 %v1754, 16
        %v2089 = vrot.slane %v2087, 5
        %v2090 = vsel %vm1764, %v2085, %v2089
        %v2091 = vshrl.u32 %v1754, 16
        %v2093 = vrot.slane %v2091, 4
        %v2094 = vor.u32 %v2093, %v2089
        %v2095 = vrot.slane %v2094, 4
        %v2097 = vshll.u32 %v1755, 16
        %v2099 = vrot.slane %v2097, 5
        %v2100 = vsel %vm1764, %v2095, %v2099
        %v2102 = vshrl.u32 %v1756, 16
        %v2104 = vrot.slane %v2102, 4
        %v2105 = vshll.u32 %v1756, 16
        %v2107 = vrot.slane %v2105, 5
        %v2108 = vor.u32 %v2104, %v2107
        %v2109 = vrot.slane %v2108, 4
        %v2111 = vshll.u32 %v1757, 16
        %v2113 = vrot.slane %v2111, 5
        %v2114 = vsel %vm1764, %v2109, %v2113
        %v2115 = vshrl.u32 %v1757, 16
        %v2117 = vrot.slane %v2115, 4
        %v2118 = vor.u32 %v2117, %v2113
        %v2119 = vrot.slane %v2118, 4
        %v2121 = vshll.u32 %v1758, 16
        %v2123 = vrot.slane %v2121, 5
        %v2124 = vsel %vm1764, %v2119, %v2123
        %v2126 = vshrl.u32 %v1759, 16
        %v2128 = vrot.slane %v2126, 4
        %v2129 = vshll.u32 %v1759, 16
        %v2131 = vrot.slane %v2129, 5
        %v2132 = vor.u32 %v2128, %v2131
        %v2133 = vrot.slane %v2132, 4
        %v2135 = vshll.u32 %v1760, 16
        %v2137 = vrot.slane %v2135, 5
        %v2138 = vsel %vm1764, %v2133, %v2137
        %v2139 = vshrl.u32 %v1760, 16
        %v2141 = vrot.slane %v2139, 4
        %v2142 = vor.u32 %v2141, %v2137
        %v2143 = vrot.slane %v2142, 4
        %v2145 = vshll.u32 %v1761, 16
        %v2147 = vrot.slane %v2145, 5
        %v2148 = vsel %vm1764, %v2143, %v2147
        %s2149 = scalar_lea.vmem [#allocation7], 128
        %v2150 = vld [vmem:[%s2149] sm:$0xf]
        %v2151 = vld [vmem:[%s2149 + $0x4] sm:$0xf]
        %v2152 = vld [vmem:[%s2149 + $0x8] sm:$0xf]
        %v2153 = vld [vmem:[%s2149 + $0xc] sm:$0xf]
        %v2154 = vld [vmem:[%s2149 + $0x10] sm:$0xf]
        %v2155 = vld [vmem:[%s2149 + $0x14] sm:$0xf]
        %v2156 = vld [vmem:[%s2149 + $0x18] sm:$0xf]
        %v2157 = vld [vmem:[%s2149 + $0x1c] sm:$0xf]
        %v2158 = vld [vmem:[%s2149 + $0x20] sm:$0xf]
        %v2159 = vld [vmem:[%s2149 + $0x24] sm:$0xf]
        %v2160 = vld [vmem:[%s2149 + $0x28] sm:$0xf]
        %v2161 = vld [vmem:[%s2149 + $0x2c] sm:$0xf]
        %v2162 = vld [vmem:[%s2149 + $0x30] sm:$0xf]
        %v2163 = vld [vmem:[%s2149 + $0x34] sm:$0xf]
        %v2164 = vld [vmem:[%s2149 + $0x38] sm:$0xf]
        %v2165 = vld [vmem:[%s2149 + $0x3c] sm:$0xf]
        %v2166 = vunpack.c.l.b16 %v1778
        %v2167 = vunpack.c.l.b16 %v1788
        %v2168 = vunpack.c.l.b16 %v1802
        %v2169 = vunpack.c.l.b16 %v1812
        %v2170 = vunpack.c.l.b16 %v1826
        %v2171 = vunpack.c.l.b16 %v1836
        %v2172 = vunpack.c.l.b16 %v1850
        %v2173 = vunpack.c.l.b16 %v1860
        %v2174 = vunpack.c.l.b16 %v1874
        %v2175 = vunpack.c.l.b16 %v1884
        %v2176 = vunpack.c.l.b16 %v1898
        %v2177 = vunpack.c.l.b16 %v1908
        %v2178 = vunpack.c.l.b16 %v1922
        %v2179 = vunpack.c.l.b16 %v1932
        %v2180 = vunpack.c.l.b16 %v1946
        %v2181 = vunpack.c.l.b16 %v1956
        %v2182 = vunpack.c.l.b16 %v1970
        %v2183 = vunpack.c.l.b16 %v1980
        %v2184 = vunpack.c.l.b16 %v1994
        %v2185 = vunpack.c.l.b16 %v2004
        %v2186 = vunpack.c.l.b16 %v2018
        %v2187 = vunpack.c.l.b16 %v2028
        %v2188 = vunpack.c.l.b16 %v2042
        %v2189 = vunpack.c.l.b16 %v2052
        %v2190 = vunpack.c.l.b16 %v2066
        %v2191 = vunpack.c.l.b16 %v2076
        %v2192 = vunpack.c.l.b16 %v2090
        %v2193 = vunpack.c.l.b16 %v2100
        %v2194 = vunpack.c.l.b16 %v2114
        %v2195 = vunpack.c.l.b16 %v2124
        %v2196 = vunpack.c.l.b16 %v2138
        %v2197 = vunpack.c.l.b16 %v2148
        %v2198 = vpack.c.b16 %v2167, %v2166
        %v2199 = vpack.c.b16 %v2169, %v2168
        %v2200 = vpack.c.b16 %v2171, %v2170
        %v2201 = vpack.c.b16 %v2173, %v2172
        %v2202 = vpack.c.b16 %v2175, %v2174
        %v2203 = vpack.c.b16 %v2177, %v2176
        %v2204 = vpack.c.b16 %v2179, %v2178
        %v2205 = vpack.c.b16 %v2181, %v2180
        %v2206 = vpack.c.b16 %v2183, %v2182
        %v2207 = vpack.c.b16 %v2185, %v2184
        %v2208 = vpack.c.b16 %v2187, %v2186
        %v2209 = vpack.c.b16 %v2189, %v2188
        %v2210 = vpack.c.b16 %v2191, %v2190
        %v2211 = vpack.c.b16 %v2193, %v2192
        %v2212 = vpack.c.b16 %v2195, %v2194
        %v2213 = vpack.c.b16 %v2197, %v2196
        %v2246 = vunpack.c.l.b16 %v2150
        %v2247 = vunpack.c.l.b16 %v2151
        %v2248 = vunpack.c.l.b16 %v2152
        %v2249 = vunpack.c.l.b16 %v2153
        %v2250 = vunpack.c.l.b16 %v2154
        %v2251 = vunpack.c.l.b16 %v2155
        %v2252 = vunpack.c.l.b16 %v2156
        %v2253 = vunpack.c.l.b16 %v2157
        %v2254 = vunpack.c.l.b16 %v2158
        %v2255 = vunpack.c.l.b16 %v2159
        %v2256 = vunpack.c.l.b16 %v2160
        %v2257 = vunpack.c.l.b16 %v2161
        %v2258 = vunpack.c.l.b16 %v2162
        %v2259 = vunpack.c.l.b16 %v2163
        %v2260 = vunpack.c.l.b16 %v2164
        %v2261 = vunpack.c.l.b16 %v2165
        %v2262 = vpack.c.b16 %v2247, %v2246
        %v2263 = vpack.c.b16 %v2249, %v2248
        %v2264 = vpack.c.b16 %v2251, %v2250
        %v2265 = vpack.c.b16 %v2253, %v2252
        %v2266 = vpack.c.b16 %v2255, %v2254
        %v2267 = vpack.c.b16 %v2257, %v2256
        %v2268 = vpack.c.b16 %v2259, %v2258
        %v2269 = vpack.c.b16 %v2261, %v2260
        %2278 = vmatprep.subr.bf16.mxu0 0
        %2279 = vmatpush1.bf16.msra.mxu0 %v2269
        %2280 = vmatprep.subr.bf16.mxu0 0
        %2281 = vmatpush1.bf16.msra.mxu0 %v2268
        %2282 = vmatprep.subr.bf16.mxu0 0
        %2283 = vmatpush1.bf16.msra.mxu0 %v2267
        %2284 = vmatprep.subr.bf16.mxu0 0
        %2285 = vmatpush1.bf16.msra.mxu0 %v2266
        %2286 = vmatprep.subr.bf16.mxu0 0
        %2287 = vmatpush1.bf16.msra.mxu0 %v2265
        %2288 = vmatprep.subr.bf16.mxu0 0
        %2289 = vmatpush1.bf16.msra.mxu0 %v2264
        %2290 = vmatprep.subr.bf16.mxu0 0
        %2291 = vmatpush1.bf16.msra.mxu0 %v2263
        %2292 = vmatprep.subr.bf16.mxu0 0
        %2293 = vmatpush1.bf16.msra.mxu0 %v2262
        %2294 = vmatprep.subr.bf16.mxu0 0
        %2295 = vmatpush2.bf16.msra.mxu0 0
        %2296 = vmatprep.subr.bf16.mxu0 0
        %2297 = vmatpush2.bf16.msra.mxu0 0
        %2298 = vmatprep.subr.bf16.mxu0 0
        %2299 = vmatpush2.bf16.msra.mxu0 0
        %2300 = vmatprep.subr.bf16.mxu0 0
        %2301 = vmatpush2.bf16.msra.mxu0 0
        %2302 = vmatprep.subr.bf16.mxu0 0
        %2303 = vmatpush2.bf16.msra.mxu0 0
        %2304 = vmatprep.subr.bf16.mxu0 0
        %2305 = vmatpush2.bf16.msra.mxu0 0
        %2306 = vmatprep.subr.bf16.mxu0 0
        %2307 = vmatpush2.bf16.msra.mxu0 0
        %2308 = vmatprep.subr.bf16.mxu0 0
        %2309 = vmatpush2.bf16.msra.mxu0 0
        %2310 = vmatprep.mubr.bf16.mxu0 0
        %2311 = vmatmul.mubr.bf16.gmra.mxu0 %v2198
        %v2312 = vpop.f32.mrf.mxu0
        %v2313 = vadd.f32 0.0, %v2312
        %v2314 = vpop.f32.mrf.mxu0
        %v2315 = vpop.f32.mrf.mxu0
        %v2316 = vadd.f32 0.0, %v2315
        %v2317 = vpop.f32.mrf.mxu0
        %2318 = vmatprep.mubr.bf16.mxu0 0
        %2319 = vmatmul.mubr.bf16.gmra.mxu0 %v2199
        %v2320 = vpop.f32.mrf.mxu0
        %v2321 = vadd.f32 0.0, %v2320
        %v2322 = vpop.f32.mrf.mxu0
        %v2323 = vpop.f32.mrf.mxu0
        %v2324 = vadd.f32 0.0, %v2323
        %v2325 = vpop.f32.mrf.mxu0
        %2326 = vmatprep.mubr.bf16.mxu0 0
        %2327 = vmatmul.mubr.bf16.gmra.mxu0 %v2200
        %v2328 = vpop.f32.mrf.mxu0
        %v2329 = vadd.f32 0.0, %v2328
        %v2330 = vpop.f32.mrf.mxu0
        %v2331 = vpop.f32.mrf.mxu0
        %v2332 = vadd.f32 0.0, %v2331
        %v2333 = vpop.f32.mrf.mxu0
        %2334 = vmatprep.mubr.bf16.mxu0 0
        %2335 = vmatmul.mubr.bf16.gmra.mxu0 %v2201
        %v2336 = vpop.f32.mrf.mxu0
        %v2337 = vadd.f32 0.0, %v2336
        %v2338 = vpop.f32.mrf.mxu0
        %v2339 = vpop.f32.mrf.mxu0
        %v2340 = vadd.f32 0.0, %v2339
        %v2341 = vpop.f32.mrf.mxu0
        %2342 = vmatprep.mubr.bf16.mxu0 0
        %2343 = vmatmul.mubr.bf16.gmra.mxu0 %v2202
        %v2344 = vpop.f32.mrf.mxu0
        %v2345 = vadd.f32 0.0, %v2344
        %v2346 = vpop.f32.mrf.mxu0
        %v2347 = vpop.f32.mrf.mxu0
        %v2348 = vadd.f32 0.0, %v2347
        %v2349 = vpop.f32.mrf.mxu0
        %2350 = vmatprep.mubr.bf16.mxu0 0
        %2351 = vmatmul.mubr.bf16.gmra.mxu0 %v2203
        %v2352 = vpop.f32.mrf.mxu0
        %v2353 = vadd.f32 0.0, %v2352
        %v2354 = vpop.f32.mrf.mxu0
        %v2355 = vpop.f32.mrf.mxu0
        %v2356 = vadd.f32 0.0, %v2355
        %v2357 = vpop.f32.mrf.mxu0
        %2358 = vmatprep.mubr.bf16.mxu0 0
        %2359 = vmatmul.mubr.bf16.gmra.mxu0 %v2204
        %v2360 = vpop.f32.mrf.mxu0
        %v2361 = vadd.f32 0.0, %v2360
        %v2362 = vpop.f32.mrf.mxu0
        %v2363 = vpop.f32.mrf.mxu0
        %v2364 = vadd.f32 0.0, %v2363
        %v2365 = vpop.f32.mrf.mxu0
        %2366 = vmatprep.mubr.bf16.mxu0 0
        %2367 = vmatmul.mubr.bf16.gmra.mxu0 %v2205
        %v2368 = vpop.f32.mrf.mxu0
        %v2369 = vadd.f32 0.0, %v2368
        %v2370 = vpop.f32.mrf.mxu0
        %v2371 = vpop.f32.mrf.mxu0
        %v2372 = vadd.f32 0.0, %v2371
        %v2373 = vpop.f32.mrf.mxu0
        %2374 = vmatprep.mubr.bf16.mxu0 0
        %2375 = vmatmul.mubr.bf16.gmra.mxu0 %v2206
        %v2376 = vpop.f32.mrf.mxu0
        %v2377 = vadd.f32 0.0, %v2376
        %v2378 = vpop.f32.mrf.mxu0
        %v2379 = vpop.f32.mrf.mxu0
        %v2380 = vadd.f32 0.0, %v2379
        %v2381 = vpop.f32.mrf.mxu0
        %2382 = vmatprep.mubr.bf16.mxu0 0
        %2383 = vmatmul.mubr.bf16.gmra.mxu0 %v2207
        %v2384 = vpop.f32.mrf.mxu0
        %v2385 = vadd.f32 0.0, %v2384
        %v2386 = vpop.f32.mrf.mxu0
        %v2387 = vpop.f32.mrf.mxu0
        %v2388 = vadd.f32 0.0, %v2387
        %v2389 = vpop.f32.mrf.mxu0
        %2390 = vmatprep.mubr.bf16.mxu0 0
        %2391 = vmatmul.mubr.bf16.gmra.mxu0 %v2208
        %v2392 = vpop.f32.mrf.mxu0
        %v2393 = vadd.f32 0.0, %v2392
        %v2394 = vpop.f32.mrf.mxu0
        %v2395 = vpop.f32.mrf.mxu0
        %v2396 = vadd.f32 0.0, %v2395
        %v2397 = vpop.f32.mrf.mxu0
        %2398 = vmatprep.mubr.bf16.mxu0 0
        %2399 = vmatmul.mubr.bf16.gmra.mxu0 %v2209
        %v2400 = vpop.f32.mrf.mxu0
        %v2401 = vadd.f32 0.0, %v2400
        %v2402 = vpop.f32.mrf.mxu0
        %v2403 = vpop.f32.mrf.mxu0
        %v2404 = vadd.f32 0.0, %v2403
        %v2405 = vpop.f32.mrf.mxu0
        %2406 = vmatprep.mubr.bf16.mxu0 0
        %2407 = vmatmul.mubr.bf16.gmra.mxu0 %v2210
        %v2408 = vpop.f32.mrf.mxu0
        %v2409 = vadd.f32 0.0, %v2408
        %v2410 = vpop.f32.mrf.mxu0
        %v2411 = vpop.f32.mrf.mxu0
        %v2412 = vadd.f32 0.0, %v2411
        %v2413 = vpop.f32.mrf.mxu0
        %2414 = vmatprep.mubr.bf16.mxu0 0
        %2415 = vmatmul.mubr.bf16.gmra.mxu0 %v2211
        %v2416 = vpop.f32.mrf.mxu0
        %v2417 = vadd.f32 0.0, %v2416
        %v2418 = vpop.f32.mrf.mxu0
        %v2419 = vpop.f32.mrf.mxu0
        %v2420 = vadd.f32 0.0, %v2419
        %v2421 = vpop.f32.mrf.mxu0
        %2422 = vmatprep.mubr.bf16.mxu0 0
        %2423 = vmatmul.mubr.bf16.gmra.mxu0 %v2212
        %v2424 = vpop.f32.mrf.mxu0
        %v2425 = vadd.f32 0.0, %v2424
        %v2426 = vpop.f32.mrf.mxu0
        %v2427 = vpop.f32.mrf.mxu0
        %v2428 = vadd.f32 0.0, %v2427
        %v2429 = vpop.f32.mrf.mxu0
        %2430 = vmatprep.mubr.bf16.mxu0 0
        %2431 = vmatmul.mubr.bf16.gmra.mxu0 %v2213
        %v2432 = vpop.f32.mrf.mxu0
        %v2433 = vadd.f32 0.0, %v2432
        %v2434 = vpop.f32.mrf.mxu0
        %v2435 = vpop.f32.mrf.mxu0
        %v2436 = vadd.f32 0.0, %v2435
        %v2437 = vpop.f32.mrf.mxu0
        %2438 = vdwg.mxu0
        %v2439 = vadd.f32 %v1588, %v2313
        %v2440 = vadd.f32 %v1591, %v2316
        %v2441 = vadd.f32 %v1596, %v2321
        %v2442 = vadd.f32 %v1599, %v2324
        %v2443 = vadd.f32 %v1604, %v2329
        %v2444 = vadd.f32 %v1607, %v2332
        %v2445 = vadd.f32 %v1612, %v2337
        %v2446 = vadd.f32 %v1615, %v2340
        %v2447 = vadd.f32 %v1620, %v2345
        %v2448 = vadd.f32 %v1623, %v2348
        %v2449 = vadd.f32 %v1628, %v2353
        %v2450 = vadd.f32 %v1631, %v2356
        %v2451 = vadd.f32 %v1636, %v2361
        %v2452 = vadd.f32 %v1639, %v2364
        %v2453 = vadd.f32 %v1644, %v2369
        %v2454 = vadd.f32 %v1647, %v2372
        %v2455 = vadd.f32 %v1652, %v2377
        %v2456 = vadd.f32 %v1655, %v2380
        %v2457 = vadd.f32 %v1660, %v2385
        %v2458 = vadd.f32 %v1663, %v2388
        %v2459 = vadd.f32 %v1668, %v2393
        %v2460 = vadd.f32 %v1671, %v2396
        %v2461 = vadd.f32 %v1676, %v2401
        %v2462 = vadd.f32 %v1679, %v2404
        %v2463 = vadd.f32 %v1684, %v2409
        %v2464 = vadd.f32 %v1687, %v2412
        %v2465 = vadd.f32 %v1692, %v2417
        %v2466 = vadd.f32 %v1695, %v2420
        %v2467 = vadd.f32 %v1700, %v2425
        %v2468 = vadd.f32 %v1703, %v2428
        %v2469 = vadd.f32 %v1708, %v2433
        %v2470 = vadd.f32 %v1711, %v2436
        %v2471 = vld [vmem:[%s296] sm:$0x8]
        %v2472 = vld [vmem:[%s296 + $0x4] sm:$0xf]
        %v2473 = vld [vmem:[%s296 + $0x8] sm:$0xf]
        %v2474 = vld [vmem:[%s296 + $0x10] sm:$0x8]
        %v2475 = vld [vmem:[%s296 + $0x14] sm:$0xf]
        %v2476 = vld [vmem:[%s296 + $0x18] sm:$0xf]
        %v2477 = vld [vmem:[%s296 + $0x20] sm:$0x8]
        %v2478 = vld [vmem:[%s296 + $0x24] sm:$0xf]
        %v2479 = vld [vmem:[%s296 + $0x28] sm:$0xf]
        %v2480 = vld [vmem:[%s296 + $0x30] sm:$0x8]
        %v2481 = vld [vmem:[%s296 + $0x34] sm:$0xf]
        %v2482 = vld [vmem:[%s296 + $0x38] sm:$0xf]
        %v2483 = vld [vmem:[%s296 + $0x40] sm:$0x8]
        %v2484 = vld [vmem:[%s296 + $0x44] sm:$0xf]
        %v2485 = vld [vmem:[%s296 + $0x48] sm:$0xf]
        %v2486 = vld [vmem:[%s296 + $0x50] sm:$0x8]
        %v2487 = vld [vmem:[%s296 + $0x54] sm:$0xf]
        %v2488 = vld [vmem:[%s296 + $0x58] sm:$0xf]
        %v2489 = vld [vmem:[%s296 + $0x60] sm:$0x8]
        %v2490 = vld [vmem:[%s296 + $0x64] sm:$0xf]
        %v2491 = vld [vmem:[%s296 + $0x68] sm:$0xf]
        %v2492 = vld [vmem:[%s296 + $0x70] sm:$0x8]
        %v2493 = vld [vmem:[%s296 + $0x74] sm:$0xf]
        %v2494 = vld [vmem:[%s296 + $0x78] sm:$0xf]
        %v2495 = vld [vmem:[%s296 + $0x80] sm:$0x8]
        %v2496 = vld [vmem:[%s296 + $0x84] sm:$0xf]
        %v2497 = vld [vmem:[%s296 + $0x88] sm:$0xf]
        %v2498 = vld [vmem:[%s296 + $0x90] sm:$0x8]
        %v2499 = vld [vmem:[%s296 + $0x94] sm:$0xf]
        %v2500 = vld [vmem:[%s296 + $0x98] sm:$0xf]
        %v2501 = vld [vmem:[%s296 + $0xa0] sm:$0x8]
        %v2502 = vld [vmem:[%s296 + $0xa4] sm:$0xf]
        %v2503 = vld [vmem:[%s296 + $0xa8] sm:$0xf]
        %v2504 = vld [vmem:[%s296 + $0xb0] sm:$0x8]
        %v2505 = vld [vmem:[%s296 + $0xb4] sm:$0xf]
        %v2506 = vld [vmem:[%s296 + $0xb8] sm:$0xf]
        %v2507 = vld [vmem:[%s296 + $0xc0] sm:$0x8]
        %v2508 = vld [vmem:[%s296 + $0xc4] sm:$0xf]
        %v2509 = vld [vmem:[%s296 + $0xc8] sm:$0xf]
        %v2510 = vld [vmem:[%s296 + $0xd0] sm:$0x8]
        %v2511 = vld [vmem:[%s296 + $0xd4] sm:$0xf]
        %v2512 = vld [vmem:[%s296 + $0xd8] sm:$0xf]
        %v2513 = vld [vmem:[%s296 + $0xe0] sm:$0x8]
        %v2514 = vld [vmem:[%s296 + $0xe4] sm:$0xf]
        %v2515 = vld [vmem:[%s296 + $0xe8] sm:$0xf]
        %v2516 = vld [vmem:[%s296 + $0xf0] sm:$0x8]
        %v2517 = vld [vmem:[%s296 + $0xf4] sm:$0xf]
        %v2518 = vld [vmem:[%s296 + $0xf8] sm:$0xf]
        %v2520 = vshrl.u32 %v2471, 16
        %v2522 = vrot.slane %v2520, 7
        %v2523 = vrot.slane %v2522, 4
        %v2525 = vshrl.u32 %v2472, 16
        %v2527 = vrot.slane %v2525, 7
        %v2528 = vshll.u32 %v2472, 16
        %v2530 = vor.u32 %v2527, %v2528
        %v2531 = vsel %vm750, %v2523, %v2530
        %v2532 = vrot.slane %v2527, 4
        %v2534 = vshrl.u32 %v2473, 16
        %v2536 = vrot.slane %v2534, 7
        %v2537 = vshll.u32 %v2473, 16
        %v2539 = vor.u32 %v2536, %v2537
        %v2540 = vsel %vm750, %v2532, %v2539
        %v2542 = vshrl.u32 %v2474, 16
        %v2544 = vrot.slane %v2542, 7
        %v2545 = vrot.slane %v2544, 4
        %v2547 = vshrl.u32 %v2475, 16
        %v2549 = vrot.slane %v2547, 7
        %v2550 = vshll.u32 %v2475, 16
        %v2552 = vor.u32 %v2549, %v2550
        %v2553 = vsel %vm750, %v2545, %v2552
        %v2554 = vrot.slane %v2549, 4
        %v2556 = vshrl.u32 %v2476, 16
        %v2558 = vrot.slane %v2556, 7
        %v2559 = vshll.u32 %v2476, 16
        %v2561 = vor.u32 %v2558, %v2559
        %v2562 = vsel %vm750, %v2554, %v2561
        %v2564 = vshrl.u32 %v2477, 16
        %v2566 = vrot.slane %v2564, 7
        %v2567 = vrot.slane %v2566, 4
        %v2569 = vshrl.u32 %v2478, 16
        %v2571 = vrot.slane %v2569, 7
        %v2572 = vshll.u32 %v2478, 16
        %v2574 = vor.u32 %v2571, %v2572
        %v2575 = vsel %vm750, %v2567, %v2574
        %v2576 = vrot.slane %v2571, 4
        %v2578 = vshrl.u32 %v2479, 16
        %v2580 = vrot.slane %v2578, 7
        %v2581 = vshll.u32 %v2479, 16
        %v2583 = vor.u32 %v2580, %v2581
        %v2584 = vsel %vm750, %v2576, %v2583
        %v2586 = vshrl.u32 %v2480, 16
        %v2588 = vrot.slane %v2586, 7
        %v2589 = vrot.slane %v2588, 4
        %v2591 = vshrl.u32 %v2481, 16
        %v2593 = vrot.slane %v2591, 7
        %v2594 = vshll.u32 %v2481, 16
        %v2596 = vor.u32 %v2593, %v2594
        %v2597 = vsel %vm750, %v2589, %v2596
        %v2598 = vrot.slane %v2593, 4
        %v2600 = vshrl.u32 %v2482, 16
        %v2602 = vrot.slane %v2600, 7
        %v2603 = vshll.u32 %v2482, 16
        %v2605 = vor.u32 %v2602, %v2603
        %v2606 = vsel %vm750, %v2598, %v2605
        %v2608 = vshrl.u32 %v2483, 16
        %v2610 = vrot.slane %v2608, 7
        %v2611 = vrot.slane %v2610, 4
        %v2613 = vshrl.u32 %v2484, 16
        %v2615 = vrot.slane %v2613, 7
        %v2616 = vshll.u32 %v2484, 16
        %v2618 = vor.u32 %v2615, %v2616
        %v2619 = vsel %vm750, %v2611, %v2618
        %v2620 = vrot.slane %v2615, 4
        %v2622 = vshrl.u32 %v2485, 16
        %v2624 = vrot.slane %v2622, 7
        %v2625 = vshll.u32 %v2485, 16
        %v2627 = vor.u32 %v2624, %v2625
        %v2628 = vsel %vm750, %v2620, %v2627
        %v2630 = vshrl.u32 %v2486, 16
        %v2632 = vrot.slane %v2630, 7
        %v2633 = vrot.slane %v2632, 4
        %v2635 = vshrl.u32 %v2487, 16
        %v2637 = vrot.slane %v2635, 7
        %v2638 = vshll.u32 %v2487, 16
        %v2640 = vor.u32 %v2637, %v2638
        %v2641 = vsel %vm750, %v2633, %v2640
        %v2642 = vrot.slane %v2637, 4
        %v2644 = vshrl.u32 %v2488, 16
        %v2646 = vrot.slane %v2644, 7
        %v2647 = vshll.u32 %v2488, 16
        %v2649 = vor.u32 %v2646, %v2647
        %v2650 = vsel %vm750, %v2642, %v2649
        %v2652 = vshrl.u32 %v2489, 16
        %v2654 = vrot.slane %v2652, 7
        %v2655 = vrot.slane %v2654, 4
        %v2657 = vshrl.u32 %v2490, 16
        %v2659 = vrot.slane %v2657, 7
        %v2660 = vshll.u32 %v2490, 16
        %v2662 = vor.u32 %v2659, %v2660
        %v2663 = vsel %vm750, %v2655, %v2662
        %v2664 = vrot.slane %v2659, 4
        %v2666 = vshrl.u32 %v2491, 16
        %v2668 = vrot.slane %v2666, 7
        %v2669 = vshll.u32 %v2491, 16
        %v2671 = vor.u32 %v2668, %v2669
        %v2672 = vsel %vm750, %v2664, %v2671
        %v2674 = vshrl.u32 %v2492, 16
        %v2676 = vrot.slane %v2674, 7
        %v2677 = vrot.slane %v2676, 4
        %v2679 = vshrl.u32 %v2493, 16
        %v2681 = vrot.slane %v2679, 7
        %v2682 = vshll.u32 %v2493, 16
        %v2684 = vor.u32 %v2681, %v2682
        %v2685 = vsel %vm750, %v2677, %v2684
        %v2686 = vrot.slane %v2681, 4
        %v2688 = vshrl.u32 %v2494, 16
        %v2690 = vrot.slane %v2688, 7
        %v2691 = vshll.u32 %v2494, 16
        %v2693 = vor.u32 %v2690, %v2691
        %v2694 = vsel %vm750, %v2686, %v2693
        %v2696 = vshrl.u32 %v2495, 16
        %v2698 = vrot.slane %v2696, 7
        %v2699 = vrot.slane %v2698, 4
        %v2701 = vshrl.u32 %v2496, 16
        %v2703 = vrot.slane %v2701, 7
        %v2704 = vshll.u32 %v2496, 16
        %v2706 = vor.u32 %v2703, %v2704
        %v2707 = vsel %vm750, %v2699, %v2706
        %v2708 = vrot.slane %v2703, 4
        %v2710 = vshrl.u32 %v2497, 16
        %v2712 = vrot.slane %v2710, 7
        %v2713 = vshll.u32 %v2497, 16
        %v2715 = vor.u32 %v2712, %v2713
        %v2716 = vsel %vm750, %v2708, %v2715
        %v2718 = vshrl.u32 %v2498, 16
        %v2720 = vrot.slane %v2718, 7
        %v2721 = vrot.slane %v2720, 4
        %v2723 = vshrl.u32 %v2499, 16
        %v2725 = vrot.slane %v2723, 7
        %v2726 = vshll.u32 %v2499, 16
        %v2728 = vor.u32 %v2725, %v2726
        %v2729 = vsel %vm750, %v2721, %v2728
        %v2730 = vrot.slane %v2725, 4
        %v2732 = vshrl.u32 %v2500, 16
        %v2734 = vrot.slane %v2732, 7
        %v2735 = vshll.u32 %v2500, 16
        %v2737 = vor.u32 %v2734, %v2735
        %v2738 = vsel %vm750, %v2730, %v2737
        %v2740 = vshrl.u32 %v2501, 16
        %v2742 = vrot.slane %v2740, 7
        %v2743 = vrot.slane %v2742, 4
        %v2745 = vshrl.u32 %v2502, 16
        %v2747 = vrot.slane %v2745, 7
        %v2748 = vshll.u32 %v2502, 16
        %v2750 = vor.u32 %v2747, %v2748
        %v2751 = vsel %vm750, %v2743, %v2750
        %v2752 = vrot.slane %v2747, 4
        %v2754 = vshrl.u32 %v2503, 16
        %v2756 = vrot.slane %v2754, 7
        %v2757 = vshll.u32 %v2503, 16
        %v2759 = vor.u32 %v2756, %v2757
        %v2760 = vsel %vm750, %v2752, %v2759
        %v2762 = vshrl.u32 %v2504, 16
        %v2764 = vrot.slane %v2762, 7
        %v2765 = vrot.slane %v2764, 4
        %v2767 = vshrl.u32 %v2505, 16
        %v2769 = vrot.slane %v2767, 7
        %v2770 = vshll.u32 %v2505, 16
        %v2772 = vor.u32 %v2769, %v2770
        %v2773 = vsel %vm750, %v2765, %v2772
        %v2774 = vrot.slane %v2769, 4
        %v2776 = vshrl.u32 %v2506, 16
        %v2778 = vrot.slane %v2776, 7
        %v2779 = vshll.u32 %v2506, 16
        %v2781 = vor.u32 %v2778, %v2779
        %v2782 = vsel %vm750, %v2774, %v2781
        %v2784 = vshrl.u32 %v2507, 16
        %v2786 = vrot.slane %v2784, 7
        %v2787 = vrot.slane %v2786, 4
        %v2789 = vshrl.u32 %v2508, 16
        %v2791 = vrot.slane %v2789, 7
        %v2792 = vshll.u32 %v2508, 16
        %v2794 = vor.u32 %v2791, %v2792
        %v2795 = vsel %vm750, %v2787, %v2794
        %v2796 = vrot.slane %v2791, 4
        %v2798 = vshrl.u32 %v2509, 16
        %v2800 = vrot.slane %v2798, 7
        %v2801 = vshll.u32 %v2509, 16
        %v2803 = vor.u32 %v2800, %v2801
        %v2804 = vsel %vm750, %v2796, %v2803
        %v2806 = vshrl.u32 %v2510, 16
        %v2808 = vrot.slane %v2806, 7
        %v2809 = vrot.slane %v2808, 4
        %v2811 = vshrl.u32 %v2511, 16
        %v2813 = vrot.slane %v2811, 7
        %v2814 = vshll.u32 %v2511, 16
        %v2816 = vor.u32 %v2813, %v2814
        %v2817 = vsel %vm750, %v2809, %v2816
        %v2818 = vrot.slane %v2813, 4
        %v2820 = vshrl.u32 %v2512, 16
        %v2822 = vrot.slane %v2820, 7
        %v2823 = vshll.u32 %v2512, 16
        %v2825 = vor.u32 %v2822, %v2823
        %v2826 = vsel %vm750, %v2818, %v2825
        %v2828 = vshrl.u32 %v2513, 16
        %v2830 = vrot.slane %v2828, 7
        %v2831 = vrot.slane %v2830, 4
        %v2833 = vshrl.u32 %v2514, 16
        %v2835 = vrot.slane %v2833, 7
        %v2836 = vshll.u32 %v2514, 16
        %v2838 = vor.u32 %v2835, %v2836
        %v2839 = vsel %vm750, %v2831, %v2838
        %v2840 = vrot.slane %v2835, 4
        %v2842 = vshrl.u32 %v2515, 16
        %v2844 = vrot.slane %v2842, 7
        %v2845 = vshll.u32 %v2515, 16
        %v2847 = vor.u32 %v2844, %v2845
        %v2848 = vsel %vm750, %v2840, %v2847
        %v2850 = vshrl.u32 %v2516, 16
        %v2852 = vrot.slane %v2850, 7
        %v2853 = vrot.slane %v2852, 4
        %v2855 = vshrl.u32 %v2517, 16
        %v2857 = vrot.slane %v2855, 7
        %v2858 = vshll.u32 %v2517, 16
        %v2860 = vor.u32 %v2857, %v2858
        %v2861 = vsel %vm750, %v2853, %v2860
        %v2862 = vrot.slane %v2857, 4
        %v2864 = vshrl.u32 %v2518, 16
        %v2866 = vrot.slane %v2864, 7
        %v2867 = vshll.u32 %v2518, 16
        %v2869 = vor.u32 %v2866, %v2867
        %v2870 = vsel %vm750, %v2862, %v2869
        %s2871 = scalar_lea.vmem [#allocation7], 192
        %v2872 = vld [vmem:[%s2871] sm:$0xf]
        %v2873 = vld [vmem:[%s2871 + $0x4] sm:$0xf]
        %v2874 = vld [vmem:[%s2871 + $0x8] sm:$0xf]
        %v2875 = vld [vmem:[%s2871 + $0xc] sm:$0xf]
        %v2876 = vld [vmem:[%s2871 + $0x10] sm:$0xf]
        %v2877 = vld [vmem:[%s2871 + $0x14] sm:$0xf]
        %v2878 = vld [vmem:[%s2871 + $0x18] sm:$0xf]
        %v2879 = vld [vmem:[%s2871 + $0x1c] sm:$0xf]
        %v2880 = vld [vmem:[%s2871 + $0x20] sm:$0xf]
        %v2881 = vld [vmem:[%s2871 + $0x24] sm:$0xf]
        %v2882 = vld [vmem:[%s2871 + $0x28] sm:$0xf]
        %v2883 = vld [vmem:[%s2871 + $0x2c] sm:$0xf]
        %v2884 = vld [vmem:[%s2871 + $0x30] sm:$0xf]
        %v2885 = vld [vmem:[%s2871 + $0x34] sm:$0xf]
        %v2886 = vld [vmem:[%s2871 + $0x38] sm:$0xf]
        %v2887 = vld [vmem:[%s2871 + $0x3c] sm:$0xf]
        %v2888 = vunpack.c.l.b16 %v2531
        %v2889 = vunpack.c.l.b16 %v2540
        %v2890 = vunpack.c.l.b16 %v2553
        %v2891 = vunpack.c.l.b16 %v2562
        %v2892 = vunpack.c.l.b16 %v2575
        %v2893 = vunpack.c.l.b16 %v2584
        %v2894 = vunpack.c.l.b16 %v2597
        %v2895 = vunpack.c.l.b16 %v2606
        %v2896 = vunpack.c.l.b16 %v2619
        %v2897 = vunpack.c.l.b16 %v2628
        %v2898 = vunpack.c.l.b16 %v2641
        %v2899 = vunpack.c.l.b16 %v2650
        %v2900 = vunpack.c.l.b16 %v2663
        %v2901 = vunpack.c.l.b16 %v2672
        %v2902 = vunpack.c.l.b16 %v2685
        %v2903 = vunpack.c.l.b16 %v2694
        %v2904 = vunpack.c.l.b16 %v2707
        %v2905 = vunpack.c.l.b16 %v2716
        %v2906 = vunpack.c.l.b16 %v2729
        %v2907 = vunpack.c.l.b16 %v2738
        %v2908 = vunpack.c.l.b16 %v2751
        %v2909 = vunpack.c.l.b16 %v2760
        %v2910 = vunpack.c.l.b16 %v2773
        %v2911 = vunpack.c.l.b16 %v2782
        %v2912 = vunpack.c.l.b16 %v2795
        %v2913 = vunpack.c.l.b16 %v2804
        %v2914 = vunpack.c.l.b16 %v2817
        %v2915 = vunpack.c.l.b16 %v2826
        %v2916 = vunpack.c.l.b16 %v2839
        %v2917 = vunpack.c.l.b16 %v2848
        %v2918 = vunpack.c.l.b16 %v2861
        %v2919 = vunpack.c.l.b16 %v2870
        %v2920 = vpack.c.b16 %v2889, %v2888
        %v2921 = vpack.c.b16 %v2891, %v2890
        %v2922 = vpack.c.b16 %v2893, %v2892
        %v2923 = vpack.c.b16 %v2895, %v2894
        %v2924 = vpack.c.b16 %v2897, %v2896
        %v2925 = vpack.c.b16 %v2899, %v2898
        %v2926 = vpack.c.b16 %v2901, %v2900
        %v2927 = vpack.c.b16 %v2903, %v2902
        %v2928 = vpack.c.b16 %v2905, %v2904
        %v2929 = vpack.c.b16 %v2907, %v2906
        %v2930 = vpack.c.b16 %v2909, %v2908
        %v2931 = vpack.c.b16 %v2911, %v2910
        %v2932 = vpack.c.b16 %v2913, %v2912
        %v2933 = vpack.c.b16 %v2915, %v2914
        %v2934 = vpack.c.b16 %v2917, %v2916
        %v2935 = vpack.c.b16 %v2919, %v2918
        %v2968 = vunpack.c.l.b16 %v2872
        %v2969 = vunpack.c.l.b16 %v2873
        %v2970 = vunpack.c.l.b16 %v2874
        %v2971 = vunpack.c.l.b16 %v2875
        %v2972 = vunpack.c.l.b16 %v2876
        %v2973 = vunpack.c.l.b16 %v2877
        %v2974 = vunpack.c.l.b16 %v2878
        %v2975 = vunpack.c.l.b16 %v2879
        %v2976 = vunpack.c.l.b16 %v2880
        %v2977 = vunpack.c.l.b16 %v2881
        %v2978 = vunpack.c.l.b16 %v2882
        %v2979 = vunpack.c.l.b16 %v2883
        %v2980 = vunpack.c.l.b16 %v2884
        %v2981 = vunpack.c.l.b16 %v2885
        %v2982 = vunpack.c.l.b16 %v2886
        %v2983 = vunpack.c.l.b16 %v2887
        %v2984 = vpack.c.b16 %v2969, %v2968
        %v2985 = vpack.c.b16 %v2971, %v2970
        %v2986 = vpack.c.b16 %v2973, %v2972
        %v2987 = vpack.c.b16 %v2975, %v2974
        %v2988 = vpack.c.b16 %v2977, %v2976
        %v2989 = vpack.c.b16 %v2979, %v2978
        %v2990 = vpack.c.b16 %v2981, %v2980
        %v2991 = vpack.c.b16 %v2983, %v2982
        %3000 = vmatprep.subr.bf16.mxu0 0
        %3001 = vmatpush1.bf16.msra.mxu0 %v2991
        %3002 = vmatprep.subr.bf16.mxu0 0
        %3003 = vmatpush1.bf16.msra.mxu0 %v2990
        %3004 = vmatprep.subr.bf16.mxu0 0
        %3005 = vmatpush1.bf16.msra.mxu0 %v2989
        %3006 = vmatprep.subr.bf16.mxu0 0
        %3007 = vmatpush1.bf16.msra.mxu0 %v2988
        %3008 = vmatprep.subr.bf16.mxu0 0
        %3009 = vmatpush1.bf16.msra.mxu0 %v2987
        %3010 = vmatprep.subr.bf16.mxu0 0
        %3011 = vmatpush1.bf16.msra.mxu0 %v2986
        %3012 = vmatprep.subr.bf16.mxu0 0
        %3013 = vmatpush1.bf16.msra.mxu0 %v2985
        %3014 = vmatprep.subr.bf16.mxu0 0
        %3015 = vmatpush1.bf16.msra.mxu0 %v2984
        %3016 = vmatprep.subr.bf16.mxu0 0
        %3017 = vmatpush2.bf16.msra.mxu0 0
        %3018 = vmatprep.subr.bf16.mxu0 0
        %3019 = vmatpush2.bf16.msra.mxu0 0
        %3020 = vmatprep.subr.bf16.mxu0 0
        %3021 = vmatpush2.bf16.msra.mxu0 0
        %3022 = vmatprep.subr.bf16.mxu0 0
        %3023 = vmatpush2.bf16.msra.mxu0 0
        %3024 = vmatprep.subr.bf16.mxu0 0
        %3025 = vmatpush2.bf16.msra.mxu0 0
        %3026 = vmatprep.subr.bf16.mxu0 0
        %3027 = vmatpush2.bf16.msra.mxu0 0
        %3028 = vmatprep.subr.bf16.mxu0 0
        %3029 = vmatpush2.bf16.msra.mxu0 0
        %3030 = vmatprep.subr.bf16.mxu0 0
        %3031 = vmatpush2.bf16.msra.mxu0 0
        %3032 = vmatprep.mubr.bf16.mxu0 0
        %3033 = vmatmul.mubr.bf16.gmra.mxu0 %v2920
        %v3034 = vpop.f32.mrf.mxu0
        %v3035 = vadd.f32 0.0, %v3034
        %v3036 = vpop.f32.mrf.mxu0
        %v3037 = vpop.f32.mrf.mxu0
        %v3038 = vadd.f32 0.0, %v3037
        %v3039 = vpop.f32.mrf.mxu0
        %3040 = vmatprep.mubr.bf16.mxu0 0
        %3041 = vmatmul.mubr.bf16.gmra.mxu0 %v2921
        %v3042 = vpop.f32.mrf.mxu0
        %v3043 = vadd.f32 0.0, %v3042
        %v3044 = vpop.f32.mrf.mxu0
        %v3045 = vpop.f32.mrf.mxu0
        %v3046 = vadd.f32 0.0, %v3045
        %v3047 = vpop.f32.mrf.mxu0
        %3048 = vmatprep.mubr.bf16.mxu0 0
        %3049 = vmatmul.mubr.bf16.gmra.mxu0 %v2922
        %v3050 = vpop.f32.mrf.mxu0
        %v3051 = vadd.f32 0.0, %v3050
        %v3052 = vpop.f32.mrf.mxu0
        %v3053 = vpop.f32.mrf.mxu0
        %v3054 = vadd.f32 0.0, %v3053
        %v3055 = vpop.f32.mrf.mxu0
        %3056 = vmatprep.mubr.bf16.mxu0 0
        %3057 = vmatmul.mubr.bf16.gmra.mxu0 %v2923
        %v3058 = vpop.f32.mrf.mxu0
        %v3059 = vadd.f32 0.0, %v3058
        %v3060 = vpop.f32.mrf.mxu0
        %v3061 = vpop.f32.mrf.mxu0
        %v3062 = vadd.f32 0.0, %v3061
        %v3063 = vpop.f32.mrf.mxu0
        %3064 = vmatprep.mubr.bf16.mxu0 0
        %3065 = vmatmul.mubr.bf16.gmra.mxu0 %v2924
        %v3066 = vpop.f32.mrf.mxu0
        %v3067 = vadd.f32 0.0, %v3066
        %v3068 = vpop.f32.mrf.mxu0
        %v3069 = vpop.f32.mrf.mxu0
        %v3070 = vadd.f32 0.0, %v3069
        %v3071 = vpop.f32.mrf.mxu0
        %3072 = vmatprep.mubr.bf16.mxu0 0
        %3073 = vmatmul.mubr.bf16.gmra.mxu0 %v2925
        %v3074 = vpop.f32.mrf.mxu0
        %v3075 = vadd.f32 0.0, %v3074
        %v3076 = vpop.f32.mrf.mxu0
        %v3077 = vpop.f32.mrf.mxu0
        %v3078 = vadd.f32 0.0, %v3077
        %v3079 = vpop.f32.mrf.mxu0
        %3080 = vmatprep.mubr.bf16.mxu0 0
        %3081 = vmatmul.mubr.bf16.gmra.mxu0 %v2926
        %v3082 = vpop.f32.mrf.mxu0
        %v3083 = vadd.f32 0.0, %v3082
        %v3084 = vpop.f32.mrf.mxu0
        %v3085 = vpop.f32.mrf.mxu0
        %v3086 = vadd.f32 0.0, %v3085
        %v3087 = vpop.f32.mrf.mxu0
        %3088 = vmatprep.mubr.bf16.mxu0 0
        %3089 = vmatmul.mubr.bf16.gmra.mxu0 %v2927
        %v3090 = vpop.f32.mrf.mxu0
        %v3091 = vadd.f32 0.0, %v3090
        %v3092 = vpop.f32.mrf.mxu0
        %v3093 = vpop.f32.mrf.mxu0
        %v3094 = vadd.f32 0.0, %v3093
        %v3095 = vpop.f32.mrf.mxu0
        %3096 = vmatprep.mubr.bf16.mxu0 0
        %3097 = vmatmul.mubr.bf16.gmra.mxu0 %v2928
        %v3098 = vpop.f32.mrf.mxu0
        %v3099 = vadd.f32 0.0, %v3098
        %v3100 = vpop.f32.mrf.mxu0
        %v3101 = vpop.f32.mrf.mxu0
        %v3102 = vadd.f32 0.0, %v3101
        %v3103 = vpop.f32.mrf.mxu0
        %3104 = vmatprep.mubr.bf16.mxu0 0
        %3105 = vmatmul.mubr.bf16.gmra.mxu0 %v2929
        %v3106 = vpop.f32.mrf.mxu0
        %v3107 = vadd.f32 0.0, %v3106
        %v3108 = vpop.f32.mrf.mxu0
        %v3109 = vpop.f32.mrf.mxu0
        %v3110 = vadd.f32 0.0, %v3109
        %v3111 = vpop.f32.mrf.mxu0
        %3112 = vmatprep.mubr.bf16.mxu0 0
        %3113 = vmatmul.mubr.bf16.gmra.mxu0 %v2930
        %v3114 = vpop.f32.mrf.mxu0
        %v3115 = vadd.f32 0.0, %v3114
        %v3116 = vpop.f32.mrf.mxu0
        %v3117 = vpop.f32.mrf.mxu0
        %v3118 = vadd.f32 0.0, %v3117
        %v3119 = vpop.f32.mrf.mxu0
        %3120 = vmatprep.mubr.bf16.mxu0 0
        %3121 = vmatmul.mubr.bf16.gmra.mxu0 %v2931
        %v3122 = vpop.f32.mrf.mxu0
        %v3123 = vadd.f32 0.0, %v3122
        %v3124 = vpop.f32.mrf.mxu0
        %v3125 = vpop.f32.mrf.mxu0
        %v3126 = vadd.f32 0.0, %v3125
        %v3127 = vpop.f32.mrf.mxu0
        %3128 = vmatprep.mubr.bf16.mxu0 0
        %3129 = vmatmul.mubr.bf16.gmra.mxu0 %v2932
        %v3130 = vpop.f32.mrf.mxu0
        %v3131 = vadd.f32 0.0, %v3130
        %v3132 = vpop.f32.mrf.mxu0
        %v3133 = vpop.f32.mrf.mxu0
        %v3134 = vadd.f32 0.0, %v3133
        %v3135 = vpop.f32.mrf.mxu0
        %3136 = vmatprep.mubr.bf16.mxu0 0
        %3137 = vmatmul.mubr.bf16.gmra.mxu0 %v2933
        %v3138 = vpop.f32.mrf.mxu0
        %v3139 = vadd.f32 0.0, %v3138
        %v3140 = vpop.f32.mrf.mxu0
        %v3141 = vpop.f32.mrf.mxu0
        %v3142 = vadd.f32 0.0, %v3141
        %v3143 = vpop.f32.mrf.mxu0
        %3144 = vmatprep.mubr.bf16.mxu0 0
        %3145 = vmatmul.mubr.bf16.gmra.mxu0 %v2934
        %v3146 = vpop.f32.mrf.mxu0
        %v3147 = vadd.f32 0.0, %v3146
        %v3148 = vpop.f32.mrf.mxu0
        %v3149 = vpop.f32.mrf.mxu0
        %v3150 = vadd.f32 0.0, %v3149
        %v3151 = vpop.f32.mrf.mxu0
        %3152 = vmatprep.mubr.bf16.mxu0 0
        %3153 = vmatmul.mubr.bf16.gmra.mxu0 %v2935
        %v3154 = vpop.f32.mrf.mxu0
        %v3155 = vadd.f32 0.0, %v3154
        %v3156 = vpop.f32.mrf.mxu0
        %v3157 = vpop.f32.mrf.mxu0
        %v3158 = vadd.f32 0.0, %v3157
        %v3159 = vpop.f32.mrf.mxu0
        %3160 = vdwg.mxu0
        %v3161 = vadd.f32 %v2439, %v3035
        %v3162 = vadd.f32 %v2440, %v3038
        %v3163 = vadd.f32 %v2441, %v3043
        %v3164 = vadd.f32 %v2442, %v3046
        %v3165 = vadd.f32 %v2443, %v3051
        %v3166 = vadd.f32 %v2444, %v3054
        %v3167 = vadd.f32 %v2445, %v3059
        %v3168 = vadd.f32 %v2446, %v3062
        %v3169 = vadd.f32 %v2447, %v3067
        %v3170 = vadd.f32 %v2448, %v3070
        %v3171 = vadd.f32 %v2449, %v3075
        %v3172 = vadd.f32 %v2450, %v3078
        %v3173 = vadd.f32 %v2451, %v3083
        %v3174 = vadd.f32 %v2452, %v3086
        %v3175 = vadd.f32 %v2453, %v3091
        %v3176 = vadd.f32 %v2454, %v3094
        %v3177 = vadd.f32 %v2455, %v3099
        %v3178 = vadd.f32 %v2456, %v3102
        %v3179 = vadd.f32 %v2457, %v3107
        %v3180 = vadd.f32 %v2458, %v3110
        %v3181 = vadd.f32 %v2459, %v3115
        %v3182 = vadd.f32 %v2460, %v3118
        %v3183 = vadd.f32 %v2461, %v3123
        %v3184 = vadd.f32 %v2462, %v3126
        %v3185 = vadd.f32 %v2463, %v3131
        %v3186 = vadd.f32 %v2464, %v3134
        %v3187 = vadd.f32 %v2465, %v3139
        %v3188 = vadd.f32 %v2466, %v3142
        %v3189 = vadd.f32 %v2467, %v3147
        %v3190 = vadd.f32 %v2468, %v3150
        %v3191 = vadd.f32 %v2469, %v3155
        %v3192 = vadd.f32 %v2470, %v3158
        %s3193 = scalar_lea.vmem [#allocation7], 256
        %v3194 = vld [vmem:[%s3193] sm:$0xf]
        %v3195 = vld [vmem:[%s3193 + $0x4] sm:$0xf]
        %v3196 = vld [vmem:[%s3193 + $0x8] sm:$0xf]
        %v3197 = vld [vmem:[%s3193 + $0xc] sm:$0xf]
        %v3198 = vld [vmem:[%s3193 + $0x10] sm:$0xf]
        %v3199 = vld [vmem:[%s3193 + $0x14] sm:$0xf]
        %v3200 = vld [vmem:[%s3193 + $0x18] sm:$0xf]
        %v3201 = vld [vmem:[%s3193 + $0x1c] sm:$0xf]
        %v3202 = vld [vmem:[%s3193 + $0x20] sm:$0xf]
        %v3203 = vld [vmem:[%s3193 + $0x24] sm:$0xf]
        %v3204 = vld [vmem:[%s3193 + $0x28] sm:$0xf]
        %v3205 = vld [vmem:[%s3193 + $0x2c] sm:$0xf]
        %v3206 = vld [vmem:[%s3193 + $0x30] sm:$0xf]
        %v3207 = vld [vmem:[%s3193 + $0x34] sm:$0xf]
        %v3208 = vld [vmem:[%s3193 + $0x38] sm:$0xf]
        %v3209 = vld [vmem:[%s3193 + $0x3c] sm:$0xf]
        %v3242 = vunpack.c.l.b16 %v2472
        %v3243 = vunpack.c.l.b16 %v2473
        %v3244 = vunpack.c.l.b16 %v2475
        %v3245 = vunpack.c.l.b16 %v2476
        %v3246 = vunpack.c.l.b16 %v2478
        %v3247 = vunpack.c.l.b16 %v2479
        %v3248 = vunpack.c.l.b16 %v2481
        %v3249 = vunpack.c.l.b16 %v2482
        %v3250 = vunpack.c.l.b16 %v2484
        %v3251 = vunpack.c.l.b16 %v2485
        %v3252 = vunpack.c.l.b16 %v2487
        %v3253 = vunpack.c.l.b16 %v2488
        %v3254 = vunpack.c.l.b16 %v2490
        %v3255 = vunpack.c.l.b16 %v2491
        %v3256 = vunpack.c.l.b16 %v2493
        %v3257 = vunpack.c.l.b16 %v2494
        %v3258 = vunpack.c.l.b16 %v2496
        %v3259 = vunpack.c.l.b16 %v2497
        %v3260 = vunpack.c.l.b16 %v2499
        %v3261 = vunpack.c.l.b16 %v2500
        %v3262 = vunpack.c.l.b16 %v2502
        %v3263 = vunpack.c.l.b16 %v2503
        %v3264 = vunpack.c.l.b16 %v2505
        %v3265 = vunpack.c.l.b16 %v2506
        %v3266 = vunpack.c.l.b16 %v2508
        %v3267 = vunpack.c.l.b16 %v2509
        %v3268 = vunpack.c.l.b16 %v2511
        %v3269 = vunpack.c.l.b16 %v2512
        %v3270 = vunpack.c.l.b16 %v2514
        %v3271 = vunpack.c.l.b16 %v2515
        %v3272 = vunpack.c.l.b16 %v2517
        %v3273 = vunpack.c.l.b16 %v2518
        %v3274 = vpack.c.b16 %v3243, %v3242
        %v3275 = vpack.c.b16 %v3245, %v3244
        %v3276 = vpack.c.b16 %v3247, %v3246
        %v3277 = vpack.c.b16 %v3249, %v3248
        %v3278 = vpack.c.b16 %v3251, %v3250
        %v3279 = vpack.c.b16 %v3253, %v3252
        %v3280 = vpack.c.b16 %v3255, %v3254
        %v3281 = vpack.c.b16 %v3257, %v3256
        %v3282 = vpack.c.b16 %v3259, %v3258
        %v3283 = vpack.c.b16 %v3261, %v3260
        %v3284 = vpack.c.b16 %v3263, %v3262
        %v3285 = vpack.c.b16 %v3265, %v3264
        %v3286 = vpack.c.b16 %v3267, %v3266
        %v3287 = vpack.c.b16 %v3269, %v3268
        %v3288 = vpack.c.b16 %v3271, %v3270
        %v3289 = vpack.c.b16 %v3273, %v3272
        %v3322 = vunpack.c.l.b16 %v3194
        %v3323 = vunpack.c.l.b16 %v3195
        %v3324 = vunpack.c.l.b16 %v3196
        %v3325 = vunpack.c.l.b16 %v3197
        %v3326 = vunpack.c.l.b16 %v3198
        %v3327 = vunpack.c.l.b16 %v3199
        %v3328 = vunpack.c.l.b16 %v3200
        %v3329 = vunpack.c.l.b16 %v3201
        %v3330 = vunpack.c.l.b16 %v3202
        %v3331 = vunpack.c.l.b16 %v3203
        %v3332 = vunpack.c.l.b16 %v3204
        %v3333 = vunpack.c.l.b16 %v3205
        %v3334 = vunpack.c.l.b16 %v3206
        %v3335 = vunpack.c.l.b16 %v3207
        %v3336 = vunpack.c.l.b16 %v3208
        %v3337 = vunpack.c.l.b16 %v3209
        %v3338 = vpack.c.b16 %v3323, %v3322
        %v3339 = vpack.c.b16 %v3325, %v3324
        %v3340 = vpack.c.b16 %v3327, %v3326
        %v3341 = vpack.c.b16 %v3329, %v3328
        %v3342 = vpack.c.b16 %v3331, %v3330
        %v3343 = vpack.c.b16 %v3333, %v3332
        %v3344 = vpack.c.b16 %v3335, %v3334
        %v3345 = vpack.c.b16 %v3337, %v3336
        %3354 = vmatprep.subr.bf16.mxu0 0
        %3355 = vmatpush1.bf16.msra.mxu0 %v3345
        %3356 = vmatprep.subr.bf16.mxu0 0
        %3357 = vmatpush1.bf16.msra.mxu0 %v3344
        %3358 = vmatprep.subr.bf16.mxu0 0
        %3359 = vmatpush1.bf16.msra.mxu0 %v3343
        %3360 = vmatprep.subr.bf16.mxu0 0
        %3361 = vmatpush1.bf16.msra.mxu0 %v3342
        %3362 = vmatprep.subr.bf16.mxu0 0
        %3363 = vmatpush1.bf16.msra.mxu0 %v3341
        %3364 = vmatprep.subr.bf16.mxu0 0
        %3365 = vmatpush1.bf16.msra.mxu0 %v3340
        %3366 = vmatprep.subr.bf16.mxu0 0
        %3367 = vmatpush1.bf16.msra.mxu0 %v3339
        %3368 = vmatprep.subr.bf16.mxu0 0
        %3369 = vmatpush1.bf16.msra.mxu0 %v3338
        %3370 = vmatprep.subr.bf16.mxu0 0
        %3371 = vmatpush2.bf16.msra.mxu0 0
        %3372 = vmatprep.subr.bf16.mxu0 0
        %3373 = vmatpush2.bf16.msra.mxu0 0
        %3374 = vmatprep.subr.bf16.mxu0 0
        %3375 = vmatpush2.bf16.msra.mxu0 0
        %3376 = vmatprep.subr.bf16.mxu0 0
        %3377 = vmatpush2.bf16.msra.mxu0 0
        %3378 = vmatprep.subr.bf16.mxu0 0
        %3379 = vmatpush2.bf16.msra.mxu0 0
        %3380 = vmatprep.subr.bf16.mxu0 0
        %3381 = vmatpush2.bf16.msra.mxu0 0
        %3382 = vmatprep.subr.bf16.mxu0 0
        %3383 = vmatpush2.bf16.msra.mxu0 0
        %3384 = vmatprep.subr.bf16.mxu0 0
        %3385 = vmatpush2.bf16.msra.mxu0 0
        %3386 = vmatprep.mubr.bf16.mxu0 0
        %3387 = vmatmul.mubr.bf16.gmra.mxu0 %v3274
        %v3388 = vpop.f32.mrf.mxu0
        %v3389 = vadd.f32 0.0, %v3388
        %v3390 = vpop.f32.mrf.mxu0
        %v3391 = vpop.f32.mrf.mxu0
        %v3392 = vadd.f32 0.0, %v3391
        %v3393 = vpop.f32.mrf.mxu0
        %3394 = vmatprep.mubr.bf16.mxu0 0
        %3395 = vmatmul.mubr.bf16.gmra.mxu0 %v3275
        %v3396 = vpop.f32.mrf.mxu0
        %v3397 = vadd.f32 0.0, %v3396
        %v3398 = vpop.f32.mrf.mxu0
        %v3399 = vpop.f32.mrf.mxu0
        %v3400 = vadd.f32 0.0, %v3399
        %v3401 = vpop.f32.mrf.mxu0
        %3402 = vmatprep.mubr.bf16.mxu0 0
        %3403 = vmatmul.mubr.bf16.gmra.mxu0 %v3276
        %v3404 = vpop.f32.mrf.mxu0
        %v3405 = vadd.f32 0.0, %v3404
        %v3406 = vpop.f32.mrf.mxu0
        %v3407 = vpop.f32.mrf.mxu0
        %v3408 = vadd.f32 0.0, %v3407
        %v3409 = vpop.f32.mrf.mxu0
        %3410 = vmatprep.mubr.bf16.mxu0 0
        %3411 = vmatmul.mubr.bf16.gmra.mxu0 %v3277
        %v3412 = vpop.f32.mrf.mxu0
        %v3413 = vadd.f32 0.0, %v3412
        %v3414 = vpop.f32.mrf.mxu0
        %v3415 = vpop.f32.mrf.mxu0
        %v3416 = vadd.f32 0.0, %v3415
        %v3417 = vpop.f32.mrf.mxu0
        %3418 = vmatprep.mubr.bf16.mxu0 0
        %3419 = vmatmul.mubr.bf16.gmra.mxu0 %v3278
        %v3420 = vpop.f32.mrf.mxu0
        %v3421 = vadd.f32 0.0, %v3420
        %v3422 = vpop.f32.mrf.mxu0
        %v3423 = vpop.f32.mrf.mxu0
        %v3424 = vadd.f32 0.0, %v3423
        %v3425 = vpop.f32.mrf.mxu0
        %3426 = vmatprep.mubr.bf16.mxu0 0
        %3427 = vmatmul.mubr.bf16.gmra.mxu0 %v3279
        %v3428 = vpop.f32.mrf.mxu0
        %v3429 = vadd.f32 0.0, %v3428
        %v3430 = vpop.f32.mrf.mxu0
        %v3431 = vpop.f32.mrf.mxu0
        %v3432 = vadd.f32 0.0, %v3431
        %v3433 = vpop.f32.mrf.mxu0
        %3434 = vmatprep.mubr.bf16.mxu0 0
        %3435 = vmatmul.mubr.bf16.gmra.mxu0 %v3280
        %v3436 = vpop.f32.mrf.mxu0
        %v3437 = vadd.f32 0.0, %v3436
        %v3438 = vpop.f32.mrf.mxu0
        %v3439 = vpop.f32.mrf.mxu0
        %v3440 = vadd.f32 0.0, %v3439
        %v3441 = vpop.f32.mrf.mxu0
        %3442 = vmatprep.mubr.bf16.mxu0 0
        %3443 = vmatmul.mubr.bf16.gmra.mxu0 %v3281
        %v3444 = vpop.f32.mrf.mxu0
        %v3445 = vadd.f32 0.0, %v3444
        %v3446 = vpop.f32.mrf.mxu0
        %v3447 = vpop.f32.mrf.mxu0
        %v3448 = vadd.f32 0.0, %v3447
        %v3449 = vpop.f32.mrf.mxu0
        %3450 = vmatprep.mubr.bf16.mxu0 0
        %3451 = vmatmul.mubr.bf16.gmra.mxu0 %v3282
        %v3452 = vpop.f32.mrf.mxu0
        %v3453 = vadd.f32 0.0, %v3452
        %v3454 = vpop.f32.mrf.mxu0
        %v3455 = vpop.f32.mrf.mxu0
        %v3456 = vadd.f32 0.0, %v3455
        %v3457 = vpop.f32.mrf.mxu0
        %3458 = vmatprep.mubr.bf16.mxu0 0
        %3459 = vmatmul.mubr.bf16.gmra.mxu0 %v3283
        %v3460 = vpop.f32.mrf.mxu0
        %v3461 = vadd.f32 0.0, %v3460
        %v3462 = vpop.f32.mrf.mxu0
        %v3463 = vpop.f32.mrf.mxu0
        %v3464 = vadd.f32 0.0, %v3463
        %v3465 = vpop.f32.mrf.mxu0
        %3466 = vmatprep.mubr.bf16.mxu0 0
        %3467 = vmatmul.mubr.bf16.gmra.mxu0 %v3284
        %v3468 = vpop.f32.mrf.mxu0
        %v3469 = vadd.f32 0.0, %v3468
        %v3470 = vpop.f32.mrf.mxu0
        %v3471 = vpop.f32.mrf.mxu0
        %v3472 = vadd.f32 0.0, %v3471
        %v3473 = vpop.f32.mrf.mxu0
        %3474 = vmatprep.mubr.bf16.mxu0 0
        %3475 = vmatmul.mubr.bf16.gmra.mxu0 %v3285
        %v3476 = vpop.f32.mrf.mxu0
        %v3477 = vadd.f32 0.0, %v3476
        %v3478 = vpop.f32.mrf.mxu0
        %v3479 = vpop.f32.mrf.mxu0
        %v3480 = vadd.f32 0.0, %v3479
        %v3481 = vpop.f32.mrf.mxu0
        %3482 = vmatprep.mubr.bf16.mxu0 0
        %3483 = vmatmul.mubr.bf16.gmra.mxu0 %v3286
        %v3484 = vpop.f32.mrf.mxu0
        %v3485 = vadd.f32 0.0, %v3484
        %v3486 = vpop.f32.mrf.mxu0
        %v3487 = vpop.f32.mrf.mxu0
        %v3488 = vadd.f32 0.0, %v3487
        %v3489 = vpop.f32.mrf.mxu0
        %3490 = vmatprep.mubr.bf16.mxu0 0
        %3491 = vmatmul.mubr.bf16.gmra.mxu0 %v3287
        %v3492 = vpop.f32.mrf.mxu0
        %v3493 = vadd.f32 0.0, %v3492
        %v3494 = vpop.f32.mrf.mxu0
        %v3495 = vpop.f32.mrf.mxu0
        %v3496 = vadd.f32 0.0, %v3495
        %v3497 = vpop.f32.mrf.mxu0
        %3498 = vmatprep.mubr.bf16.mxu0 0
        %3499 = vmatmul.mubr.bf16.gmra.mxu0 %v3288
        %v3500 = vpop.f32.mrf.mxu0
        %v3501 = vadd.f32 0.0, %v3500
        %v3502 = vpop.f32.mrf.mxu0
        %v3503 = vpop.f32.mrf.mxu0
        %v3504 = vadd.f32 0.0, %v3503
        %v3505 = vpop.f32.mrf.mxu0
        %3506 = vmatprep.mubr.bf16.mxu0 0
        %3507 = vmatmul.mubr.bf16.gmra.mxu0 %v3289
        %v3508 = vpop.f32.mrf.mxu0
        %v3509 = vadd.f32 0.0, %v3508
        %v3510 = vpop.f32.mrf.mxu0
        %v3511 = vpop.f32.mrf.mxu0
        %v3512 = vadd.f32 0.0, %v3511
        %v3513 = vpop.f32.mrf.mxu0
        %3514 = vdwg.mxu0
        %v3515 = vadd.f32 %v3161, %v3389
        %v3516 = vadd.f32 %v3162, %v3392
        %v3517 = vadd.f32 %v3163, %v3397
        %v3518 = vadd.f32 %v3164, %v3400
        %v3519 = vadd.f32 %v3165, %v3405
        %v3520 = vadd.f32 %v3166, %v3408
        %v3521 = vadd.f32 %v3167, %v3413
        %v3522 = vadd.f32 %v3168, %v3416
        %v3523 = vadd.f32 %v3169, %v3421
        %v3524 = vadd.f32 %v3170, %v3424
        %v3525 = vadd.f32 %v3171, %v3429
        %v3526 = vadd.f32 %v3172, %v3432
        %v3527 = vadd.f32 %v3173, %v3437
        %v3528 = vadd.f32 %v3174, %v3440
        %v3529 = vadd.f32 %v3175, %v3445
        %v3530 = vadd.f32 %v3176, %v3448
        %v3531 = vadd.f32 %v3177, %v3453
        %v3532 = vadd.f32 %v3178, %v3456
        %v3533 = vadd.f32 %v3179, %v3461
        %v3534 = vadd.f32 %v3180, %v3464
        %v3535 = vadd.f32 %v3181, %v3469
        %v3536 = vadd.f32 %v3182, %v3472
        %v3537 = vadd.f32 %v3183, %v3477
        %v3538 = vadd.f32 %v3184, %v3480
        %v3539 = vadd.f32 %v3185, %v3485
        %v3540 = vadd.f32 %v3186, %v3488
        %v3541 = vadd.f32 %v3187, %v3493
        %v3542 = vadd.f32 %v3188, %v3496
        %v3543 = vadd.f32 %v3189, %v3501
        %v3544 = vadd.f32 %v3190, %v3504
        %v3545 = vadd.f32 %v3191, %v3509
        %v3546 = vadd.f32 %v3192, %v3512
        %v3547 = vld [vmem:[%s296 + $0x4] sm:$0xf]
        %v3548 = vld [vmem:[%s296 + $0x8] sm:$0xf]
        %v3549 = vld [vmem:[%s296 + $0xc] sm:$0x1]
        %v3550 = vld [vmem:[%s296 + $0x14] sm:$0xf]
        %v3551 = vld [vmem:[%s296 + $0x18] sm:$0xf]
        %v3552 = vld [vmem:[%s296 + $0x1c] sm:$0x1]
        %v3553 = vld [vmem:[%s296 + $0x24] sm:$0xf]
        %v3554 = vld [vmem:[%s296 + $0x28] sm:$0xf]
        %v3555 = vld [vmem:[%s296 + $0x2c] sm:$0x1]
        %v3556 = vld [vmem:[%s296 + $0x34] sm:$0xf]
        %v3557 = vld [vmem:[%s296 + $0x38] sm:$0xf]
        %v3558 = vld [vmem:[%s296 + $0x3c] sm:$0x1]
        %v3559 = vld [vmem:[%s296 + $0x44] sm:$0xf]
        %v3560 = vld [vmem:[%s296 + $0x48] sm:$0xf]
        %v3561 = vld [vmem:[%s296 + $0x4c] sm:$0x1]
        %v3562 = vld [vmem:[%s296 + $0x54] sm:$0xf]
        %v3563 = vld [vmem:[%s296 + $0x58] sm:$0xf]
        %v3564 = vld [vmem:[%s296 + $0x5c] sm:$0x1]
        %v3565 = vld [vmem:[%s296 + $0x64] sm:$0xf]
        %v3566 = vld [vmem:[%s296 + $0x68] sm:$0xf]
        %v3567 = vld [vmem:[%s296 + $0x6c] sm:$0x1]
        %v3568 = vld [vmem:[%s296 + $0x74] sm:$0xf]
        %v3569 = vld [vmem:[%s296 + $0x78] sm:$0xf]
        %v3570 = vld [vmem:[%s296 + $0x7c] sm:$0x1]
        %v3571 = vld [vmem:[%s296 + $0x84] sm:$0xf]
        %v3572 = vld [vmem:[%s296 + $0x88] sm:$0xf]
        %v3573 = vld [vmem:[%s296 + $0x8c] sm:$0x1]
        %v3574 = vld [vmem:[%s296 + $0x94] sm:$0xf]
        %v3575 = vld [vmem:[%s296 + $0x98] sm:$0xf]
        %v3576 = vld [vmem:[%s296 + $0x9c] sm:$0x1]
        %v3577 = vld [vmem:[%s296 + $0xa4] sm:$0xf]
        %v3578 = vld [vmem:[%s296 + $0xa8] sm:$0xf]
        %v3579 = vld [vmem:[%s296 + $0xac] sm:$0x1]
        %v3580 = vld [vmem:[%s296 + $0xb4] sm:$0xf]
        %v3581 = vld [vmem:[%s296 + $0xb8] sm:$0xf]
        %v3582 = vld [vmem:[%s296 + $0xbc] sm:$0x1]
        %v3583 = vld [vmem:[%s296 + $0xc4] sm:$0xf]
        %v3584 = vld [vmem:[%s296 + $0xc8] sm:$0xf]
        %v3585 = vld [vmem:[%s296 + $0xcc] sm:$0x1]
        %v3586 = vld [vmem:[%s296 + $0xd4] sm:$0xf]
        %v3587 = vld [vmem:[%s296 + $0xd8] sm:$0xf]
        %v3588 = vld [vmem:[%s296 + $0xdc] sm:$0x1]
        %v3589 = vld [vmem:[%s296 + $0xe4] sm:$0xf]
        %v3590 = vld [vmem:[%s296 + $0xe8] sm:$0xf]
        %v3591 = vld [vmem:[%s296 + $0xec] sm:$0x1]
        %v3592 = vld [vmem:[%s296 + $0xf4] sm:$0xf]
        %v3593 = vld [vmem:[%s296 + $0xf8] sm:$0xf]
        %v3594 = vld [vmem:[%s296 + $0xfc] sm:$0x1]
        %v3596 = vshrl.u32 %v3547, 16
        %v3598 = vrot.slane %v3596, 4
        %v3599 = vshll.u32 %v3547, 16
        %v3601 = vrot.slane %v3599, 5
        %v3602 = vor.u32 %v3598, %v3601
        %v3603 = vrot.slane %v3602, 4
        %v3605 = vshll.u32 %v3548, 16
        %v3607 = vrot.slane %v3605, 5
        %v3608 = vsel %vm1764, %v3603, %v3607
        %v3609 = vshrl.u32 %v3548, 16
        %v3611 = vrot.slane %v3609, 4
        %v3612 = vor.u32 %v3611, %v3607
        %v3613 = vrot.slane %v3612, 4
        %v3615 = vshll.u32 %v3549, 16
        %v3617 = vrot.slane %v3615, 5
        %v3618 = vsel %vm1764, %v3613, %v3617
        %v3620 = vshrl.u32 %v3550, 16
        %v3622 = vrot.slane %v3620, 4
        %v3623 = vshll.u32 %v3550, 16
        %v3625 = vrot.slane %v3623, 5
        %v3626 = vor.u32 %v3622, %v3625
        %v3627 = vrot.slane %v3626, 4
        %v3629 = vshll.u32 %v3551, 16
        %v3631 = vrot.slane %v3629, 5
        %v3632 = vsel %vm1764, %v3627, %v3631
        %v3633 = vshrl.u32 %v3551, 16
        %v3635 = vrot.slane %v3633, 4
        %v3636 = vor.u32 %v3635, %v3631
        %v3637 = vrot.slane %v3636, 4
        %v3639 = vshll.u32 %v3552, 16
        %v3641 = vrot.slane %v3639, 5
        %v3642 = vsel %vm1764, %v3637, %v3641
        %v3644 = vshrl.u32 %v3553, 16
        %v3646 = vrot.slane %v3644, 4
        %v3647 = vshll.u32 %v3553, 16
        %v3649 = vrot.slane %v3647, 5
        %v3650 = vor.u32 %v3646, %v3649
        %v3651 = vrot.slane %v3650, 4
        %v3653 = vshll.u32 %v3554, 16
        %v3655 = vrot.slane %v3653, 5
        %v3656 = vsel %vm1764, %v3651, %v3655
        %v3657 = vshrl.u32 %v3554, 16
        %v3659 = vrot.slane %v3657, 4
        %v3660 = vor.u32 %v3659, %v3655
        %v3661 = vrot.slane %v3660, 4
        %v3663 = vshll.u32 %v3555, 16
        %v3665 = vrot.slane %v3663, 5
        %v3666 = vsel %vm1764, %v3661, %v3665
        %v3668 = vshrl.u32 %v3556, 16
        %v3670 = vrot.slane %v3668, 4
        %v3671 = vshll.u32 %v3556, 16
        %v3673 = vrot.slane %v3671, 5
        %v3674 = vor.u32 %v3670, %v3673
        %v3675 = vrot.slane %v3674, 4
        %v3677 = vshll.u32 %v3557, 16
        %v3679 = vrot.slane %v3677, 5
        %v3680 = vsel %vm1764, %v3675, %v3679
        %v3681 = vshrl.u32 %v3557, 16
        %v3683 = vrot.slane %v3681, 4
        %v3684 = vor.u32 %v3683, %v3679
        %v3685 = vrot.slane %v3684, 4
        %v3687 = vshll.u32 %v3558, 16
        %v3689 = vrot.slane %v3687, 5
        %v3690 = vsel %vm1764, %v3685, %v3689
        %v3692 = vshrl.u32 %v3559, 16
        %v3694 = vrot.slane %v3692, 4
        %v3695 = vshll.u32 %v3559, 16
        %v3697 = vrot.slane %v3695, 5
        %v3698 = vor.u32 %v3694, %v3697
        %v3699 = vrot.slane %v3698, 4
        %v3701 = vshll.u32 %v3560, 16
        %v3703 = vrot.slane %v3701, 5
        %v3704 = vsel %vm1764, %v3699, %v3703
        %v3705 = vshrl.u32 %v3560, 16
        %v3707 = vrot.slane %v3705, 4
        %v3708 = vor.u32 %v3707, %v3703
        %v3709 = vrot.slane %v3708, 4
        %v3711 = vshll.u32 %v3561, 16
        %v3713 = vrot.slane %v3711, 5
        %v3714 = vsel %vm1764, %v3709, %v3713
        %v3716 = vshrl.u32 %v3562, 16
        %v3718 = vrot.slane %v3716, 4
        %v3719 = vshll.u32 %v3562, 16
        %v3721 = vrot.slane %v3719, 5
        %v3722 = vor.u32 %v3718, %v3721
        %v3723 = vrot.slane %v3722, 4
        %v3725 = vshll.u32 %v3563, 16
        %v3727 = vrot.slane %v3725, 5
        %v3728 = vsel %vm1764, %v3723, %v3727
        %v3729 = vshrl.u32 %v3563, 16
        %v3731 = vrot.slane %v3729, 4
        %v3732 = vor.u32 %v3731, %v3727
        %v3733 = vrot.slane %v3732, 4
        %v3735 = vshll.u32 %v3564, 16
        %v3737 = vrot.slane %v3735, 5
        %v3738 = vsel %vm1764, %v3733, %v3737
        %v3740 = vshrl.u32 %v3565, 16
        %v3742 = vrot.slane %v3740, 4
        %v3743 = vshll.u32 %v3565, 16
        %v3745 = vrot.slane %v3743, 5
        %v3746 = vor.u32 %v3742, %v3745
        %v3747 = vrot.slane %v3746, 4
        %v3749 = vshll.u32 %v3566, 16
        %v3751 = vrot.slane %v3749, 5
        %v3752 = vsel %vm1764, %v3747, %v3751
        %v3753 = vshrl.u32 %v3566, 16
        %v3755 = vrot.slane %v3753, 4
        %v3756 = vor.u32 %v3755, %v3751
        %v3757 = vrot.slane %v3756, 4
        %v3759 = vshll.u32 %v3567, 16
        %v3761 = vrot.slane %v3759, 5
        %v3762 = vsel %vm1764, %v3757, %v3761
        %v3764 = vshrl.u32 %v3568, 16
        %v3766 = vrot.slane %v3764, 4
        %v3767 = vshll.u32 %v3568, 16
        %v3769 = vrot.slane %v3767, 5
        %v3770 = vor.u32 %v3766, %v3769
        %v3771 = vrot.slane %v3770, 4
        %v3773 = vshll.u32 %v3569, 16
        %v3775 = vrot.slane %v3773, 5
        %v3776 = vsel %vm1764, %v3771, %v3775
        %v3777 = vshrl.u32 %v3569, 16
        %v3779 = vrot.slane %v3777, 4
        %v3780 = vor.u32 %v3779, %v3775
        %v3781 = vrot.slane %v3780, 4
        %v3783 = vshll.u32 %v3570, 16
        %v3785 = vrot.slane %v3783, 5
        %v3786 = vsel %vm1764, %v3781, %v3785
        %v3788 = vshrl.u32 %v3571, 16
        %v3790 = vrot.slane %v3788, 4
        %v3791 = vshll.u32 %v3571, 16
        %v3793 = vrot.slane %v3791, 5
        %v3794 = vor.u32 %v3790, %v3793
        %v3795 = vrot.slane %v3794, 4
        %v3797 = vshll.u32 %v3572, 16
        %v3799 = vrot.slane %v3797, 5
        %v3800 = vsel %vm1764, %v3795, %v3799
        %v3801 = vshrl.u32 %v3572, 16
        %v3803 = vrot.slane %v3801, 4
        %v3804 = vor.u32 %v3803, %v3799
        %v3805 = vrot.slane %v3804, 4
        %v3807 = vshll.u32 %v3573, 16
        %v3809 = vrot.slane %v3807, 5
        %v3810 = vsel %vm1764, %v3805, %v3809
        %v3812 = vshrl.u32 %v3574, 16
        %v3814 = vrot.slane %v3812, 4
        %v3815 = vshll.u32 %v3574, 16
        %v3817 = vrot.slane %v3815, 5
        %v3818 = vor.u32 %v3814, %v3817
        %v3819 = vrot.slane %v3818, 4
        %v3821 = vshll.u32 %v3575, 16
        %v3823 = vrot.slane %v3821, 5
        %v3824 = vsel %vm1764, %v3819, %v3823
        %v3825 = vshrl.u32 %v3575, 16
        %v3827 = vrot.slane %v3825, 4
        %v3828 = vor.u32 %v3827, %v3823
        %v3829 = vrot.slane %v3828, 4
        %v3831 = vshll.u32 %v3576, 16
        %v3833 = vrot.slane %v3831, 5
        %v3834 = vsel %vm1764, %v3829, %v3833
        %v3836 = vshrl.u32 %v3577, 16
        %v3838 = vrot.slane %v3836, 4
        %v3839 = vshll.u32 %v3577, 16
        %v3841 = vrot.slane %v3839, 5
        %v3842 = vor.u32 %v3838, %v3841
        %v3843 = vrot.slane %v3842, 4
        %v3845 = vshll.u32 %v3578, 16
        %v3847 = vrot.slane %v3845, 5
        %v3848 = vsel %vm1764, %v3843, %v3847
        %v3849 = vshrl.u32 %v3578, 16
        %v3851 = vrot.slane %v3849, 4
        %v3852 = vor.u32 %v3851, %v3847
        %v3853 = vrot.slane %v3852, 4
        %v3855 = vshll.u32 %v3579, 16
        %v3857 = vrot.slane %v3855, 5
        %v3858 = vsel %vm1764, %v3853, %v3857
        %v3860 = vshrl.u32 %v3580, 16
        %v3862 = vrot.slane %v3860, 4
        %v3863 = vshll.u32 %v3580, 16
        %v3865 = vrot.slane %v3863, 5
        %v3866 = vor.u32 %v3862, %v3865
        %v3867 = vrot.slane %v3866, 4
        %v3869 = vshll.u32 %v3581, 16
        %v3871 = vrot.slane %v3869, 5
        %v3872 = vsel %vm1764, %v3867, %v3871
        %v3873 = vshrl.u32 %v3581, 16
        %v3875 = vrot.slane %v3873, 4
        %v3876 = vor.u32 %v3875, %v3871
        %v3877 = vrot.slane %v3876, 4
        %v3879 = vshll.u32 %v3582, 16
        %v3881 = vrot.slane %v3879, 5
        %v3882 = vsel %vm1764, %v3877, %v3881
        %v3884 = vshrl.u32 %v3583, 16
        %v3886 = vrot.slane %v3884, 4
        %v3887 = vshll.u32 %v3583, 16
        %v3889 = vrot.slane %v3887, 5
        %v3890 = vor.u32 %v3886, %v3889
        %v3891 = vrot.slane %v3890, 4
        %v3893 = vshll.u32 %v3584, 16
        %v3895 = vrot.slane %v3893, 5
        %v3896 = vsel %vm1764, %v3891, %v3895
        %v3897 = vshrl.u32 %v3584, 16
        %v3899 = vrot.slane %v3897, 4
        %v3900 = vor.u32 %v3899, %v3895
        %v3901 = vrot.slane %v3900, 4
        %v3903 = vshll.u32 %v3585, 16
        %v3905 = vrot.slane %v3903, 5
        %v3906 = vsel %vm1764, %v3901, %v3905
        %v3908 = vshrl.u32 %v3586, 16
        %v3910 = vrot.slane %v3908, 4
        %v3911 = vshll.u32 %v3586, 16
        %v3913 = vrot.slane %v3911, 5
        %v3914 = vor.u32 %v3910, %v3913
        %v3915 = vrot.slane %v3914, 4
        %v3917 = vshll.u32 %v3587, 16
        %v3919 = vrot.slane %v3917, 5
        %v3920 = vsel %vm1764, %v3915, %v3919
        %v3921 = vshrl.u32 %v3587, 16
        %v3923 = vrot.slane %v3921, 4
        %v3924 = vor.u32 %v3923, %v3919
        %v3925 = vrot.slane %v3924, 4
        %v3927 = vshll.u32 %v3588, 16
        %v3929 = vrot.slane %v3927, 5
        %v3930 = vsel %vm1764, %v3925, %v3929
        %v3932 = vshrl.u32 %v3589, 16
        %v3934 = vrot.slane %v3932, 4
        %v3935 = vshll.u32 %v3589, 16
        %v3937 = vrot.slane %v3935, 5
        %v3938 = vor.u32 %v3934, %v3937
        %v3939 = vrot.slane %v3938, 4
        %v3941 = vshll.u32 %v3590, 16
        %v3943 = vrot.slane %v3941, 5
        %v3944 = vsel %vm1764, %v3939, %v3943
        %v3945 = vshrl.u32 %v3590, 16
        %v3947 = vrot.slane %v3945, 4
        %v3948 = vor.u32 %v3947, %v3943
        %v3949 = vrot.slane %v3948, 4
        %v3951 = vshll.u32 %v3591, 16
        %v3953 = vrot.slane %v3951, 5
        %v3954 = vsel %vm1764, %v3949, %v3953
        %v3956 = vshrl.u32 %v3592, 16
        %v3958 = vrot.slane %v3956, 4
        %v3959 = vshll.u32 %v3592, 16
        %v3961 = vrot.slane %v3959, 5
        %v3962 = vor.u32 %v3958, %v3961
        %v3963 = vrot.slane %v3962, 4
        %v3965 = vshll.u32 %v3593, 16
        %v3967 = vrot.slane %v3965, 5
        %v3968 = vsel %vm1764, %v3963, %v3967
        %v3969 = vshrl.u32 %v3593, 16
        %v3971 = vrot.slane %v3969, 4
        %v3972 = vor.u32 %v3971, %v3967
        %v3973 = vrot.slane %v3972, 4
        %v3975 = vshll.u32 %v3594, 16
        %v3977 = vrot.slane %v3975, 5
        %v3978 = vsel %vm1764, %v3973, %v3977
        %s3979 = scalar_lea.vmem [#allocation7], 320
        %v3980 = vld [vmem:[%s3979] sm:$0xf]
        %v3981 = vld [vmem:[%s3979 + $0x4] sm:$0xf]
        %v3982 = vld [vmem:[%s3979 + $0x8] sm:$0xf]
        %v3983 = vld [vmem:[%s3979 + $0xc] sm:$0xf]
        %v3984 = vld [vmem:[%s3979 + $0x10] sm:$0xf]
        %v3985 = vld [vmem:[%s3979 + $0x14] sm:$0xf]
        %v3986 = vld [vmem:[%s3979 + $0x18] sm:$0xf]
        %v3987 = vld [vmem:[%s3979 + $0x1c] sm:$0xf]
        %v3988 = vld [vmem:[%s3979 + $0x20] sm:$0xf]
        %v3989 = vld [vmem:[%s3979 + $0x24] sm:$0xf]
        %v3990 = vld [vmem:[%s3979 + $0x28] sm:$0xf]
        %v3991 = vld [vmem:[%s3979 + $0x2c] sm:$0xf]
        %v3992 = vld [vmem:[%s3979 + $0x30] sm:$0xf]
        %v3993 = vld [vmem:[%s3979 + $0x34] sm:$0xf]
        %v3994 = vld [vmem:[%s3979 + $0x38] sm:$0xf]
        %v3995 = vld [vmem:[%s3979 + $0x3c] sm:$0xf]
        %v3996 = vunpack.c.l.b16 %v3608
        %v3997 = vunpack.c.l.b16 %v3618
        %v3998 = vunpack.c.l.b16 %v3632
        %v3999 = vunpack.c.l.b16 %v3642
        %v4000 = vunpack.c.l.b16 %v3656
        %v4001 = vunpack.c.l.b16 %v3666
        %v4002 = vunpack.c.l.b16 %v3680
        %v4003 = vunpack.c.l.b16 %v3690
        %v4004 = vunpack.c.l.b16 %v3704
        %v4005 = vunpack.c.l.b16 %v3714
        %v4006 = vunpack.c.l.b16 %v3728
        %v4007 = vunpack.c.l.b16 %v3738
        %v4008 = vunpack.c.l.b16 %v3752
        %v4009 = vunpack.c.l.b16 %v3762
        %v4010 = vunpack.c.l.b16 %v3776
        %v4011 = vunpack.c.l.b16 %v3786
        %v4012 = vunpack.c.l.b16 %v3800
        %v4013 = vunpack.c.l.b16 %v3810
        %v4014 = vunpack.c.l.b16 %v3824
        %v4015 = vunpack.c.l.b16 %v3834
        %v4016 = vunpack.c.l.b16 %v3848
        %v4017 = vunpack.c.l.b16 %v3858
        %v4018 = vunpack.c.l.b16 %v3872
        %v4019 = vunpack.c.l.b16 %v3882
        %v4020 = vunpack.c.l.b16 %v3896
        %v4021 = vunpack.c.l.b16 %v3906
        %v4022 = vunpack.c.l.b16 %v3920
        %v4023 = vunpack.c.l.b16 %v3930
        %v4024 = vunpack.c.l.b16 %v3944
        %v4025 = vunpack.c.l.b16 %v3954
        %v4026 = vunpack.c.l.b16 %v3968
        %v4027 = vunpack.c.l.b16 %v3978
        %v4028 = vpack.c.b16 %v3997, %v3996
        %v4029 = vpack.c.b16 %v3999, %v3998
        %v4030 = vpack.c.b16 %v4001, %v4000
        %v4031 = vpack.c.b16 %v4003, %v4002
        %v4032 = vpack.c.b16 %v4005, %v4004
        %v4033 = vpack.c.b16 %v4007, %v4006
        %v4034 = vpack.c.b16 %v4009, %v4008
        %v4035 = vpack.c.b16 %v4011, %v4010
        %v4036 = vpack.c.b16 %v4013, %v4012
        %v4037 = vpack.c.b16 %v4015, %v4014
        %v4038 = vpack.c.b16 %v4017, %v4016
        %v4039 = vpack.c.b16 %v4019, %v4018
        %v4040 = vpack.c.b16 %v4021, %v4020
        %v4041 = vpack.c.b16 %v4023, %v4022
        %v4042 = vpack.c.b16 %v4025, %v4024
        %v4043 = vpack.c.b16 %v4027, %v4026
        %v4076 = vunpack.c.l.b16 %v3980
        %v4077 = vunpack.c.l.b16 %v3981
        %v4078 = vunpack.c.l.b16 %v3982
        %v4079 = vunpack.c.l.b16 %v3983
        %v4080 = vunpack.c.l.b16 %v3984
        %v4081 = vunpack.c.l.b16 %v3985
        %v4082 = vunpack.c.l.b16 %v3986
        %v4083 = vunpack.c.l.b16 %v3987
        %v4084 = vunpack.c.l.b16 %v3988
        %v4085 = vunpack.c.l.b16 %v3989
        %v4086 = vunpack.c.l.b16 %v3990
        %v4087 = vunpack.c.l.b16 %v3991
        %v4088 = vunpack.c.l.b16 %v3992
        %v4089 = vunpack.c.l.b16 %v3993
        %v4090 = vunpack.c.l.b16 %v3994
        %v4091 = vunpack.c.l.b16 %v3995
        %v4092 = vpack.c.b16 %v4077, %v4076
        %v4093 = vpack.c.b16 %v4079, %v4078
        %v4094 = vpack.c.b16 %v4081, %v4080
        %v4095 = vpack.c.b16 %v4083, %v4082
        %v4096 = vpack.c.b16 %v4085, %v4084
        %v4097 = vpack.c.b16 %v4087, %v4086
        %v4098 = vpack.c.b16 %v4089, %v4088
        %v4099 = vpack.c.b16 %v4091, %v4090
        %4108 = vmatprep.subr.bf16.mxu0 0
        %4109 = vmatpush1.bf16.msra.mxu0 %v4099
        %4110 = vmatprep.subr.bf16.mxu0 0
        %4111 = vmatpush1.bf16.msra.mxu0 %v4098
        %4112 = vmatprep.subr.bf16.mxu0 0
        %4113 = vmatpush1.bf16.msra.mxu0 %v4097
        %4114 = vmatprep.subr.bf16.mxu0 0
        %4115 = vmatpush1.bf16.msra.mxu0 %v4096
        %4116 = vmatprep.subr.bf16.mxu0 0
        %4117 = vmatpush1.bf16.msra.mxu0 %v4095
        %4118 = vmatprep.subr.bf16.mxu0 0
        %4119 = vmatpush1.bf16.msra.mxu0 %v4094
        %4120 = vmatprep.subr.bf16.mxu0 0
        %4121 = vmatpush1.bf16.msra.mxu0 %v4093
        %4122 = vmatprep.subr.bf16.mxu0 0
        %4123 = vmatpush1.bf16.msra.mxu0 %v4092
        %4124 = vmatprep.subr.bf16.mxu0 0
        %4125 = vmatpush2.bf16.msra.mxu0 0
        %4126 = vmatprep.subr.bf16.mxu0 0
        %4127 = vmatpush2.bf16.msra.mxu0 0
        %4128 = vmatprep.subr.bf16.mxu0 0
        %4129 = vmatpush2.bf16.msra.mxu0 0
        %4130 = vmatprep.subr.bf16.mxu0 0
        %4131 = vmatpush2.bf16.msra.mxu0 0
        %4132 = vmatprep.subr.bf16.mxu0 0
        %4133 = vmatpush2.bf16.msra.mxu0 0
        %4134 = vmatprep.subr.bf16.mxu0 0
        %4135 = vmatpush2.bf16.msra.mxu0 0
        %4136 = vmatprep.subr.bf16.mxu0 0
        %4137 = vmatpush2.bf16.msra.mxu0 0
        %4138 = vmatprep.subr.bf16.mxu0 0
        %4139 = vmatpush2.bf16.msra.mxu0 0
        %4140 = vmatprep.mubr.bf16.mxu0 0
        %4141 = vmatmul.mubr.bf16.gmra.mxu0 %v4028
        %v4142 = vpop.f32.mrf.mxu0
        %v4143 = vadd.f32 0.0, %v4142
        %v4144 = vpop.f32.mrf.mxu0
        %v4145 = vpop.f32.mrf.mxu0
        %v4146 = vadd.f32 0.0, %v4145
        %v4147 = vpop.f32.mrf.mxu0
        %4148 = vmatprep.mubr.bf16.mxu0 0
        %4149 = vmatmul.mubr.bf16.gmra.mxu0 %v4029
        %v4150 = vpop.f32.mrf.mxu0
        %v4151 = vadd.f32 0.0, %v4150
        %v4152 = vpop.f32.mrf.mxu0
        %v4153 = vpop.f32.mrf.mxu0
        %v4154 = vadd.f32 0.0, %v4153
        %v4155 = vpop.f32.mrf.mxu0
        %4156 = vmatprep.mubr.bf16.mxu0 0
        %4157 = vmatmul.mubr.bf16.gmra.mxu0 %v4030
        %v4158 = vpop.f32.mrf.mxu0
        %v4159 = vadd.f32 0.0, %v4158
        %v4160 = vpop.f32.mrf.mxu0
        %v4161 = vpop.f32.mrf.mxu0
        %v4162 = vadd.f32 0.0, %v4161
        %v4163 = vpop.f32.mrf.mxu0
        %4164 = vmatprep.mubr.bf16.mxu0 0
        %4165 = vmatmul.mubr.bf16.gmra.mxu0 %v4031
        %v4166 = vpop.f32.mrf.mxu0
        %v4167 = vadd.f32 0.0, %v4166
        %v4168 = vpop.f32.mrf.mxu0
        %v4169 = vpop.f32.mrf.mxu0
        %v4170 = vadd.f32 0.0, %v4169
        %v4171 = vpop.f32.mrf.mxu0
        %4172 = vmatprep.mubr.bf16.mxu0 0
        %4173 = vmatmul.mubr.bf16.gmra.mxu0 %v4032
        %v4174 = vpop.f32.mrf.mxu0
        %v4175 = vadd.f32 0.0, %v4174
        %v4176 = vpop.f32.mrf.mxu0
        %v4177 = vpop.f32.mrf.mxu0
        %v4178 = vadd.f32 0.0, %v4177
        %v4179 = vpop.f32.mrf.mxu0
        %4180 = vmatprep.mubr.bf16.mxu0 0
        %4181 = vmatmul.mubr.bf16.gmra.mxu0 %v4033
        %v4182 = vpop.f32.mrf.mxu0
        %v4183 = vadd.f32 0.0, %v4182
        %v4184 = vpop.f32.mrf.mxu0
        %v4185 = vpop.f32.mrf.mxu0
        %v4186 = vadd.f32 0.0, %v4185
        %v4187 = vpop.f32.mrf.mxu0
        %4188 = vmatprep.mubr.bf16.mxu0 0
        %4189 = vmatmul.mubr.bf16.gmra.mxu0 %v4034
        %v4190 = vpop.f32.mrf.mxu0
        %v4191 = vadd.f32 0.0, %v4190
        %v4192 = vpop.f32.mrf.mxu0
        %v4193 = vpop.f32.mrf.mxu0
        %v4194 = vadd.f32 0.0, %v4193
        %v4195 = vpop.f32.mrf.mxu0
        %4196 = vmatprep.mubr.bf16.mxu0 0
        %4197 = vmatmul.mubr.bf16.gmra.mxu0 %v4035
        %v4198 = vpop.f32.mrf.mxu0
        %v4199 = vadd.f32 0.0, %v4198
        %v4200 = vpop.f32.mrf.mxu0
        %v4201 = vpop.f32.mrf.mxu0
        %v4202 = vadd.f32 0.0, %v4201
        %v4203 = vpop.f32.mrf.mxu0
        %4204 = vmatprep.mubr.bf16.mxu0 0
        %4205 = vmatmul.mubr.bf16.gmra.mxu0 %v4036
        %v4206 = vpop.f32.mrf.mxu0
        %v4207 = vadd.f32 0.0, %v4206
        %v4208 = vpop.f32.mrf.mxu0
        %v4209 = vpop.f32.mrf.mxu0
        %v4210 = vadd.f32 0.0, %v4209
        %v4211 = vpop.f32.mrf.mxu0
        %4212 = vmatprep.mubr.bf16.mxu0 0
        %4213 = vmatmul.mubr.bf16.gmra.mxu0 %v4037
        %v4214 = vpop.f32.mrf.mxu0
        %v4215 = vadd.f32 0.0, %v4214
        %v4216 = vpop.f32.mrf.mxu0
        %v4217 = vpop.f32.mrf.mxu0
        %v4218 = vadd.f32 0.0, %v4217
        %v4219 = vpop.f32.mrf.mxu0
        %4220 = vmatprep.mubr.bf16.mxu0 0
        %4221 = vmatmul.mubr.bf16.gmra.mxu0 %v4038
        %v4222 = vpop.f32.mrf.mxu0
        %v4223 = vadd.f32 0.0, %v4222
        %v4224 = vpop.f32.mrf.mxu0
        %v4225 = vpop.f32.mrf.mxu0
        %v4226 = vadd.f32 0.0, %v4225
        %v4227 = vpop.f32.mrf.mxu0
        %4228 = vmatprep.mubr.bf16.mxu0 0
        %4229 = vmatmul.mubr.bf16.gmra.mxu0 %v4039
        %v4230 = vpop.f32.mrf.mxu0
        %v4231 = vadd.f32 0.0, %v4230
        %v4232 = vpop.f32.mrf.mxu0
        %v4233 = vpop.f32.mrf.mxu0
        %v4234 = vadd.f32 0.0, %v4233
        %v4235 = vpop.f32.mrf.mxu0
        %4236 = vmatprep.mubr.bf16.mxu0 0
        %4237 = vmatmul.mubr.bf16.gmra.mxu0 %v4040
        %v4238 = vpop.f32.mrf.mxu0
        %v4239 = vadd.f32 0.0, %v4238
        %v4240 = vpop.f32.mrf.mxu0
        %v4241 = vpop.f32.mrf.mxu0
        %v4242 = vadd.f32 0.0, %v4241
        %v4243 = vpop.f32.mrf.mxu0
        %4244 = vmatprep.mubr.bf16.mxu0 0
        %4245 = vmatmul.mubr.bf16.gmra.mxu0 %v4041
        %v4246 = vpop.f32.mrf.mxu0
        %v4247 = vadd.f32 0.0, %v4246
        %v4248 = vpop.f32.mrf.mxu0
        %v4249 = vpop.f32.mrf.mxu0
        %v4250 = vadd.f32 0.0, %v4249
        %v4251 = vpop.f32.mrf.mxu0
        %4252 = vmatprep.mubr.bf16.mxu0 0
        %4253 = vmatmul.mubr.bf16.gmra.mxu0 %v4042
        %v4254 = vpop.f32.mrf.mxu0
        %v4255 = vadd.f32 0.0, %v4254
        %v4256 = vpop.f32.mrf.mxu0
        %v4257 = vpop.f32.mrf.mxu0
        %v4258 = vadd.f32 0.0, %v4257
        %v4259 = vpop.f32.mrf.mxu0
        %4260 = vmatprep.mubr.bf16.mxu0 0
        %4261 = vmatmul.mubr.bf16.gmra.mxu0 %v4043
        %v4262 = vpop.f32.mrf.mxu0
        %v4263 = vadd.f32 0.0, %v4262
        %v4264 = vpop.f32.mrf.mxu0
        %v4265 = vpop.f32.mrf.mxu0
        %v4266 = vadd.f32 0.0, %v4265
        %v4267 = vpop.f32.mrf.mxu0
        %4268 = vdwg.mxu0
        %v4269 = vadd.f32 %v3515, %v4143
        %v4270 = vadd.f32 %v3516, %v4146
        %v4271 = vadd.f32 %v3517, %v4151
        %v4272 = vadd.f32 %v3518, %v4154
        %v4273 = vadd.f32 %v3519, %v4159
        %v4274 = vadd.f32 %v3520, %v4162
        %v4275 = vadd.f32 %v3521, %v4167
        %v4276 = vadd.f32 %v3522, %v4170
        %v4277 = vadd.f32 %v3523, %v4175
        %v4278 = vadd.f32 %v3524, %v4178
        %v4279 = vadd.f32 %v3525, %v4183
        %v4280 = vadd.f32 %v3526, %v4186
        %v4281 = vadd.f32 %v3527, %v4191
        %v4282 = vadd.f32 %v3528, %v4194
        %v4283 = vadd.f32 %v3529, %v4199
        %v4284 = vadd.f32 %v3530, %v4202
        %v4285 = vadd.f32 %v3531, %v4207
        %v4286 = vadd.f32 %v3532, %v4210
        %v4287 = vadd.f32 %v3533, %v4215
        %v4288 = vadd.f32 %v3534, %v4218
        %v4289 = vadd.f32 %v3535, %v4223
        %v4290 = vadd.f32 %v3536, %v4226
        %v4291 = vadd.f32 %v3537, %v4231
        %v4292 = vadd.f32 %v3538, %v4234
        %v4293 = vadd.f32 %v3539, %v4239
        %v4294 = vadd.f32 %v3540, %v4242
        %v4295 = vadd.f32 %v3541, %v4247
        %v4296 = vadd.f32 %v3542, %v4250
        %v4297 = vadd.f32 %v3543, %v4255
        %v4298 = vadd.f32 %v3544, %v4258
        %v4299 = vadd.f32 %v3545, %v4263
        %v4300 = vadd.f32 %v3546, %v4266
        %s4301 = scalar_lea.vmem [#allocation2], 32
        %v4302 = vld [vmem:[%s4301] sm:$0x8]
        %v4303 = vld [vmem:[%s4301 + $0x4] sm:$0xf]
        %v4304 = vld [vmem:[%s4301 + $0x8] sm:$0xf]
        %v4305 = vld [vmem:[%s4301 + $0x10] sm:$0x8]
        %v4306 = vld [vmem:[%s4301 + $0x14] sm:$0xf]
        %v4307 = vld [vmem:[%s4301 + $0x18] sm:$0xf]
        %v4308 = vld [vmem:[%s4301 + $0x20] sm:$0x8]
        %v4309 = vld [vmem:[%s4301 + $0x24] sm:$0xf]
        %v4310 = vld [vmem:[%s4301 + $0x28] sm:$0xf]
        %v4311 = vld [vmem:[%s4301 + $0x30] sm:$0x8]
        %v4312 = vld [vmem:[%s4301 + $0x34] sm:$0xf]
        %v4313 = vld [vmem:[%s4301 + $0x38] sm:$0xf]
        %v4314 = vld [vmem:[%s4301 + $0x40] sm:$0x8]
        %v4315 = vld [vmem:[%s4301 + $0x44] sm:$0xf]
        %v4316 = vld [vmem:[%s4301 + $0x48] sm:$0xf]
        %v4317 = vld [vmem:[%s4301 + $0x50] sm:$0x8]
        %v4318 = vld [vmem:[%s4301 + $0x54] sm:$0xf]
        %v4319 = vld [vmem:[%s4301 + $0x58] sm:$0xf]
        %v4320 = vld [vmem:[%s4301 + $0x60] sm:$0x8]
        %v4321 = vld [vmem:[%s4301 + $0x64] sm:$0xf]
        %v4322 = vld [vmem:[%s4301 + $0x68] sm:$0xf]
        %v4323 = vld [vmem:[%s4301 + $0x70] sm:$0x8]
        %v4324 = vld [vmem:[%s4301 + $0x74] sm:$0xf]
        %v4325 = vld [vmem:[%s4301 + $0x78] sm:$0xf]
        %v4326 = vld [vmem:[%s4301 + $0x80] sm:$0x8]
        %v4327 = vld [vmem:[%s4301 + $0x84] sm:$0xf]
        %v4328 = vld [vmem:[%s4301 + $0x88] sm:$0xf]
        %v4329 = vld [vmem:[%s4301 + $0x90] sm:$0x8]
        %v4330 = vld [vmem:[%s4301 + $0x94] sm:$0xf]
        %v4331 = vld [vmem:[%s4301 + $0x98] sm:$0xf]
        %v4332 = vld [vmem:[%s4301 + $0xa0] sm:$0x8]
        %v4333 = vld [vmem:[%s4301 + $0xa4] sm:$0xf]
        %v4334 = vld [vmem:[%s4301 + $0xa8] sm:$0xf]
        %v4335 = vld [vmem:[%s4301 + $0xb0] sm:$0x8]
        %v4336 = vld [vmem:[%s4301 + $0xb4] sm:$0xf]
        %v4337 = vld [vmem:[%s4301 + $0xb8] sm:$0xf]
        %v4338 = vld [vmem:[%s4301 + $0xc0] sm:$0x8]
        %v4339 = vld [vmem:[%s4301 + $0xc4] sm:$0xf]
        %v4340 = vld [vmem:[%s4301 + $0xc8] sm:$0xf]
        %v4341 = vld [vmem:[%s4301 + $0xd0] sm:$0x8]
        %v4342 = vld [vmem:[%s4301 + $0xd4] sm:$0xf]
        %v4343 = vld [vmem:[%s4301 + $0xd8] sm:$0xf]
        %v4344 = vld [vmem:[%s4301 + $0xe0] sm:$0x8]
        %v4345 = vld [vmem:[%s4301 + $0xe4] sm:$0xf]
        %v4346 = vld [vmem:[%s4301 + $0xe8] sm:$0xf]
        %v4347 = vld [vmem:[%s4301 + $0xf0] sm:$0x8]
        %v4348 = vld [vmem:[%s4301 + $0xf4] sm:$0xf]
        %v4349 = vld [vmem:[%s4301 + $0xf8] sm:$0xf]
        %v4351 = vshrl.u32 %v4302, 16
        %v4353 = vrot.slane %v4351, 7
        %v4354 = vrot.slane %v4353, 4
        %v4356 = vshrl.u32 %v4303, 16
        %v4358 = vrot.slane %v4356, 7
        %v4359 = vshll.u32 %v4303, 16
        %v4361 = vor.u32 %v4358, %v4359
        %v4362 = vsel %vm750, %v4354, %v4361
        %v4363 = vrot.slane %v4358, 4
        %v4365 = vshrl.u32 %v4304, 16
        %v4367 = vrot.slane %v4365, 7
        %v4368 = vshll.u32 %v4304, 16
        %v4370 = vor.u32 %v4367, %v4368
        %v4371 = vsel %vm750, %v4363, %v4370
        %v4373 = vshrl.u32 %v4305, 16
        %v4375 = vrot.slane %v4373, 7
        %v4376 = vrot.slane %v4375, 4
        %v4378 = vshrl.u32 %v4306, 16
        %v4380 = vrot.slane %v4378, 7
        %v4381 = vshll.u32 %v4306, 16
        %v4383 = vor.u32 %v4380, %v4381
        %v4384 = vsel %vm750, %v4376, %v4383
        %v4385 = vrot.slane %v4380, 4
        %v4387 = vshrl.u32 %v4307, 16
        %v4389 = vrot.slane %v4387, 7
        %v4390 = vshll.u32 %v4307, 16
        %v4392 = vor.u32 %v4389, %v4390
        %v4393 = vsel %vm750, %v4385, %v4392
        %v4395 = vshrl.u32 %v4308, 16
        %v4397 = vrot.slane %v4395, 7
        %v4398 = vrot.slane %v4397, 4
        %v4400 = vshrl.u32 %v4309, 16
        %v4402 = vrot.slane %v4400, 7
        %v4403 = vshll.u32 %v4309, 16
        %v4405 = vor.u32 %v4402, %v4403
        %v4406 = vsel %vm750, %v4398, %v4405
        %v4407 = vrot.slane %v4402, 4
        %v4409 = vshrl.u32 %v4310, 16
        %v4411 = vrot.slane %v4409, 7
        %v4412 = vshll.u32 %v4310, 16
        %v4414 = vor.u32 %v4411, %v4412
        %v4415 = vsel %vm750, %v4407, %v4414
        %v4417 = vshrl.u32 %v4311, 16
        %v4419 = vrot.slane %v4417, 7
        %v4420 = vrot.slane %v4419, 4
        %v4422 = vshrl.u32 %v4312, 16
        %v4424 = vrot.slane %v4422, 7
        %v4425 = vshll.u32 %v4312, 16
        %v4427 = vor.u32 %v4424, %v4425
        %v4428 = vsel %vm750, %v4420, %v4427
        %v4429 = vrot.slane %v4424, 4
        %v4431 = vshrl.u32 %v4313, 16
        %v4433 = vrot.slane %v4431, 7
        %v4434 = vshll.u32 %v4313, 16
        %v4436 = vor.u32 %v4433, %v4434
        %v4437 = vsel %vm750, %v4429, %v4436
        %v4439 = vshrl.u32 %v4314, 16
        %v4441 = vrot.slane %v4439, 7
        %v4442 = vrot.slane %v4441, 4
        %v4444 = vshrl.u32 %v4315, 16
        %v4446 = vrot.slane %v4444, 7
        %v4447 = vshll.u32 %v4315, 16
        %v4449 = vor.u32 %v4446, %v4447
        %v4450 = vsel %vm750, %v4442, %v4449
        %v4451 = vrot.slane %v4446, 4
        %v4453 = vshrl.u32 %v4316, 16
        %v4455 = vrot.slane %v4453, 7
        %v4456 = vshll.u32 %v4316, 16
        %v4458 = vor.u32 %v4455, %v4456
        %v4459 = vsel %vm750, %v4451, %v4458
        %v4461 = vshrl.u32 %v4317, 16
        %v4463 = vrot.slane %v4461, 7
        %v4464 = vrot.slane %v4463, 4
        %v4466 = vshrl.u32 %v4318, 16
        %v4468 = vrot.slane %v4466, 7
        %v4469 = vshll.u32 %v4318, 16
        %v4471 = vor.u32 %v4468, %v4469
        %v4472 = vsel %vm750, %v4464, %v4471
        %v4473 = vrot.slane %v4468, 4
        %v4475 = vshrl.u32 %v4319, 16
        %v4477 = vrot.slane %v4475, 7
        %v4478 = vshll.u32 %v4319, 16
        %v4480 = vor.u32 %v4477, %v4478
        %v4481 = vsel %vm750, %v4473, %v4480
        %v4483 = vshrl.u32 %v4320, 16
        %v4485 = vrot.slane %v4483, 7
        %v4486 = vrot.slane %v4485, 4
        %v4488 = vshrl.u32 %v4321, 16
        %v4490 = vrot.slane %v4488, 7
        %v4491 = vshll.u32 %v4321, 16
        %v4493 = vor.u32 %v4490, %v4491
        %v4494 = vsel %vm750, %v4486, %v4493
        %v4495 = vrot.slane %v4490, 4
        %v4497 = vshrl.u32 %v4322, 16
        %v4499 = vrot.slane %v4497, 7
        %v4500 = vshll.u32 %v4322, 16
        %v4502 = vor.u32 %v4499, %v4500
        %v4503 = vsel %vm750, %v4495, %v4502
        %v4505 = vshrl.u32 %v4323, 16
        %v4507 = vrot.slane %v4505, 7
        %v4508 = vrot.slane %v4507, 4
        %v4510 = vshrl.u32 %v4324, 16
        %v4512 = vrot.slane %v4510, 7
        %v4513 = vshll.u32 %v4324, 16
        %v4515 = vor.u32 %v4512, %v4513
        %v4516 = vsel %vm750, %v4508, %v4515
        %v4517 = vrot.slane %v4512, 4
        %v4519 = vshrl.u32 %v4325, 16
        %v4521 = vrot.slane %v4519, 7
        %v4522 = vshll.u32 %v4325, 16
        %v4524 = vor.u32 %v4521, %v4522
        %v4525 = vsel %vm750, %v4517, %v4524
        %v4527 = vshrl.u32 %v4326, 16
        %v4529 = vrot.slane %v4527, 7
        %v4530 = vrot.slane %v4529, 4
        %v4532 = vshrl.u32 %v4327, 16
        %v4534 = vrot.slane %v4532, 7
        %v4535 = vshll.u32 %v4327, 16
        %v4537 = vor.u32 %v4534, %v4535
        %v4538 = vsel %vm750, %v4530, %v4537
        %v4539 = vrot.slane %v4534, 4
        %v4541 = vshrl.u32 %v4328, 16
        %v4543 = vrot.slane %v4541, 7
        %v4544 = vshll.u32 %v4328, 16
        %v4546 = vor.u32 %v4543, %v4544
        %v4547 = vsel %vm750, %v4539, %v4546
        %v4549 = vshrl.u32 %v4329, 16
        %v4551 = vrot.slane %v4549, 7
        %v4552 = vrot.slane %v4551, 4
        %v4554 = vshrl.u32 %v4330, 16
        %v4556 = vrot.slane %v4554, 7
        %v4557 = vshll.u32 %v4330, 16
        %v4559 = vor.u32 %v4556, %v4557
        %v4560 = vsel %vm750, %v4552, %v4559
        %v4561 = vrot.slane %v4556, 4
        %v4563 = vshrl.u32 %v4331, 16
        %v4565 = vrot.slane %v4563, 7
        %v4566 = vshll.u32 %v4331, 16
        %v4568 = vor.u32 %v4565, %v4566
        %v4569 = vsel %vm750, %v4561, %v4568
        %v4571 = vshrl.u32 %v4332, 16
        %v4573 = vrot.slane %v4571, 7
        %v4574 = vrot.slane %v4573, 4
        %v4576 = vshrl.u32 %v4333, 16
        %v4578 = vrot.slane %v4576, 7
        %v4579 = vshll.u32 %v4333, 16
        %v4581 = vor.u32 %v4578, %v4579
        %v4582 = vsel %vm750, %v4574, %v4581
        %v4583 = vrot.slane %v4578, 4
        %v4585 = vshrl.u32 %v4334, 16
        %v4587 = vrot.slane %v4585, 7
        %v4588 = vshll.u32 %v4334, 16
        %v4590 = vor.u32 %v4587, %v4588
        %v4591 = vsel %vm750, %v4583, %v4590
        %v4593 = vshrl.u32 %v4335, 16
        %v4595 = vrot.slane %v4593, 7
        %v4596 = vrot.slane %v4595, 4
        %v4598 = vshrl.u32 %v4336, 16
        %v4600 = vrot.slane %v4598, 7
        %v4601 = vshll.u32 %v4336, 16
        %v4603 = vor.u32 %v4600, %v4601
        %v4604 = vsel %vm750, %v4596, %v4603
        %v4605 = vrot.slane %v4600, 4
        %v4607 = vshrl.u32 %v4337, 16
        %v4609 = vrot.slane %v4607, 7
        %v4610 = vshll.u32 %v4337, 16
        %v4612 = vor.u32 %v4609, %v4610
        %v4613 = vsel %vm750, %v4605, %v4612
        %v4615 = vshrl.u32 %v4338, 16
        %v4617 = vrot.slane %v4615, 7
        %v4618 = vrot.slane %v4617, 4
        %v4620 = vshrl.u32 %v4339, 16
        %v4622 = vrot.slane %v4620, 7
        %v4623 = vshll.u32 %v4339, 16
        %v4625 = vor.u32 %v4622, %v4623
        %v4626 = vsel %vm750, %v4618, %v4625
        %v4627 = vrot.slane %v4622, 4
        %v4629 = vshrl.u32 %v4340, 16
        %v4631 = vrot.slane %v4629, 7
        %v4632 = vshll.u32 %v4340, 16
        %v4634 = vor.u32 %v4631, %v4632
        %v4635 = vsel %vm750, %v4627, %v4634
        %v4637 = vshrl.u32 %v4341, 16
        %v4639 = vrot.slane %v4637, 7
        %v4640 = vrot.slane %v4639, 4
        %v4642 = vshrl.u32 %v4342, 16
        %v4644 = vrot.slane %v4642, 7
        %v4645 = vshll.u32 %v4342, 16
        %v4647 = vor.u32 %v4644, %v4645
        %v4648 = vsel %vm750, %v4640, %v4647
        %v4649 = vrot.slane %v4644, 4
        %v4651 = vshrl.u32 %v4343, 16
        %v4653 = vrot.slane %v4651, 7
        %v4654 = vshll.u32 %v4343, 16
        %v4656 = vor.u32 %v4653, %v4654
        %v4657 = vsel %vm750, %v4649, %v4656
        %v4659 = vshrl.u32 %v4344, 16
        %v4661 = vrot.slane %v4659, 7
        %v4662 = vrot.slane %v4661, 4
        %v4664 = vshrl.u32 %v4345, 16
        %v4666 = vrot.slane %v4664, 7
        %v4667 = vshll.u32 %v4345, 16
        %v4669 = vor.u32 %v4666, %v4667
        %v4670 = vsel %vm750, %v4662, %v4669
        %v4671 = vrot.slane %v4666, 4
        %v4673 = vshrl.u32 %v4346, 16
        %v4675 = vrot.slane %v4673, 7
        %v4676 = vshll.u32 %v4346, 16
        %v4678 = vor.u32 %v4675, %v4676
        %v4679 = vsel %vm750, %v4671, %v4678
        %v4681 = vshrl.u32 %v4347, 16
        %v4683 = vrot.slane %v4681, 7
        %v4684 = vrot.slane %v4683, 4
        %v4686 = vshrl.u32 %v4348, 16
        %v4688 = vrot.slane %v4686, 7
        %v4689 = vshll.u32 %v4348, 16
        %v4691 = vor.u32 %v4688, %v4689
        %v4692 = vsel %vm750, %v4684, %v4691
        %v4693 = vrot.slane %v4688, 4
        %v4695 = vshrl.u32 %v4349, 16
        %v4697 = vrot.slane %v4695, 7
        %v4698 = vshll.u32 %v4349, 16
        %v4700 = vor.u32 %v4697, %v4698
        %v4701 = vsel %vm750, %v4693, %v4700
        %s4702 = scalar_lea.vmem [#allocation7], 384
        %v4703 = vld [vmem:[%s4702] sm:$0xf]
        %v4704 = vld [vmem:[%s4702 + $0x4] sm:$0xf]
        %v4705 = vld [vmem:[%s4702 + $0x8] sm:$0xf]
        %v4706 = vld [vmem:[%s4702 + $0xc] sm:$0xf]
        %v4707 = vld [vmem:[%s4702 + $0x10] sm:$0xf]
        %v4708 = vld [vmem:[%s4702 + $0x14] sm:$0xf]
        %v4709 = vld [vmem:[%s4702 + $0x18] sm:$0xf]
        %v4710 = vld [vmem:[%s4702 + $0x1c] sm:$0xf]
        %v4711 = vld [vmem:[%s4702 + $0x20] sm:$0xf]
        %v4712 = vld [vmem:[%s4702 + $0x24] sm:$0xf]
        %v4713 = vld [vmem:[%s4702 + $0x28] sm:$0xf]
        %v4714 = vld [vmem:[%s4702 + $0x2c] sm:$0xf]
        %v4715 = vld [vmem:[%s4702 + $0x30] sm:$0xf]
        %v4716 = vld [vmem:[%s4702 + $0x34] sm:$0xf]
        %v4717 = vld [vmem:[%s4702 + $0x38] sm:$0xf]
        %v4718 = vld [vmem:[%s4702 + $0x3c] sm:$0xf]
        %v4719 = vunpack.c.l.b16 %v4362
        %v4720 = vunpack.c.l.b16 %v4371
        %v4721 = vunpack.c.l.b16 %v4384
        %v4722 = vunpack.c.l.b16 %v4393
        %v4723 = vunpack.c.l.b16 %v4406
        %v4724 = vunpack.c.l.b16 %v4415
        %v4725 = vunpack.c.l.b16 %v4428
        %v4726 = vunpack.c.l.b16 %v4437
        %v4727 = vunpack.c.l.b16 %v4450
        %v4728 = vunpack.c.l.b16 %v4459
        %v4729 = vunpack.c.l.b16 %v4472
        %v4730 = vunpack.c.l.b16 %v4481
        %v4731 = vunpack.c.l.b16 %v4494
        %v4732 = vunpack.c.l.b16 %v4503
        %v4733 = vunpack.c.l.b16 %v4516
        %v4734 = vunpack.c.l.b16 %v4525
        %v4735 = vunpack.c.l.b16 %v4538
        %v4736 = vunpack.c.l.b16 %v4547
        %v4737 = vunpack.c.l.b16 %v4560
        %v4738 = vunpack.c.l.b16 %v4569
        %v4739 = vunpack.c.l.b16 %v4582
        %v4740 = vunpack.c.l.b16 %v4591
        %v4741 = vunpack.c.l.b16 %v4604
        %v4742 = vunpack.c.l.b16 %v4613
        %v4743 = vunpack.c.l.b16 %v4626
        %v4744 = vunpack.c.l.b16 %v4635
        %v4745 = vunpack.c.l.b16 %v4648
        %v4746 = vunpack.c.l.b16 %v4657
        %v4747 = vunpack.c.l.b16 %v4670
        %v4748 = vunpack.c.l.b16 %v4679
        %v4749 = vunpack.c.l.b16 %v4692
        %v4750 = vunpack.c.l.b16 %v4701
        %v4751 = vpack.c.b16 %v4720, %v4719
        %v4752 = vpack.c.b16 %v4722, %v4721
        %v4753 = vpack.c.b16 %v4724, %v4723
        %v4754 = vpack.c.b16 %v4726, %v4725
        %v4755 = vpack.c.b16 %v4728, %v4727
        %v4756 = vpack.c.b16 %v4730, %v4729
        %v4757 = vpack.c.b16 %v4732, %v4731
        %v4758 = vpack.c.b16 %v4734, %v4733
        %v4759 = vpack.c.b16 %v4736, %v4735
        %v4760 = vpack.c.b16 %v4738, %v4737
        %v4761 = vpack.c.b16 %v4740, %v4739
        %v4762 = vpack.c.b16 %v4742, %v4741
        %v4763 = vpack.c.b16 %v4744, %v4743
        %v4764 = vpack.c.b16 %v4746, %v4745
        %v4765 = vpack.c.b16 %v4748, %v4747
        %v4766 = vpack.c.b16 %v4750, %v4749
        %v4799 = vunpack.c.l.b16 %v4703
        %v4800 = vunpack.c.l.b16 %v4704
        %v4801 = vunpack.c.l.b16 %v4705
        %v4802 = vunpack.c.l.b16 %v4706
        %v4803 = vunpack.c.l.b16 %v4707
        %v4804 = vunpack.c.l.b16 %v4708
        %v4805 = vunpack.c.l.b16 %v4709
        %v4806 = vunpack.c.l.b16 %v4710
        %v4807 = vunpack.c.l.b16 %v4711
        %v4808 = vunpack.c.l.b16 %v4712
        %v4809 = vunpack.c.l.b16 %v4713
        %v4810 = vunpack.c.l.b16 %v4714
        %v4811 = vunpack.c.l.b16 %v4715
        %v4812 = vunpack.c.l.b16 %v4716
        %v4813 = vunpack.c.l.b16 %v4717
        %v4814 = vunpack.c.l.b16 %v4718
        %v4815 = vpack.c.b16 %v4800, %v4799
        %v4816 = vpack.c.b16 %v4802, %v4801
        %v4817 = vpack.c.b16 %v4804, %v4803
        %v4818 = vpack.c.b16 %v4806, %v4805
        %v4819 = vpack.c.b16 %v4808, %v4807
        %v4820 = vpack.c.b16 %v4810, %v4809
        %v4821 = vpack.c.b16 %v4812, %v4811
        %v4822 = vpack.c.b16 %v4814, %v4813
        %4831 = vmatprep.subr.bf16.mxu0 0
        %4832 = vmatpush1.bf16.msra.mxu0 %v4822
        %4833 = vmatprep.subr.bf16.mxu0 0
        %4834 = vmatpush1.bf16.msra.mxu0 %v4821
        %4835 = vmatprep.subr.bf16.mxu0 0
        %4836 = vmatpush1.bf16.msra.mxu0 %v4820
        %4837 = vmatprep.subr.bf16.mxu0 0
        %4838 = vmatpush1.bf16.msra.mxu0 %v4819
        %4839 = vmatprep.subr.bf16.mxu0 0
        %4840 = vmatpush1.bf16.msra.mxu0 %v4818
        %4841 = vmatprep.subr.bf16.mxu0 0
        %4842 = vmatpush1.bf16.msra.mxu0 %v4817
        %4843 = vmatprep.subr.bf16.mxu0 0
        %4844 = vmatpush1.bf16.msra.mxu0 %v4816
        %4845 = vmatprep.subr.bf16.mxu0 0
        %4846 = vmatpush1.bf16.msra.mxu0 %v4815
        %4847 = vmatprep.subr.bf16.mxu0 0
        %4848 = vmatpush2.bf16.msra.mxu0 0
        %4849 = vmatprep.subr.bf16.mxu0 0
        %4850 = vmatpush2.bf16.msra.mxu0 0
        %4851 = vmatprep.subr.bf16.mxu0 0
        %4852 = vmatpush2.bf16.msra.mxu0 0
        %4853 = vmatprep.subr.bf16.mxu0 0
        %4854 = vmatpush2.bf16.msra.mxu0 0
        %4855 = vmatprep.subr.bf16.mxu0 0
        %4856 = vmatpush2.bf16.msra.mxu0 0
        %4857 = vmatprep.subr.bf16.mxu0 0
        %4858 = vmatpush2.bf16.msra.mxu0 0
        %4859 = vmatprep.subr.bf16.mxu0 0
        %4860 = vmatpush2.bf16.msra.mxu0 0
        %4861 = vmatprep.subr.bf16.mxu0 0
        %4862 = vmatpush2.bf16.msra.mxu0 0
        %4863 = vmatprep.mubr.bf16.mxu0 0
        %4864 = vmatmul.mubr.bf16.gmra.mxu0 %v4751
        %v4865 = vpop.f32.mrf.mxu0
        %v4866 = vadd.f32 0.0, %v4865
        %v4867 = vpop.f32.mrf.mxu0
        %v4868 = vpop.f32.mrf.mxu0
        %v4869 = vadd.f32 0.0, %v4868
        %v4870 = vpop.f32.mrf.mxu0
        %4871 = vmatprep.mubr.bf16.mxu0 0
        %4872 = vmatmul.mubr.bf16.gmra.mxu0 %v4752
        %v4873 = vpop.f32.mrf.mxu0
        %v4874 = vadd.f32 0.0, %v4873
        %v4875 = vpop.f32.mrf.mxu0
        %v4876 = vpop.f32.mrf.mxu0
        %v4877 = vadd.f32 0.0, %v4876
        %v4878 = vpop.f32.mrf.mxu0
        %4879 = vmatprep.mubr.bf16.mxu0 0
        %4880 = vmatmul.mubr.bf16.gmra.mxu0 %v4753
        %v4881 = vpop.f32.mrf.mxu0
        %v4882 = vadd.f32 0.0, %v4881
        %v4883 = vpop.f32.mrf.mxu0
        %v4884 = vpop.f32.mrf.mxu0
        %v4885 = vadd.f32 0.0, %v4884
        %v4886 = vpop.f32.mrf.mxu0
        %4887 = vmatprep.mubr.bf16.mxu0 0
        %4888 = vmatmul.mubr.bf16.gmra.mxu0 %v4754
        %v4889 = vpop.f32.mrf.mxu0
        %v4890 = vadd.f32 0.0, %v4889
        %v4891 = vpop.f32.mrf.mxu0
        %v4892 = vpop.f32.mrf.mxu0
        %v4893 = vadd.f32 0.0, %v4892
        %v4894 = vpop.f32.mrf.mxu0
        %4895 = vmatprep.mubr.bf16.mxu0 0
        %4896 = vmatmul.mubr.bf16.gmra.mxu0 %v4755
        %v4897 = vpop.f32.mrf.mxu0
        %v4898 = vadd.f32 0.0, %v4897
        %v4899 = vpop.f32.mrf.mxu0
        %v4900 = vpop.f32.mrf.mxu0
        %v4901 = vadd.f32 0.0, %v4900
        %v4902 = vpop.f32.mrf.mxu0
        %4903 = vmatprep.mubr.bf16.mxu0 0
        %4904 = vmatmul.mubr.bf16.gmra.mxu0 %v4756
        %v4905 = vpop.f32.mrf.mxu0
        %v4906 = vadd.f32 0.0, %v4905
        %v4907 = vpop.f32.mrf.mxu0
        %v4908 = vpop.f32.mrf.mxu0
        %v4909 = vadd.f32 0.0, %v4908
        %v4910 = vpop.f32.mrf.mxu0
        %4911 = vmatprep.mubr.bf16.mxu0 0
        %4912 = vmatmul.mubr.bf16.gmra.mxu0 %v4757
        %v4913 = vpop.f32.mrf.mxu0
        %v4914 = vadd.f32 0.0, %v4913
        %v4915 = vpop.f32.mrf.mxu0
        %v4916 = vpop.f32.mrf.mxu0
        %v4917 = vadd.f32 0.0, %v4916
        %v4918 = vpop.f32.mrf.mxu0
        %4919 = vmatprep.mubr.bf16.mxu0 0
        %4920 = vmatmul.mubr.bf16.gmra.mxu0 %v4758
        %v4921 = vpop.f32.mrf.mxu0
        %v4922 = vadd.f32 0.0, %v4921
        %v4923 = vpop.f32.mrf.mxu0
        %v4924 = vpop.f32.mrf.mxu0
        %v4925 = vadd.f32 0.0, %v4924
        %v4926 = vpop.f32.mrf.mxu0
        %4927 = vmatprep.mubr.bf16.mxu0 0
        %4928 = vmatmul.mubr.bf16.gmra.mxu0 %v4759
        %v4929 = vpop.f32.mrf.mxu0
        %v4930 = vadd.f32 0.0, %v4929
        %v4931 = vpop.f32.mrf.mxu0
        %v4932 = vpop.f32.mrf.mxu0
        %v4933 = vadd.f32 0.0, %v4932
        %v4934 = vpop.f32.mrf.mxu0
        %4935 = vmatprep.mubr.bf16.mxu0 0
        %4936 = vmatmul.mubr.bf16.gmra.mxu0 %v4760
        %v4937 = vpop.f32.mrf.mxu0
        %v4938 = vadd.f32 0.0, %v4937
        %v4939 = vpop.f32.mrf.mxu0
        %v4940 = vpop.f32.mrf.mxu0
        %v4941 = vadd.f32 0.0, %v4940
        %v4942 = vpop.f32.mrf.mxu0
        %4943 = vmatprep.mubr.bf16.mxu0 0
        %4944 = vmatmul.mubr.bf16.gmra.mxu0 %v4761
        %v4945 = vpop.f32.mrf.mxu0
        %v4946 = vadd.f32 0.0, %v4945
        %v4947 = vpop.f32.mrf.mxu0
        %v4948 = vpop.f32.mrf.mxu0
        %v4949 = vadd.f32 0.0, %v4948
        %v4950 = vpop.f32.mrf.mxu0
        %4951 = vmatprep.mubr.bf16.mxu0 0
        %4952 = vmatmul.mubr.bf16.gmra.mxu0 %v4762
        %v4953 = vpop.f32.mrf.mxu0
        %v4954 = vadd.f32 0.0, %v4953
        %v4955 = vpop.f32.mrf.mxu0
        %v4956 = vpop.f32.mrf.mxu0
        %v4957 = vadd.f32 0.0, %v4956
        %v4958 = vpop.f32.mrf.mxu0
        %4959 = vmatprep.mubr.bf16.mxu0 0
        %4960 = vmatmul.mubr.bf16.gmra.mxu0 %v4763
        %v4961 = vpop.f32.mrf.mxu0
        %v4962 = vadd.f32 0.0, %v4961
        %v4963 = vpop.f32.mrf.mxu0
        %v4964 = vpop.f32.mrf.mxu0
        %v4965 = vadd.f32 0.0, %v4964
        %v4966 = vpop.f32.mrf.mxu0
        %4967 = vmatprep.mubr.bf16.mxu0 0
        %4968 = vmatmul.mubr.bf16.gmra.mxu0 %v4764
        %v4969 = vpop.f32.mrf.mxu0
        %v4970 = vadd.f32 0.0, %v4969
        %v4971 = vpop.f32.mrf.mxu0
        %v4972 = vpop.f32.mrf.mxu0
        %v4973 = vadd.f32 0.0, %v4972
        %v4974 = vpop.f32.mrf.mxu0
        %4975 = vmatprep.mubr.bf16.mxu0 0
        %4976 = vmatmul.mubr.bf16.gmra.mxu0 %v4765
        %v4977 = vpop.f32.mrf.mxu0
        %v4978 = vadd.f32 0.0, %v4977
        %v4979 = vpop.f32.mrf.mxu0
        %v4980 = vpop.f32.mrf.mxu0
        %v4981 = vadd.f32 0.0, %v4980
        %v4982 = vpop.f32.mrf.mxu0
        %4983 = vmatprep.mubr.bf16.mxu0 0
        %4984 = vmatmul.mubr.bf16.gmra.mxu0 %v4766
        %v4985 = vpop.f32.mrf.mxu0
        %v4986 = vadd.f32 0.0, %v4985
        %v4987 = vpop.f32.mrf.mxu0
        %v4988 = vpop.f32.mrf.mxu0
        %v4989 = vadd.f32 0.0, %v4988
        %v4990 = vpop.f32.mrf.mxu0
        %4991 = vdwg.mxu0
        %v4992 = vadd.f32 %v4269, %v4866
        %v4993 = vadd.f32 %v4270, %v4869
        %v4994 = vadd.f32 %v4271, %v4874
        %v4995 = vadd.f32 %v4272, %v4877
        %v4996 = vadd.f32 %v4273, %v4882
        %v4997 = vadd.f32 %v4274, %v4885
        %v4998 = vadd.f32 %v4275, %v4890
        %v4999 = vadd.f32 %v4276, %v4893
        %v5000 = vadd.f32 %v4277, %v4898
        %v5001 = vadd.f32 %v4278, %v4901
        %v5002 = vadd.f32 %v4279, %v4906
        %v5003 = vadd.f32 %v4280, %v4909
        %v5004 = vadd.f32 %v4281, %v4914
        %v5005 = vadd.f32 %v4282, %v4917
        %v5006 = vadd.f32 %v4283, %v4922
        %v5007 = vadd.f32 %v4284, %v4925
        %v5008 = vadd.f32 %v4285, %v4930
        %v5009 = vadd.f32 %v4286, %v4933
        %v5010 = vadd.f32 %v4287, %v4938
        %v5011 = vadd.f32 %v4288, %v4941
        %v5012 = vadd.f32 %v4289, %v4946
        %v5013 = vadd.f32 %v4290, %v4949
        %v5014 = vadd.f32 %v4291, %v4954
        %v5015 = vadd.f32 %v4292, %v4957
        %v5016 = vadd.f32 %v4293, %v4962
        %v5017 = vadd.f32 %v4294, %v4965
        %v5018 = vadd.f32 %v4295, %v4970
        %v5019 = vadd.f32 %v4296, %v4973
        %v5020 = vadd.f32 %v4297, %v4978
        %v5021 = vadd.f32 %v4298, %v4981
        %v5022 = vadd.f32 %v4299, %v4986
        %v5023 = vadd.f32 %v4300, %v4989
        %s5024 = scalar_lea.vmem [#allocation7], 448
        %v5025 = vld [vmem:[%s5024] sm:$0xf]
        %v5026 = vld [vmem:[%s5024 + $0x4] sm:$0xf]
        %v5027 = vld [vmem:[%s5024 + $0x8] sm:$0xf]
        %v5028 = vld [vmem:[%s5024 + $0xc] sm:$0xf]
        %v5029 = vld [vmem:[%s5024 + $0x10] sm:$0xf]
        %v5030 = vld [vmem:[%s5024 + $0x14] sm:$0xf]
        %v5031 = vld [vmem:[%s5024 + $0x18] sm:$0xf]
        %v5032 = vld [vmem:[%s5024 + $0x1c] sm:$0xf]
        %v5033 = vld [vmem:[%s5024 + $0x20] sm:$0xf]
        %v5034 = vld [vmem:[%s5024 + $0x24] sm:$0xf]
        %v5035 = vld [vmem:[%s5024 + $0x28] sm:$0xf]
        %v5036 = vld [vmem:[%s5024 + $0x2c] sm:$0xf]
        %v5037 = vld [vmem:[%s5024 + $0x30] sm:$0xf]
        %v5038 = vld [vmem:[%s5024 + $0x34] sm:$0xf]
        %v5039 = vld [vmem:[%s5024 + $0x38] sm:$0xf]
        %v5040 = vld [vmem:[%s5024 + $0x3c] sm:$0xf]
        %v5073 = vunpack.c.l.b16 %v4303
        %v5074 = vunpack.c.l.b16 %v4304
        %v5075 = vunpack.c.l.b16 %v4306
        %v5076 = vunpack.c.l.b16 %v4307
        %v5077 = vunpack.c.l.b16 %v4309
        %v5078 = vunpack.c.l.b16 %v4310
        %v5079 = vunpack.c.l.b16 %v4312
        %v5080 = vunpack.c.l.b16 %v4313
        %v5081 = vunpack.c.l.b16 %v4315
        %v5082 = vunpack.c.l.b16 %v4316
        %v5083 = vunpack.c.l.b16 %v4318
        %v5084 = vunpack.c.l.b16 %v4319
        %v5085 = vunpack.c.l.b16 %v4321
        %v5086 = vunpack.c.l.b16 %v4322
        %v5087 = vunpack.c.l.b16 %v4324
        %v5088 = vunpack.c.l.b16 %v4325
        %v5089 = vunpack.c.l.b16 %v4327
        %v5090 = vunpack.c.l.b16 %v4328
        %v5091 = vunpack.c.l.b16 %v4330
        %v5092 = vunpack.c.l.b16 %v4331
        %v5093 = vunpack.c.l.b16 %v4333
        %v5094 = vunpack.c.l.b16 %v4334
        %v5095 = vunpack.c.l.b16 %v4336
        %v5096 = vunpack.c.l.b16 %v4337
        %v5097 = vunpack.c.l.b16 %v4339
        %v5098 = vunpack.c.l.b16 %v4340
        %v5099 = vunpack.c.l.b16 %v4342
        %v5100 = vunpack.c.l.b16 %v4343
        %v5101 = vunpack.c.l.b16 %v4345
        %v5102 = vunpack.c.l.b16 %v4346
        %v5103 = vunpack.c.l.b16 %v4348
        %v5104 = vunpack.c.l.b16 %v4349
        %v5105 = vpack.c.b16 %v5074, %v5073
        %v5106 = vpack.c.b16 %v5076, %v5075
        %v5107 = vpack.c.b16 %v5078, %v5077
        %v5108 = vpack.c.b16 %v5080, %v5079
        %v5109 = vpack.c.b16 %v5082, %v5081
        %v5110 = vpack.c.b16 %v5084, %v5083
        %v5111 = vpack.c.b16 %v5086, %v5085
        %v5112 = vpack.c.b16 %v5088, %v5087
        %v5113 = vpack.c.b16 %v5090, %v5089
        %v5114 = vpack.c.b16 %v5092, %v5091
        %v5115 = vpack.c.b16 %v5094, %v5093
        %v5116 = vpack.c.b16 %v5096, %v5095
        %v5117 = vpack.c.b16 %v5098, %v5097
        %v5118 = vpack.c.b16 %v5100, %v5099
        %v5119 = vpack.c.b16 %v5102, %v5101
        %v5120 = vpack.c.b16 %v5104, %v5103
        %v5153 = vunpack.c.l.b16 %v5025
        %v5154 = vunpack.c.l.b16 %v5026
        %v5155 = vunpack.c.l.b16 %v5027
        %v5156 = vunpack.c.l.b16 %v5028
        %v5157 = vunpack.c.l.b16 %v5029
        %v5158 = vunpack.c.l.b16 %v5030
        %v5159 = vunpack.c.l.b16 %v5031
        %v5160 = vunpack.c.l.b16 %v5032
        %v5161 = vunpack.c.l.b16 %v5033
        %v5162 = vunpack.c.l.b16 %v5034
        %v5163 = vunpack.c.l.b16 %v5035
        %v5164 = vunpack.c.l.b16 %v5036
        %v5165 = vunpack.c.l.b16 %v5037
        %v5166 = vunpack.c.l.b16 %v5038
        %v5167 = vunpack.c.l.b16 %v5039
        %v5168 = vunpack.c.l.b16 %v5040
        %v5169 = vpack.c.b16 %v5154, %v5153
        %v5170 = vpack.c.b16 %v5156, %v5155
        %v5171 = vpack.c.b16 %v5158, %v5157
        %v5172 = vpack.c.b16 %v5160, %v5159
        %v5173 = vpack.c.b16 %v5162, %v5161
        %v5174 = vpack.c.b16 %v5164, %v5163
        %v5175 = vpack.c.b16 %v5166, %v5165
        %v5176 = vpack.c.b16 %v5168, %v5167
        %5185 = vmatprep.subr.bf16.mxu0 0
        %5186 = vmatpush1.bf16.msra.mxu0 %v5176
        %5187 = vmatprep.subr.bf16.mxu0 0
        %5188 = vmatpush1.bf16.msra.mxu0 %v5175
        %5189 = vmatprep.subr.bf16.mxu0 0
        %5190 = vmatpush1.bf16.msra.mxu0 %v5174
        %5191 = vmatprep.subr.bf16.mxu0 0
        %5192 = vmatpush1.bf16.msra.mxu0 %v5173
        %5193 = vmatprep.subr.bf16.mxu0 0
        %5194 = vmatpush1.bf16.msra.mxu0 %v5172
        %5195 = vmatprep.subr.bf16.mxu0 0
        %5196 = vmatpush1.bf16.msra.mxu0 %v5171
        %5197 = vmatprep.subr.bf16.mxu0 0
        %5198 = vmatpush1.bf16.msra.mxu0 %v5170
        %5199 = vmatprep.subr.bf16.mxu0 0
        %5200 = vmatpush1.bf16.msra.mxu0 %v5169
        %5201 = vmatprep.subr.bf16.mxu0 0
        %5202 = vmatpush2.bf16.msra.mxu0 0
        %5203 = vmatprep.subr.bf16.mxu0 0
        %5204 = vmatpush2.bf16.msra.mxu0 0
        %5205 = vmatprep.subr.bf16.mxu0 0
        %5206 = vmatpush2.bf16.msra.mxu0 0
        %5207 = vmatprep.subr.bf16.mxu0 0
        %5208 = vmatpush2.bf16.msra.mxu0 0
        %5209 = vmatprep.subr.bf16.mxu0 0
        %5210 = vmatpush2.bf16.msra.mxu0 0
        %5211 = vmatprep.subr.bf16.mxu0 0
        %5212 = vmatpush2.bf16.msra.mxu0 0
        %5213 = vmatprep.subr.bf16.mxu0 0
        %5214 = vmatpush2.bf16.msra.mxu0 0
        %5215 = vmatprep.subr.bf16.mxu0 0
        %5216 = vmatpush2.bf16.msra.mxu0 0
        %5217 = vmatprep.mubr.bf16.mxu0 0
        %5218 = vmatmul.mubr.bf16.gmra.mxu0 %v5105
        %v5219 = vpop.f32.mrf.mxu0
        %v5220 = vadd.f32 0.0, %v5219
        %v5221 = vpop.f32.mrf.mxu0
        %v5222 = vpop.f32.mrf.mxu0
        %v5223 = vadd.f32 0.0, %v5222
        %v5224 = vpop.f32.mrf.mxu0
        %5225 = vmatprep.mubr.bf16.mxu0 0
        %5226 = vmatmul.mubr.bf16.gmra.mxu0 %v5106
        %v5227 = vpop.f32.mrf.mxu0
        %v5228 = vadd.f32 0.0, %v5227
        %v5229 = vpop.f32.mrf.mxu0
        %v5230 = vpop.f32.mrf.mxu0
        %v5231 = vadd.f32 0.0, %v5230
        %v5232 = vpop.f32.mrf.mxu0
        %5233 = vmatprep.mubr.bf16.mxu0 0
        %5234 = vmatmul.mubr.bf16.gmra.mxu0 %v5107
        %v5235 = vpop.f32.mrf.mxu0
        %v5236 = vadd.f32 0.0, %v5235
        %v5237 = vpop.f32.mrf.mxu0
        %v5238 = vpop.f32.mrf.mxu0
        %v5239 = vadd.f32 0.0, %v5238
        %v5240 = vpop.f32.mrf.mxu0
        %5241 = vmatprep.mubr.bf16.mxu0 0
        %5242 = vmatmul.mubr.bf16.gmra.mxu0 %v5108
        %v5243 = vpop.f32.mrf.mxu0
        %v5244 = vadd.f32 0.0, %v5243
        %v5245 = vpop.f32.mrf.mxu0
        %v5246 = vpop.f32.mrf.mxu0
        %v5247 = vadd.f32 0.0, %v5246
        %v5248 = vpop.f32.mrf.mxu0
        %5249 = vmatprep.mubr.bf16.mxu0 0
        %5250 = vmatmul.mubr.bf16.gmra.mxu0 %v5109
        %v5251 = vpop.f32.mrf.mxu0
        %v5252 = vadd.f32 0.0, %v5251
        %v5253 = vpop.f32.mrf.mxu0
        %v5254 = vpop.f32.mrf.mxu0
        %v5255 = vadd.f32 0.0, %v5254
        %v5256 = vpop.f32.mrf.mxu0
        %5257 = vmatprep.mubr.bf16.mxu0 0
        %5258 = vmatmul.mubr.bf16.gmra.mxu0 %v5110
        %v5259 = vpop.f32.mrf.mxu0
        %v5260 = vadd.f32 0.0, %v5259
        %v5261 = vpop.f32.mrf.mxu0
        %v5262 = vpop.f32.mrf.mxu0
        %v5263 = vadd.f32 0.0, %v5262
        %v5264 = vpop.f32.mrf.mxu0
        %5265 = vmatprep.mubr.bf16.mxu0 0
        %5266 = vmatmul.mubr.bf16.gmra.mxu0 %v5111
        %v5267 = vpop.f32.mrf.mxu0
        %v5268 = vadd.f32 0.0, %v5267
        %v5269 = vpop.f32.mrf.mxu0
        %v5270 = vpop.f32.mrf.mxu0
        %v5271 = vadd.f32 0.0, %v5270
        %v5272 = vpop.f32.mrf.mxu0
        %5273 = vmatprep.mubr.bf16.mxu0 0
        %5274 = vmatmul.mubr.bf16.gmra.mxu0 %v5112
        %v5275 = vpop.f32.mrf.mxu0
        %v5276 = vadd.f32 0.0, %v5275
        %v5277 = vpop.f32.mrf.mxu0
        %v5278 = vpop.f32.mrf.mxu0
        %v5279 = vadd.f32 0.0, %v5278
        %v5280 = vpop.f32.mrf.mxu0
        %5281 = vmatprep.mubr.bf16.mxu0 0
        %5282 = vmatmul.mubr.bf16.gmra.mxu0 %v5113
        %v5283 = vpop.f32.mrf.mxu0
        %v5284 = vadd.f32 0.0, %v5283
        %v5285 = vpop.f32.mrf.mxu0
        %v5286 = vpop.f32.mrf.mxu0
        %v5287 = vadd.f32 0.0, %v5286
        %v5288 = vpop.f32.mrf.mxu0
        %5289 = vmatprep.mubr.bf16.mxu0 0
        %5290 = vmatmul.mubr.bf16.gmra.mxu0 %v5114
        %v5291 = vpop.f32.mrf.mxu0
        %v5292 = vadd.f32 0.0, %v5291
        %v5293 = vpop.f32.mrf.mxu0
        %v5294 = vpop.f32.mrf.mxu0
        %v5295 = vadd.f32 0.0, %v5294
        %v5296 = vpop.f32.mrf.mxu0
        %5297 = vmatprep.mubr.bf16.mxu0 0
        %5298 = vmatmul.mubr.bf16.gmra.mxu0 %v5115
        %v5299 = vpop.f32.mrf.mxu0
        %v5300 = vadd.f32 0.0, %v5299
        %v5301 = vpop.f32.mrf.mxu0
        %v5302 = vpop.f32.mrf.mxu0
        %v5303 = vadd.f32 0.0, %v5302
        %v5304 = vpop.f32.mrf.mxu0
        %5305 = vmatprep.mubr.bf16.mxu0 0
        %5306 = vmatmul.mubr.bf16.gmra.mxu0 %v5116
        %v5307 = vpop.f32.mrf.mxu0
        %v5308 = vadd.f32 0.0, %v5307
        %v5309 = vpop.f32.mrf.mxu0
        %v5310 = vpop.f32.mrf.mxu0
        %v5311 = vadd.f32 0.0, %v5310
        %v5312 = vpop.f32.mrf.mxu0
        %5313 = vmatprep.mubr.bf16.mxu0 0
        %5314 = vmatmul.mubr.bf16.gmra.mxu0 %v5117
        %v5315 = vpop.f32.mrf.mxu0
        %v5316 = vadd.f32 0.0, %v5315
        %v5317 = vpop.f32.mrf.mxu0
        %v5318 = vpop.f32.mrf.mxu0
        %v5319 = vadd.f32 0.0, %v5318
        %v5320 = vpop.f32.mrf.mxu0
        %5321 = vmatprep.mubr.bf16.mxu0 0
        %5322 = vmatmul.mubr.bf16.gmra.mxu0 %v5118
        %v5323 = vpop.f32.mrf.mxu0
        %v5324 = vadd.f32 0.0, %v5323
        %v5325 = vpop.f32.mrf.mxu0
        %v5326 = vpop.f32.mrf.mxu0
        %v5327 = vadd.f32 0.0, %v5326
        %v5328 = vpop.f32.mrf.mxu0
        %5329 = vmatprep.mubr.bf16.mxu0 0
        %5330 = vmatmul.mubr.bf16.gmra.mxu0 %v5119
        %v5331 = vpop.f32.mrf.mxu0
        %v5332 = vadd.f32 0.0, %v5331
        %v5333 = vpop.f32.mrf.mxu0
        %v5334 = vpop.f32.mrf.mxu0
        %v5335 = vadd.f32 0.0, %v5334
        %v5336 = vpop.f32.mrf.mxu0
        %5337 = vmatprep.mubr.bf16.mxu0 0
        %5338 = vmatmul.mubr.bf16.gmra.mxu0 %v5120
        %v5339 = vpop.f32.mrf.mxu0
        %v5340 = vadd.f32 0.0, %v5339
        %v5341 = vpop.f32.mrf.mxu0
        %v5342 = vpop.f32.mrf.mxu0
        %v5343 = vadd.f32 0.0, %v5342
        %v5344 = vpop.f32.mrf.mxu0
        %5345 = vdwg.mxu0
        %v5346 = vadd.f32 %v4992, %v5220
        %v5347 = vadd.f32 %v4993, %v5223
        %v5348 = vadd.f32 %v4994, %v5228
        %v5349 = vadd.f32 %v4995, %v5231
        %v5350 = vadd.f32 %v4996, %v5236
        %v5351 = vadd.f32 %v4997, %v5239
        %v5352 = vadd.f32 %v4998, %v5244
        %v5353 = vadd.f32 %v4999, %v5247
        %v5354 = vadd.f32 %v5000, %v5252
        %v5355 = vadd.f32 %v5001, %v5255
        %v5356 = vadd.f32 %v5002, %v5260
        %v5357 = vadd.f32 %v5003, %v5263
        %v5358 = vadd.f32 %v5004, %v5268
        %v5359 = vadd.f32 %v5005, %v5271
        %v5360 = vadd.f32 %v5006, %v5276
        %v5361 = vadd.f32 %v5007, %v5279
        %v5362 = vadd.f32 %v5008, %v5284
        %v5363 = vadd.f32 %v5009, %v5287
        %v5364 = vadd.f32 %v5010, %v5292
        %v5365 = vadd.f32 %v5011, %v5295
        %v5366 = vadd.f32 %v5012, %v5300
        %v5367 = vadd.f32 %v5013, %v5303
        %v5368 = vadd.f32 %v5014, %v5308
        %v5369 = vadd.f32 %v5015, %v5311
        %v5370 = vadd.f32 %v5016, %v5316
        %v5371 = vadd.f32 %v5017, %v5319
        %v5372 = vadd.f32 %v5018, %v5324
        %v5373 = vadd.f32 %v5019, %v5327
        %v5374 = vadd.f32 %v5020, %v5332
        %v5375 = vadd.f32 %v5021, %v5335
        %v5376 = vadd.f32 %v5022, %v5340
        %v5377 = vadd.f32 %v5023, %v5343
        %v5378 = vld [vmem:[%s4301 + $0x4] sm:$0xf]
        %v5379 = vld [vmem:[%s4301 + $0x8] sm:$0xf]
        %v5380 = vld [vmem:[%s4301 + $0xc] sm:$0x1]
        %v5381 = vld [vmem:[%s4301 + $0x14] sm:$0xf]
        %v5382 = vld [vmem:[%s4301 + $0x18] sm:$0xf]
        %v5383 = vld [vmem:[%s4301 + $0x1c] sm:$0x1]
        %v5384 = vld [vmem:[%s4301 + $0x24] sm:$0xf]
        %v5385 = vld [vmem:[%s4301 + $0x28] sm:$0xf]
        %v5386 = vld [vmem:[%s4301 + $0x2c] sm:$0x1]
        %v5387 = vld [vmem:[%s4301 + $0x34] sm:$0xf]
        %v5388 = vld [vmem:[%s4301 + $0x38] sm:$0xf]
        %v5389 = vld [vmem:[%s4301 + $0x3c] sm:$0x1]
        %v5390 = vld [vmem:[%s4301 + $0x44] sm:$0xf]
        %v5391 = vld [vmem:[%s4301 + $0x48] sm:$0xf]
        %v5392 = vld [vmem:[%s4301 + $0x4c] sm:$0x1]
        %v5393 = vld [vmem:[%s4301 + $0x54] sm:$0xf]
        %v5394 = vld [vmem:[%s4301 + $0x58] sm:$0xf]
        %v5395 = vld [vmem:[%s4301 + $0x5c] sm:$0x1]
        %v5396 = vld [vmem:[%s4301 + $0x64] sm:$0xf]
        %v5397 = vld [vmem:[%s4301 + $0x68] sm:$0xf]
        %v5398 = vld [vmem:[%s4301 + $0x6c] sm:$0x1]
        %v5399 = vld [vmem:[%s4301 + $0x74] sm:$0xf]
        %v5400 = vld [vmem:[%s4301 + $0x78] sm:$0xf]
        %v5401 = vld [vmem:[%s4301 + $0x7c] sm:$0x1]
        %v5402 = vld [vmem:[%s4301 + $0x84] sm:$0xf]
        %v5403 = vld [vmem:[%s4301 + $0x88] sm:$0xf]
        %v5404 = vld [vmem:[%s4301 + $0x8c] sm:$0x1]
        %v5405 = vld [vmem:[%s4301 + $0x94] sm:$0xf]
        %v5406 = vld [vmem:[%s4301 + $0x98] sm:$0xf]
        %v5407 = vld [vmem:[%s4301 + $0x9c] sm:$0x1]
        %v5408 = vld [vmem:[%s4301 + $0xa4] sm:$0xf]
        %v5409 = vld [vmem:[%s4301 + $0xa8] sm:$0xf]
        %v5410 = vld [vmem:[%s4301 + $0xac] sm:$0x1]
        %v5411 = vld [vmem:[%s4301 + $0xb4] sm:$0xf]
        %v5412 = vld [vmem:[%s4301 + $0xb8] sm:$0xf]
        %v5413 = vld [vmem:[%s4301 + $0xbc] sm:$0x1]
        %v5414 = vld [vmem:[%s4301 + $0xc4] sm:$0xf]
        %v5415 = vld [vmem:[%s4301 + $0xc8] sm:$0xf]
        %v5416 = vld [vmem:[%s4301 + $0xcc] sm:$0x1]
        %v5417 = vld [vmem:[%s4301 + $0xd4] sm:$0xf]
        %v5418 = vld [vmem:[%s4301 + $0xd8] sm:$0xf]
        %v5419 = vld [vmem:[%s4301 + $0xdc] sm:$0x1]
        %v5420 = vld [vmem:[%s4301 + $0xe4] sm:$0xf]
        %v5421 = vld [vmem:[%s4301 + $0xe8] sm:$0xf]
        %v5422 = vld [vmem:[%s4301 + $0xec] sm:$0x1]
        %v5423 = vld [vmem:[%s4301 + $0xf4] sm:$0xf]
        %v5424 = vld [vmem:[%s4301 + $0xf8] sm:$0xf]
        %v5425 = vld [vmem:[%s4301 + $0xfc] sm:$0x1]
        %v5427 = vshrl.u32 %v5378, 16
        %v5429 = vrot.slane %v5427, 4
        %v5430 = vshll.u32 %v5378, 16
        %v5432 = vrot.slane %v5430, 5
        %v5433 = vor.u32 %v5429, %v5432
        %v5434 = vrot.slane %v5433, 4
        %v5436 = vshll.u32 %v5379, 16
        %v5438 = vrot.slane %v5436, 5
        %v5439 = vsel %vm1764, %v5434, %v5438
        %v5440 = vshrl.u32 %v5379, 16
        %v5442 = vrot.slane %v5440, 4
        %v5443 = vor.u32 %v5442, %v5438
        %v5444 = vrot.slane %v5443, 4
        %v5446 = vshll.u32 %v5380, 16
        %v5448 = vrot.slane %v5446, 5
        %v5449 = vsel %vm1764, %v5444, %v5448
        %v5451 = vshrl.u32 %v5381, 16
        %v5453 = vrot.slane %v5451, 4
        %v5454 = vshll.u32 %v5381, 16
        %v5456 = vrot.slane %v5454, 5
        %v5457 = vor.u32 %v5453, %v5456
        %v5458 = vrot.slane %v5457, 4
        %v5460 = vshll.u32 %v5382, 16
        %v5462 = vrot.slane %v5460, 5
        %v5463 = vsel %vm1764, %v5458, %v5462
        %v5464 = vshrl.u32 %v5382, 16
        %v5466 = vrot.slane %v5464, 4
        %v5467 = vor.u32 %v5466, %v5462
        %v5468 = vrot.slane %v5467, 4
        %v5470 = vshll.u32 %v5383, 16
        %v5472 = vrot.slane %v5470, 5
        %v5473 = vsel %vm1764, %v5468, %v5472
        %v5475 = vshrl.u32 %v5384, 16
        %v5477 = vrot.slane %v5475, 4
        %v5478 = vshll.u32 %v5384, 16
        %v5480 = vrot.slane %v5478, 5
        %v5481 = vor.u32 %v5477, %v5480
        %v5482 = vrot.slane %v5481, 4
        %v5484 = vshll.u32 %v5385, 16
        %v5486 = vrot.slane %v5484, 5
        %v5487 = vsel %vm1764, %v5482, %v5486
        %v5488 = vshrl.u32 %v5385, 16
        %v5490 = vrot.slane %v5488, 4
        %v5491 = vor.u32 %v5490, %v5486
        %v5492 = vrot.slane %v5491, 4
        %v5494 = vshll.u32 %v5386, 16
        %v5496 = vrot.slane %v5494, 5
        %v5497 = vsel %vm1764, %v5492, %v5496
        %v5499 = vshrl.u32 %v5387, 16
        %v5501 = vrot.slane %v5499, 4
        %v5502 = vshll.u32 %v5387, 16
        %v5504 = vrot.slane %v5502, 5
        %v5505 = vor.u32 %v5501, %v5504
        %v5506 = vrot.slane %v5505, 4
        %v5508 = vshll.u32 %v5388, 16
        %v5510 = vrot.slane %v5508, 5
        %v5511 = vsel %vm1764, %v5506, %v5510
        %v5512 = vshrl.u32 %v5388, 16
        %v5514 = vrot.slane %v5512, 4
        %v5515 = vor.u32 %v5514, %v5510
        %v5516 = vrot.slane %v5515, 4
        %v5518 = vshll.u32 %v5389, 16
        %v5520 = vrot.slane %v5518, 5
        %v5521 = vsel %vm1764, %v5516, %v5520
        %v5523 = vshrl.u32 %v5390, 16
        %v5525 = vrot.slane %v5523, 4
        %v5526 = vshll.u32 %v5390, 16
        %v5528 = vrot.slane %v5526, 5
        %v5529 = vor.u32 %v5525, %v5528
        %v5530 = vrot.slane %v5529, 4
        %v5532 = vshll.u32 %v5391, 16
        %v5534 = vrot.slane %v5532, 5
        %v5535 = vsel %vm1764, %v5530, %v5534
        %v5536 = vshrl.u32 %v5391, 16
        %v5538 = vrot.slane %v5536, 4
        %v5539 = vor.u32 %v5538, %v5534
        %v5540 = vrot.slane %v5539, 4
        %v5542 = vshll.u32 %v5392, 16
        %v5544 = vrot.slane %v5542, 5
        %v5545 = vsel %vm1764, %v5540, %v5544
        %v5547 = vshrl.u32 %v5393, 16
        %v5549 = vrot.slane %v5547, 4
        %v5550 = vshll.u32 %v5393, 16
        %v5552 = vrot.slane %v5550, 5
        %v5553 = vor.u32 %v5549, %v5552
        %v5554 = vrot.slane %v5553, 4
        %v5556 = vshll.u32 %v5394, 16
        %v5558 = vrot.slane %v5556, 5
        %v5559 = vsel %vm1764, %v5554, %v5558
        %v5560 = vshrl.u32 %v5394, 16
        %v5562 = vrot.slane %v5560, 4
        %v5563 = vor.u32 %v5562, %v5558
        %v5564 = vrot.slane %v5563, 4
        %v5566 = vshll.u32 %v5395, 16
        %v5568 = vrot.slane %v5566, 5
        %v5569 = vsel %vm1764, %v5564, %v5568
        %v5571 = vshrl.u32 %v5396, 16
        %v5573 = vrot.slane %v5571, 4
        %v5574 = vshll.u32 %v5396, 16
        %v5576 = vrot.slane %v5574, 5
        %v5577 = vor.u32 %v5573, %v5576
        %v5578 = vrot.slane %v5577, 4
        %v5580 = vshll.u32 %v5397, 16
        %v5582 = vrot.slane %v5580, 5
        %v5583 = vsel %vm1764, %v5578, %v5582
        %v5584 = vshrl.u32 %v5397, 16
        %v5586 = vrot.slane %v5584, 4
        %v5587 = vor.u32 %v5586, %v5582
        %v5588 = vrot.slane %v5587, 4
        %v5590 = vshll.u32 %v5398, 16
        %v5592 = vrot.slane %v5590, 5
        %v5593 = vsel %vm1764, %v5588, %v5592
        %v5595 = vshrl.u32 %v5399, 16
        %v5597 = vrot.slane %v5595, 4
        %v5598 = vshll.u32 %v5399, 16
        %v5600 = vrot.slane %v5598, 5
        %v5601 = vor.u32 %v5597, %v5600
        %v5602 = vrot.slane %v5601, 4
        %v5604 = vshll.u32 %v5400, 16
        %v5606 = vrot.slane %v5604, 5
        %v5607 = vsel %vm1764, %v5602, %v5606
        %v5608 = vshrl.u32 %v5400, 16
        %v5610 = vrot.slane %v5608, 4
        %v5611 = vor.u32 %v5610, %v5606
        %v5612 = vrot.slane %v5611, 4
        %v5614 = vshll.u32 %v5401, 16
        %v5616 = vrot.slane %v5614, 5
        %v5617 = vsel %vm1764, %v5612, %v5616
        %v5619 = vshrl.u32 %v5402, 16
        %v5621 = vrot.slane %v5619, 4
        %v5622 = vshll.u32 %v5402, 16
        %v5624 = vrot.slane %v5622, 5
        %v5625 = vor.u32 %v5621, %v5624
        %v5626 = vrot.slane %v5625, 4
        %v5628 = vshll.u32 %v5403, 16
        %v5630 = vrot.slane %v5628, 5
        %v5631 = vsel %vm1764, %v5626, %v5630
        %v5632 = vshrl.u32 %v5403, 16
        %v5634 = vrot.slane %v5632, 4
        %v5635 = vor.u32 %v5634, %v5630
        %v5636 = vrot.slane %v5635, 4
        %v5638 = vshll.u32 %v5404, 16
        %v5640 = vrot.slane %v5638, 5
        %v5641 = vsel %vm1764, %v5636, %v5640
        %v5643 = vshrl.u32 %v5405, 16
        %v5645 = vrot.slane %v5643, 4
        %v5646 = vshll.u32 %v5405, 16
        %v5648 = vrot.slane %v5646, 5
        %v5649 = vor.u32 %v5645, %v5648
        %v5650 = vrot.slane %v5649, 4
        %v5652 = vshll.u32 %v5406, 16
        %v5654 = vrot.slane %v5652, 5
        %v5655 = vsel %vm1764, %v5650, %v5654
        %v5656 = vshrl.u32 %v5406, 16
        %v5658 = vrot.slane %v5656, 4
        %v5659 = vor.u32 %v5658, %v5654
        %v5660 = vrot.slane %v5659, 4
        %v5662 = vshll.u32 %v5407, 16
        %v5664 = vrot.slane %v5662, 5
        %v5665 = vsel %vm1764, %v5660, %v5664
        %v5667 = vshrl.u32 %v5408, 16
        %v5669 = vrot.slane %v5667, 4
        %v5670 = vshll.u32 %v5408, 16
        %v5672 = vrot.slane %v5670, 5
        %v5673 = vor.u32 %v5669, %v5672
        %v5674 = vrot.slane %v5673, 4
        %v5676 = vshll.u32 %v5409, 16
        %v5678 = vrot.slane %v5676, 5
        %v5679 = vsel %vm1764, %v5674, %v5678
        %v5680 = vshrl.u32 %v5409, 16
        %v5682 = vrot.slane %v5680, 4
        %v5683 = vor.u32 %v5682, %v5678
        %v5684 = vrot.slane %v5683, 4
        %v5686 = vshll.u32 %v5410, 16
        %v5688 = vrot.slane %v5686, 5
        %v5689 = vsel %vm1764, %v5684, %v5688
        %v5691 = vshrl.u32 %v5411, 16
        %v5693 = vrot.slane %v5691, 4
        %v5694 = vshll.u32 %v5411, 16
        %v5696 = vrot.slane %v5694, 5
        %v5697 = vor.u32 %v5693, %v5696
        %v5698 = vrot.slane %v5697, 4
        %v5700 = vshll.u32 %v5412, 16
        %v5702 = vrot.slane %v5700, 5
        %v5703 = vsel %vm1764, %v5698, %v5702
        %v5704 = vshrl.u32 %v5412, 16
        %v5706 = vrot.slane %v5704, 4
        %v5707 = vor.u32 %v5706, %v5702
        %v5708 = vrot.slane %v5707, 4
        %v5710 = vshll.u32 %v5413, 16
        %v5712 = vrot.slane %v5710, 5
        %v5713 = vsel %vm1764, %v5708, %v5712
        %v5715 = vshrl.u32 %v5414, 16
        %v5717 = vrot.slane %v5715, 4
        %v5718 = vshll.u32 %v5414, 16
        %v5720 = vrot.slane %v5718, 5
        %v5721 = vor.u32 %v5717, %v5720
        %v5722 = vrot.slane %v5721, 4
        %v5724 = vshll.u32 %v5415, 16
        %v5726 = vrot.slane %v5724, 5
        %v5727 = vsel %vm1764, %v5722, %v5726
        %v5728 = vshrl.u32 %v5415, 16
        %v5730 = vrot.slane %v5728, 4
        %v5731 = vor.u32 %v5730, %v5726
        %v5732 = vrot.slane %v5731, 4
        %v5734 = vshll.u32 %v5416, 16
        %v5736 = vrot.slane %v5734, 5
        %v5737 = vsel %vm1764, %v5732, %v5736
        %v5739 = vshrl.u32 %v5417, 16
        %v5741 = vrot.slane %v5739, 4
        %v5742 = vshll.u32 %v5417, 16
        %v5744 = vrot.slane %v5742, 5
        %v5745 = vor.u32 %v5741, %v5744
        %v5746 = vrot.slane %v5745, 4
        %v5748 = vshll.u32 %v5418, 16
        %v5750 = vrot.slane %v5748, 5
        %v5751 = vsel %vm1764, %v5746, %v5750
        %v5752 = vshrl.u32 %v5418, 16
        %v5754 = vrot.slane %v5752, 4
        %v5755 = vor.u32 %v5754, %v5750
        %v5756 = vrot.slane %v5755, 4
        %v5758 = vshll.u32 %v5419, 16
        %v5760 = vrot.slane %v5758, 5
        %v5761 = vsel %vm1764, %v5756, %v5760
        %v5763 = vshrl.u32 %v5420, 16
        %v5765 = vrot.slane %v5763, 4
        %v5766 = vshll.u32 %v5420, 16
        %v5768 = vrot.slane %v5766, 5
        %v5769 = vor.u32 %v5765, %v5768
        %v5770 = vrot.slane %v5769, 4
        %v5772 = vshll.u32 %v5421, 16
        %v5774 = vrot.slane %v5772, 5
        %v5775 = vsel %vm1764, %v5770, %v5774
        %v5776 = vshrl.u32 %v5421, 16
        %v5778 = vrot.slane %v5776, 4
        %v5779 = vor.u32 %v5778, %v5774
        %v5780 = vrot.slane %v5779, 4
        %v5782 = vshll.u32 %v5422, 16
        %v5784 = vrot.slane %v5782, 5
        %v5785 = vsel %vm1764, %v5780, %v5784
        %v5787 = vshrl.u32 %v5423, 16
        %v5789 = vrot.slane %v5787, 4
        %v5790 = vshll.u32 %v5423, 16
        %v5792 = vrot.slane %v5790, 5
        %v5793 = vor.u32 %v5789, %v5792
        %v5794 = vrot.slane %v5793, 4
        %v5796 = vshll.u32 %v5424, 16
        %v5798 = vrot.slane %v5796, 5
        %v5799 = vsel %vm1764, %v5794, %v5798
        %v5800 = vshrl.u32 %v5424, 16
        %v5802 = vrot.slane %v5800, 4
        %v5803 = vor.u32 %v5802, %v5798
        %v5804 = vrot.slane %v5803, 4
        %v5806 = vshll.u32 %v5425, 16
        %v5808 = vrot.slane %v5806, 5
        %v5809 = vsel %vm1764, %v5804, %v5808
        %s5810 = scalar_lea.vmem [#allocation7], 512
        %v5811 = vld [vmem:[%s5810] sm:$0xf]
        %v5812 = vld [vmem:[%s5810 + $0x4] sm:$0xf]
        %v5813 = vld [vmem:[%s5810 + $0x8] sm:$0xf]
        %v5814 = vld [vmem:[%s5810 + $0xc] sm:$0xf]
        %v5815 = vld [vmem:[%s5810 + $0x10] sm:$0xf]
        %v5816 = vld [vmem:[%s5810 + $0x14] sm:$0xf]
        %v5817 = vld [vmem:[%s5810 + $0x18] sm:$0xf]
        %v5818 = vld [vmem:[%s5810 + $0x1c] sm:$0xf]
        %v5819 = vld [vmem:[%s5810 + $0x20] sm:$0xf]
        %v5820 = vld [vmem:[%s5810 + $0x24] sm:$0xf]
        %v5821 = vld [vmem:[%s5810 + $0x28] sm:$0xf]
        %v5822 = vld [vmem:[%s5810 + $0x2c] sm:$0xf]
        %v5823 = vld [vmem:[%s5810 + $0x30] sm:$0xf]
        %v5824 = vld [vmem:[%s5810 + $0x34] sm:$0xf]
        %v5825 = vld [vmem:[%s5810 + $0x38] sm:$0xf]
        %v5826 = vld [vmem:[%s5810 + $0x3c] sm:$0xf]
        %v5827 = vunpack.c.l.b16 %v5439
        %v5828 = vunpack.c.l.b16 %v5449
        %v5829 = vunpack.c.l.b16 %v5463
        %v5830 = vunpack.c.l.b16 %v5473
        %v5831 = vunpack.c.l.b16 %v5487
        %v5832 = vunpack.c.l.b16 %v5497
        %v5833 = vunpack.c.l.b16 %v5511
        %v5834 = vunpack.c.l.b16 %v5521
        %v5835 = vunpack.c.l.b16 %v5535
        %v5836 = vunpack.c.l.b16 %v5545
        %v5837 = vunpack.c.l.b16 %v5559
        %v5838 = vunpack.c.l.b16 %v5569
        %v5839 = vunpack.c.l.b16 %v5583
        %v5840 = vunpack.c.l.b16 %v5593
        %v5841 = vunpack.c.l.b16 %v5607
        %v5842 = vunpack.c.l.b16 %v5617
        %v5843 = vunpack.c.l.b16 %v5631
        %v5844 = vunpack.c.l.b16 %v5641
        %v5845 = vunpack.c.l.b16 %v5655
        %v5846 = vunpack.c.l.b16 %v5665
        %v5847 = vunpack.c.l.b16 %v5679
        %v5848 = vunpack.c.l.b16 %v5689
        %v5849 = vunpack.c.l.b16 %v5703
        %v5850 = vunpack.c.l.b16 %v5713
        %v5851 = vunpack.c.l.b16 %v5727
        %v5852 = vunpack.c.l.b16 %v5737
        %v5853 = vunpack.c.l.b16 %v5751
        %v5854 = vunpack.c.l.b16 %v5761
        %v5855 = vunpack.c.l.b16 %v5775
        %v5856 = vunpack.c.l.b16 %v5785
        %v5857 = vunpack.c.l.b16 %v5799
        %v5858 = vunpack.c.l.b16 %v5809
        %v5859 = vpack.c.b16 %v5828, %v5827
        %v5860 = vpack.c.b16 %v5830, %v5829
        %v5861 = vpack.c.b16 %v5832, %v5831
        %v5862 = vpack.c.b16 %v5834, %v5833
        %v5863 = vpack.c.b16 %v5836, %v5835
        %v5864 = vpack.c.b16 %v5838, %v5837
        %v5865 = vpack.c.b16 %v5840, %v5839
        %v5866 = vpack.c.b16 %v5842, %v5841
        %v5867 = vpack.c.b16 %v5844, %v5843
        %v5868 = vpack.c.b16 %v5846, %v5845
        %v5869 = vpack.c.b16 %v5848, %v5847
        %v5870 = vpack.c.b16 %v5850, %v5849
        %v5871 = vpack.c.b16 %v5852, %v5851
        %v5872 = vpack.c.b16 %v5854, %v5853
        %v5873 = vpack.c.b16 %v5856, %v5855
        %v5874 = vpack.c.b16 %v5858, %v5857
        %v5907 = vunpack.c.l.b16 %v5811
        %v5908 = vunpack.c.l.b16 %v5812
        %v5909 = vunpack.c.l.b16 %v5813
        %v5910 = vunpack.c.l.b16 %v5814
        %v5911 = vunpack.c.l.b16 %v5815
        %v5912 = vunpack.c.l.b16 %v5816
        %v5913 = vunpack.c.l.b16 %v5817
        %v5914 = vunpack.c.l.b16 %v5818
        %v5915 = vunpack.c.l.b16 %v5819
        %v5916 = vunpack.c.l.b16 %v5820
        %v5917 = vunpack.c.l.b16 %v5821
        %v5918 = vunpack.c.l.b16 %v5822
        %v5919 = vunpack.c.l.b16 %v5823
        %v5920 = vunpack.c.l.b16 %v5824
        %v5921 = vunpack.c.l.b16 %v5825
        %v5922 = vunpack.c.l.b16 %v5826
        %v5923 = vpack.c.b16 %v5908, %v5907
        %v5924 = vpack.c.b16 %v5910, %v5909
        %v5925 = vpack.c.b16 %v5912, %v5911
        %v5926 = vpack.c.b16 %v5914, %v5913
        %v5927 = vpack.c.b16 %v5916, %v5915
        %v5928 = vpack.c.b16 %v5918, %v5917
        %v5929 = vpack.c.b16 %v5920, %v5919
        %v5930 = vpack.c.b16 %v5922, %v5921
        %5939 = vmatprep.subr.bf16.mxu0 0
        %5940 = vmatpush1.bf16.msra.mxu0 %v5930
        %5941 = vmatprep.subr.bf16.mxu0 0
        %5942 = vmatpush1.bf16.msra.mxu0 %v5929
        %5943 = vmatprep.subr.bf16.mxu0 0
        %5944 = vmatpush1.bf16.msra.mxu0 %v5928
        %5945 = vmatprep.subr.bf16.mxu0 0
        %5946 = vmatpush1.bf16.msra.mxu0 %v5927
        %5947 = vmatprep.subr.bf16.mxu0 0
        %5948 = vmatpush1.bf16.msra.mxu0 %v5926
        %5949 = vmatprep.subr.bf16.mxu0 0
        %5950 = vmatpush1.bf16.msra.mxu0 %v5925
        %5951 = vmatprep.subr.bf16.mxu0 0
        %5952 = vmatpush1.bf16.msra.mxu0 %v5924
        %5953 = vmatprep.subr.bf16.mxu0 0
        %5954 = vmatpush1.bf16.msra.mxu0 %v5923
        %5955 = vmatprep.subr.bf16.mxu0 0
        %5956 = vmatpush2.bf16.msra.mxu0 0
        %5957 = vmatprep.subr.bf16.mxu0 0
        %5958 = vmatpush2.bf16.msra.mxu0 0
        %5959 = vmatprep.subr.bf16.mxu0 0
        %5960 = vmatpush2.bf16.msra.mxu0 0
        %5961 = vmatprep.subr.bf16.mxu0 0
        %5962 = vmatpush2.bf16.msra.mxu0 0
        %5963 = vmatprep.subr.bf16.mxu0 0
        %5964 = vmatpush2.bf16.msra.mxu0 0
        %5965 = vmatprep.subr.bf16.mxu0 0
        %5966 = vmatpush2.bf16.msra.mxu0 0
        %5967 = vmatprep.subr.bf16.mxu0 0
        %5968 = vmatpush2.bf16.msra.mxu0 0
        %5969 = vmatprep.subr.bf16.mxu0 0
        %5970 = vmatpush2.bf16.msra.mxu0 0
        %5971 = vmatprep.mubr.bf16.mxu0 0
        %5972 = vmatmul.mubr.bf16.gmra.mxu0 %v5859
        %v5973 = vpop.f32.mrf.mxu0
        %v5974 = vadd.f32 0.0, %v5973
        %v5975 = vpop.f32.mrf.mxu0
        %v5976 = vpop.f32.mrf.mxu0
        %v5977 = vadd.f32 0.0, %v5976
        %v5978 = vpop.f32.mrf.mxu0
        %5979 = vmatprep.mubr.bf16.mxu0 0
        %5980 = vmatmul.mubr.bf16.gmra.mxu0 %v5860
        %v5981 = vpop.f32.mrf.mxu0
        %v5982 = vadd.f32 0.0, %v5981
        %v5983 = vpop.f32.mrf.mxu0
        %v5984 = vpop.f32.mrf.mxu0
        %v5985 = vadd.f32 0.0, %v5984
        %v5986 = vpop.f32.mrf.mxu0
        %5987 = vmatprep.mubr.bf16.mxu0 0
        %5988 = vmatmul.mubr.bf16.gmra.mxu0 %v5861
        %v5989 = vpop.f32.mrf.mxu0
        %v5990 = vadd.f32 0.0, %v5989
        %v5991 = vpop.f32.mrf.mxu0
        %v5992 = vpop.f32.mrf.mxu0
        %v5993 = vadd.f32 0.0, %v5992
        %v5994 = vpop.f32.mrf.mxu0
        %5995 = vmatprep.mubr.bf16.mxu0 0
        %5996 = vmatmul.mubr.bf16.gmra.mxu0 %v5862
        %v5997 = vpop.f32.mrf.mxu0
        %v5998 = vadd.f32 0.0, %v5997
        %v5999 = vpop.f32.mrf.mxu0
        %v6000 = vpop.f32.mrf.mxu0
        %v6001 = vadd.f32 0.0, %v6000
        %v6002 = vpop.f32.mrf.mxu0
        %6003 = vmatprep.mubr.bf16.mxu0 0
        %6004 = vmatmul.mubr.bf16.gmra.mxu0 %v5863
        %v6005 = vpop.f32.mrf.mxu0
        %v6006 = vadd.f32 0.0, %v6005
        %v6007 = vpop.f32.mrf.mxu0
        %v6008 = vpop.f32.mrf.mxu0
        %v6009 = vadd.f32 0.0, %v6008
        %v6010 = vpop.f32.mrf.mxu0
        %6011 = vmatprep.mubr.bf16.mxu0 0
        %6012 = vmatmul.mubr.bf16.gmra.mxu0 %v5864
        %v6013 = vpop.f32.mrf.mxu0
        %v6014 = vadd.f32 0.0, %v6013
        %v6015 = vpop.f32.mrf.mxu0
        %v6016 = vpop.f32.mrf.mxu0
        %v6017 = vadd.f32 0.0, %v6016
        %v6018 = vpop.f32.mrf.mxu0
        %6019 = vmatprep.mubr.bf16.mxu0 0
        %6020 = vmatmul.mubr.bf16.gmra.mxu0 %v5865
        %v6021 = vpop.f32.mrf.mxu0
        %v6022 = vadd.f32 0.0, %v6021
        %v6023 = vpop.f32.mrf.mxu0
        %v6024 = vpop.f32.mrf.mxu0
        %v6025 = vadd.f32 0.0, %v6024
        %v6026 = vpop.f32.mrf.mxu0
        %6027 = vmatprep.mubr.bf16.mxu0 0
        %6028 = vmatmul.mubr.bf16.gmra.mxu0 %v5866
        %v6029 = vpop.f32.mrf.mxu0
        %v6030 = vadd.f32 0.0, %v6029
        %v6031 = vpop.f32.mrf.mxu0
        %v6032 = vpop.f32.mrf.mxu0
        %v6033 = vadd.f32 0.0, %v6032
        %v6034 = vpop.f32.mrf.mxu0
        %6035 = vmatprep.mubr.bf16.mxu0 0
        %6036 = vmatmul.mubr.bf16.gmra.mxu0 %v5867
        %v6037 = vpop.f32.mrf.mxu0
        %v6038 = vadd.f32 0.0, %v6037
        %v6039 = vpop.f32.mrf.mxu0
        %v6040 = vpop.f32.mrf.mxu0
        %v6041 = vadd.f32 0.0, %v6040
        %v6042 = vpop.f32.mrf.mxu0
        %6043 = vmatprep.mubr.bf16.mxu0 0
        %6044 = vmatmul.mubr.bf16.gmra.mxu0 %v5868
        %v6045 = vpop.f32.mrf.mxu0
        %v6046 = vadd.f32 0.0, %v6045
        %v6047 = vpop.f32.mrf.mxu0
        %v6048 = vpop.f32.mrf.mxu0
        %v6049 = vadd.f32 0.0, %v6048
        %v6050 = vpop.f32.mrf.mxu0
        %6051 = vmatprep.mubr.bf16.mxu0 0
        %6052 = vmatmul.mubr.bf16.gmra.mxu0 %v5869
        %v6053 = vpop.f32.mrf.mxu0
        %v6054 = vadd.f32 0.0, %v6053
        %v6055 = vpop.f32.mrf.mxu0
        %v6056 = vpop.f32.mrf.mxu0
        %v6057 = vadd.f32 0.0, %v6056
        %v6058 = vpop.f32.mrf.mxu0
        %6059 = vmatprep.mubr.bf16.mxu0 0
        %6060 = vmatmul.mubr.bf16.gmra.mxu0 %v5870
        %v6061 = vpop.f32.mrf.mxu0
        %v6062 = vadd.f32 0.0, %v6061
        %v6063 = vpop.f32.mrf.mxu0
        %v6064 = vpop.f32.mrf.mxu0
        %v6065 = vadd.f32 0.0, %v6064
        %v6066 = vpop.f32.mrf.mxu0
        %6067 = vmatprep.mubr.bf16.mxu0 0
        %6068 = vmatmul.mubr.bf16.gmra.mxu0 %v5871
        %v6069 = vpop.f32.mrf.mxu0
        %v6070 = vadd.f32 0.0, %v6069
        %v6071 = vpop.f32.mrf.mxu0
        %v6072 = vpop.f32.mrf.mxu0
        %v6073 = vadd.f32 0.0, %v6072
        %v6074 = vpop.f32.mrf.mxu0
        %6075 = vmatprep.mubr.bf16.mxu0 0
        %6076 = vmatmul.mubr.bf16.gmra.mxu0 %v5872
        %v6077 = vpop.f32.mrf.mxu0
        %v6078 = vadd.f32 0.0, %v6077
        %v6079 = vpop.f32.mrf.mxu0
        %v6080 = vpop.f32.mrf.mxu0
        %v6081 = vadd.f32 0.0, %v6080
        %v6082 = vpop.f32.mrf.mxu0
        %6083 = vmatprep.mubr.bf16.mxu0 0
        %6084 = vmatmul.mubr.bf16.gmra.mxu0 %v5873
        %v6085 = vpop.f32.mrf.mxu0
        %v6086 = vadd.f32 0.0, %v6085
        %v6087 = vpop.f32.mrf.mxu0
        %v6088 = vpop.f32.mrf.mxu0
        %v6089 = vadd.f32 0.0, %v6088
        %v6090 = vpop.f32.mrf.mxu0
        %6091 = vmatprep.mubr.bf16.mxu0 0
        %6092 = vmatmul.mubr.bf16.gmra.mxu0 %v5874
        %v6093 = vpop.f32.mrf.mxu0
        %v6094 = vadd.f32 0.0, %v6093
        %v6095 = vpop.f32.mrf.mxu0
        %v6096 = vpop.f32.mrf.mxu0
        %v6097 = vadd.f32 0.0, %v6096
        %v6098 = vpop.f32.mrf.mxu0
        %6099 = vdwg.mxu0
        %v6100 = vadd.f32 %v5346, %v5974
        %v6101 = vadd.f32 %v5347, %v5977
        %v6102 = vadd.f32 %v5348, %v5982
        %v6103 = vadd.f32 %v5349, %v5985
        %v6104 = vadd.f32 %v5350, %v5990
        %v6105 = vadd.f32 %v5351, %v5993
        %v6106 = vadd.f32 %v5352, %v5998
        %v6107 = vadd.f32 %v5353, %v6001
        %v6108 = vadd.f32 %v5354, %v6006
        %v6109 = vadd.f32 %v5355, %v6009
        %v6110 = vadd.f32 %v5356, %v6014
        %v6111 = vadd.f32 %v5357, %v6017
        %v6112 = vadd.f32 %v5358, %v6022
        %v6113 = vadd.f32 %v5359, %v6025
        %v6114 = vadd.f32 %v5360, %v6030
        %v6115 = vadd.f32 %v5361, %v6033
        %v6116 = vadd.f32 %v5362, %v6038
        %v6117 = vadd.f32 %v5363, %v6041
        %v6118 = vadd.f32 %v5364, %v6046
        %v6119 = vadd.f32 %v5365, %v6049
        %v6120 = vadd.f32 %v5366, %v6054
        %v6121 = vadd.f32 %v5367, %v6057
        %v6122 = vadd.f32 %v5368, %v6062
        %v6123 = vadd.f32 %v5369, %v6065
        %v6124 = vadd.f32 %v5370, %v6070
        %v6125 = vadd.f32 %v5371, %v6073
        %v6126 = vadd.f32 %v5372, %v6078
        %v6127 = vadd.f32 %v5373, %v6081
        %v6128 = vadd.f32 %v5374, %v6086
        %v6129 = vadd.f32 %v5375, %v6089
        %v6130 = vadd.f32 %v5376, %v6094
        %v6131 = vadd.f32 %v5377, %v6097
        %v6133 = vlaneseq
        %v6134 = vshrl.u32 %v6133, 7
        %v6135 = vsub.s32 0, %v6134
        %v6136 = vrot.slane %v699, %v6135
        %v6138 = vadd.f32 %v6100, %v6136
        %v6139 = vadd.f32 %v6101, %v6136
        %v6140 = vadd.f32 %v6102, %v6136
        %v6141 = vadd.f32 %v6103, %v6136
        %v6142 = vadd.f32 %v6104, %v6136
        %v6143 = vadd.f32 %v6105, %v6136
        %v6144 = vadd.f32 %v6106, %v6136
        %v6145 = vadd.f32 %v6107, %v6136
        %v6146 = vadd.f32 %v6108, %v6136
        %v6147 = vadd.f32 %v6109, %v6136
        %v6148 = vadd.f32 %v6110, %v6136
        %v6149 = vadd.f32 %v6111, %v6136
        %v6150 = vadd.f32 %v6112, %v6136
        %v6151 = vadd.f32 %v6113, %v6136
        %v6152 = vadd.f32 %v6114, %v6136
        %v6153 = vadd.f32 %v6115, %v6136
        %v6154 = vadd.f32 %v6116, %v6136
        %v6155 = vadd.f32 %v6117, %v6136
        %v6156 = vadd.f32 %v6118, %v6136
        %v6157 = vadd.f32 %v6119, %v6136
        %v6158 = vadd.f32 %v6120, %v6136
        %v6159 = vadd.f32 %v6121, %v6136
        %v6160 = vadd.f32 %v6122, %v6136
        %v6161 = vadd.f32 %v6123, %v6136
        %v6162 = vadd.f32 %v6124, %v6136
        %v6163 = vadd.f32 %v6125, %v6136
        %v6164 = vadd.f32 %v6126, %v6136
        %v6165 = vadd.f32 %v6127, %v6136
        %v6166 = vadd.f32 %v6128, %v6136
        %v6167 = vadd.f32 %v6129, %v6136
        %v6168 = vadd.f32 %v6130, %v6136
        %v6169 = vadd.f32 %v6131, %v6136
        %v6170 = vmax.f32 %v6138, 0.0
        %v6171 = vmax.f32 %v6139, 0.0
        %v6172 = vmax.f32 %v6140, 0.0
        %v6173 = vmax.f32 %v6141, 0.0
        %v6174 = vmax.f32 %v6142, 0.0
        %v6175 = vmax.f32 %v6143, 0.0
        %v6176 = vmax.f32 %v6144, 0.0
        %v6177 = vmax.f32 %v6145, 0.0
        %v6178 = vmax.f32 %v6146, 0.0
        %v6179 = vmax.f32 %v6147, 0.0
        %v6180 = vmax.f32 %v6148, 0.0
        %v6181 = vmax.f32 %v6149, 0.0
        %v6182 = vmax.f32 %v6150, 0.0
        %v6183 = vmax.f32 %v6151, 0.0
        %v6184 = vmax.f32 %v6152, 0.0
        %v6185 = vmax.f32 %v6153, 0.0
        %v6186 = vmax.f32 %v6154, 0.0
        %v6187 = vmax.f32 %v6155, 0.0
        %v6188 = vmax.f32 %v6156, 0.0
        %v6189 = vmax.f32 %v6157, 0.0
        %v6190 = vmax.f32 %v6158, 0.0
        %v6191 = vmax.f32 %v6159, 0.0
        %v6192 = vmax.f32 %v6160, 0.0
        %v6193 = vmax.f32 %v6161, 0.0
        %v6194 = vmax.f32 %v6162, 0.0
        %v6195 = vmax.f32 %v6163, 0.0
        %v6196 = vmax.f32 %v6164, 0.0
        %v6197 = vmax.f32 %v6165, 0.0
        %v6198 = vmax.f32 %v6166, 0.0
        %v6199 = vmax.f32 %v6167, 0.0
        %v6200 = vmax.f32 %v6168, 0.0
        %v6201 = vmax.f32 %v6169, 0.0
        %v6202 = vpack.c.bf16 %v6171, %v6170
        %v6203 = vpack.c.bf16 %v6173, %v6172
        %v6204 = vpack.c.bf16 %v6175, %v6174
        %v6205 = vpack.c.bf16 %v6177, %v6176
        %v6206 = vpack.c.bf16 %v6179, %v6178
        %v6207 = vpack.c.bf16 %v6181, %v6180
        %v6208 = vpack.c.bf16 %v6183, %v6182
        %v6209 = vpack.c.bf16 %v6185, %v6184
        %v6210 = vpack.c.bf16 %v6187, %v6186
        %v6211 = vpack.c.bf16 %v6189, %v6188
        %v6212 = vpack.c.bf16 %v6191, %v6190
        %v6213 = vpack.c.bf16 %v6193, %v6192
        %v6214 = vpack.c.bf16 %v6195, %v6194
        %v6215 = vpack.c.bf16 %v6197, %v6196
        %v6216 = vpack.c.bf16 %v6199, %v6198
        %v6217 = vpack.c.bf16 %v6201, %v6200
        %v6234 = vunpack.c.l.b16 %v6202
        %v6235 = vunpack.c.h.b16 %v6202
        %v6236 = vunpack.c.l.b16 %v6203
        %v6237 = vunpack.c.h.b16 %v6203
        %v6238 = vunpack.c.l.b16 %v6204
        %v6239 = vunpack.c.h.b16 %v6204
        %v6240 = vunpack.c.l.b16 %v6205
        %v6241 = vunpack.c.h.b16 %v6205
        %v6242 = vunpack.c.l.b16 %v6206
        %v6243 = vunpack.c.h.b16 %v6206
        %v6244 = vunpack.c.l.b16 %v6207
        %v6245 = vunpack.c.h.b16 %v6207
        %v6246 = vunpack.c.l.b16 %v6208
        %v6247 = vunpack.c.h.b16 %v6208
        %v6248 = vunpack.c.l.b16 %v6209
        %v6249 = vunpack.c.h.b16 %v6209
        %v6250 = vunpack.c.l.b16 %v6210
        %v6251 = vunpack.c.h.b16 %v6210
        %v6252 = vunpack.c.l.b16 %v6211
        %v6253 = vunpack.c.h.b16 %v6211
        %v6254 = vunpack.c.l.b16 %v6212
        %v6255 = vunpack.c.h.b16 %v6212
        %v6256 = vunpack.c.l.b16 %v6213
        %v6257 = vunpack.c.h.b16 %v6213
        %v6258 = vunpack.c.l.b16 %v6214
        %v6259 = vunpack.c.h.b16 %v6214
        %v6260 = vunpack.c.l.b16 %v6215
        %v6261 = vunpack.c.h.b16 %v6215
        %v6262 = vunpack.c.l.b16 %v6216
        %v6263 = vunpack.c.h.b16 %v6216
        %v6264 = vunpack.c.l.b16 %v6217
        %v6265 = vunpack.c.h.b16 %v6217
        %v6266 = vpack.c.b16 %v6234, %v6234
        %v6267 = vpack.c.b16 %v6235, %v6235
        %v6268 = vpack.c.b16 %v6236, %v6236
        %v6269 = vpack.c.b16 %v6237, %v6237
        %v6270 = vpack.c.b16 %v6238, %v6238
        %v6271 = vpack.c.b16 %v6239, %v6239
        %v6272 = vpack.c.b16 %v6240, %v6240
        %v6273 = vpack.c.b16 %v6241, %v6241
        %v6274 = vpack.c.b16 %v6242, %v6242
        %v6275 = vpack.c.b16 %v6243, %v6243
        %v6276 = vpack.c.b16 %v6244, %v6244
        %v6277 = vpack.c.b16 %v6245, %v6245
        %v6278 = vpack.c.b16 %v6246, %v6246
        %v6279 = vpack.c.b16 %v6247, %v6247
        %v6280 = vpack.c.b16 %v6248, %v6248
        %v6281 = vpack.c.b16 %v6249, %v6249
        %v6282 = vpack.c.b16 %v6250, %v6250
        %v6283 = vpack.c.b16 %v6251, %v6251
        %v6284 = vpack.c.b16 %v6252, %v6252
        %v6285 = vpack.c.b16 %v6253, %v6253
        %v6286 = vpack.c.b16 %v6254, %v6254
        %v6287 = vpack.c.b16 %v6255, %v6255
        %v6288 = vpack.c.b16 %v6256, %v6256
        %v6289 = vpack.c.b16 %v6257, %v6257
        %v6290 = vpack.c.b16 %v6258, %v6258
        %v6291 = vpack.c.b16 %v6259, %v6259
        %v6292 = vpack.c.b16 %v6260, %v6260
        %v6293 = vpack.c.b16 %v6261, %v6261
        %v6294 = vpack.c.b16 %v6262, %v6262
        %v6295 = vpack.c.b16 %v6263, %v6263
        %v6296 = vpack.c.b16 %v6264, %v6264
        %v6297 = vpack.c.b16 %v6265, %v6265
        %6330 = vst [vmem:[%s410 + $0x4] sm:$0xf] %v6266
        %6331 = vst [vmem:[%s410 + $0x8] sm:$0xf] %v6267
        %6332 = vst [vmem:[%s410 + $0x14] sm:$0xf] %v6268
        %6333 = vst [vmem:[%s410 + $0x18] sm:$0xf] %v6269
        %6334 = vst [vmem:[%s410 + $0x24] sm:$0xf] %v6270
        %6335 = vst [vmem:[%s410 + $0x28] sm:$0xf] %v6271
        %6336 = vst [vmem:[%s410 + $0x34] sm:$0xf] %v6272
        %6337 = vst [vmem:[%s410 + $0x38] sm:$0xf] %v6273
        %6338 = vst [vmem:[%s410 + $0x44] sm:$0xf] %v6274
        %6339 = vst [vmem:[%s410 + $0x48] sm:$0xf] %v6275
        %6340 = vst [vmem:[%s410 + $0x54] sm:$0xf] %v6276
        %6341 = vst [vmem:[%s410 + $0x58] sm:$0xf] %v6277
        %6342 = vst [vmem:[%s410 + $0x64] sm:$0xf] %v6278
        %6343 = vst [vmem:[%s410 + $0x68] sm:$0xf] %v6279
        %6344 = vst [vmem:[%s410 + $0x74] sm:$0xf] %v6280
        %6345 = vst [vmem:[%s410 + $0x78] sm:$0xf] %v6281
        %6346 = vst [vmem:[%s410 + $0x84] sm:$0xf] %v6282
        %6347 = vst [vmem:[%s410 + $0x88] sm:$0xf] %v6283
        %6348 = vst [vmem:[%s410 + $0x94] sm:$0xf] %v6284
        %6349 = vst [vmem:[%s410 + $0x98] sm:$0xf] %v6285
        %6350 = vst [vmem:[%s410 + $0xa4] sm:$0xf] %v6286
        %6351 = vst [vmem:[%s410 + $0xa8] sm:$0xf] %v6287
        %6352 = vst [vmem:[%s410 + $0xb4] sm:$0xf] %v6288
        %6353 = vst [vmem:[%s410 + $0xb8] sm:$0xf] %v6289
        %6354 = vst [vmem:[%s410 + $0xc4] sm:$0xf] %v6290
        %6355 = vst [vmem:[%s410 + $0xc8] sm:$0xf] %v6291
        %6356 = vst [vmem:[%s410 + $0xd4] sm:$0xf] %v6292
        %6357 = vst [vmem:[%s410 + $0xd8] sm:$0xf] %v6293
        %6358 = vst [vmem:[%s410 + $0xe4] sm:$0xf] %v6294
        %6359 = vst [vmem:[%s410 + $0xe8] sm:$0xf] %v6295
        %6360 = vst [vmem:[%s410 + $0xf4] sm:$0xf] %v6296
        %6361 = vst [vmem:[%s410 + $0xf8] sm:$0xf] %v6297
        %v6362 = vld [vmem:[#allocation3] sm:$0x8]
        %v6363 = vld [vmem:[#allocation3 + $0x4] sm:$0xf]
        %v6364 = vld [vmem:[#allocation3 + $0x8] sm:$0xf]
        %v6365 = vld [vmem:[#allocation3 + $0x10] sm:$0x8]
        %v6366 = vld [vmem:[#allocation3 + $0x14] sm:$0xf]
        %v6367 = vld [vmem:[#allocation3 + $0x18] sm:$0xf]
        %v6368 = vld [vmem:[#allocation3 + $0x20] sm:$0x8]
        %v6369 = vld [vmem:[#allocation3 + $0x24] sm:$0xf]
        %v6370 = vld [vmem:[#allocation3 + $0x28] sm:$0xf]
        %v6371 = vld [vmem:[#allocation3 + $0x30] sm:$0x8]
        %v6372 = vld [vmem:[#allocation3 + $0x34] sm:$0xf]
        %v6373 = vld [vmem:[#allocation3 + $0x38] sm:$0xf]
        %v6374 = vld [vmem:[#allocation3 + $0x40] sm:$0x8]
        %v6375 = vld [vmem:[#allocation3 + $0x44] sm:$0xf]
        %v6376 = vld [vmem:[#allocation3 + $0x48] sm:$0xf]
        %v6377 = vld [vmem:[#allocation3 + $0x50] sm:$0x8]
        %v6378 = vld [vmem:[#allocation3 + $0x54] sm:$0xf]
        %v6379 = vld [vmem:[#allocation3 + $0x58] sm:$0xf]
        %v6380 = vld [vmem:[#allocation3 + $0x60] sm:$0x8]
        %v6381 = vld [vmem:[#allocation3 + $0x64] sm:$0xf]
        %v6382 = vld [vmem:[#allocation3 + $0x68] sm:$0xf]
        %v6383 = vld [vmem:[#allocation3 + $0x70] sm:$0x8]
        %v6384 = vld [vmem:[#allocation3 + $0x74] sm:$0xf]
        %v6385 = vld [vmem:[#allocation3 + $0x78] sm:$0xf]
        %v6386 = vld [vmem:[#allocation3 + $0x80] sm:$0x8]
        %v6387 = vld [vmem:[#allocation3 + $0x84] sm:$0xf]
        %v6388 = vld [vmem:[#allocation3 + $0x88] sm:$0xf]
        %v6389 = vld [vmem:[#allocation3 + $0x90] sm:$0x8]
        %v6390 = vld [vmem:[#allocation3 + $0x94] sm:$0xf]
        %v6391 = vld [vmem:[#allocation3 + $0x98] sm:$0xf]
        %v6392 = vld [vmem:[#allocation3 + $0xa0] sm:$0x8]
        %v6393 = vld [vmem:[#allocation3 + $0xa4] sm:$0xf]
        %v6394 = vld [vmem:[#allocation3 + $0xa8] sm:$0xf]
        %v6395 = vld [vmem:[#allocation3 + $0xb0] sm:$0x8]
        %v6396 = vld [vmem:[#allocation3 + $0xb4] sm:$0xf]
        %v6397 = vld [vmem:[#allocation3 + $0xb8] sm:$0xf]
        %v6398 = vld [vmem:[#allocation3 + $0xc0] sm:$0x8]
        %v6399 = vld [vmem:[#allocation3 + $0xc4] sm:$0xf]
        %v6400 = vld [vmem:[#allocation3 + $0xc8] sm:$0xf]
        %v6401 = vld [vmem:[#allocation3 + $0xd0] sm:$0x8]
        %v6402 = vld [vmem:[#allocation3 + $0xd4] sm:$0xf]
        %v6403 = vld [vmem:[#allocation3 + $0xd8] sm:$0xf]
        %v6404 = vld [vmem:[#allocation3 + $0xe0] sm:$0x8]
        %v6405 = vld [vmem:[#allocation3 + $0xe4] sm:$0xf]
        %v6406 = vld [vmem:[#allocation3 + $0xe8] sm:$0xf]
        %v6407 = vld [vmem:[#allocation3 + $0xf0] sm:$0x8]
        %v6408 = vld [vmem:[#allocation3 + $0xf4] sm:$0xf]
        %v6409 = vld [vmem:[#allocation3 + $0xf8] sm:$0xf]
        %v6411 = vshrl.u32 %v6362, 16
        %v6413 = vrot.slane %v6411, 7
        %v6414 = vrot.slane %v6413, 4
        %v6416 = vshrl.u32 %v6363, 16
        %v6418 = vrot.slane %v6416, 7
        %v6419 = vshll.u32 %v6363, 16
        %v6421 = vor.u32 %v6418, %v6419
        %v6422 = vsel %vm750, %v6414, %v6421
        %v6423 = vrot.slane %v6418, 4
        %v6425 = vshrl.u32 %v6364, 16
        %v6427 = vrot.slane %v6425, 7
        %v6428 = vshll.u32 %v6364, 16
        %v6430 = vor.u32 %v6427, %v6428
        %v6431 = vsel %vm750, %v6423, %v6430
        %v6433 = vshrl.u32 %v6365, 16
        %v6435 = vrot.slane %v6433, 7
        %v6436 = vrot.slane %v6435, 4
        %v6438 = vshrl.u32 %v6366, 16
        %v6440 = vrot.slane %v6438, 7
        %v6441 = vshll.u32 %v6366, 16
        %v6443 = vor.u32 %v6440, %v6441
        %v6444 = vsel %vm750, %v6436, %v6443
        %v6445 = vrot.slane %v6440, 4
        %v6447 = vshrl.u32 %v6367, 16
        %v6449 = vrot.slane %v6447, 7
        %v6450 = vshll.u32 %v6367, 16
        %v6452 = vor.u32 %v6449, %v6450
        %v6453 = vsel %vm750, %v6445, %v6452
        %v6455 = vshrl.u32 %v6368, 16
        %v6457 = vrot.slane %v6455, 7
        %v6458 = vrot.slane %v6457, 4
        %v6460 = vshrl.u32 %v6369, 16
        %v6462 = vrot.slane %v6460, 7
        %v6463 = vshll.u32 %v6369, 16
        %v6465 = vor.u32 %v6462, %v6463
        %v6466 = vsel %vm750, %v6458, %v6465
        %v6467 = vrot.slane %v6462, 4
        %v6469 = vshrl.u32 %v6370, 16
        %v6471 = vrot.slane %v6469, 7
        %v6472 = vshll.u32 %v6370, 16
        %v6474 = vor.u32 %v6471, %v6472
        %v6475 = vsel %vm750, %v6467, %v6474
        %v6477 = vshrl.u32 %v6371, 16
        %v6479 = vrot.slane %v6477, 7
        %v6480 = vrot.slane %v6479, 4
        %v6482 = vshrl.u32 %v6372, 16
        %v6484 = vrot.slane %v6482, 7
        %v6485 = vshll.u32 %v6372, 16
        %v6487 = vor.u32 %v6484, %v6485
        %v6488 = vsel %vm750, %v6480, %v6487
        %v6489 = vrot.slane %v6484, 4
        %v6491 = vshrl.u32 %v6373, 16
        %v6493 = vrot.slane %v6491, 7
        %v6494 = vshll.u32 %v6373, 16
        %v6496 = vor.u32 %v6493, %v6494
        %v6497 = vsel %vm750, %v6489, %v6496
        %v6499 = vshrl.u32 %v6374, 16
        %v6501 = vrot.slane %v6499, 7
        %v6502 = vrot.slane %v6501, 4
        %v6504 = vshrl.u32 %v6375, 16
        %v6506 = vrot.slane %v6504, 7
        %v6507 = vshll.u32 %v6375, 16
        %v6509 = vor.u32 %v6506, %v6507
        %v6510 = vsel %vm750, %v6502, %v6509
        %v6511 = vrot.slane %v6506, 4
        %v6513 = vshrl.u32 %v6376, 16
        %v6515 = vrot.slane %v6513, 7
        %v6516 = vshll.u32 %v6376, 16
        %v6518 = vor.u32 %v6515, %v6516
        %v6519 = vsel %vm750, %v6511, %v6518
        %v6521 = vshrl.u32 %v6377, 16
        %v6523 = vrot.slane %v6521, 7
        %v6524 = vrot.slane %v6523, 4
        %v6526 = vshrl.u32 %v6378, 16
        %v6528 = vrot.slane %v6526, 7
        %v6529 = vshll.u32 %v6378, 16
        %v6531 = vor.u32 %v6528, %v6529
        %v6532 = vsel %vm750, %v6524, %v6531
        %v6533 = vrot.slane %v6528, 4
        %v6535 = vshrl.u32 %v6379, 16
        %v6537 = vrot.slane %v6535, 7
        %v6538 = vshll.u32 %v6379, 16
        %v6540 = vor.u32 %v6537, %v6538
        %v6541 = vsel %vm750, %v6533, %v6540
        %v6543 = vshrl.u32 %v6380, 16
        %v6545 = vrot.slane %v6543, 7
        %v6546 = vrot.slane %v6545, 4
        %v6548 = vshrl.u32 %v6381, 16
        %v6550 = vrot.slane %v6548, 7
        %v6551 = vshll.u32 %v6381, 16
        %v6553 = vor.u32 %v6550, %v6551
        %v6554 = vsel %vm750, %v6546, %v6553
        %v6555 = vrot.slane %v6550, 4
        %v6557 = vshrl.u32 %v6382, 16
        %v6559 = vrot.slane %v6557, 7
        %v6560 = vshll.u32 %v6382, 16
        %v6562 = vor.u32 %v6559, %v6560
        %v6563 = vsel %vm750, %v6555, %v6562
        %v6565 = vshrl.u32 %v6383, 16
        %v6567 = vrot.slane %v6565, 7
        %v6568 = vrot.slane %v6567, 4
        %v6570 = vshrl.u32 %v6384, 16
        %v6572 = vrot.slane %v6570, 7
        %v6573 = vshll.u32 %v6384, 16
        %v6575 = vor.u32 %v6572, %v6573
        %v6576 = vsel %vm750, %v6568, %v6575
        %v6577 = vrot.slane %v6572, 4
        %v6579 = vshrl.u32 %v6385, 16
        %v6581 = vrot.slane %v6579, 7
        %v6582 = vshll.u32 %v6385, 16
        %v6584 = vor.u32 %v6581, %v6582
        %v6585 = vsel %vm750, %v6577, %v6584
        %v6587 = vshrl.u32 %v6386, 16
        %v6589 = vrot.slane %v6587, 7
        %v6590 = vrot.slane %v6589, 4
        %v6592 = vshrl.u32 %v6387, 16
        %v6594 = vrot.slane %v6592, 7
        %v6595 = vshll.u32 %v6387, 16
        %v6597 = vor.u32 %v6594, %v6595
        %v6598 = vsel %vm750, %v6590, %v6597
        %v6599 = vrot.slane %v6594, 4
        %v6601 = vshrl.u32 %v6388, 16
        %v6603 = vrot.slane %v6601, 7
        %v6604 = vshll.u32 %v6388, 16
        %v6606 = vor.u32 %v6603, %v6604
        %v6607 = vsel %vm750, %v6599, %v6606
        %v6609 = vshrl.u32 %v6389, 16
        %v6611 = vrot.slane %v6609, 7
        %v6612 = vrot.slane %v6611, 4
        %v6614 = vshrl.u32 %v6390, 16
        %v6616 = vrot.slane %v6614, 7
        %v6617 = vshll.u32 %v6390, 16
        %v6619 = vor.u32 %v6616, %v6617
        %v6620 = vsel %vm750, %v6612, %v6619
        %v6621 = vrot.slane %v6616, 4
        %v6623 = vshrl.u32 %v6391, 16
        %v6625 = vrot.slane %v6623, 7
        %v6626 = vshll.u32 %v6391, 16
        %v6628 = vor.u32 %v6625, %v6626
        %v6629 = vsel %vm750, %v6621, %v6628
        %v6631 = vshrl.u32 %v6392, 16
        %v6633 = vrot.slane %v6631, 7
        %v6634 = vrot.slane %v6633, 4
        %v6636 = vshrl.u32 %v6393, 16
        %v6638 = vrot.slane %v6636, 7
        %v6639 = vshll.u32 %v6393, 16
        %v6641 = vor.u32 %v6638, %v6639
        %v6642 = vsel %vm750, %v6634, %v6641
        %v6643 = vrot.slane %v6638, 4
        %v6645 = vshrl.u32 %v6394, 16
        %v6647 = vrot.slane %v6645, 7
        %v6648 = vshll.u32 %v6394, 16
        %v6650 = vor.u32 %v6647, %v6648
        %v6651 = vsel %vm750, %v6643, %v6650
        %v6653 = vshrl.u32 %v6395, 16
        %v6655 = vrot.slane %v6653, 7
        %v6656 = vrot.slane %v6655, 4
        %v6658 = vshrl.u32 %v6396, 16
        %v6660 = vrot.slane %v6658, 7
        %v6661 = vshll.u32 %v6396, 16
        %v6663 = vor.u32 %v6660, %v6661
        %v6664 = vsel %vm750, %v6656, %v6663
        %v6665 = vrot.slane %v6660, 4
        %v6667 = vshrl.u32 %v6397, 16
        %v6669 = vrot.slane %v6667, 7
        %v6670 = vshll.u32 %v6397, 16
        %v6672 = vor.u32 %v6669, %v6670
        %v6673 = vsel %vm750, %v6665, %v6672
        %v6675 = vshrl.u32 %v6398, 16
        %v6677 = vrot.slane %v6675, 7
        %v6678 = vrot.slane %v6677, 4
        %v6680 = vshrl.u32 %v6399, 16
        %v6682 = vrot.slane %v6680, 7
        %v6683 = vshll.u32 %v6399, 16
        %v6685 = vor.u32 %v6682, %v6683
        %v6686 = vsel %vm750, %v6678, %v6685
        %v6687 = vrot.slane %v6682, 4
        %v6689 = vshrl.u32 %v6400, 16
        %v6691 = vrot.slane %v6689, 7
        %v6692 = vshll.u32 %v6400, 16
        %v6694 = vor.u32 %v6691, %v6692
        %v6695 = vsel %vm750, %v6687, %v6694
        %v6697 = vshrl.u32 %v6401, 16
        %v6699 = vrot.slane %v6697, 7
        %v6700 = vrot.slane %v6699, 4
        %v6702 = vshrl.u32 %v6402, 16
        %v6704 = vrot.slane %v6702, 7
        %v6705 = vshll.u32 %v6402, 16
        %v6707 = vor.u32 %v6704, %v6705
        %v6708 = vsel %vm750, %v6700, %v6707
        %v6709 = vrot.slane %v6704, 4
        %v6711 = vshrl.u32 %v6403, 16
        %v6713 = vrot.slane %v6711, 7
        %v6714 = vshll.u32 %v6403, 16
        %v6716 = vor.u32 %v6713, %v6714
        %v6717 = vsel %vm750, %v6709, %v6716
        %v6719 = vshrl.u32 %v6404, 16
        %v6721 = vrot.slane %v6719, 7
        %v6722 = vrot.slane %v6721, 4
        %v6724 = vshrl.u32 %v6405, 16
        %v6726 = vrot.slane %v6724, 7
        %v6727 = vshll.u32 %v6405, 16
        %v6729 = vor.u32 %v6726, %v6727
        %v6730 = vsel %vm750, %v6722, %v6729
        %v6731 = vrot.slane %v6726, 4
        %v6733 = vshrl.u32 %v6406, 16
        %v6735 = vrot.slane %v6733, 7
        %v6736 = vshll.u32 %v6406, 16
        %v6738 = vor.u32 %v6735, %v6736
        %v6739 = vsel %vm750, %v6731, %v6738
        %v6741 = vshrl.u32 %v6407, 16
        %v6743 = vrot.slane %v6741, 7
        %v6744 = vrot.slane %v6743, 4
        %v6746 = vshrl.u32 %v6408, 16
        %v6748 = vrot.slane %v6746, 7
        %v6749 = vshll.u32 %v6408, 16
        %v6751 = vor.u32 %v6748, %v6749
        %v6752 = vsel %vm750, %v6744, %v6751
        %v6753 = vrot.slane %v6748, 4
        %v6755 = vshrl.u32 %v6409, 16
        %v6757 = vrot.slane %v6755, 7
        %v6758 = vshll.u32 %v6409, 16
        %v6760 = vor.u32 %v6757, %v6758
        %v6761 = vsel %vm750, %v6753, %v6760
        %v6762 = vld [vmem:[#allocation9] sm:$0xf]
        %v6763 = vld [vmem:[#allocation9 + $0x4] sm:$0xf]
        %v6764 = vld [vmem:[#allocation9 + $0x8] sm:$0xf]
        %v6765 = vld [vmem:[#allocation9 + $0xc] sm:$0xf]
        %v6766 = vld [vmem:[#allocation9 + $0x10] sm:$0xf]
        %v6767 = vld [vmem:[#allocation9 + $0x14] sm:$0xf]
        %v6768 = vld [vmem:[#allocation9 + $0x18] sm:$0xf]
        %v6769 = vld [vmem:[#allocation9 + $0x1c] sm:$0xf]
        %v6770 = vld [vmem:[#allocation9 + $0x20] sm:$0xf]
        %v6771 = vld [vmem:[#allocation9 + $0x24] sm:$0xf]
        %v6772 = vld [vmem:[#allocation9 + $0x28] sm:$0xf]
        %v6773 = vld [vmem:[#allocation9 + $0x2c] sm:$0xf]
        %v6774 = vld [vmem:[#allocation9 + $0x30] sm:$0xf]
        %v6775 = vld [vmem:[#allocation9 + $0x34] sm:$0xf]
        %v6776 = vld [vmem:[#allocation9 + $0x38] sm:$0xf]
        %v6777 = vld [vmem:[#allocation9 + $0x3c] sm:$0xf]
        %s6778 = scalar_lea.vmem [#allocation9], 64
        %v6779 = vld [vmem:[%s6778] sm:$0xf]
        %v6780 = vld [vmem:[%s6778 + $0x4] sm:$0xf]
        %v6781 = vld [vmem:[%s6778 + $0x8] sm:$0xf]
        %v6782 = vld [vmem:[%s6778 + $0xc] sm:$0xf]
        %v6783 = vld [vmem:[%s6778 + $0x10] sm:$0xf]
        %v6784 = vld [vmem:[%s6778 + $0x14] sm:$0xf]
        %v6785 = vld [vmem:[%s6778 + $0x18] sm:$0xf]
        %v6786 = vld [vmem:[%s6778 + $0x1c] sm:$0xf]
        %v6787 = vld [vmem:[%s6778 + $0x20] sm:$0xf]
        %v6788 = vld [vmem:[%s6778 + $0x24] sm:$0xf]
        %v6789 = vld [vmem:[%s6778 + $0x28] sm:$0xf]
        %v6790 = vld [vmem:[%s6778 + $0x2c] sm:$0xf]
        %v6791 = vld [vmem:[%s6778 + $0x30] sm:$0xf]
        %v6792 = vld [vmem:[%s6778 + $0x34] sm:$0xf]
        %v6793 = vld [vmem:[%s6778 + $0x38] sm:$0xf]
        %v6794 = vld [vmem:[%s6778 + $0x3c] sm:$0xf]
        %v6827 = vunpack.c.l.b16 %v6363
        %v6828 = vunpack.c.l.b16 %v6364
        %v6829 = vunpack.c.l.b16 %v6366
        %v6830 = vunpack.c.l.b16 %v6367
        %v6831 = vunpack.c.l.b16 %v6369
        %v6832 = vunpack.c.l.b16 %v6370
        %v6833 = vunpack.c.l.b16 %v6372
        %v6834 = vunpack.c.l.b16 %v6373
        %v6835 = vunpack.c.l.b16 %v6375
        %v6836 = vunpack.c.l.b16 %v6376
        %v6837 = vunpack.c.l.b16 %v6378
        %v6838 = vunpack.c.l.b16 %v6379
        %v6839 = vunpack.c.l.b16 %v6381
        %v6840 = vunpack.c.l.b16 %v6382
        %v6841 = vunpack.c.l.b16 %v6384
        %v6842 = vunpack.c.l.b16 %v6385
        %v6843 = vunpack.c.l.b16 %v6387
        %v6844 = vunpack.c.l.b16 %v6388
        %v6845 = vunpack.c.l.b16 %v6390
        %v6846 = vunpack.c.l.b16 %v6391
        %v6847 = vunpack.c.l.b16 %v6393
        %v6848 = vunpack.c.l.b16 %v6394
        %v6849 = vunpack.c.l.b16 %v6396
        %v6850 = vunpack.c.l.b16 %v6397
        %v6851 = vunpack.c.l.b16 %v6399
        %v6852 = vunpack.c.l.b16 %v6400
        %v6853 = vunpack.c.l.b16 %v6402
        %v6854 = vunpack.c.l.b16 %v6403
        %v6855 = vunpack.c.l.b16 %v6405
        %v6856 = vunpack.c.l.b16 %v6406
        %v6857 = vunpack.c.l.b16 %v6408
        %v6858 = vunpack.c.l.b16 %v6409
        %v6859 = vpack.c.b16 %v6828, %v6827
        %v6860 = vpack.c.b16 %v6830, %v6829
        %v6861 = vpack.c.b16 %v6832, %v6831
        %v6862 = vpack.c.b16 %v6834, %v6833
        %v6863 = vpack.c.b16 %v6836, %v6835
        %v6864 = vpack.c.b16 %v6838, %v6837
        %v6865 = vpack.c.b16 %v6840, %v6839
        %v6866 = vpack.c.b16 %v6842, %v6841
        %v6867 = vpack.c.b16 %v6844, %v6843
        %v6868 = vpack.c.b16 %v6846, %v6845
        %v6869 = vpack.c.b16 %v6848, %v6847
        %v6870 = vpack.c.b16 %v6850, %v6849
        %v6871 = vpack.c.b16 %v6852, %v6851
        %v6872 = vpack.c.b16 %v6854, %v6853
        %v6873 = vpack.c.b16 %v6856, %v6855
        %v6874 = vpack.c.b16 %v6858, %v6857
        %v6907 = vunpack.c.l.b16 %v6779
        %v6908 = vunpack.c.l.b16 %v6780
        %v6909 = vunpack.c.l.b16 %v6781
        %v6910 = vunpack.c.l.b16 %v6782
        %v6911 = vunpack.c.l.b16 %v6783
        %v6912 = vunpack.c.l.b16 %v6784
        %v6913 = vunpack.c.l.b16 %v6785
        %v6914 = vunpack.c.l.b16 %v6786
        %v6915 = vunpack.c.l.b16 %v6787
        %v6916 = vunpack.c.l.b16 %v6788
        %v6917 = vunpack.c.l.b16 %v6789
        %v6918 = vunpack.c.l.b16 %v6790
        %v6919 = vunpack.c.l.b16 %v6791
        %v6920 = vunpack.c.l.b16 %v6792
        %v6921 = vunpack.c.l.b16 %v6793
        %v6922 = vunpack.c.l.b16 %v6794
        %v6923 = vpack.c.b16 %v6908, %v6907
        %v6924 = vpack.c.b16 %v6910, %v6909
        %v6925 = vpack.c.b16 %v6912, %v6911
        %v6926 = vpack.c.b16 %v6914, %v6913
        %v6927 = vpack.c.b16 %v6916, %v6915
        %v6928 = vpack.c.b16 %v6918, %v6917
        %v6929 = vpack.c.b16 %v6920, %v6919
        %v6930 = vpack.c.b16 %v6922, %v6921
        %6939 = vmatprep.subr.bf16.mxu0 0
        %6940 = vmatpush1.bf16.msra.mxu0 %v6930
        %6941 = vmatprep.subr.bf16.mxu0 0
        %6942 = vmatpush1.bf16.msra.mxu0 %v6929
        %6943 = vmatprep.subr.bf16.mxu0 0
        %6944 = vmatpush1.bf16.msra.mxu0 %v6928
        %6945 = vmatprep.subr.bf16.mxu0 0
        %6946 = vmatpush1.bf16.msra.mxu0 %v6927
        %6947 = vmatprep.subr.bf16.mxu0 0
        %6948 = vmatpush1.bf16.msra.mxu0 %v6926
        %6949 = vmatprep.subr.bf16.mxu0 0
        %6950 = vmatpush1.bf16.msra.mxu0 %v6925
        %6951 = vmatprep.subr.bf16.mxu0 0
        %6952 = vmatpush1.bf16.msra.mxu0 %v6924
        %6953 = vmatprep.subr.bf16.mxu0 0
        %6954 = vmatpush1.bf16.msra.mxu0 %v6923
        %6955 = vmatprep.subr.bf16.mxu0 0
        %6956 = vmatpush2.bf16.msra.mxu0 0
        %6957 = vmatprep.subr.bf16.mxu0 0
        %6958 = vmatpush2.bf16.msra.mxu0 0
        %6959 = vmatprep.subr.bf16.mxu0 0
        %6960 = vmatpush2.bf16.msra.mxu0 0
        %6961 = vmatprep.subr.bf16.mxu0 0
        %6962 = vmatpush2.bf16.msra.mxu0 0
        %6963 = vmatprep.subr.bf16.mxu0 0
        %6964 = vmatpush2.bf16.msra.mxu0 0
        %6965 = vmatprep.subr.bf16.mxu0 0
        %6966 = vmatpush2.bf16.msra.mxu0 0
        %6967 = vmatprep.subr.bf16.mxu0 0
        %6968 = vmatpush2.bf16.msra.mxu0 0
        %6969 = vmatprep.subr.bf16.mxu0 0
        %6970 = vmatpush2.bf16.msra.mxu0 0
        %6971 = vmatprep.mubr.bf16.mxu0 0
        %6972 = vmatmul.mubr.bf16.gmra.mxu0 %v6859
        %v6973 = vpop.f32.mrf.mxu0
        %v6974 = vadd.f32 0.0, %v6973
        %v6975 = vpop.f32.mrf.mxu0
        %v6976 = vpop.f32.mrf.mxu0
        %v6977 = vadd.f32 0.0, %v6976
        %v6978 = vpop.f32.mrf.mxu0
        %6979 = vmatprep.mubr.bf16.mxu0 0
        %6980 = vmatmul.mubr.bf16.gmra.mxu0 %v6860
        %v6981 = vpop.f32.mrf.mxu0
        %v6982 = vadd.f32 0.0, %v6981
        %v6983 = vpop.f32.mrf.mxu0
        %v6984 = vpop.f32.mrf.mxu0
        %v6985 = vadd.f32 0.0, %v6984
        %v6986 = vpop.f32.mrf.mxu0
        %6987 = vmatprep.mubr.bf16.mxu0 0
        %6988 = vmatmul.mubr.bf16.gmra.mxu0 %v6861
        %v6989 = vpop.f32.mrf.mxu0
        %v6990 = vadd.f32 0.0, %v6989
        %v6991 = vpop.f32.mrf.mxu0
        %v6992 = vpop.f32.mrf.mxu0
        %v6993 = vadd.f32 0.0, %v6992
        %v6994 = vpop.f32.mrf.mxu0
        %6995 = vmatprep.mubr.bf16.mxu0 0
        %6996 = vmatmul.mubr.bf16.gmra.mxu0 %v6862
        %v6997 = vpop.f32.mrf.mxu0
        %v6998 = vadd.f32 0.0, %v6997
        %v6999 = vpop.f32.mrf.mxu0
        %v7000 = vpop.f32.mrf.mxu0
        %v7001 = vadd.f32 0.0, %v7000
        %v7002 = vpop.f32.mrf.mxu0
        %7003 = vmatprep.mubr.bf16.mxu0 0
        %7004 = vmatmul.mubr.bf16.gmra.mxu0 %v6863
        %v7005 = vpop.f32.mrf.mxu0
        %v7006 = vadd.f32 0.0, %v7005
        %v7007 = vpop.f32.mrf.mxu0
        %v7008 = vpop.f32.mrf.mxu0
        %v7009 = vadd.f32 0.0, %v7008
        %v7010 = vpop.f32.mrf.mxu0
        %7011 = vmatprep.mubr.bf16.mxu0 0
        %7012 = vmatmul.mubr.bf16.gmra.mxu0 %v6864
        %v7013 = vpop.f32.mrf.mxu0
        %v7014 = vadd.f32 0.0, %v7013
        %v7015 = vpop.f32.mrf.mxu0
        %v7016 = vpop.f32.mrf.mxu0
        %v7017 = vadd.f32 0.0, %v7016
        %v7018 = vpop.f32.mrf.mxu0
        %7019 = vmatprep.mubr.bf16.mxu0 0
        %7020 = vmatmul.mubr.bf16.gmra.mxu0 %v6865
        %v7021 = vpop.f32.mrf.mxu0
        %v7022 = vadd.f32 0.0, %v7021
        %v7023 = vpop.f32.mrf.mxu0
        %v7024 = vpop.f32.mrf.mxu0
        %v7025 = vadd.f32 0.0, %v7024
        %v7026 = vpop.f32.mrf.mxu0
        %7027 = vmatprep.mubr.bf16.mxu0 0
        %7028 = vmatmul.mubr.bf16.gmra.mxu0 %v6866
        %v7029 = vpop.f32.mrf.mxu0
        %v7030 = vadd.f32 0.0, %v7029
        %v7031 = vpop.f32.mrf.mxu0
        %v7032 = vpop.f32.mrf.mxu0
        %v7033 = vadd.f32 0.0, %v7032
        %v7034 = vpop.f32.mrf.mxu0
        %7035 = vmatprep.mubr.bf16.mxu0 0
        %7036 = vmatmul.mubr.bf16.gmra.mxu0 %v6867
        %v7037 = vpop.f32.mrf.mxu0
        %v7038 = vadd.f32 0.0, %v7037
        %v7039 = vpop.f32.mrf.mxu0
        %v7040 = vpop.f32.mrf.mxu0
        %v7041 = vadd.f32 0.0, %v7040
        %v7042 = vpop.f32.mrf.mxu0
        %7043 = vmatprep.mubr.bf16.mxu0 0
        %7044 = vmatmul.mubr.bf16.gmra.mxu0 %v6868
        %v7045 = vpop.f32.mrf.mxu0
        %v7046 = vadd.f32 0.0, %v7045
        %v7047 = vpop.f32.mrf.mxu0
        %v7048 = vpop.f32.mrf.mxu0
        %v7049 = vadd.f32 0.0, %v7048
        %v7050 = vpop.f32.mrf.mxu0
        %7051 = vmatprep.mubr.bf16.mxu0 0
        %7052 = vmatmul.mubr.bf16.gmra.mxu0 %v6869
        %v7053 = vpop.f32.mrf.mxu0
        %v7054 = vadd.f32 0.0, %v7053
        %v7055 = vpop.f32.mrf.mxu0
        %v7056 = vpop.f32.mrf.mxu0
        %v7057 = vadd.f32 0.0, %v7056
        %v7058 = vpop.f32.mrf.mxu0
        %7059 = vmatprep.mubr.bf16.mxu0 0
        %7060 = vmatmul.mubr.bf16.gmra.mxu0 %v6870
        %v7061 = vpop.f32.mrf.mxu0
        %v7062 = vadd.f32 0.0, %v7061
        %v7063 = vpop.f32.mrf.mxu0
        %v7064 = vpop.f32.mrf.mxu0
        %v7065 = vadd.f32 0.0, %v7064
        %v7066 = vpop.f32.mrf.mxu0
        %7067 = vmatprep.mubr.bf16.mxu0 0
        %7068 = vmatmul.mubr.bf16.gmra.mxu0 %v6871
        %v7069 = vpop.f32.mrf.mxu0
        %v7070 = vadd.f32 0.0, %v7069
        %v7071 = vpop.f32.mrf.mxu0
        %v7072 = vpop.f32.mrf.mxu0
        %v7073 = vadd.f32 0.0, %v7072
        %v7074 = vpop.f32.mrf.mxu0
        %7075 = vmatprep.mubr.bf16.mxu0 0
        %7076 = vmatmul.mubr.bf16.gmra.mxu0 %v6872
        %v7077 = vpop.f32.mrf.mxu0
        %v7078 = vadd.f32 0.0, %v7077
        %v7079 = vpop.f32.mrf.mxu0
        %v7080 = vpop.f32.mrf.mxu0
        %v7081 = vadd.f32 0.0, %v7080
        %v7082 = vpop.f32.mrf.mxu0
        %7083 = vmatprep.mubr.bf16.mxu0 0
        %7084 = vmatmul.mubr.bf16.gmra.mxu0 %v6873
        %v7085 = vpop.f32.mrf.mxu0
        %v7086 = vadd.f32 0.0, %v7085
        %v7087 = vpop.f32.mrf.mxu0
        %v7088 = vpop.f32.mrf.mxu0
        %v7089 = vadd.f32 0.0, %v7088
        %v7090 = vpop.f32.mrf.mxu0
        %7091 = vmatprep.mubr.bf16.mxu0 0
        %7092 = vmatmul.mubr.bf16.gmra.mxu0 %v6874
        %v7093 = vpop.f32.mrf.mxu0
        %v7094 = vadd.f32 0.0, %v7093
        %v7095 = vpop.f32.mrf.mxu0
        %v7096 = vpop.f32.mrf.mxu0
        %v7097 = vadd.f32 0.0, %v7096
        %v7098 = vpop.f32.mrf.mxu0
        %7099 = vdwg.mxu0
        %v7100 = vunpack.c.l.b16 %v6422
        %v7101 = vunpack.c.l.b16 %v6431
        %v7102 = vunpack.c.l.b16 %v6444
        %v7103 = vunpack.c.l.b16 %v6453
        %v7104 = vunpack.c.l.b16 %v6466
        %v7105 = vunpack.c.l.b16 %v6475
        %v7106 = vunpack.c.l.b16 %v6488
        %v7107 = vunpack.c.l.b16 %v6497
        %v7108 = vunpack.c.l.b16 %v6510
        %v7109 = vunpack.c.l.b16 %v6519
        %v7110 = vunpack.c.l.b16 %v6532
        %v7111 = vunpack.c.l.b16 %v6541
        %v7112 = vunpack.c.l.b16 %v6554
        %v7113 = vunpack.c.l.b16 %v6563
        %v7114 = vunpack.c.l.b16 %v6576
        %v7115 = vunpack.c.l.b16 %v6585
        %v7116 = vunpack.c.l.b16 %v6598
        %v7117 = vunpack.c.l.b16 %v6607
        %v7118 = vunpack.c.l.b16 %v6620
        %v7119 = vunpack.c.l.b16 %v6629
        %v7120 = vunpack.c.l.b16 %v6642
        %v7121 = vunpack.c.l.b16 %v6651
        %v7122 = vunpack.c.l.b16 %v6664
        %v7123 = vunpack.c.l.b16 %v6673
        %v7124 = vunpack.c.l.b16 %v6686
        %v7125 = vunpack.c.l.b16 %v6695
        %v7126 = vunpack.c.l.b16 %v6708
        %v7127 = vunpack.c.l.b16 %v6717
        %v7128 = vunpack.c.l.b16 %v6730
        %v7129 = vunpack.c.l.b16 %v6739
        %v7130 = vunpack.c.l.b16 %v6752
        %v7131 = vunpack.c.l.b16 %v6761
        %v7132 = vpack.c.b16 %v7101, %v7100
        %v7133 = vpack.c.b16 %v7103, %v7102
        %v7134 = vpack.c.b16 %v7105, %v7104
        %v7135 = vpack.c.b16 %v7107, %v7106
        %v7136 = vpack.c.b16 %v7109, %v7108
        %v7137 = vpack.c.b16 %v7111, %v7110
        %v7138 = vpack.c.b16 %v7113, %v7112
        %v7139 = vpack.c.b16 %v7115, %v7114
        %v7140 = vpack.c.b16 %v7117, %v7116
        %v7141 = vpack.c.b16 %v7119, %v7118
        %v7142 = vpack.c.b16 %v7121, %v7120
        %v7143 = vpack.c.b16 %v7123, %v7122
        %v7144 = vpack.c.b16 %v7125, %v7124
        %v7145 = vpack.c.b16 %v7127, %v7126
        %v7146 = vpack.c.b16 %v7129, %v7128
        %v7147 = vpack.c.b16 %v7131, %v7130
        %v7180 = vunpack.c.l.b16 %v6762
        %v7181 = vunpack.c.l.b16 %v6763
        %v7182 = vunpack.c.l.b16 %v6764
        %v7183 = vunpack.c.l.b16 %v6765
        %v7184 = vunpack.c.l.b16 %v6766
        %v7185 = vunpack.c.l.b16 %v6767
        %v7186 = vunpack.c.l.b16 %v6768
        %v7187 = vunpack.c.l.b16 %v6769
        %v7188 = vunpack.c.l.b16 %v6770
        %v7189 = vunpack.c.l.b16 %v6771
        %v7190 = vunpack.c.l.b16 %v6772
        %v7191 = vunpack.c.l.b16 %v6773
        %v7192 = vunpack.c.l.b16 %v6774
        %v7193 = vunpack.c.l.b16 %v6775
        %v7194 = vunpack.c.l.b16 %v6776
        %v7195 = vunpack.c.l.b16 %v6777
        %v7196 = vpack.c.b16 %v7181, %v7180
        %v7197 = vpack.c.b16 %v7183, %v7182
        %v7198 = vpack.c.b16 %v7185, %v7184
        %v7199 = vpack.c.b16 %v7187, %v7186
        %v7200 = vpack.c.b16 %v7189, %v7188
        %v7201 = vpack.c.b16 %v7191, %v7190
        %v7202 = vpack.c.b16 %v7193, %v7192
        %v7203 = vpack.c.b16 %v7195, %v7194
        %7212 = vmatprep.subr.bf16.mxu0 0
        %7213 = vmatpush1.bf16.msra.mxu0 %v7203
        %7214 = vmatprep.subr.bf16.mxu0 0
        %7215 = vmatpush1.bf16.msra.mxu0 %v7202
        %7216 = vmatprep.subr.bf16.mxu0 0
        %7217 = vmatpush1.bf16.msra.mxu0 %v7201
        %7218 = vmatprep.subr.bf16.mxu0 0
        %7219 = vmatpush1.bf16.msra.mxu0 %v7200
        %7220 = vmatprep.subr.bf16.mxu0 0
        %7221 = vmatpush1.bf16.msra.mxu0 %v7199
        %7222 = vmatprep.subr.bf16.mxu0 0
        %7223 = vmatpush1.bf16.msra.mxu0 %v7198
        %7224 = vmatprep.subr.bf16.mxu0 0
        %7225 = vmatpush1.bf16.msra.mxu0 %v7197
        %7226 = vmatprep.subr.bf16.mxu0 0
        %7227 = vmatpush1.bf16.msra.mxu0 %v7196
        %7228 = vmatprep.subr.bf16.mxu0 0
        %7229 = vmatpush2.bf16.msra.mxu0 0
        %7230 = vmatprep.subr.bf16.mxu0 0
        %7231 = vmatpush2.bf16.msra.mxu0 0
        %7232 = vmatprep.subr.bf16.mxu0 0
        %7233 = vmatpush2.bf16.msra.mxu0 0
        %7234 = vmatprep.subr.bf16.mxu0 0
        %7235 = vmatpush2.bf16.msra.mxu0 0
        %7236 = vmatprep.subr.bf16.mxu0 0
        %7237 = vmatpush2.bf16.msra.mxu0 0
        %7238 = vmatprep.subr.bf16.mxu0 0
        %7239 = vmatpush2.bf16.msra.mxu0 0
        %7240 = vmatprep.subr.bf16.mxu0 0
        %7241 = vmatpush2.bf16.msra.mxu0 0
        %7242 = vmatprep.subr.bf16.mxu0 0
        %7243 = vmatpush2.bf16.msra.mxu0 0
        %7244 = vmatprep.mubr.bf16.mxu0 0
        %7245 = vmatmul.mubr.bf16.gmra.mxu0 %v7132
        %v7246 = vpop.f32.mrf.mxu0
        %v7247 = vadd.f32 %v6974, %v7246
        %v7248 = vpop.f32.mrf.mxu0
        %v7249 = vpop.f32.mrf.mxu0
        %v7250 = vadd.f32 %v6977, %v7249
        %v7251 = vpop.f32.mrf.mxu0
        %7252 = vmatprep.mubr.bf16.mxu0 0
        %7253 = vmatmul.mubr.bf16.gmra.mxu0 %v7133
        %v7254 = vpop.f32.mrf.mxu0
        %v7255 = vadd.f32 %v6982, %v7254
        %v7256 = vpop.f32.mrf.mxu0
        %v7257 = vpop.f32.mrf.mxu0
        %v7258 = vadd.f32 %v6985, %v7257
        %v7259 = vpop.f32.mrf.mxu0
        %7260 = vmatprep.mubr.bf16.mxu0 0
        %7261 = vmatmul.mubr.bf16.gmra.mxu0 %v7134
        %v7262 = vpop.f32.mrf.mxu0
        %v7263 = vadd.f32 %v6990, %v7262
        %v7264 = vpop.f32.mrf.mxu0
        %v7265 = vpop.f32.mrf.mxu0
        %v7266 = vadd.f32 %v6993, %v7265
        %v7267 = vpop.f32.mrf.mxu0
        %7268 = vmatprep.mubr.bf16.mxu0 0
        %7269 = vmatmul.mubr.bf16.gmra.mxu0 %v7135
        %v7270 = vpop.f32.mrf.mxu0
        %v7271 = vadd.f32 %v6998, %v7270
        %v7272 = vpop.f32.mrf.mxu0
        %v7273 = vpop.f32.mrf.mxu0
        %v7274 = vadd.f32 %v7001, %v7273
        %v7275 = vpop.f32.mrf.mxu0
        %7276 = vmatprep.mubr.bf16.mxu0 0
        %7277 = vmatmul.mubr.bf16.gmra.mxu0 %v7136
        %v7278 = vpop.f32.mrf.mxu0
        %v7279 = vadd.f32 %v7006, %v7278
        %v7280 = vpop.f32.mrf.mxu0
        %v7281 = vpop.f32.mrf.mxu0
        %v7282 = vadd.f32 %v7009, %v7281
        %v7283 = vpop.f32.mrf.mxu0
        %7284 = vmatprep.mubr.bf16.mxu0 0
        %7285 = vmatmul.mubr.bf16.gmra.mxu0 %v7137
        %v7286 = vpop.f32.mrf.mxu0
        %v7287 = vadd.f32 %v7014, %v7286
        %v7288 = vpop.f32.mrf.mxu0
        %v7289 = vpop.f32.mrf.mxu0
        %v7290 = vadd.f32 %v7017, %v7289
        %v7291 = vpop.f32.mrf.mxu0
        %7292 = vmatprep.mubr.bf16.mxu0 0
        %7293 = vmatmul.mubr.bf16.gmra.mxu0 %v7138
        %v7294 = vpop.f32.mrf.mxu0
        %v7295 = vadd.f32 %v7022, %v7294
        %v7296 = vpop.f32.mrf.mxu0
        %v7297 = vpop.f32.mrf.mxu0
        %v7298 = vadd.f32 %v7025, %v7297
        %v7299 = vpop.f32.mrf.mxu0
        %7300 = vmatprep.mubr.bf16.mxu0 0
        %7301 = vmatmul.mubr.bf16.gmra.mxu0 %v7139
        %v7302 = vpop.f32.mrf.mxu0
        %v7303 = vadd.f32 %v7030, %v7302
        %v7304 = vpop.f32.mrf.mxu0
        %v7305 = vpop.f32.mrf.mxu0
        %v7306 = vadd.f32 %v7033, %v7305
        %v7307 = vpop.f32.mrf.mxu0
        %7308 = vmatprep.mubr.bf16.mxu0 0
        %7309 = vmatmul.mubr.bf16.gmra.mxu0 %v7140
        %v7310 = vpop.f32.mrf.mxu0
        %v7311 = vadd.f32 %v7038, %v7310
        %v7312 = vpop.f32.mrf.mxu0
        %v7313 = vpop.f32.mrf.mxu0
        %v7314 = vadd.f32 %v7041, %v7313
        %v7315 = vpop.f32.mrf.mxu0
        %7316 = vmatprep.mubr.bf16.mxu0 0
        %7317 = vmatmul.mubr.bf16.gmra.mxu0 %v7141
        %v7318 = vpop.f32.mrf.mxu0
        %v7319 = vadd.f32 %v7046, %v7318
        %v7320 = vpop.f32.mrf.mxu0
        %v7321 = vpop.f32.mrf.mxu0
        %v7322 = vadd.f32 %v7049, %v7321
        %v7323 = vpop.f32.mrf.mxu0
        %7324 = vmatprep.mubr.bf16.mxu0 0
        %7325 = vmatmul.mubr.bf16.gmra.mxu0 %v7142
        %v7326 = vpop.f32.mrf.mxu0
        %v7327 = vadd.f32 %v7054, %v7326
        %v7328 = vpop.f32.mrf.mxu0
        %v7329 = vpop.f32.mrf.mxu0
        %v7330 = vadd.f32 %v7057, %v7329
        %v7331 = vpop.f32.mrf.mxu0
        %7332 = vmatprep.mubr.bf16.mxu0 0
        %7333 = vmatmul.mubr.bf16.gmra.mxu0 %v7143
        %v7334 = vpop.f32.mrf.mxu0
        %v7335 = vadd.f32 %v7062, %v7334
        %v7336 = vpop.f32.mrf.mxu0
        %v7337 = vpop.f32.mrf.mxu0
        %v7338 = vadd.f32 %v7065, %v7337
        %v7339 = vpop.f32.mrf.mxu0
        %7340 = vmatprep.mubr.bf16.mxu0 0
        %7341 = vmatmul.mubr.bf16.gmra.mxu0 %v7144
        %v7342 = vpop.f32.mrf.mxu0
        %v7343 = vadd.f32 %v7070, %v7342
        %v7344 = vpop.f32.mrf.mxu0
        %v7345 = vpop.f32.mrf.mxu0
        %v7346 = vadd.f32 %v7073, %v7345
        %v7347 = vpop.f32.mrf.mxu0
        %7348 = vmatprep.mubr.bf16.mxu0 0
        %7349 = vmatmul.mubr.bf16.gmra.mxu0 %v7145
        %v7350 = vpop.f32.mrf.mxu0
        %v7351 = vadd.f32 %v7078, %v7350
        %v7352 = vpop.f32.mrf.mxu0
        %v7353 = vpop.f32.mrf.mxu0
        %v7354 = vadd.f32 %v7081, %v7353
        %v7355 = vpop.f32.mrf.mxu0
        %7356 = vmatprep.mubr.bf16.mxu0 0
        %7357 = vmatmul.mubr.bf16.gmra.mxu0 %v7146
        %v7358 = vpop.f32.mrf.mxu0
        %v7359 = vadd.f32 %v7086, %v7358
        %v7360 = vpop.f32.mrf.mxu0
        %v7361 = vpop.f32.mrf.mxu0
        %v7362 = vadd.f32 %v7089, %v7361
        %v7363 = vpop.f32.mrf.mxu0
        %7364 = vmatprep.mubr.bf16.mxu0 0
        %7365 = vmatmul.mubr.bf16.gmra.mxu0 %v7147
        %v7366 = vpop.f32.mrf.mxu0
        %v7367 = vadd.f32 %v7094, %v7366
        %v7368 = vpop.f32.mrf.mxu0
        %v7369 = vpop.f32.mrf.mxu0
        %v7370 = vadd.f32 %v7097, %v7369
        %v7371 = vpop.f32.mrf.mxu0
        %7372 = vdwg.mxu0
        %v7373 = vld [vmem:[#allocation3 + $0x4] sm:$0xf]
        %v7374 = vld [vmem:[#allocation3 + $0x8] sm:$0xf]
        %v7375 = vld [vmem:[#allocation3 + $0xc] sm:$0x1]
        %v7376 = vld [vmem:[#allocation3 + $0x14] sm:$0xf]
        %v7377 = vld [vmem:[#allocation3 + $0x18] sm:$0xf]
        %v7378 = vld [vmem:[#allocation3 + $0x1c] sm:$0x1]
        %v7379 = vld [vmem:[#allocation3 + $0x24] sm:$0xf]
        %v7380 = vld [vmem:[#allocation3 + $0x28] sm:$0xf]
        %v7381 = vld [vmem:[#allocation3 + $0x2c] sm:$0x1]
        %v7382 = vld [vmem:[#allocation3 + $0x34] sm:$0xf]
        %v7383 = vld [vmem:[#allocation3 + $0x38] sm:$0xf]
        %v7384 = vld [vmem:[#allocation3 + $0x3c] sm:$0x1]
        %v7385 = vld [vmem:[#allocation3 + $0x44] sm:$0xf]
        %v7386 = vld [vmem:[#allocation3 + $0x48] sm:$0xf]
        %v7387 = vld [vmem:[#allocation3 + $0x4c] sm:$0x1]
        %v7388 = vld [vmem:[#allocation3 + $0x54] sm:$0xf]
        %v7389 = vld [vmem:[#allocation3 + $0x58] sm:$0xf]
        %v7390 = vld [vmem:[#allocation3 + $0x5c] sm:$0x1]
        %v7391 = vld [vmem:[#allocation3 + $0x64] sm:$0xf]
        %v7392 = vld [vmem:[#allocation3 + $0x68] sm:$0xf]
        %v7393 = vld [vmem:[#allocation3 + $0x6c] sm:$0x1]
        %v7394 = vld [vmem:[#allocation3 + $0x74] sm:$0xf]
        %v7395 = vld [vmem:[#allocation3 + $0x78] sm:$0xf]
        %v7396 = vld [vmem:[#allocation3 + $0x7c] sm:$0x1]
        %v7397 = vld [vmem:[#allocation3 + $0x84] sm:$0xf]
        %v7398 = vld [vmem:[#allocation3 + $0x88] sm:$0xf]
        %v7399 = vld [vmem:[#allocation3 + $0x8c] sm:$0x1]
        %v7400 = vld [vmem:[#allocation3 + $0x94] sm:$0xf]
        %v7401 = vld [vmem:[#allocation3 + $0x98] sm:$0xf]
        %v7402 = vld [vmem:[#allocation3 + $0x9c] sm:$0x1]
        %v7403 = vld [vmem:[#allocation3 + $0xa4] sm:$0xf]
        %v7404 = vld [vmem:[#allocation3 + $0xa8] sm:$0xf]
        %v7405 = vld [vmem:[#allocation3 + $0xac] sm:$0x1]
        %v7406 = vld [vmem:[#allocation3 + $0xb4] sm:$0xf]
        %v7407 = vld [vmem:[#allocation3 + $0xb8] sm:$0xf]
        %v7408 = vld [vmem:[#allocation3 + $0xbc] sm:$0x1]
        %v7409 = vld [vmem:[#allocation3 + $0xc4] sm:$0xf]
        %v7410 = vld [vmem:[#allocation3 + $0xc8] sm:$0xf]
        %v7411 = vld [vmem:[#allocation3 + $0xcc] sm:$0x1]
        %v7412 = vld [vmem:[#allocation3 + $0xd4] sm:$0xf]
        %v7413 = vld [vmem:[#allocation3 + $0xd8] sm:$0xf]
        %v7414 = vld [vmem:[#allocation3 + $0xdc] sm:$0x1]
        %v7415 = vld [vmem:[#allocation3 + $0xe4] sm:$0xf]
        %v7416 = vld [vmem:[#allocation3 + $0xe8] sm:$0xf]
        %v7417 = vld [vmem:[#allocation3 + $0xec] sm:$0x1]
        %v7418 = vld [vmem:[#allocation3 + $0xf4] sm:$0xf]
        %v7419 = vld [vmem:[#allocation3 + $0xf8] sm:$0xf]
        %v7420 = vld [vmem:[#allocation3 + $0xfc] sm:$0x1]
        %v7422 = vshrl.u32 %v7373, 16
        %v7424 = vrot.slane %v7422, 4
        %v7425 = vshll.u32 %v7373, 16
        %v7427 = vrot.slane %v7425, 5
        %v7428 = vor.u32 %v7424, %v7427
        %v7429 = vrot.slane %v7428, 4
        %v7431 = vshll.u32 %v7374, 16
        %v7433 = vrot.slane %v7431, 5
        %v7434 = vsel %vm1764, %v7429, %v7433
        %v7435 = vshrl.u32 %v7374, 16
        %v7437 = vrot.slane %v7435, 4
        %v7438 = vor.u32 %v7437, %v7433
        %v7439 = vrot.slane %v7438, 4
        %v7441 = vshll.u32 %v7375, 16
        %v7443 = vrot.slane %v7441, 5
        %v7444 = vsel %vm1764, %v7439, %v7443
        %v7446 = vshrl.u32 %v7376, 16
        %v7448 = vrot.slane %v7446, 4
        %v7449 = vshll.u32 %v7376, 16
        %v7451 = vrot.slane %v7449, 5
        %v7452 = vor.u32 %v7448, %v7451
        %v7453 = vrot.slane %v7452, 4
        %v7455 = vshll.u32 %v7377, 16
        %v7457 = vrot.slane %v7455, 5
        %v7458 = vsel %vm1764, %v7453, %v7457
        %v7459 = vshrl.u32 %v7377, 16
        %v7461 = vrot.slane %v7459, 4
        %v7462 = vor.u32 %v7461, %v7457
        %v7463 = vrot.slane %v7462, 4
        %v7465 = vshll.u32 %v7378, 16
        %v7467 = vrot.slane %v7465, 5
        %v7468 = vsel %vm1764, %v7463, %v7467
        %v7470 = vshrl.u32 %v7379, 16
        %v7472 = vrot.slane %v7470, 4
        %v7473 = vshll.u32 %v7379, 16
        %v7475 = vrot.slane %v7473, 5
        %v7476 = vor.u32 %v7472, %v7475
        %v7477 = vrot.slane %v7476, 4
        %v7479 = vshll.u32 %v7380, 16
        %v7481 = vrot.slane %v7479, 5
        %v7482 = vsel %vm1764, %v7477, %v7481
        %v7483 = vshrl.u32 %v7380, 16
        %v7485 = vrot.slane %v7483, 4
        %v7486 = vor.u32 %v7485, %v7481
        %v7487 = vrot.slane %v7486, 4
        %v7489 = vshll.u32 %v7381, 16
        %v7491 = vrot.slane %v7489, 5
        %v7492 = vsel %vm1764, %v7487, %v7491
        %v7494 = vshrl.u32 %v7382, 16
        %v7496 = vrot.slane %v7494, 4
        %v7497 = vshll.u32 %v7382, 16
        %v7499 = vrot.slane %v7497, 5
        %v7500 = vor.u32 %v7496, %v7499
        %v7501 = vrot.slane %v7500, 4
        %v7503 = vshll.u32 %v7383, 16
        %v7505 = vrot.slane %v7503, 5
        %v7506 = vsel %vm1764, %v7501, %v7505
        %v7507 = vshrl.u32 %v7383, 16
        %v7509 = vrot.slane %v7507, 4
        %v7510 = vor.u32 %v7509, %v7505
        %v7511 = vrot.slane %v7510, 4
        %v7513 = vshll.u32 %v7384, 16
        %v7515 = vrot.slane %v7513, 5
        %v7516 = vsel %vm1764, %v7511, %v7515
        %v7518 = vshrl.u32 %v7385, 16
        %v7520 = vrot.slane %v7518, 4
        %v7521 = vshll.u32 %v7385, 16
        %v7523 = vrot.slane %v7521, 5
        %v7524 = vor.u32 %v7520, %v7523
        %v7525 = vrot.slane %v7524, 4
        %v7527 = vshll.u32 %v7386, 16
        %v7529 = vrot.slane %v7527, 5
        %v7530 = vsel %vm1764, %v7525, %v7529
        %v7531 = vshrl.u32 %v7386, 16
        %v7533 = vrot.slane %v7531, 4
        %v7534 = vor.u32 %v7533, %v7529
        %v7535 = vrot.slane %v7534, 4
        %v7537 = vshll.u32 %v7387, 16
        %v7539 = vrot.slane %v7537, 5
        %v7540 = vsel %vm1764, %v7535, %v7539
        %v7542 = vshrl.u32 %v7388, 16
        %v7544 = vrot.slane %v7542, 4
        %v7545 = vshll.u32 %v7388, 16
        %v7547 = vrot.slane %v7545, 5
        %v7548 = vor.u32 %v7544, %v7547
        %v7549 = vrot.slane %v7548, 4
        %v7551 = vshll.u32 %v7389, 16
        %v7553 = vrot.slane %v7551, 5
        %v7554 = vsel %vm1764, %v7549, %v7553
        %v7555 = vshrl.u32 %v7389, 16
        %v7557 = vrot.slane %v7555, 4
        %v7558 = vor.u32 %v7557, %v7553
        %v7559 = vrot.slane %v7558, 4
        %v7561 = vshll.u32 %v7390, 16
        %v7563 = vrot.slane %v7561, 5
        %v7564 = vsel %vm1764, %v7559, %v7563
        %v7566 = vshrl.u32 %v7391, 16
        %v7568 = vrot.slane %v7566, 4
        %v7569 = vshll.u32 %v7391, 16
        %v7571 = vrot.slane %v7569, 5
        %v7572 = vor.u32 %v7568, %v7571
        %v7573 = vrot.slane %v7572, 4
        %v7575 = vshll.u32 %v7392, 16
        %v7577 = vrot.slane %v7575, 5
        %v7578 = vsel %vm1764, %v7573, %v7577
        %v7579 = vshrl.u32 %v7392, 16
        %v7581 = vrot.slane %v7579, 4
        %v7582 = vor.u32 %v7581, %v7577
        %v7583 = vrot.slane %v7582, 4
        %v7585 = vshll.u32 %v7393, 16
        %v7587 = vrot.slane %v7585, 5
        %v7588 = vsel %vm1764, %v7583, %v7587
        %v7590 = vshrl.u32 %v7394, 16
        %v7592 = vrot.slane %v7590, 4
        %v7593 = vshll.u32 %v7394, 16
        %v7595 = vrot.slane %v7593, 5
        %v7596 = vor.u32 %v7592, %v7595
        %v7597 = vrot.slane %v7596, 4
        %v7599 = vshll.u32 %v7395, 16
        %v7601 = vrot.slane %v7599, 5
        %v7602 = vsel %vm1764, %v7597, %v7601
        %v7603 = vshrl.u32 %v7395, 16
        %v7605 = vrot.slane %v7603, 4
        %v7606 = vor.u32 %v7605, %v7601
        %v7607 = vrot.slane %v7606, 4
        %v7609 = vshll.u32 %v7396, 16
        %v7611 = vrot.slane %v7609, 5
        %v7612 = vsel %vm1764, %v7607, %v7611
        %v7614 = vshrl.u32 %v7397, 16
        %v7616 = vrot.slane %v7614, 4
        %v7617 = vshll.u32 %v7397, 16
        %v7619 = vrot.slane %v7617, 5
        %v7620 = vor.u32 %v7616, %v7619
        %v7621 = vrot.slane %v7620, 4
        %v7623 = vshll.u32 %v7398, 16
        %v7625 = vrot.slane %v7623, 5
        %v7626 = vsel %vm1764, %v7621, %v7625
        %v7627 = vshrl.u32 %v7398, 16
        %v7629 = vrot.slane %v7627, 4
        %v7630 = vor.u32 %v7629, %v7625
        %v7631 = vrot.slane %v7630, 4
        %v7633 = vshll.u32 %v7399, 16
        %v7635 = vrot.slane %v7633, 5
        %v7636 = vsel %vm1764, %v7631, %v7635
        %v7638 = vshrl.u32 %v7400, 16
        %v7640 = vrot.slane %v7638, 4
        %v7641 = vshll.u32 %v7400, 16
        %v7643 = vrot.slane %v7641, 5
        %v7644 = vor.u32 %v7640, %v7643
        %v7645 = vrot.slane %v7644, 4
        %v7647 = vshll.u32 %v7401, 16
        %v7649 = vrot.slane %v7647, 5
        %v7650 = vsel %vm1764, %v7645, %v7649
        %v7651 = vshrl.u32 %v7401, 16
        %v7653 = vrot.slane %v7651, 4
        %v7654 = vor.u32 %v7653, %v7649
        %v7655 = vrot.slane %v7654, 4
        %v7657 = vshll.u32 %v7402, 16
        %v7659 = vrot.slane %v7657, 5
        %v7660 = vsel %vm1764, %v7655, %v7659
        %v7662 = vshrl.u32 %v7403, 16
        %v7664 = vrot.slane %v7662, 4
        %v7665 = vshll.u32 %v7403, 16
        %v7667 = vrot.slane %v7665, 5
        %v7668 = vor.u32 %v7664, %v7667
        %v7669 = vrot.slane %v7668, 4
        %v7671 = vshll.u32 %v7404, 16
        %v7673 = vrot.slane %v7671, 5
        %v7674 = vsel %vm1764, %v7669, %v7673
        %v7675 = vshrl.u32 %v7404, 16
        %v7677 = vrot.slane %v7675, 4
        %v7678 = vor.u32 %v7677, %v7673
        %v7679 = vrot.slane %v7678, 4
        %v7681 = vshll.u32 %v7405, 16
        %v7683 = vrot.slane %v7681, 5
        %v7684 = vsel %vm1764, %v7679, %v7683
        %v7686 = vshrl.u32 %v7406, 16
        %v7688 = vrot.slane %v7686, 4
        %v7689 = vshll.u32 %v7406, 16
        %v7691 = vrot.slane %v7689, 5
        %v7692 = vor.u32 %v7688, %v7691
        %v7693 = vrot.slane %v7692, 4
        %v7695 = vshll.u32 %v7407, 16
        %v7697 = vrot.slane %v7695, 5
        %v7698 = vsel %vm1764, %v7693, %v7697
        %v7699 = vshrl.u32 %v7407, 16
        %v7701 = vrot.slane %v7699, 4
        %v7702 = vor.u32 %v7701, %v7697
        %v7703 = vrot.slane %v7702, 4
        %v7705 = vshll.u32 %v7408, 16
        %v7707 = vrot.slane %v7705, 5
        %v7708 = vsel %vm1764, %v7703, %v7707
        %v7710 = vshrl.u32 %v7409, 16
        %v7712 = vrot.slane %v7710, 4
        %v7713 = vshll.u32 %v7409, 16
        %v7715 = vrot.slane %v7713, 5
        %v7716 = vor.u32 %v7712, %v7715
        %v7717 = vrot.slane %v7716, 4
        %v7719 = vshll.u32 %v7410, 16
        %v7721 = vrot.slane %v7719, 5
        %v7722 = vsel %vm1764, %v7717, %v7721
        %v7723 = vshrl.u32 %v7410, 16
        %v7725 = vrot.slane %v7723, 4
        %v7726 = vor.u32 %v7725, %v7721
        %v7727 = vrot.slane %v7726, 4
        %v7729 = vshll.u32 %v7411, 16
        %v7731 = vrot.slane %v7729, 5
        %v7732 = vsel %vm1764, %v7727, %v7731
        %v7734 = vshrl.u32 %v7412, 16
        %v7736 = vrot.slane %v7734, 4
        %v7737 = vshll.u32 %v7412, 16
        %v7739 = vrot.slane %v7737, 5
        %v7740 = vor.u32 %v7736, %v7739
        %v7741 = vrot.slane %v7740, 4
        %v7743 = vshll.u32 %v7413, 16
        %v7745 = vrot.slane %v7743, 5
        %v7746 = vsel %vm1764, %v7741, %v7745
        %v7747 = vshrl.u32 %v7413, 16
        %v7749 = vrot.slane %v7747, 4
        %v7750 = vor.u32 %v7749, %v7745
        %v7751 = vrot.slane %v7750, 4
        %v7753 = vshll.u32 %v7414, 16
        %v7755 = vrot.slane %v7753, 5
        %v7756 = vsel %vm1764, %v7751, %v7755
        %v7758 = vshrl.u32 %v7415, 16
        %v7760 = vrot.slane %v7758, 4
        %v7761 = vshll.u32 %v7415, 16
        %v7763 = vrot.slane %v7761, 5
        %v7764 = vor.u32 %v7760, %v7763
        %v7765 = vrot.slane %v7764, 4
        %v7767 = vshll.u32 %v7416, 16
        %v7769 = vrot.slane %v7767, 5
        %v7770 = vsel %vm1764, %v7765, %v7769
        %v7771 = vshrl.u32 %v7416, 16
        %v7773 = vrot.slane %v7771, 4
        %v7774 = vor.u32 %v7773, %v7769
        %v7775 = vrot.slane %v7774, 4
        %v7777 = vshll.u32 %v7417, 16
        %v7779 = vrot.slane %v7777, 5
        %v7780 = vsel %vm1764, %v7775, %v7779
        %v7782 = vshrl.u32 %v7418, 16
        %v7784 = vrot.slane %v7782, 4
        %v7785 = vshll.u32 %v7418, 16
        %v7787 = vrot.slane %v7785, 5
        %v7788 = vor.u32 %v7784, %v7787
        %v7789 = vrot.slane %v7788, 4
        %v7791 = vshll.u32 %v7419, 16
        %v7793 = vrot.slane %v7791, 5
        %v7794 = vsel %vm1764, %v7789, %v7793
        %v7795 = vshrl.u32 %v7419, 16
        %v7797 = vrot.slane %v7795, 4
        %v7798 = vor.u32 %v7797, %v7793
        %v7799 = vrot.slane %v7798, 4
        %v7801 = vshll.u32 %v7420, 16
        %v7803 = vrot.slane %v7801, 5
        %v7804 = vsel %vm1764, %v7799, %v7803
        %s7805 = scalar_lea.vmem [#allocation9], 128
        %v7806 = vld [vmem:[%s7805] sm:$0xf]
        %v7807 = vld [vmem:[%s7805 + $0x4] sm:$0xf]
        %v7808 = vld [vmem:[%s7805 + $0x8] sm:$0xf]
        %v7809 = vld [vmem:[%s7805 + $0xc] sm:$0xf]
        %v7810 = vld [vmem:[%s7805 + $0x10] sm:$0xf]
        %v7811 = vld [vmem:[%s7805 + $0x14] sm:$0xf]
        %v7812 = vld [vmem:[%s7805 + $0x18] sm:$0xf]
        %v7813 = vld [vmem:[%s7805 + $0x1c] sm:$0xf]
        %v7814 = vld [vmem:[%s7805 + $0x20] sm:$0xf]
        %v7815 = vld [vmem:[%s7805 + $0x24] sm:$0xf]
        %v7816 = vld [vmem:[%s7805 + $0x28] sm:$0xf]
        %v7817 = vld [vmem:[%s7805 + $0x2c] sm:$0xf]
        %v7818 = vld [vmem:[%s7805 + $0x30] sm:$0xf]
        %v7819 = vld [vmem:[%s7805 + $0x34] sm:$0xf]
        %v7820 = vld [vmem:[%s7805 + $0x38] sm:$0xf]
        %v7821 = vld [vmem:[%s7805 + $0x3c] sm:$0xf]
        %v7822 = vunpack.c.l.b16 %v7434
        %v7823 = vunpack.c.l.b16 %v7444
        %v7824 = vunpack.c.l.b16 %v7458
        %v7825 = vunpack.c.l.b16 %v7468
        %v7826 = vunpack.c.l.b16 %v7482
        %v7827 = vunpack.c.l.b16 %v7492
        %v7828 = vunpack.c.l.b16 %v7506
        %v7829 = vunpack.c.l.b16 %v7516
        %v7830 = vunpack.c.l.b16 %v7530
        %v7831 = vunpack.c.l.b16 %v7540
        %v7832 = vunpack.c.l.b16 %v7554
        %v7833 = vunpack.c.l.b16 %v7564
        %v7834 = vunpack.c.l.b16 %v7578
        %v7835 = vunpack.c.l.b16 %v7588
        %v7836 = vunpack.c.l.b16 %v7602
        %v7837 = vunpack.c.l.b16 %v7612
        %v7838 = vunpack.c.l.b16 %v7626
        %v7839 = vunpack.c.l.b16 %v7636
        %v7840 = vunpack.c.l.b16 %v7650
        %v7841 = vunpack.c.l.b16 %v7660
        %v7842 = vunpack.c.l.b16 %v7674
        %v7843 = vunpack.c.l.b16 %v7684
        %v7844 = vunpack.c.l.b16 %v7698
        %v7845 = vunpack.c.l.b16 %v7708
        %v7846 = vunpack.c.l.b16 %v7722
        %v7847 = vunpack.c.l.b16 %v7732
        %v7848 = vunpack.c.l.b16 %v7746
        %v7849 = vunpack.c.l.b16 %v7756
        %v7850 = vunpack.c.l.b16 %v7770
        %v7851 = vunpack.c.l.b16 %v7780
        %v7852 = vunpack.c.l.b16 %v7794
        %v7853 = vunpack.c.l.b16 %v7804
        %v7854 = vpack.c.b16 %v7823, %v7822
        %v7855 = vpack.c.b16 %v7825, %v7824
        %v7856 = vpack.c.b16 %v7827, %v7826
        %v7857 = vpack.c.b16 %v7829, %v7828
        %v7858 = vpack.c.b16 %v7831, %v7830
        %v7859 = vpack.c.b16 %v7833, %v7832
        %v7860 = vpack.c.b16 %v7835, %v7834
        %v7861 = vpack.c.b16 %v7837, %v7836
        %v7862 = vpack.c.b16 %v7839, %v7838
        %v7863 = vpack.c.b16 %v7841, %v7840
        %v7864 = vpack.c.b16 %v7843, %v7842
        %v7865 = vpack.c.b16 %v7845, %v7844
        %v7866 = vpack.c.b16 %v7847, %v7846
        %v7867 = vpack.c.b16 %v7849, %v7848
        %v7868 = vpack.c.b16 %v7851, %v7850
        %v7869 = vpack.c.b16 %v7853, %v7852
        %v7902 = vunpack.c.l.b16 %v7806
        %v7903 = vunpack.c.l.b16 %v7807
        %v7904 = vunpack.c.l.b16 %v7808
        %v7905 = vunpack.c.l.b16 %v7809
        %v7906 = vunpack.c.l.b16 %v7810
        %v7907 = vunpack.c.l.b16 %v7811
        %v7908 = vunpack.c.l.b16 %v7812
        %v7909 = vunpack.c.l.b16 %v7813
        %v7910 = vunpack.c.l.b16 %v7814
        %v7911 = vunpack.c.l.b16 %v7815
        %v7912 = vunpack.c.l.b16 %v7816
        %v7913 = vunpack.c.l.b16 %v7817
        %v7914 = vunpack.c.l.b16 %v7818
        %v7915 = vunpack.c.l.b16 %v7819
        %v7916 = vunpack.c.l.b16 %v7820
        %v7917 = vunpack.c.l.b16 %v7821
        %v7918 = vpack.c.b16 %v7903, %v7902
        %v7919 = vpack.c.b16 %v7905, %v7904
        %v7920 = vpack.c.b16 %v7907, %v7906
        %v7921 = vpack.c.b16 %v7909, %v7908
        %v7922 = vpack.c.b16 %v7911, %v7910
        %v7923 = vpack.c.b16 %v7913, %v7912
        %v7924 = vpack.c.b16 %v7915, %v7914
        %v7925 = vpack.c.b16 %v7917, %v7916
        %7934 = vmatprep.subr.bf16.mxu0 0
        %7935 = vmatpush1.bf16.msra.mxu0 %v7925
        %7936 = vmatprep.subr.bf16.mxu0 0
        %7937 = vmatpush1.bf16.msra.mxu0 %v7924
        %7938 = vmatprep.subr.bf16.mxu0 0
        %7939 = vmatpush1.bf16.msra.mxu0 %v7923
        %7940 = vmatprep.subr.bf16.mxu0 0
        %7941 = vmatpush1.bf16.msra.mxu0 %v7922
        %7942 = vmatprep.subr.bf16.mxu0 0
        %7943 = vmatpush1.bf16.msra.mxu0 %v7921
        %7944 = vmatprep.subr.bf16.mxu0 0
        %7945 = vmatpush1.bf16.msra.mxu0 %v7920
        %7946 = vmatprep.subr.bf16.mxu0 0
        %7947 = vmatpush1.bf16.msra.mxu0 %v7919
        %7948 = vmatprep.subr.bf16.mxu0 0
        %7949 = vmatpush1.bf16.msra.mxu0 %v7918
        %7950 = vmatprep.subr.bf16.mxu0 0
        %7951 = vmatpush2.bf16.msra.mxu0 0
        %7952 = vmatprep.subr.bf16.mxu0 0
        %7953 = vmatpush2.bf16.msra.mxu0 0
        %7954 = vmatprep.subr.bf16.mxu0 0
        %7955 = vmatpush2.bf16.msra.mxu0 0
        %7956 = vmatprep.subr.bf16.mxu0 0
        %7957 = vmatpush2.bf16.msra.mxu0 0
        %7958 = vmatprep.subr.bf16.mxu0 0
        %7959 = vmatpush2.bf16.msra.mxu0 0
        %7960 = vmatprep.subr.bf16.mxu0 0
        %7961 = vmatpush2.bf16.msra.mxu0 0
        %7962 = vmatprep.subr.bf16.mxu0 0
        %7963 = vmatpush2.bf16.msra.mxu0 0
        %7964 = vmatprep.subr.bf16.mxu0 0
        %7965 = vmatpush2.bf16.msra.mxu0 0
        %7966 = vmatprep.mubr.bf16.mxu0 0
        %7967 = vmatmul.mubr.bf16.gmra.mxu0 %v7854
        %v7968 = vpop.f32.mrf.mxu0
        %v7969 = vadd.f32 0.0, %v7968
        %v7970 = vpop.f32.mrf.mxu0
        %v7971 = vpop.f32.mrf.mxu0
        %v7972 = vadd.f32 0.0, %v7971
        %v7973 = vpop.f32.mrf.mxu0
        %7974 = vmatprep.mubr.bf16.mxu0 0
        %7975 = vmatmul.mubr.bf16.gmra.mxu0 %v7855
        %v7976 = vpop.f32.mrf.mxu0
        %v7977 = vadd.f32 0.0, %v7976
        %v7978 = vpop.f32.mrf.mxu0
        %v7979 = vpop.f32.mrf.mxu0
        %v7980 = vadd.f32 0.0, %v7979
        %v7981 = vpop.f32.mrf.mxu0
        %7982 = vmatprep.mubr.bf16.mxu0 0
        %7983 = vmatmul.mubr.bf16.gmra.mxu0 %v7856
        %v7984 = vpop.f32.mrf.mxu0
        %v7985 = vadd.f32 0.0, %v7984
        %v7986 = vpop.f32.mrf.mxu0
        %v7987 = vpop.f32.mrf.mxu0
        %v7988 = vadd.f32 0.0, %v7987
        %v7989 = vpop.f32.mrf.mxu0
        %7990 = vmatprep.mubr.bf16.mxu0 0
        %7991 = vmatmul.mubr.bf16.gmra.mxu0 %v7857
        %v7992 = vpop.f32.mrf.mxu0
        %v7993 = vadd.f32 0.0, %v7992
        %v7994 = vpop.f32.mrf.mxu0
        %v7995 = vpop.f32.mrf.mxu0
        %v7996 = vadd.f32 0.0, %v7995
        %v7997 = vpop.f32.mrf.mxu0
        %7998 = vmatprep.mubr.bf16.mxu0 0
        %7999 = vmatmul.mubr.bf16.gmra.mxu0 %v7858
        %v8000 = vpop.f32.mrf.mxu0
        %v8001 = vadd.f32 0.0, %v8000
        %v8002 = vpop.f32.mrf.mxu0
        %v8003 = vpop.f32.mrf.mxu0
        %v8004 = vadd.f32 0.0, %v8003
        %v8005 = vpop.f32.mrf.mxu0
        %8006 = vmatprep.mubr.bf16.mxu0 0
        %8007 = vmatmul.mubr.bf16.gmra.mxu0 %v7859
        %v8008 = vpop.f32.mrf.mxu0
        %v8009 = vadd.f32 0.0, %v8008
        %v8010 = vpop.f32.mrf.mxu0
        %v8011 = vpop.f32.mrf.mxu0
        %v8012 = vadd.f32 0.0, %v8011
        %v8013 = vpop.f32.mrf.mxu0
        %8014 = vmatprep.mubr.bf16.mxu0 0
        %8015 = vmatmul.mubr.bf16.gmra.mxu0 %v7860
        %v8016 = vpop.f32.mrf.mxu0
        %v8017 = vadd.f32 0.0, %v8016
        %v8018 = vpop.f32.mrf.mxu0
        %v8019 = vpop.f32.mrf.mxu0
        %v8020 = vadd.f32 0.0, %v8019
        %v8021 = vpop.f32.mrf.mxu0
        %8022 = vmatprep.mubr.bf16.mxu0 0
        %8023 = vmatmul.mubr.bf16.gmra.mxu0 %v7861
        %v8024 = vpop.f32.mrf.mxu0
        %v8025 = vadd.f32 0.0, %v8024
        %v8026 = vpop.f32.mrf.mxu0
        %v8027 = vpop.f32.mrf.mxu0
        %v8028 = vadd.f32 0.0, %v8027
        %v8029 = vpop.f32.mrf.mxu0
        %8030 = vmatprep.mubr.bf16.mxu0 0
        %8031 = vmatmul.mubr.bf16.gmra.mxu0 %v7862
        %v8032 = vpop.f32.mrf.mxu0
        %v8033 = vadd.f32 0.0, %v8032
        %v8034 = vpop.f32.mrf.mxu0
        %v8035 = vpop.f32.mrf.mxu0
        %v8036 = vadd.f32 0.0, %v8035
        %v8037 = vpop.f32.mrf.mxu0
        %8038 = vmatprep.mubr.bf16.mxu0 0
        %8039 = vmatmul.mubr.bf16.gmra.mxu0 %v7863
        %v8040 = vpop.f32.mrf.mxu0
        %v8041 = vadd.f32 0.0, %v8040
        %v8042 = vpop.f32.mrf.mxu0
        %v8043 = vpop.f32.mrf.mxu0
        %v8044 = vadd.f32 0.0, %v8043
        %v8045 = vpop.f32.mrf.mxu0
        %8046 = vmatprep.mubr.bf16.mxu0 0
        %8047 = vmatmul.mubr.bf16.gmra.mxu0 %v7864
        %v8048 = vpop.f32.mrf.mxu0
        %v8049 = vadd.f32 0.0, %v8048
        %v8050 = vpop.f32.mrf.mxu0
        %v8051 = vpop.f32.mrf.mxu0
        %v8052 = vadd.f32 0.0, %v8051
        %v8053 = vpop.f32.mrf.mxu0
        %8054 = vmatprep.mubr.bf16.mxu0 0
        %8055 = vmatmul.mubr.bf16.gmra.mxu0 %v7865
        %v8056 = vpop.f32.mrf.mxu0
        %v8057 = vadd.f32 0.0, %v8056
        %v8058 = vpop.f32.mrf.mxu0
        %v8059 = vpop.f32.mrf.mxu0
        %v8060 = vadd.f32 0.0, %v8059
        %v8061 = vpop.f32.mrf.mxu0
        %8062 = vmatprep.mubr.bf16.mxu0 0
        %8063 = vmatmul.mubr.bf16.gmra.mxu0 %v7866
        %v8064 = vpop.f32.mrf.mxu0
        %v8065 = vadd.f32 0.0, %v8064
        %v8066 = vpop.f32.mrf.mxu0
        %v8067 = vpop.f32.mrf.mxu0
        %v8068 = vadd.f32 0.0, %v8067
        %v8069 = vpop.f32.mrf.mxu0
        %8070 = vmatprep.mubr.bf16.mxu0 0
        %8071 = vmatmul.mubr.bf16.gmra.mxu0 %v7867
        %v8072 = vpop.f32.mrf.mxu0
        %v8073 = vadd.f32 0.0, %v8072
        %v8074 = vpop.f32.mrf.mxu0
        %v8075 = vpop.f32.mrf.mxu0
        %v8076 = vadd.f32 0.0, %v8075
        %v8077 = vpop.f32.mrf.mxu0
        %8078 = vmatprep.mubr.bf16.mxu0 0
        %8079 = vmatmul.mubr.bf16.gmra.mxu0 %v7868
        %v8080 = vpop.f32.mrf.mxu0
        %v8081 = vadd.f32 0.0, %v8080
        %v8082 = vpop.f32.mrf.mxu0
        %v8083 = vpop.f32.mrf.mxu0
        %v8084 = vadd.f32 0.0, %v8083
        %v8085 = vpop.f32.mrf.mxu0
        %8086 = vmatprep.mubr.bf16.mxu0 0
        %8087 = vmatmul.mubr.bf16.gmra.mxu0 %v7869
        %v8088 = vpop.f32.mrf.mxu0
        %v8089 = vadd.f32 0.0, %v8088
        %v8090 = vpop.f32.mrf.mxu0
        %v8091 = vpop.f32.mrf.mxu0
        %v8092 = vadd.f32 0.0, %v8091
        %v8093 = vpop.f32.mrf.mxu0
        %8094 = vdwg.mxu0
        %v8095 = vadd.f32 %v7247, %v7969
        %v8096 = vadd.f32 %v7250, %v7972
        %v8097 = vadd.f32 %v7255, %v7977
        %v8098 = vadd.f32 %v7258, %v7980
        %v8099 = vadd.f32 %v7263, %v7985
        %v8100 = vadd.f32 %v7266, %v7988
        %v8101 = vadd.f32 %v7271, %v7993
        %v8102 = vadd.f32 %v7274, %v7996
        %v8103 = vadd.f32 %v7279, %v8001
        %v8104 = vadd.f32 %v7282, %v8004
        %v8105 = vadd.f32 %v7287, %v8009
        %v8106 = vadd.f32 %v7290, %v8012
        %v8107 = vadd.f32 %v7295, %v8017
        %v8108 = vadd.f32 %v7298, %v8020
        %v8109 = vadd.f32 %v7303, %v8025
        %v8110 = vadd.f32 %v7306, %v8028
        %v8111 = vadd.f32 %v7311, %v8033
        %v8112 = vadd.f32 %v7314, %v8036
        %v8113 = vadd.f32 %v7319, %v8041
        %v8114 = vadd.f32 %v7322, %v8044
        %v8115 = vadd.f32 %v7327, %v8049
        %v8116 = vadd.f32 %v7330, %v8052
        %v8117 = vadd.f32 %v7335, %v8057
        %v8118 = vadd.f32 %v7338, %v8060
        %v8119 = vadd.f32 %v7343, %v8065
        %v8120 = vadd.f32 %v7346, %v8068
        %v8121 = vadd.f32 %v7351, %v8073
        %v8122 = vadd.f32 %v7354, %v8076
        %v8123 = vadd.f32 %v7359, %v8081
        %v8124 = vadd.f32 %v7362, %v8084
        %v8125 = vadd.f32 %v7367, %v8089
        %v8126 = vadd.f32 %v7370, %v8092
        %v8127 = vld [vmem:[%s410] sm:$0x8]
        %v8128 = vld [vmem:[%s410 + $0x4] sm:$0xf]
        %v8129 = vld [vmem:[%s410 + $0x8] sm:$0xf]
        %v8130 = vld [vmem:[%s410 + $0x10] sm:$0x8]
        %v8131 = vld [vmem:[%s410 + $0x14] sm:$0xf]
        %v8132 = vld [vmem:[%s410 + $0x18] sm:$0xf]
        %v8133 = vld [vmem:[%s410 + $0x20] sm:$0x8]
        %v8134 = vld [vmem:[%s410 + $0x24] sm:$0xf]
        %v8135 = vld [vmem:[%s410 + $0x28] sm:$0xf]
        %v8136 = vld [vmem:[%s410 + $0x30] sm:$0x8]
        %v8137 = vld [vmem:[%s410 + $0x34] sm:$0xf]
        %v8138 = vld [vmem:[%s410 + $0x38] sm:$0xf]
        %v8139 = vld [vmem:[%s410 + $0x40] sm:$0x8]
        %v8140 = vld [vmem:[%s410 + $0x44] sm:$0xf]
        %v8141 = vld [vmem:[%s410 + $0x48] sm:$0xf]
        %v8142 = vld [vmem:[%s410 + $0x50] sm:$0x8]
        %v8143 = vld [vmem:[%s410 + $0x54] sm:$0xf]
        %v8144 = vld [vmem:[%s410 + $0x58] sm:$0xf]
        %v8145 = vld [vmem:[%s410 + $0x60] sm:$0x8]
        %v8146 = vld [vmem:[%s410 + $0x64] sm:$0xf]
        %v8147 = vld [vmem:[%s410 + $0x68] sm:$0xf]
        %v8148 = vld [vmem:[%s410 + $0x70] sm:$0x8]
        %v8149 = vld [vmem:[%s410 + $0x74] sm:$0xf]
        %v8150 = vld [vmem:[%s410 + $0x78] sm:$0xf]
        %v8151 = vld [vmem:[%s410 + $0x80] sm:$0x8]
        %v8152 = vld [vmem:[%s410 + $0x84] sm:$0xf]
        %v8153 = vld [vmem:[%s410 + $0x88] sm:$0xf]
        %v8154 = vld [vmem:[%s410 + $0x90] sm:$0x8]
        %v8155 = vld [vmem:[%s410 + $0x94] sm:$0xf]
        %v8156 = vld [vmem:[%s410 + $0x98] sm:$0xf]
        %v8157 = vld [vmem:[%s410 + $0xa0] sm:$0x8]
        %v8158 = vld [vmem:[%s410 + $0xa4] sm:$0xf]
        %v8159 = vld [vmem:[%s410 + $0xa8] sm:$0xf]
        %v8160 = vld [vmem:[%s410 + $0xb0] sm:$0x8]
        %v8161 = vld [vmem:[%s410 + $0xb4] sm:$0xf]
        %v8162 = vld [vmem:[%s410 + $0xb8] sm:$0xf]
        %v8163 = vld [vmem:[%s410 + $0xc0] sm:$0x8]
        %v8164 = vld [vmem:[%s410 + $0xc4] sm:$0xf]
        %v8165 = vld [vmem:[%s410 + $0xc8] sm:$0xf]
        %v8166 = vld [vmem:[%s410 + $0xd0] sm:$0x8]
        %v8167 = vld [vmem:[%s410 + $0xd4] sm:$0xf]
        %v8168 = vld [vmem:[%s410 + $0xd8] sm:$0xf]
        %v8169 = vld [vmem:[%s410 + $0xe0] sm:$0x8]
        %v8170 = vld [vmem:[%s410 + $0xe4] sm:$0xf]
        %v8171 = vld [vmem:[%s410 + $0xe8] sm:$0xf]
        %v8172 = vld [vmem:[%s410 + $0xf0] sm:$0x8]
        %v8173 = vld [vmem:[%s410 + $0xf4] sm:$0xf]
        %v8174 = vld [vmem:[%s410 + $0xf8] sm:$0xf]
        %v8176 = vshrl.u32 %v8127, 16
        %v8178 = vrot.slane %v8176, 7
        %v8179 = vrot.slane %v8178, 4
        %v8181 = vshrl.u32 %v8128, 16
        %v8183 = vrot.slane %v8181, 7
        %v8184 = vshll.u32 %v8128, 16
        %v8186 = vor.u32 %v8183, %v8184
        %v8187 = vsel %vm750, %v8179, %v8186
        %v8188 = vrot.slane %v8183, 4
        %v8190 = vshrl.u32 %v8129, 16
        %v8192 = vrot.slane %v8190, 7
        %v8193 = vshll.u32 %v8129, 16
        %v8195 = vor.u32 %v8192, %v8193
        %v8196 = vsel %vm750, %v8188, %v8195
        %v8198 = vshrl.u32 %v8130, 16
        %v8200 = vrot.slane %v8198, 7
        %v8201 = vrot.slane %v8200, 4
        %v8203 = vshrl.u32 %v8131, 16
        %v8205 = vrot.slane %v8203, 7
        %v8206 = vshll.u32 %v8131, 16
        %v8208 = vor.u32 %v8205, %v8206
        %v8209 = vsel %vm750, %v8201, %v8208
        %v8210 = vrot.slane %v8205, 4
        %v8212 = vshrl.u32 %v8132, 16
        %v8214 = vrot.slane %v8212, 7
        %v8215 = vshll.u32 %v8132, 16
        %v8217 = vor.u32 %v8214, %v8215
        %v8218 = vsel %vm750, %v8210, %v8217
        %v8220 = vshrl.u32 %v8133, 16
        %v8222 = vrot.slane %v8220, 7
        %v8223 = vrot.slane %v8222, 4
        %v8225 = vshrl.u32 %v8134, 16
        %v8227 = vrot.slane %v8225, 7
        %v8228 = vshll.u32 %v8134, 16
        %v8230 = vor.u32 %v8227, %v8228
        %v8231 = vsel %vm750, %v8223, %v8230
        %v8232 = vrot.slane %v8227, 4
        %v8234 = vshrl.u32 %v8135, 16
        %v8236 = vrot.slane %v8234, 7
        %v8237 = vshll.u32 %v8135, 16
        %v8239 = vor.u32 %v8236, %v8237
        %v8240 = vsel %vm750, %v8232, %v8239
        %v8242 = vshrl.u32 %v8136, 16
        %v8244 = vrot.slane %v8242, 7
        %v8245 = vrot.slane %v8244, 4
        %v8247 = vshrl.u32 %v8137, 16
        %v8249 = vrot.slane %v8247, 7
        %v8250 = vshll.u32 %v8137, 16
        %v8252 = vor.u32 %v8249, %v8250
        %v8253 = vsel %vm750, %v8245, %v8252
        %v8254 = vrot.slane %v8249, 4
        %v8256 = vshrl.u32 %v8138, 16
        %v8258 = vrot.slane %v8256, 7
        %v8259 = vshll.u32 %v8138, 16
        %v8261 = vor.u32 %v8258, %v8259
        %v8262 = vsel %vm750, %v8254, %v8261
        %v8264 = vshrl.u32 %v8139, 16
        %v8266 = vrot.slane %v8264, 7
        %v8267 = vrot.slane %v8266, 4
        %v8269 = vshrl.u32 %v8140, 16
        %v8271 = vrot.slane %v8269, 7
        %v8272 = vshll.u32 %v8140, 16
        %v8274 = vor.u32 %v8271, %v8272
        %v8275 = vsel %vm750, %v8267, %v8274
        %v8276 = vrot.slane %v8271, 4
        %v8278 = vshrl.u32 %v8141, 16
        %v8280 = vrot.slane %v8278, 7
        %v8281 = vshll.u32 %v8141, 16
        %v8283 = vor.u32 %v8280, %v8281
        %v8284 = vsel %vm750, %v8276, %v8283
        %v8286 = vshrl.u32 %v8142, 16
        %v8288 = vrot.slane %v8286, 7
        %v8289 = vrot.slane %v8288, 4
        %v8291 = vshrl.u32 %v8143, 16
        %v8293 = vrot.slane %v8291, 7
        %v8294 = vshll.u32 %v8143, 16
        %v8296 = vor.u32 %v8293, %v8294
        %v8297 = vsel %vm750, %v8289, %v8296
        %v8298 = vrot.slane %v8293, 4
        %v8300 = vshrl.u32 %v8144, 16
        %v8302 = vrot.slane %v8300, 7
        %v8303 = vshll.u32 %v8144, 16
        %v8305 = vor.u32 %v8302, %v8303
        %v8306 = vsel %vm750, %v8298, %v8305
        %v8308 = vshrl.u32 %v8145, 16
        %v8310 = vrot.slane %v8308, 7
        %v8311 = vrot.slane %v8310, 4
        %v8313 = vshrl.u32 %v8146, 16
        %v8315 = vrot.slane %v8313, 7
        %v8316 = vshll.u32 %v8146, 16
        %v8318 = vor.u32 %v8315, %v8316
        %v8319 = vsel %vm750, %v8311, %v8318
        %v8320 = vrot.slane %v8315, 4
        %v8322 = vshrl.u32 %v8147, 16
        %v8324 = vrot.slane %v8322, 7
        %v8325 = vshll.u32 %v8147, 16
        %v8327 = vor.u32 %v8324, %v8325
        %v8328 = vsel %vm750, %v8320, %v8327
        %v8330 = vshrl.u32 %v8148, 16
        %v8332 = vrot.slane %v8330, 7
        %v8333 = vrot.slane %v8332, 4
        %v8335 = vshrl.u32 %v8149, 16
        %v8337 = vrot.slane %v8335, 7
        %v8338 = vshll.u32 %v8149, 16
        %v8340 = vor.u32 %v8337, %v8338
        %v8341 = vsel %vm750, %v8333, %v8340
        %v8342 = vrot.slane %v8337, 4
        %v8344 = vshrl.u32 %v8150, 16
        %v8346 = vrot.slane %v8344, 7
        %v8347 = vshll.u32 %v8150, 16
        %v8349 = vor.u32 %v8346, %v8347
        %v8350 = vsel %vm750, %v8342, %v8349
        %v8352 = vshrl.u32 %v8151, 16
        %v8354 = vrot.slane %v8352, 7
        %v8355 = vrot.slane %v8354, 4
        %v8357 = vshrl.u32 %v8152, 16
        %v8359 = vrot.slane %v8357, 7
        %v8360 = vshll.u32 %v8152, 16
        %v8362 = vor.u32 %v8359, %v8360
        %v8363 = vsel %vm750, %v8355, %v8362
        %v8364 = vrot.slane %v8359, 4
        %v8366 = vshrl.u32 %v8153, 16
        %v8368 = vrot.slane %v8366, 7
        %v8369 = vshll.u32 %v8153, 16
        %v8371 = vor.u32 %v8368, %v8369
        %v8372 = vsel %vm750, %v8364, %v8371
        %v8374 = vshrl.u32 %v8154, 16
        %v8376 = vrot.slane %v8374, 7
        %v8377 = vrot.slane %v8376, 4
        %v8379 = vshrl.u32 %v8155, 16
        %v8381 = vrot.slane %v8379, 7
        %v8382 = vshll.u32 %v8155, 16
        %v8384 = vor.u32 %v8381, %v8382
        %v8385 = vsel %vm750, %v8377, %v8384
        %v8386 = vrot.slane %v8381, 4
        %v8388 = vshrl.u32 %v8156, 16
        %v8390 = vrot.slane %v8388, 7
        %v8391 = vshll.u32 %v8156, 16
        %v8393 = vor.u32 %v8390, %v8391
        %v8394 = vsel %vm750, %v8386, %v8393
        %v8396 = vshrl.u32 %v8157, 16
        %v8398 = vrot.slane %v8396, 7
        %v8399 = vrot.slane %v8398, 4
        %v8401 = vshrl.u32 %v8158, 16
        %v8403 = vrot.slane %v8401, 7
        %v8404 = vshll.u32 %v8158, 16
        %v8406 = vor.u32 %v8403, %v8404
        %v8407 = vsel %vm750, %v8399, %v8406
        %v8408 = vrot.slane %v8403, 4
        %v8410 = vshrl.u32 %v8159, 16
        %v8412 = vrot.slane %v8410, 7
        %v8413 = vshll.u32 %v8159, 16
        %v8415 = vor.u32 %v8412, %v8413
        %v8416 = vsel %vm750, %v8408, %v8415
        %v8418 = vshrl.u32 %v8160, 16
        %v8420 = vrot.slane %v8418, 7
        %v8421 = vrot.slane %v8420, 4
        %v8423 = vshrl.u32 %v8161, 16
        %v8425 = vrot.slane %v8423, 7
        %v8426 = vshll.u32 %v8161, 16
        %v8428 = vor.u32 %v8425, %v8426
        %v8429 = vsel %vm750, %v8421, %v8428
        %v8430 = vrot.slane %v8425, 4
        %v8432 = vshrl.u32 %v8162, 16
        %v8434 = vrot.slane %v8432, 7
        %v8435 = vshll.u32 %v8162, 16
        %v8437 = vor.u32 %v8434, %v8435
        %v8438 = vsel %vm750, %v8430, %v8437
        %v8440 = vshrl.u32 %v8163, 16
        %v8442 = vrot.slane %v8440, 7
        %v8443 = vrot.slane %v8442, 4
        %v8445 = vshrl.u32 %v8164, 16
        %v8447 = vrot.slane %v8445, 7
        %v8448 = vshll.u32 %v8164, 16
        %v8450 = vor.u32 %v8447, %v8448
        %v8451 = vsel %vm750, %v8443, %v8450
        %v8452 = vrot.slane %v8447, 4
        %v8454 = vshrl.u32 %v8165, 16
        %v8456 = vrot.slane %v8454, 7
        %v8457 = vshll.u32 %v8165, 16
        %v8459 = vor.u32 %v8456, %v8457
        %v8460 = vsel %vm750, %v8452, %v8459
        %v8462 = vshrl.u32 %v8166, 16
        %v8464 = vrot.slane %v8462, 7
        %v8465 = vrot.slane %v8464, 4
        %v8467 = vshrl.u32 %v8167, 16
        %v8469 = vrot.slane %v8467, 7
        %v8470 = vshll.u32 %v8167, 16
        %v8472 = vor.u32 %v8469, %v8470
        %v8473 = vsel %vm750, %v8465, %v8472
        %v8474 = vrot.slane %v8469, 4
        %v8476 = vshrl.u32 %v8168, 16
        %v8478 = vrot.slane %v8476, 7
        %v8479 = vshll.u32 %v8168, 16
        %v8481 = vor.u32 %v8478, %v8479
        %v8482 = vsel %vm750, %v8474, %v8481
        %v8484 = vshrl.u32 %v8169, 16
        %v8486 = vrot.slane %v8484, 7
        %v8487 = vrot.slane %v8486, 4
        %v8489 = vshrl.u32 %v8170, 16
        %v8491 = vrot.slane %v8489, 7
        %v8492 = vshll.u32 %v8170, 16
        %v8494 = vor.u32 %v8491, %v8492
        %v8495 = vsel %vm750, %v8487, %v8494
        %v8496 = vrot.slane %v8491, 4
        %v8498 = vshrl.u32 %v8171, 16
        %v8500 = vrot.slane %v8498, 7
        %v8501 = vshll.u32 %v8171, 16
        %v8503 = vor.u32 %v8500, %v8501
        %v8504 = vsel %vm750, %v8496, %v8503
        %v8506 = vshrl.u32 %v8172, 16
        %v8508 = vrot.slane %v8506, 7
        %v8509 = vrot.slane %v8508, 4
        %v8511 = vshrl.u32 %v8173, 16
        %v8513 = vrot.slane %v8511, 7
        %v8514 = vshll.u32 %v8173, 16
        %v8516 = vor.u32 %v8513, %v8514
        %v8517 = vsel %vm750, %v8509, %v8516
        %v8518 = vrot.slane %v8513, 4
        %v8520 = vshrl.u32 %v8174, 16
        %v8522 = vrot.slane %v8520, 7
        %v8523 = vshll.u32 %v8174, 16
        %v8525 = vor.u32 %v8522, %v8523
        %v8526 = vsel %vm750, %v8518, %v8525
        %s8527 = scalar_lea.vmem [#allocation9], 192
        %v8528 = vld [vmem:[%s8527] sm:$0xf]
        %v8529 = vld [vmem:[%s8527 + $0x4] sm:$0xf]
        %v8530 = vld [vmem:[%s8527 + $0x8] sm:$0xf]
        %v8531 = vld [vmem:[%s8527 + $0xc] sm:$0xf]
        %v8532 = vld [vmem:[%s8527 + $0x10] sm:$0xf]
        %v8533 = vld [vmem:[%s8527 + $0x14] sm:$0xf]
        %v8534 = vld [vmem:[%s8527 + $0x18] sm:$0xf]
        %v8535 = vld [vmem:[%s8527 + $0x1c] sm:$0xf]
        %v8536 = vld [vmem:[%s8527 + $0x20] sm:$0xf]
        %v8537 = vld [vmem:[%s8527 + $0x24] sm:$0xf]
        %v8538 = vld [vmem:[%s8527 + $0x28] sm:$0xf]
        %v8539 = vld [vmem:[%s8527 + $0x2c] sm:$0xf]
        %v8540 = vld [vmem:[%s8527 + $0x30] sm:$0xf]
        %v8541 = vld [vmem:[%s8527 + $0x34] sm:$0xf]
        %v8542 = vld [vmem:[%s8527 + $0x38] sm:$0xf]
        %v8543 = vld [vmem:[%s8527 + $0x3c] sm:$0xf]
        %v8544 = vunpack.c.l.b16 %v8187
        %v8545 = vunpack.c.l.b16 %v8196
        %v8546 = vunpack.c.l.b16 %v8209
        %v8547 = vunpack.c.l.b16 %v8218
        %v8548 = vunpack.c.l.b16 %v8231
        %v8549 = vunpack.c.l.b16 %v8240
        %v8550 = vunpack.c.l.b16 %v8253
        %v8551 = vunpack.c.l.b16 %v8262
        %v8552 = vunpack.c.l.b16 %v8275
        %v8553 = vunpack.c.l.b16 %v8284
        %v8554 = vunpack.c.l.b16 %v8297
        %v8555 = vunpack.c.l.b16 %v8306
        %v8556 = vunpack.c.l.b16 %v8319
        %v8557 = vunpack.c.l.b16 %v8328
        %v8558 = vunpack.c.l.b16 %v8341
        %v8559 = vunpack.c.l.b16 %v8350
        %v8560 = vunpack.c.l.b16 %v8363
        %v8561 = vunpack.c.l.b16 %v8372
        %v8562 = vunpack.c.l.b16 %v8385
        %v8563 = vunpack.c.l.b16 %v8394
        %v8564 = vunpack.c.l.b16 %v8407
        %v8565 = vunpack.c.l.b16 %v8416
        %v8566 = vunpack.c.l.b16 %v8429
        %v8567 = vunpack.c.l.b16 %v8438
        %v8568 = vunpack.c.l.b16 %v8451
        %v8569 = vunpack.c.l.b16 %v8460
        %v8570 = vunpack.c.l.b16 %v8473
        %v8571 = vunpack.c.l.b16 %v8482
        %v8572 = vunpack.c.l.b16 %v8495
        %v8573 = vunpack.c.l.b16 %v8504
        %v8574 = vunpack.c.l.b16 %v8517
        %v8575 = vunpack.c.l.b16 %v8526
        %v8576 = vpack.c.b16 %v8545, %v8544
        %v8577 = vpack.c.b16 %v8547, %v8546
        %v8578 = vpack.c.b16 %v8549, %v8548
        %v8579 = vpack.c.b16 %v8551, %v8550
        %v8580 = vpack.c.b16 %v8553, %v8552
        %v8581 = vpack.c.b16 %v8555, %v8554
        %v8582 = vpack.c.b16 %v8557, %v8556
        %v8583 = vpack.c.b16 %v8559, %v8558
        %v8584 = vpack.c.b16 %v8561, %v8560
        %v8585 = vpack.c.b16 %v8563, %v8562
        %v8586 = vpack.c.b16 %v8565, %v8564
        %v8587 = vpack.c.b16 %v8567, %v8566
        %v8588 = vpack.c.b16 %v8569, %v8568
        %v8589 = vpack.c.b16 %v8571, %v8570
        %v8590 = vpack.c.b16 %v8573, %v8572
        %v8591 = vpack.c.b16 %v8575, %v8574
        %v8624 = vunpack.c.l.b16 %v8528
        %v8625 = vunpack.c.l.b16 %v8529
        %v8626 = vunpack.c.l.b16 %v8530
        %v8627 = vunpack.c.l.b16 %v8531
        %v8628 = vunpack.c.l.b16 %v8532
        %v8629 = vunpack.c.l.b16 %v8533
        %v8630 = vunpack.c.l.b16 %v8534
        %v8631 = vunpack.c.l.b16 %v8535
        %v8632 = vunpack.c.l.b16 %v8536
        %v8633 = vunpack.c.l.b16 %v8537
        %v8634 = vunpack.c.l.b16 %v8538
        %v8635 = vunpack.c.l.b16 %v8539
        %v8636 = vunpack.c.l.b16 %v8540
        %v8637 = vunpack.c.l.b16 %v8541
        %v8638 = vunpack.c.l.b16 %v8542
        %v8639 = vunpack.c.l.b16 %v8543
        %v8640 = vpack.c.b16 %v8625, %v8624
        %v8641 = vpack.c.b16 %v8627, %v8626
        %v8642 = vpack.c.b16 %v8629, %v8628
        %v8643 = vpack.c.b16 %v8631, %v8630
        %v8644 = vpack.c.b16 %v8633, %v8632
        %v8645 = vpack.c.b16 %v8635, %v8634
        %v8646 = vpack.c.b16 %v8637, %v8636
        %v8647 = vpack.c.b16 %v8639, %v8638
        %8656 = vmatprep.subr.bf16.mxu0 0
        %8657 = vmatpush1.bf16.msra.mxu0 %v8647
        %8658 = vmatprep.subr.bf16.mxu0 0
        %8659 = vmatpush1.bf16.msra.mxu0 %v8646
        %8660 = vmatprep.subr.bf16.mxu0 0
        %8661 = vmatpush1.bf16.msra.mxu0 %v8645
        %8662 = vmatprep.subr.bf16.mxu0 0
        %8663 = vmatpush1.bf16.msra.mxu0 %v8644
        %8664 = vmatprep.subr.bf16.mxu0 0
        %8665 = vmatpush1.bf16.msra.mxu0 %v8643
        %8666 = vmatprep.subr.bf16.mxu0 0
        %8667 = vmatpush1.bf16.msra.mxu0 %v8642
        %8668 = vmatprep.subr.bf16.mxu0 0
        %8669 = vmatpush1.bf16.msra.mxu0 %v8641
        %8670 = vmatprep.subr.bf16.mxu0 0
        %8671 = vmatpush1.bf16.msra.mxu0 %v8640
        %8672 = vmatprep.subr.bf16.mxu0 0
        %8673 = vmatpush2.bf16.msra.mxu0 0
        %8674 = vmatprep.subr.bf16.mxu0 0
        %8675 = vmatpush2.bf16.msra.mxu0 0
        %8676 = vmatprep.subr.bf16.mxu0 0
        %8677 = vmatpush2.bf16.msra.mxu0 0
        %8678 = vmatprep.subr.bf16.mxu0 0
        %8679 = vmatpush2.bf16.msra.mxu0 0
        %8680 = vmatprep.subr.bf16.mxu0 0
        %8681 = vmatpush2.bf16.msra.mxu0 0
        %8682 = vmatprep.subr.bf16.mxu0 0
        %8683 = vmatpush2.bf16.msra.mxu0 0
        %8684 = vmatprep.subr.bf16.mxu0 0
        %8685 = vmatpush2.bf16.msra.mxu0 0
        %8686 = vmatprep.subr.bf16.mxu0 0
        %8687 = vmatpush2.bf16.msra.mxu0 0
        %8688 = vmatprep.mubr.bf16.mxu0 0
        %8689 = vmatmul.mubr.bf16.gmra.mxu0 %v8576
        %v8690 = vpop.f32.mrf.mxu0
        %v8691 = vadd.f32 0.0, %v8690
        %v8692 = vpop.f32.mrf.mxu0
        %v8693 = vpop.f32.mrf.mxu0
        %v8694 = vadd.f32 0.0, %v8693
        %v8695 = vpop.f32.mrf.mxu0
        %8696 = vmatprep.mubr.bf16.mxu0 0
        %8697 = vmatmul.mubr.bf16.gmra.mxu0 %v8577
        %v8698 = vpop.f32.mrf.mxu0
        %v8699 = vadd.f32 0.0, %v8698
        %v8700 = vpop.f32.mrf.mxu0
        %v8701 = vpop.f32.mrf.mxu0
        %v8702 = vadd.f32 0.0, %v8701
        %v8703 = vpop.f32.mrf.mxu0
        %8704 = vmatprep.mubr.bf16.mxu0 0
        %8705 = vmatmul.mubr.bf16.gmra.mxu0 %v8578
        %v8706 = vpop.f32.mrf.mxu0
        %v8707 = vadd.f32 0.0, %v8706
        %v8708 = vpop.f32.mrf.mxu0
        %v8709 = vpop.f32.mrf.mxu0
        %v8710 = vadd.f32 0.0, %v8709
        %v8711 = vpop.f32.mrf.mxu0
        %8712 = vmatprep.mubr.bf16.mxu0 0
        %8713 = vmatmul.mubr.bf16.gmra.mxu0 %v8579
        %v8714 = vpop.f32.mrf.mxu0
        %v8715 = vadd.f32 0.0, %v8714
        %v8716 = vpop.f32.mrf.mxu0
        %v8717 = vpop.f32.mrf.mxu0
        %v8718 = vadd.f32 0.0, %v8717
        %v8719 = vpop.f32.mrf.mxu0
        %8720 = vmatprep.mubr.bf16.mxu0 0
        %8721 = vmatmul.mubr.bf16.gmra.mxu0 %v8580
        %v8722 = vpop.f32.mrf.mxu0
        %v8723 = vadd.f32 0.0, %v8722
        %v8724 = vpop.f32.mrf.mxu0
        %v8725 = vpop.f32.mrf.mxu0
        %v8726 = vadd.f32 0.0, %v8725
        %v8727 = vpop.f32.mrf.mxu0
        %8728 = vmatprep.mubr.bf16.mxu0 0
        %8729 = vmatmul.mubr.bf16.gmra.mxu0 %v8581
        %v8730 = vpop.f32.mrf.mxu0
        %v8731 = vadd.f32 0.0, %v8730
        %v8732 = vpop.f32.mrf.mxu0
        %v8733 = vpop.f32.mrf.mxu0
        %v8734 = vadd.f32 0.0, %v8733
        %v8735 = vpop.f32.mrf.mxu0
        %8736 = vmatprep.mubr.bf16.mxu0 0
        %8737 = vmatmul.mubr.bf16.gmra.mxu0 %v8582
        %v8738 = vpop.f32.mrf.mxu0
        %v8739 = vadd.f32 0.0, %v8738
        %v8740 = vpop.f32.mrf.mxu0
        %v8741 = vpop.f32.mrf.mxu0
        %v8742 = vadd.f32 0.0, %v8741
        %v8743 = vpop.f32.mrf.mxu0
        %8744 = vmatprep.mubr.bf16.mxu0 0
        %8745 = vmatmul.mubr.bf16.gmra.mxu0 %v8583
        %v8746 = vpop.f32.mrf.mxu0
        %v8747 = vadd.f32 0.0, %v8746
        %v8748 = vpop.f32.mrf.mxu0
        %v8749 = vpop.f32.mrf.mxu0
        %v8750 = vadd.f32 0.0, %v8749
        %v8751 = vpop.f32.mrf.mxu0
        %8752 = vmatprep.mubr.bf16.mxu0 0
        %8753 = vmatmul.mubr.bf16.gmra.mxu0 %v8584
        %v8754 = vpop.f32.mrf.mxu0
        %v8755 = vadd.f32 0.0, %v8754
        %v8756 = vpop.f32.mrf.mxu0
        %v8757 = vpop.f32.mrf.mxu0
        %v8758 = vadd.f32 0.0, %v8757
        %v8759 = vpop.f32.mrf.mxu0
        %8760 = vmatprep.mubr.bf16.mxu0 0
        %8761 = vmatmul.mubr.bf16.gmra.mxu0 %v8585
        %v8762 = vpop.f32.mrf.mxu0
        %v8763 = vadd.f32 0.0, %v8762
        %v8764 = vpop.f32.mrf.mxu0
        %v8765 = vpop.f32.mrf.mxu0
        %v8766 = vadd.f32 0.0, %v8765
        %v8767 = vpop.f32.mrf.mxu0
        %8768 = vmatprep.mubr.bf16.mxu0 0
        %8769 = vmatmul.mubr.bf16.gmra.mxu0 %v8586
        %v8770 = vpop.f32.mrf.mxu0
        %v8771 = vadd.f32 0.0, %v8770
        %v8772 = vpop.f32.mrf.mxu0
        %v8773 = vpop.f32.mrf.mxu0
        %v8774 = vadd.f32 0.0, %v8773
        %v8775 = vpop.f32.mrf.mxu0
        %8776 = vmatprep.mubr.bf16.mxu0 0
        %8777 = vmatmul.mubr.bf16.gmra.mxu0 %v8587
        %v8778 = vpop.f32.mrf.mxu0
        %v8779 = vadd.f32 0.0, %v8778
        %v8780 = vpop.f32.mrf.mxu0
        %v8781 = vpop.f32.mrf.mxu0
        %v8782 = vadd.f32 0.0, %v8781
        %v8783 = vpop.f32.mrf.mxu0
        %8784 = vmatprep.mubr.bf16.mxu0 0
        %8785 = vmatmul.mubr.bf16.gmra.mxu0 %v8588
        %v8786 = vpop.f32.mrf.mxu0
        %v8787 = vadd.f32 0.0, %v8786
        %v8788 = vpop.f32.mrf.mxu0
        %v8789 = vpop.f32.mrf.mxu0
        %v8790 = vadd.f32 0.0, %v8789
        %v8791 = vpop.f32.mrf.mxu0
        %8792 = vmatprep.mubr.bf16.mxu0 0
        %8793 = vmatmul.mubr.bf16.gmra.mxu0 %v8589
        %v8794 = vpop.f32.mrf.mxu0
        %v8795 = vadd.f32 0.0, %v8794
        %v8796 = vpop.f32.mrf.mxu0
        %v8797 = vpop.f32.mrf.mxu0
        %v8798 = vadd.f32 0.0, %v8797
        %v8799 = vpop.f32.mrf.mxu0
        %8800 = vmatprep.mubr.bf16.mxu0 0
        %8801 = vmatmul.mubr.bf16.gmra.mxu0 %v8590
        %v8802 = vpop.f32.mrf.mxu0
        %v8803 = vadd.f32 0.0, %v8802
        %v8804 = vpop.f32.mrf.mxu0
        %v8805 = vpop.f32.mrf.mxu0
        %v8806 = vadd.f32 0.0, %v8805
        %v8807 = vpop.f32.mrf.mxu0
        %8808 = vmatprep.mubr.bf16.mxu0 0
        %8809 = vmatmul.mubr.bf16.gmra.mxu0 %v8591
        %v8810 = vpop.f32.mrf.mxu0
        %v8811 = vadd.f32 0.0, %v8810
        %v8812 = vpop.f32.mrf.mxu0
        %v8813 = vpop.f32.mrf.mxu0
        %v8814 = vadd.f32 0.0, %v8813
        %v8815 = vpop.f32.mrf.mxu0
        %8816 = vdwg.mxu0
        %v8817 = vadd.f32 %v8095, %v8691
        %v8818 = vadd.f32 %v8096, %v8694
        %v8819 = vadd.f32 %v8097, %v8699
        %v8820 = vadd.f32 %v8098, %v8702
        %v8821 = vadd.f32 %v8099, %v8707
        %v8822 = vadd.f32 %v8100, %v8710
        %v8823 = vadd.f32 %v8101, %v8715
        %v8824 = vadd.f32 %v8102, %v8718
        %v8825 = vadd.f32 %v8103, %v8723
        %v8826 = vadd.f32 %v8104, %v8726
        %v8827 = vadd.f32 %v8105, %v8731
        %v8828 = vadd.f32 %v8106, %v8734
        %v8829 = vadd.f32 %v8107, %v8739
        %v8830 = vadd.f32 %v8108, %v8742
        %v8831 = vadd.f32 %v8109, %v8747
        %v8832 = vadd.f32 %v8110, %v8750
        %v8833 = vadd.f32 %v8111, %v8755
        %v8834 = vadd.f32 %v8112, %v8758
        %v8835 = vadd.f32 %v8113, %v8763
        %v8836 = vadd.f32 %v8114, %v8766
        %v8837 = vadd.f32 %v8115, %v8771
        %v8838 = vadd.f32 %v8116, %v8774
        %v8839 = vadd.f32 %v8117, %v8779
        %v8840 = vadd.f32 %v8118, %v8782
        %v8841 = vadd.f32 %v8119, %v8787
        %v8842 = vadd.f32 %v8120, %v8790
        %v8843 = vadd.f32 %v8121, %v8795
        %v8844 = vadd.f32 %v8122, %v8798
        %v8845 = vadd.f32 %v8123, %v8803
        %v8846 = vadd.f32 %v8124, %v8806
        %v8847 = vadd.f32 %v8125, %v8811
        %v8848 = vadd.f32 %v8126, %v8814
        %s8849 = scalar_lea.vmem [#allocation9], 256
        %v8850 = vld [vmem:[%s8849] sm:$0xf]
        %v8851 = vld [vmem:[%s8849 + $0x4] sm:$0xf]
        %v8852 = vld [vmem:[%s8849 + $0x8] sm:$0xf]
        %v8853 = vld [vmem:[%s8849 + $0xc] sm:$0xf]
        %v8854 = vld [vmem:[%s8849 + $0x10] sm:$0xf]
        %v8855 = vld [vmem:[%s8849 + $0x14] sm:$0xf]
        %v8856 = vld [vmem:[%s8849 + $0x18] sm:$0xf]
        %v8857 = vld [vmem:[%s8849 + $0x1c] sm:$0xf]
        %v8858 = vld [vmem:[%s8849 + $0x20] sm:$0xf]
        %v8859 = vld [vmem:[%s8849 + $0x24] sm:$0xf]
        %v8860 = vld [vmem:[%s8849 + $0x28] sm:$0xf]
        %v8861 = vld [vmem:[%s8849 + $0x2c] sm:$0xf]
        %v8862 = vld [vmem:[%s8849 + $0x30] sm:$0xf]
        %v8863 = vld [vmem:[%s8849 + $0x34] sm:$0xf]
        %v8864 = vld [vmem:[%s8849 + $0x38] sm:$0xf]
        %v8865 = vld [vmem:[%s8849 + $0x3c] sm:$0xf]
        %v8898 = vunpack.c.l.b16 %v8128
        %v8899 = vunpack.c.l.b16 %v8129
        %v8900 = vunpack.c.l.b16 %v8131
        %v8901 = vunpack.c.l.b16 %v8132
        %v8902 = vunpack.c.l.b16 %v8134
        %v8903 = vunpack.c.l.b16 %v8135
        %v8904 = vunpack.c.l.b16 %v8137
        %v8905 = vunpack.c.l.b16 %v8138
        %v8906 = vunpack.c.l.b16 %v8140
        %v8907 = vunpack.c.l.b16 %v8141
        %v8908 = vunpack.c.l.b16 %v8143
        %v8909 = vunpack.c.l.b16 %v8144
        %v8910 = vunpack.c.l.b16 %v8146
        %v8911 = vunpack.c.l.b16 %v8147
        %v8912 = vunpack.c.l.b16 %v8149
        %v8913 = vunpack.c.l.b16 %v8150
        %v8914 = vunpack.c.l.b16 %v8152
        %v8915 = vunpack.c.l.b16 %v8153
        %v8916 = vunpack.c.l.b16 %v8155
        %v8917 = vunpack.c.l.b16 %v8156
        %v8918 = vunpack.c.l.b16 %v8158
        %v8919 = vunpack.c.l.b16 %v8159
        %v8920 = vunpack.c.l.b16 %v8161
        %v8921 = vunpack.c.l.b16 %v8162
        %v8922 = vunpack.c.l.b16 %v8164
        %v8923 = vunpack.c.l.b16 %v8165
        %v8924 = vunpack.c.l.b16 %v8167
        %v8925 = vunpack.c.l.b16 %v8168
        %v8926 = vunpack.c.l.b16 %v8170
        %v8927 = vunpack.c.l.b16 %v8171
        %v8928 = vunpack.c.l.b16 %v8173
        %v8929 = vunpack.c.l.b16 %v8174
        %v8930 = vpack.c.b16 %v8899, %v8898
        %v8931 = vpack.c.b16 %v8901, %v8900
        %v8932 = vpack.c.b16 %v8903, %v8902
        %v8933 = vpack.c.b16 %v8905, %v8904
        %v8934 = vpack.c.b16 %v8907, %v8906
        %v8935 = vpack.c.b16 %v8909, %v8908
        %v8936 = vpack.c.b16 %v8911, %v8910
        %v8937 = vpack.c.b16 %v8913, %v8912
        %v8938 = vpack.c.b16 %v8915, %v8914
        %v8939 = vpack.c.b16 %v8917, %v8916
        %v8940 = vpack.c.b16 %v8919, %v8918
        %v8941 = vpack.c.b16 %v8921, %v8920
        %v8942 = vpack.c.b16 %v8923, %v8922
        %v8943 = vpack.c.b16 %v8925, %v8924
        %v8944 = vpack.c.b16 %v8927, %v8926
        %v8945 = vpack.c.b16 %v8929, %v8928
        %v8978 = vunpack.c.l.b16 %v8850
        %v8979 = vunpack.c.l.b16 %v8851
        %v8980 = vunpack.c.l.b16 %v8852
        %v8981 = vunpack.c.l.b16 %v8853
        %v8982 = vunpack.c.l.b16 %v8854
        %v8983 = vunpack.c.l.b16 %v8855
        %v8984 = vunpack.c.l.b16 %v8856
        %v8985 = vunpack.c.l.b16 %v8857
        %v8986 = vunpack.c.l.b16 %v8858
        %v8987 = vunpack.c.l.b16 %v8859
        %v8988 = vunpack.c.l.b16 %v8860
        %v8989 = vunpack.c.l.b16 %v8861
        %v8990 = vunpack.c.l.b16 %v8862
        %v8991 = vunpack.c.l.b16 %v8863
        %v8992 = vunpack.c.l.b16 %v8864
        %v8993 = vunpack.c.l.b16 %v8865
        %v8994 = vpack.c.b16 %v8979, %v8978
        %v8995 = vpack.c.b16 %v8981, %v8980
        %v8996 = vpack.c.b16 %v8983, %v8982
        %v8997 = vpack.c.b16 %v8985, %v8984
        %v8998 = vpack.c.b16 %v8987, %v8986
        %v8999 = vpack.c.b16 %v8989, %v8988
        %v9000 = vpack.c.b16 %v8991, %v8990
        %v9001 = vpack.c.b16 %v8993, %v8992
        %9010 = vmatprep.subr.bf16.mxu0 0
        %9011 = vmatpush1.bf16.msra.mxu0 %v9001
        %9012 = vmatprep.subr.bf16.mxu0 0
        %9013 = vmatpush1.bf16.msra.mxu0 %v9000
        %9014 = vmatprep.subr.bf16.mxu0 0
        %9015 = vmatpush1.bf16.msra.mxu0 %v8999
        %9016 = vmatprep.subr.bf16.mxu0 0
        %9017 = vmatpush1.bf16.msra.mxu0 %v8998
        %9018 = vmatprep.subr.bf16.mxu0 0
        %9019 = vmatpush1.bf16.msra.mxu0 %v8997
        %9020 = vmatprep.subr.bf16.mxu0 0
        %9021 = vmatpush1.bf16.msra.mxu0 %v8996
        %9022 = vmatprep.subr.bf16.mxu0 0
        %9023 = vmatpush1.bf16.msra.mxu0 %v8995
        %9024 = vmatprep.subr.bf16.mxu0 0
        %9025 = vmatpush1.bf16.msra.mxu0 %v8994
        %9026 = vmatprep.subr.bf16.mxu0 0
        %9027 = vmatpush2.bf16.msra.mxu0 0
        %9028 = vmatprep.subr.bf16.mxu0 0
        %9029 = vmatpush2.bf16.msra.mxu0 0
        %9030 = vmatprep.subr.bf16.mxu0 0
        %9031 = vmatpush2.bf16.msra.mxu0 0
        %9032 = vmatprep.subr.bf16.mxu0 0
        %9033 = vmatpush2.bf16.msra.mxu0 0
        %9034 = vmatprep.subr.bf16.mxu0 0
        %9035 = vmatpush2.bf16.msra.mxu0 0
        %9036 = vmatprep.subr.bf16.mxu0 0
        %9037 = vmatpush2.bf16.msra.mxu0 0
        %9038 = vmatprep.subr.bf16.mxu0 0
        %9039 = vmatpush2.bf16.msra.mxu0 0
        %9040 = vmatprep.subr.bf16.mxu0 0
        %9041 = vmatpush2.bf16.msra.mxu0 0
        %9042 = vmatprep.mubr.bf16.mxu0 0
        %9043 = vmatmul.mubr.bf16.gmra.mxu0 %v8930
        %v9044 = vpop.f32.mrf.mxu0
        %v9045 = vadd.f32 0.0, %v9044
        %v9046 = vpop.f32.mrf.mxu0
        %v9047 = vpop.f32.mrf.mxu0
        %v9048 = vadd.f32 0.0, %v9047
        %v9049 = vpop.f32.mrf.mxu0
        %9050 = vmatprep.mubr.bf16.mxu0 0
        %9051 = vmatmul.mubr.bf16.gmra.mxu0 %v8931
        %v9052 = vpop.f32.mrf.mxu0
        %v9053 = vadd.f32 0.0, %v9052
        %v9054 = vpop.f32.mrf.mxu0
        %v9055 = vpop.f32.mrf.mxu0
        %v9056 = vadd.f32 0.0, %v9055
        %v9057 = vpop.f32.mrf.mxu0
        %9058 = vmatprep.mubr.bf16.mxu0 0
        %9059 = vmatmul.mubr.bf16.gmra.mxu0 %v8932
        %v9060 = vpop.f32.mrf.mxu0
        %v9061 = vadd.f32 0.0, %v9060
        %v9062 = vpop.f32.mrf.mxu0
        %v9063 = vpop.f32.mrf.mxu0
        %v9064 = vadd.f32 0.0, %v9063
        %v9065 = vpop.f32.mrf.mxu0
        %9066 = vmatprep.mubr.bf16.mxu0 0
        %9067 = vmatmul.mubr.bf16.gmra.mxu0 %v8933
        %v9068 = vpop.f32.mrf.mxu0
        %v9069 = vadd.f32 0.0, %v9068
        %v9070 = vpop.f32.mrf.mxu0
        %v9071 = vpop.f32.mrf.mxu0
        %v9072 = vadd.f32 0.0, %v9071
        %v9073 = vpop.f32.mrf.mxu0
        %9074 = vmatprep.mubr.bf16.mxu0 0
        %9075 = vmatmul.mubr.bf16.gmra.mxu0 %v8934
        %v9076 = vpop.f32.mrf.mxu0
        %v9077 = vadd.f32 0.0, %v9076
        %v9078 = vpop.f32.mrf.mxu0
        %v9079 = vpop.f32.mrf.mxu0
        %v9080 = vadd.f32 0.0, %v9079
        %v9081 = vpop.f32.mrf.mxu0
        %9082 = vmatprep.mubr.bf16.mxu0 0
        %9083 = vmatmul.mubr.bf16.gmra.mxu0 %v8935
        %v9084 = vpop.f32.mrf.mxu0
        %v9085 = vadd.f32 0.0, %v9084
        %v9086 = vpop.f32.mrf.mxu0
        %v9087 = vpop.f32.mrf.mxu0
        %v9088 = vadd.f32 0.0, %v9087
        %v9089 = vpop.f32.mrf.mxu0
        %9090 = vmatprep.mubr.bf16.mxu0 0
        %9091 = vmatmul.mubr.bf16.gmra.mxu0 %v8936
        %v9092 = vpop.f32.mrf.mxu0
        %v9093 = vadd.f32 0.0, %v9092
        %v9094 = vpop.f32.mrf.mxu0
        %v9095 = vpop.f32.mrf.mxu0
        %v9096 = vadd.f32 0.0, %v9095
        %v9097 = vpop.f32.mrf.mxu0
        %9098 = vmatprep.mubr.bf16.mxu0 0
        %9099 = vmatmul.mubr.bf16.gmra.mxu0 %v8937
        %v9100 = vpop.f32.mrf.mxu0
        %v9101 = vadd.f32 0.0, %v9100
        %v9102 = vpop.f32.mrf.mxu0
        %v9103 = vpop.f32.mrf.mxu0
        %v9104 = vadd.f32 0.0, %v9103
        %v9105 = vpop.f32.mrf.mxu0
        %9106 = vmatprep.mubr.bf16.mxu0 0
        %9107 = vmatmul.mubr.bf16.gmra.mxu0 %v8938
        %v9108 = vpop.f32.mrf.mxu0
        %v9109 = vadd.f32 0.0, %v9108
        %v9110 = vpop.f32.mrf.mxu0
        %v9111 = vpop.f32.mrf.mxu0
        %v9112 = vadd.f32 0.0, %v9111
        %v9113 = vpop.f32.mrf.mxu0
        %9114 = vmatprep.mubr.bf16.mxu0 0
        %9115 = vmatmul.mubr.bf16.gmra.mxu0 %v8939
        %v9116 = vpop.f32.mrf.mxu0
        %v9117 = vadd.f32 0.0, %v9116
        %v9118 = vpop.f32.mrf.mxu0
        %v9119 = vpop.f32.mrf.mxu0
        %v9120 = vadd.f32 0.0, %v9119
        %v9121 = vpop.f32.mrf.mxu0
        %9122 = vmatprep.mubr.bf16.mxu0 0
        %9123 = vmatmul.mubr.bf16.gmra.mxu0 %v8940
        %v9124 = vpop.f32.mrf.mxu0
        %v9125 = vadd.f32 0.0, %v9124
        %v9126 = vpop.f32.mrf.mxu0
        %v9127 = vpop.f32.mrf.mxu0
        %v9128 = vadd.f32 0.0, %v9127
        %v9129 = vpop.f32.mrf.mxu0
        %9130 = vmatprep.mubr.bf16.mxu0 0
        %9131 = vmatmul.mubr.bf16.gmra.mxu0 %v8941
        %v9132 = vpop.f32.mrf.mxu0
        %v9133 = vadd.f32 0.0, %v9132
        %v9134 = vpop.f32.mrf.mxu0
        %v9135 = vpop.f32.mrf.mxu0
        %v9136 = vadd.f32 0.0, %v9135
        %v9137 = vpop.f32.mrf.mxu0
        %9138 = vmatprep.mubr.bf16.mxu0 0
        %9139 = vmatmul.mubr.bf16.gmra.mxu0 %v8942
        %v9140 = vpop.f32.mrf.mxu0
        %v9141 = vadd.f32 0.0, %v9140
        %v9142 = vpop.f32.mrf.mxu0
        %v9143 = vpop.f32.mrf.mxu0
        %v9144 = vadd.f32 0.0, %v9143
        %v9145 = vpop.f32.mrf.mxu0
        %9146 = vmatprep.mubr.bf16.mxu0 0
        %9147 = vmatmul.mubr.bf16.gmra.mxu0 %v8943
        %v9148 = vpop.f32.mrf.mxu0
        %v9149 = vadd.f32 0.0, %v9148
        %v9150 = vpop.f32.mrf.mxu0
        %v9151 = vpop.f32.mrf.mxu0
        %v9152 = vadd.f32 0.0, %v9151
        %v9153 = vpop.f32.mrf.mxu0
        %9154 = vmatprep.mubr.bf16.mxu0 0
        %9155 = vmatmul.mubr.bf16.gmra.mxu0 %v8944
        %v9156 = vpop.f32.mrf.mxu0
        %v9157 = vadd.f32 0.0, %v9156
        %v9158 = vpop.f32.mrf.mxu0
        %v9159 = vpop.f32.mrf.mxu0
        %v9160 = vadd.f32 0.0, %v9159
        %v9161 = vpop.f32.mrf.mxu0
        %9162 = vmatprep.mubr.bf16.mxu0 0
        %9163 = vmatmul.mubr.bf16.gmra.mxu0 %v8945
        %v9164 = vpop.f32.mrf.mxu0
        %v9165 = vadd.f32 0.0, %v9164
        %v9166 = vpop.f32.mrf.mxu0
        %v9167 = vpop.f32.mrf.mxu0
        %v9168 = vadd.f32 0.0, %v9167
        %v9169 = vpop.f32.mrf.mxu0
        %9170 = vdwg.mxu0
        %v9171 = vadd.f32 %v8817, %v9045
        %v9172 = vadd.f32 %v8818, %v9048
        %v9173 = vadd.f32 %v8819, %v9053
        %v9174 = vadd.f32 %v8820, %v9056
        %v9175 = vadd.f32 %v8821, %v9061
        %v9176 = vadd.f32 %v8822, %v9064
        %v9177 = vadd.f32 %v8823, %v9069
        %v9178 = vadd.f32 %v8824, %v9072
        %v9179 = vadd.f32 %v8825, %v9077
        %v9180 = vadd.f32 %v8826, %v9080
        %v9181 = vadd.f32 %v8827, %v9085
        %v9182 = vadd.f32 %v8828, %v9088
        %v9183 = vadd.f32 %v8829, %v9093
        %v9184 = vadd.f32 %v8830, %v9096
        %v9185 = vadd.f32 %v8831, %v9101
        %v9186 = vadd.f32 %v8832, %v9104
        %v9187 = vadd.f32 %v8833, %v9109
        %v9188 = vadd.f32 %v8834, %v9112
        %v9189 = vadd.f32 %v8835, %v9117
        %v9190 = vadd.f32 %v8836, %v9120
        %v9191 = vadd.f32 %v8837, %v9125
        %v9192 = vadd.f32 %v8838, %v9128
        %v9193 = vadd.f32 %v8839, %v9133
        %v9194 = vadd.f32 %v8840, %v9136
        %v9195 = vadd.f32 %v8841, %v9141
        %v9196 = vadd.f32 %v8842, %v9144
        %v9197 = vadd.f32 %v8843, %v9149
        %v9198 = vadd.f32 %v8844, %v9152
        %v9199 = vadd.f32 %v8845, %v9157
        %v9200 = vadd.f32 %v8846, %v9160
        %v9201 = vadd.f32 %v8847, %v9165
        %v9202 = vadd.f32 %v8848, %v9168
        %v9203 = vld [vmem:[%s410 + $0x4] sm:$0xf]
        %v9204 = vld [vmem:[%s410 + $0x8] sm:$0xf]
        %v9205 = vld [vmem:[%s410 + $0xc] sm:$0x1]
        %v9206 = vld [vmem:[%s410 + $0x14] sm:$0xf]
        %v9207 = vld [vmem:[%s410 + $0x18] sm:$0xf]
        %v9208 = vld [vmem:[%s410 + $0x1c] sm:$0x1]
        %v9209 = vld [vmem:[%s410 + $0x24] sm:$0xf]
        %v9210 = vld [vmem:[%s410 + $0x28] sm:$0xf]
        %v9211 = vld [vmem:[%s410 + $0x2c] sm:$0x1]
        %v9212 = vld [vmem:[%s410 + $0x34] sm:$0xf]
        %v9213 = vld [vmem:[%s410 + $0x38] sm:$0xf]
        %v9214 = vld [vmem:[%s410 + $0x3c] sm:$0x1]
        %v9215 = vld [vmem:[%s410 + $0x44] sm:$0xf]
        %v9216 = vld [vmem:[%s410 + $0x48] sm:$0xf]
        %v9217 = vld [vmem:[%s410 + $0x4c] sm:$0x1]
        %v9218 = vld [vmem:[%s410 + $0x54] sm:$0xf]
        %v9219 = vld [vmem:[%s410 + $0x58] sm:$0xf]
        %v9220 = vld [vmem:[%s410 + $0x5c] sm:$0x1]
        %v9221 = vld [vmem:[%s410 + $0x64] sm:$0xf]
        %v9222 = vld [vmem:[%s410 + $0x68] sm:$0xf]
        %v9223 = vld [vmem:[%s410 + $0x6c] sm:$0x1]
        %v9224 = vld [vmem:[%s410 + $0x74] sm:$0xf]
        %v9225 = vld [vmem:[%s410 + $0x78] sm:$0xf]
        %v9226 = vld [vmem:[%s410 + $0x7c] sm:$0x1]
        %v9227 = vld [vmem:[%s410 + $0x84] sm:$0xf]
        %v9228 = vld [vmem:[%s410 + $0x88] sm:$0xf]
        %v9229 = vld [vmem:[%s410 + $0x8c] sm:$0x1]
        %v9230 = vld [vmem:[%s410 + $0x94] sm:$0xf]
        %v9231 = vld [vmem:[%s410 + $0x98] sm:$0xf]
        %v9232 = vld [vmem:[%s410 + $0x9c] sm:$0x1]
        %v9233 = vld [vmem:[%s410 + $0xa4] sm:$0xf]
        %v9234 = vld [vmem:[%s410 + $0xa8] sm:$0xf]
        %v9235 = vld [vmem:[%s410 + $0xac] sm:$0x1]
        %v9236 = vld [vmem:[%s410 + $0xb4] sm:$0xf]
        %v9237 = vld [vmem:[%s410 + $0xb8] sm:$0xf]
        %v9238 = vld [vmem:[%s410 + $0xbc] sm:$0x1]
        %v9239 = vld [vmem:[%s410 + $0xc4] sm:$0xf]
        %v9240 = vld [vmem:[%s410 + $0xc8] sm:$0xf]
        %v9241 = vld [vmem:[%s410 + $0xcc] sm:$0x1]
        %v9242 = vld [vmem:[%s410 + $0xd4] sm:$0xf]
        %v9243 = vld [vmem:[%s410 + $0xd8] sm:$0xf]
        %v9244 = vld [vmem:[%s410 + $0xdc] sm:$0x1]
        %v9245 = vld [vmem:[%s410 + $0xe4] sm:$0xf]
        %v9246 = vld [vmem:[%s410 + $0xe8] sm:$0xf]
        %v9247 = vld [vmem:[%s410 + $0xec] sm:$0x1]
        %v9248 = vld [vmem:[%s410 + $0xf4] sm:$0xf]
        %v9249 = vld [vmem:[%s410 + $0xf8] sm:$0xf]
        %v9250 = vld [vmem:[%s410 + $0xfc] sm:$0x1]
        %v9252 = vshrl.u32 %v9203, 16
        %v9254 = vrot.slane %v9252, 4
        %v9255 = vshll.u32 %v9203, 16
        %v9257 = vrot.slane %v9255, 5
        %v9258 = vor.u32 %v9254, %v9257
        %v9259 = vrot.slane %v9258, 4
        %v9261 = vshll.u32 %v9204, 16
        %v9263 = vrot.slane %v9261, 5
        %v9264 = vsel %vm1764, %v9259, %v9263
        %v9265 = vshrl.u32 %v9204, 16
        %v9267 = vrot.slane %v9265, 4
        %v9268 = vor.u32 %v9267, %v9263
        %v9269 = vrot.slane %v9268, 4
        %v9271 = vshll.u32 %v9205, 16
        %v9273 = vrot.slane %v9271, 5
        %v9274 = vsel %vm1764, %v9269, %v9273
        %v9276 = vshrl.u32 %v9206, 16
        %v9278 = vrot.slane %v9276, 4
        %v9279 = vshll.u32 %v9206, 16
        %v9281 = vrot.slane %v9279, 5
        %v9282 = vor.u32 %v9278, %v9281
        %v9283 = vrot.slane %v9282, 4
        %v9285 = vshll.u32 %v9207, 16
        %v9287 = vrot.slane %v9285, 5
        %v9288 = vsel %vm1764, %v9283, %v9287
        %v9289 = vshrl.u32 %v9207, 16
        %v9291 = vrot.slane %v9289, 4
        %v9292 = vor.u32 %v9291, %v9287
        %v9293 = vrot.slane %v9292, 4
        %v9295 = vshll.u32 %v9208, 16
        %v9297 = vrot.slane %v9295, 5
        %v9298 = vsel %vm1764, %v9293, %v9297
        %v9300 = vshrl.u32 %v9209, 16
        %v9302 = vrot.slane %v9300, 4
        %v9303 = vshll.u32 %v9209, 16
        %v9305 = vrot.slane %v9303, 5
        %v9306 = vor.u32 %v9302, %v9305
        %v9307 = vrot.slane %v9306, 4
        %v9309 = vshll.u32 %v9210, 16
        %v9311 = vrot.slane %v9309, 5
        %v9312 = vsel %vm1764, %v9307, %v9311
        %v9313 = vshrl.u32 %v9210, 16
        %v9315 = vrot.slane %v9313, 4
        %v9316 = vor.u32 %v9315, %v9311
        %v9317 = vrot.slane %v9316, 4
        %v9319 = vshll.u32 %v9211, 16
        %v9321 = vrot.slane %v9319, 5
        %v9322 = vsel %vm1764, %v9317, %v9321
        %v9324 = vshrl.u32 %v9212, 16
        %v9326 = vrot.slane %v9324, 4
        %v9327 = vshll.u32 %v9212, 16
        %v9329 = vrot.slane %v9327, 5
        %v9330 = vor.u32 %v9326, %v9329
        %v9331 = vrot.slane %v9330, 4
        %v9333 = vshll.u32 %v9213, 16
        %v9335 = vrot.slane %v9333, 5
        %v9336 = vsel %vm1764, %v9331, %v9335
        %v9337 = vshrl.u32 %v9213, 16
        %v9339 = vrot.slane %v9337, 4
        %v9340 = vor.u32 %v9339, %v9335
        %v9341 = vrot.slane %v9340, 4
        %v9343 = vshll.u32 %v9214, 16
        %v9345 = vrot.slane %v9343, 5
        %v9346 = vsel %vm1764, %v9341, %v9345
        %v9348 = vshrl.u32 %v9215, 16
        %v9350 = vrot.slane %v9348, 4
        %v9351 = vshll.u32 %v9215, 16
        %v9353 = vrot.slane %v9351, 5
        %v9354 = vor.u32 %v9350, %v9353
        %v9355 = vrot.slane %v9354, 4
        %v9357 = vshll.u32 %v9216, 16
        %v9359 = vrot.slane %v9357, 5
        %v9360 = vsel %vm1764, %v9355, %v9359
        %v9361 = vshrl.u32 %v9216, 16
        %v9363 = vrot.slane %v9361, 4
        %v9364 = vor.u32 %v9363, %v9359
        %v9365 = vrot.slane %v9364, 4
        %v9367 = vshll.u32 %v9217, 16
        %v9369 = vrot.slane %v9367, 5
        %v9370 = vsel %vm1764, %v9365, %v9369
        %v9372 = vshrl.u32 %v9218, 16
        %v9374 = vrot.slane %v9372, 4
        %v9375 = vshll.u32 %v9218, 16
        %v9377 = vrot.slane %v9375, 5
        %v9378 = vor.u32 %v9374, %v9377
        %v9379 = vrot.slane %v9378, 4
        %v9381 = vshll.u32 %v9219, 16
        %v9383 = vrot.slane %v9381, 5
        %v9384 = vsel %vm1764, %v9379, %v9383
        %v9385 = vshrl.u32 %v9219, 16
        %v9387 = vrot.slane %v9385, 4
        %v9388 = vor.u32 %v9387, %v9383
        %v9389 = vrot.slane %v9388, 4
        %v9391 = vshll.u32 %v9220, 16
        %v9393 = vrot.slane %v9391, 5
        %v9394 = vsel %vm1764, %v9389, %v9393
        %v9396 = vshrl.u32 %v9221, 16
        %v9398 = vrot.slane %v9396, 4
        %v9399 = vshll.u32 %v9221, 16
        %v9401 = vrot.slane %v9399, 5
        %v9402 = vor.u32 %v9398, %v9401
        %v9403 = vrot.slane %v9402, 4
        %v9405 = vshll.u32 %v9222, 16
        %v9407 = vrot.slane %v9405, 5
        %v9408 = vsel %vm1764, %v9403, %v9407
        %v9409 = vshrl.u32 %v9222, 16
        %v9411 = vrot.slane %v9409, 4
        %v9412 = vor.u32 %v9411, %v9407
        %v9413 = vrot.slane %v9412, 4
        %v9415 = vshll.u32 %v9223, 16
        %v9417 = vrot.slane %v9415, 5
        %v9418 = vsel %vm1764, %v9413, %v9417
        %v9420 = vshrl.u32 %v9224, 16
        %v9422 = vrot.slane %v9420, 4
        %v9423 = vshll.u32 %v9224, 16
        %v9425 = vrot.slane %v9423, 5
        %v9426 = vor.u32 %v9422, %v9425
        %v9427 = vrot.slane %v9426, 4
        %v9429 = vshll.u32 %v9225, 16
        %v9431 = vrot.slane %v9429, 5
        %v9432 = vsel %vm1764, %v9427, %v9431
        %v9433 = vshrl.u32 %v9225, 16
        %v9435 = vrot.slane %v9433, 4
        %v9436 = vor.u32 %v9435, %v9431
        %v9437 = vrot.slane %v9436, 4
        %v9439 = vshll.u32 %v9226, 16
        %v9441 = vrot.slane %v9439, 5
        %v9442 = vsel %vm1764, %v9437, %v9441
        %v9444 = vshrl.u32 %v9227, 16
        %v9446 = vrot.slane %v9444, 4
        %v9447 = vshll.u32 %v9227, 16
        %v9449 = vrot.slane %v9447, 5
        %v9450 = vor.u32 %v9446, %v9449
        %v9451 = vrot.slane %v9450, 4
        %v9453 = vshll.u32 %v9228, 16
        %v9455 = vrot.slane %v9453, 5
        %v9456 = vsel %vm1764, %v9451, %v9455
        %v9457 = vshrl.u32 %v9228, 16
        %v9459 = vrot.slane %v9457, 4
        %v9460 = vor.u32 %v9459, %v9455
        %v9461 = vrot.slane %v9460, 4
        %v9463 = vshll.u32 %v9229, 16
        %v9465 = vrot.slane %v9463, 5
        %v9466 = vsel %vm1764, %v9461, %v9465
        %v9468 = vshrl.u32 %v9230, 16
        %v9470 = vrot.slane %v9468, 4
        %v9471 = vshll.u32 %v9230, 16
        %v9473 = vrot.slane %v9471, 5
        %v9474 = vor.u32 %v9470, %v9473
        %v9475 = vrot.slane %v9474, 4
        %v9477 = vshll.u32 %v9231, 16
        %v9479 = vrot.slane %v9477, 5
        %v9480 = vsel %vm1764, %v9475, %v9479
        %v9481 = vshrl.u32 %v9231, 16
        %v9483 = vrot.slane %v9481, 4
        %v9484 = vor.u32 %v9483, %v9479
        %v9485 = vrot.slane %v9484, 4
        %v9487 = vshll.u32 %v9232, 16
        %v9489 = vrot.slane %v9487, 5
        %v9490 = vsel %vm1764, %v9485, %v9489
        %v9492 = vshrl.u32 %v9233, 16
        %v9494 = vrot.slane %v9492, 4
        %v9495 = vshll.u32 %v9233, 16
        %v9497 = vrot.slane %v9495, 5
        %v9498 = vor.u32 %v9494, %v9497
        %v9499 = vrot.slane %v9498, 4
        %v9501 = vshll.u32 %v9234, 16
        %v9503 = vrot.slane %v9501, 5
        %v9504 = vsel %vm1764, %v9499, %v9503
        %v9505 = vshrl.u32 %v9234, 16
        %v9507 = vrot.slane %v9505, 4
        %v9508 = vor.u32 %v9507, %v9503
        %v9509 = vrot.slane %v9508, 4
        %v9511 = vshll.u32 %v9235, 16
        %v9513 = vrot.slane %v9511, 5
        %v9514 = vsel %vm1764, %v9509, %v9513
        %v9516 = vshrl.u32 %v9236, 16
        %v9518 = vrot.slane %v9516, 4
        %v9519 = vshll.u32 %v9236, 16
        %v9521 = vrot.slane %v9519, 5
        %v9522 = vor.u32 %v9518, %v9521
        %v9523 = vrot.slane %v9522, 4
        %v9525 = vshll.u32 %v9237, 16
        %v9527 = vrot.slane %v9525, 5
        %v9528 = vsel %vm1764, %v9523, %v9527
        %v9529 = vshrl.u32 %v9237, 16
        %v9531 = vrot.slane %v9529, 4
        %v9532 = vor.u32 %v9531, %v9527
        %v9533 = vrot.slane %v9532, 4
        %v9535 = vshll.u32 %v9238, 16
        %v9537 = vrot.slane %v9535, 5
        %v9538 = vsel %vm1764, %v9533, %v9537
        %v9540 = vshrl.u32 %v9239, 16
        %v9542 = vrot.slane %v9540, 4
        %v9543 = vshll.u32 %v9239, 16
        %v9545 = vrot.slane %v9543, 5
        %v9546 = vor.u32 %v9542, %v9545
        %v9547 = vrot.slane %v9546, 4
        %v9549 = vshll.u32 %v9240, 16
        %v9551 = vrot.slane %v9549, 5
        %v9552 = vsel %vm1764, %v9547, %v9551
        %v9553 = vshrl.u32 %v9240, 16
        %v9555 = vrot.slane %v9553, 4
        %v9556 = vor.u32 %v9555, %v9551
        %v9557 = vrot.slane %v9556, 4
        %v9559 = vshll.u32 %v9241, 16
        %v9561 = vrot.slane %v9559, 5
        %v9562 = vsel %vm1764, %v9557, %v9561
        %v9564 = vshrl.u32 %v9242, 16
        %v9566 = vrot.slane %v9564, 4
        %v9567 = vshll.u32 %v9242, 16
        %v9569 = vrot.slane %v9567, 5
        %v9570 = vor.u32 %v9566, %v9569
        %v9571 = vrot.slane %v9570, 4
        %v9573 = vshll.u32 %v9243, 16
        %v9575 = vrot.slane %v9573, 5
        %v9576 = vsel %vm1764, %v9571, %v9575
        %v9577 = vshrl.u32 %v9243, 16
        %v9579 = vrot.slane %v9577, 4
        %v9580 = vor.u32 %v9579, %v9575
        %v9581 = vrot.slane %v9580, 4
        %v9583 = vshll.u32 %v9244, 16
        %v9585 = vrot.slane %v9583, 5
        %v9586 = vsel %vm1764, %v9581, %v9585
        %v9588 = vshrl.u32 %v9245, 16
        %v9590 = vrot.slane %v9588, 4
        %v9591 = vshll.u32 %v9245, 16
        %v9593 = vrot.slane %v9591, 5
        %v9594 = vor.u32 %v9590, %v9593
        %v9595 = vrot.slane %v9594, 4
        %v9597 = vshll.u32 %v9246, 16
        %v9599 = vrot.slane %v9597, 5
        %v9600 = vsel %vm1764, %v9595, %v9599
        %v9601 = vshrl.u32 %v9246, 16
        %v9603 = vrot.slane %v9601, 4
        %v9604 = vor.u32 %v9603, %v9599
        %v9605 = vrot.slane %v9604, 4
        %v9607 = vshll.u32 %v9247, 16
        %v9609 = vrot.slane %v9607, 5
        %v9610 = vsel %vm1764, %v9605, %v9609
        %v9612 = vshrl.u32 %v9248, 16
        %v9614 = vrot.slane %v9612, 4
        %v9615 = vshll.u32 %v9248, 16
        %v9617 = vrot.slane %v9615, 5
        %v9618 = vor.u32 %v9614, %v9617
        %v9619 = vrot.slane %v9618, 4
        %v9621 = vshll.u32 %v9249, 16
        %v9623 = vrot.slane %v9621, 5
        %v9624 = vsel %vm1764, %v9619, %v9623
        %v9625 = vshrl.u32 %v9249, 16
        %v9627 = vrot.slane %v9625, 4
        %v9628 = vor.u32 %v9627, %v9623
        %v9629 = vrot.slane %v9628, 4
        %v9631 = vshll.u32 %v9250, 16
        %v9633 = vrot.slane %v9631, 5
        %v9634 = vsel %vm1764, %v9629, %v9633
        %s9635 = scalar_lea.vmem [#allocation9], 320
        %v9636 = vld [vmem:[%s9635] sm:$0xf]
        %v9637 = vld [vmem:[%s9635 + $0x4] sm:$0xf]
        %v9638 = vld [vmem:[%s9635 + $0x8] sm:$0xf]
        %v9639 = vld [vmem:[%s9635 + $0xc] sm:$0xf]
        %v9640 = vld [vmem:[%s9635 + $0x10] sm:$0xf]
        %v9641 = vld [vmem:[%s9635 + $0x14] sm:$0xf]
        %v9642 = vld [vmem:[%s9635 + $0x18] sm:$0xf]
        %v9643 = vld [vmem:[%s9635 + $0x1c] sm:$0xf]
        %v9644 = vld [vmem:[%s9635 + $0x20] sm:$0xf]
        %v9645 = vld [vmem:[%s9635 + $0x24] sm:$0xf]
        %v9646 = vld [vmem:[%s9635 + $0x28] sm:$0xf]
        %v9647 = vld [vmem:[%s9635 + $0x2c] sm:$0xf]
        %v9648 = vld [vmem:[%s9635 + $0x30] sm:$0xf]
        %v9649 = vld [vmem:[%s9635 + $0x34] sm:$0xf]
        %v9650 = vld [vmem:[%s9635 + $0x38] sm:$0xf]
        %v9651 = vld [vmem:[%s9635 + $0x3c] sm:$0xf]
        %v9652 = vunpack.c.l.b16 %v9264
        %v9653 = vunpack.c.l.b16 %v9274
        %v9654 = vunpack.c.l.b16 %v9288
        %v9655 = vunpack.c.l.b16 %v9298
        %v9656 = vunpack.c.l.b16 %v9312
        %v9657 = vunpack.c.l.b16 %v9322
        %v9658 = vunpack.c.l.b16 %v9336
        %v9659 = vunpack.c.l.b16 %v9346
        %v9660 = vunpack.c.l.b16 %v9360
        %v9661 = vunpack.c.l.b16 %v9370
        %v9662 = vunpack.c.l.b16 %v9384
        %v9663 = vunpack.c.l.b16 %v9394
        %v9664 = vunpack.c.l.b16 %v9408
        %v9665 = vunpack.c.l.b16 %v9418
        %v9666 = vunpack.c.l.b16 %v9432
        %v9667 = vunpack.c.l.b16 %v9442
        %v9668 = vunpack.c.l.b16 %v9456
        %v9669 = vunpack.c.l.b16 %v9466
        %v9670 = vunpack.c.l.b16 %v9480
        %v9671 = vunpack.c.l.b16 %v9490
        %v9672 = vunpack.c.l.b16 %v9504
        %v9673 = vunpack.c.l.b16 %v9514
        %v9674 = vunpack.c.l.b16 %v9528
        %v9675 = vunpack.c.l.b16 %v9538
        %v9676 = vunpack.c.l.b16 %v9552
        %v9677 = vunpack.c.l.b16 %v9562
        %v9678 = vunpack.c.l.b16 %v9576
        %v9679 = vunpack.c.l.b16 %v9586
        %v9680 = vunpack.c.l.b16 %v9600
        %v9681 = vunpack.c.l.b16 %v9610
        %v9682 = vunpack.c.l.b16 %v9624
        %v9683 = vunpack.c.l.b16 %v9634
        %v9684 = vpack.c.b16 %v9653, %v9652
        %v9685 = vpack.c.b16 %v9655, %v9654
        %v9686 = vpack.c.b16 %v9657, %v9656
        %v9687 = vpack.c.b16 %v9659, %v9658
        %v9688 = vpack.c.b16 %v9661, %v9660
        %v9689 = vpack.c.b16 %v9663, %v9662
        %v9690 = vpack.c.b16 %v9665, %v9664
        %v9691 = vpack.c.b16 %v9667, %v9666
        %v9692 = vpack.c.b16 %v9669, %v9668
        %v9693 = vpack.c.b16 %v9671, %v9670
        %v9694 = vpack.c.b16 %v9673, %v9672
        %v9695 = vpack.c.b16 %v9675, %v9674
        %v9696 = vpack.c.b16 %v9677, %v9676
        %v9697 = vpack.c.b16 %v9679, %v9678
        %v9698 = vpack.c.b16 %v9681, %v9680
        %v9699 = vpack.c.b16 %v9683, %v9682
        %v9732 = vunpack.c.l.b16 %v9636
        %v9733 = vunpack.c.l.b16 %v9637
        %v9734 = vunpack.c.l.b16 %v9638
        %v9735 = vunpack.c.l.b16 %v9639
        %v9736 = vunpack.c.l.b16 %v9640
        %v9737 = vunpack.c.l.b16 %v9641
        %v9738 = vunpack.c.l.b16 %v9642
        %v9739 = vunpack.c.l.b16 %v9643
        %v9740 = vunpack.c.l.b16 %v9644
        %v9741 = vunpack.c.l.b16 %v9645
        %v9742 = vunpack.c.l.b16 %v9646
        %v9743 = vunpack.c.l.b16 %v9647
        %v9744 = vunpack.c.l.b16 %v9648
        %v9745 = vunpack.c.l.b16 %v9649
        %v9746 = vunpack.c.l.b16 %v9650
        %v9747 = vunpack.c.l.b16 %v9651
        %v9748 = vpack.c.b16 %v9733, %v9732
        %v9749 = vpack.c.b16 %v9735, %v9734
        %v9750 = vpack.c.b16 %v9737, %v9736
        %v9751 = vpack.c.b16 %v9739, %v9738
        %v9752 = vpack.c.b16 %v9741, %v9740
        %v9753 = vpack.c.b16 %v9743, %v9742
        %v9754 = vpack.c.b16 %v9745, %v9744
        %v9755 = vpack.c.b16 %v9747, %v9746
        %9764 = vmatprep.subr.bf16.mxu0 0
        %9765 = vmatpush1.bf16.msra.mxu0 %v9755
        %9766 = vmatprep.subr.bf16.mxu0 0
        %9767 = vmatpush1.bf16.msra.mxu0 %v9754
        %9768 = vmatprep.subr.bf16.mxu0 0
        %9769 = vmatpush1.bf16.msra.mxu0 %v9753
        %9770 = vmatprep.subr.bf16.mxu0 0
        %9771 = vmatpush1.bf16.msra.mxu0 %v9752
        %9772 = vmatprep.subr.bf16.mxu0 0
        %9773 = vmatpush1.bf16.msra.mxu0 %v9751
        %9774 = vmatprep.subr.bf16.mxu0 0
        %9775 = vmatpush1.bf16.msra.mxu0 %v9750
        %9776 = vmatprep.subr.bf16.mxu0 0
        %9777 = vmatpush1.bf16.msra.mxu0 %v9749
        %9778 = vmatprep.subr.bf16.mxu0 0
        %9779 = vmatpush1.bf16.msra.mxu0 %v9748
        %9780 = vmatprep.subr.bf16.mxu0 0
        %9781 = vmatpush2.bf16.msra.mxu0 0
        %9782 = vmatprep.subr.bf16.mxu0 0
        %9783 = vmatpush2.bf16.msra.mxu0 0
        %9784 = vmatprep.subr.bf16.mxu0 0
        %9785 = vmatpush2.bf16.msra.mxu0 0
        %9786 = vmatprep.subr.bf16.mxu0 0
        %9787 = vmatpush2.bf16.msra.mxu0 0
        %9788 = vmatprep.subr.bf16.mxu0 0
        %9789 = vmatpush2.bf16.msra.mxu0 0
        %9790 = vmatprep.subr.bf16.mxu0 0
        %9791 = vmatpush2.bf16.msra.mxu0 0
        %9792 = vmatprep.subr.bf16.mxu0 0
        %9793 = vmatpush2.bf16.msra.mxu0 0
        %9794 = vmatprep.subr.bf16.mxu0 0
        %9795 = vmatpush2.bf16.msra.mxu0 0
        %9796 = vmatprep.mubr.bf16.mxu0 0
        %9797 = vmatmul.mubr.bf16.gmra.mxu0 %v9684
        %v9798 = vpop.f32.mrf.mxu0
        %v9799 = vadd.f32 0.0, %v9798
        %v9800 = vpop.f32.mrf.mxu0
        %v9801 = vpop.f32.mrf.mxu0
        %v9802 = vadd.f32 0.0, %v9801
        %v9803 = vpop.f32.mrf.mxu0
        %9804 = vmatprep.mubr.bf16.mxu0 0
        %9805 = vmatmul.mubr.bf16.gmra.mxu0 %v9685
        %v9806 = vpop.f32.mrf.mxu0
        %v9807 = vadd.f32 0.0, %v9806
        %v9808 = vpop.f32.mrf.mxu0
        %v9809 = vpop.f32.mrf.mxu0
        %v9810 = vadd.f32 0.0, %v9809
        %v9811 = vpop.f32.mrf.mxu0
        %9812 = vmatprep.mubr.bf16.mxu0 0
        %9813 = vmatmul.mubr.bf16.gmra.mxu0 %v9686
        %v9814 = vpop.f32.mrf.mxu0
        %v9815 = vadd.f32 0.0, %v9814
        %v9816 = vpop.f32.mrf.mxu0
        %v9817 = vpop.f32.mrf.mxu0
        %v9818 = vadd.f32 0.0, %v9817
        %v9819 = vpop.f32.mrf.mxu0
        %9820 = vmatprep.mubr.bf16.mxu0 0
        %9821 = vmatmul.mubr.bf16.gmra.mxu0 %v9687
        %v9822 = vpop.f32.mrf.mxu0
        %v9823 = vadd.f32 0.0, %v9822
        %v9824 = vpop.f32.mrf.mxu0
        %v9825 = vpop.f32.mrf.mxu0
        %v9826 = vadd.f32 0.0, %v9825
        %v9827 = vpop.f32.mrf.mxu0
        %9828 = vmatprep.mubr.bf16.mxu0 0
        %9829 = vmatmul.mubr.bf16.gmra.mxu0 %v9688
        %v9830 = vpop.f32.mrf.mxu0
        %v9831 = vadd.f32 0.0, %v9830
        %v9832 = vpop.f32.mrf.mxu0
        %v9833 = vpop.f32.mrf.mxu0
        %v9834 = vadd.f32 0.0, %v9833
        %v9835 = vpop.f32.mrf.mxu0
        %9836 = vmatprep.mubr.bf16.mxu0 0
        %9837 = vmatmul.mubr.bf16.gmra.mxu0 %v9689
        %v9838 = vpop.f32.mrf.mxu0
        %v9839 = vadd.f32 0.0, %v9838
        %v9840 = vpop.f32.mrf.mxu0
        %v9841 = vpop.f32.mrf.mxu0
        %v9842 = vadd.f32 0.0, %v9841
        %v9843 = vpop.f32.mrf.mxu0
        %9844 = vmatprep.mubr.bf16.mxu0 0
        %9845 = vmatmul.mubr.bf16.gmra.mxu0 %v9690
        %v9846 = vpop.f32.mrf.mxu0
        %v9847 = vadd.f32 0.0, %v9846
        %v9848 = vpop.f32.mrf.mxu0
        %v9849 = vpop.f32.mrf.mxu0
        %v9850 = vadd.f32 0.0, %v9849
        %v9851 = vpop.f32.mrf.mxu0
        %9852 = vmatprep.mubr.bf16.mxu0 0
        %9853 = vmatmul.mubr.bf16.gmra.mxu0 %v9691
        %v9854 = vpop.f32.mrf.mxu0
        %v9855 = vadd.f32 0.0, %v9854
        %v9856 = vpop.f32.mrf.mxu0
        %v9857 = vpop.f32.mrf.mxu0
        %v9858 = vadd.f32 0.0, %v9857
        %v9859 = vpop.f32.mrf.mxu0
        %9860 = vmatprep.mubr.bf16.mxu0 0
        %9861 = vmatmul.mubr.bf16.gmra.mxu0 %v9692
        %v9862 = vpop.f32.mrf.mxu0
        %v9863 = vadd.f32 0.0, %v9862
        %v9864 = vpop.f32.mrf.mxu0
        %v9865 = vpop.f32.mrf.mxu0
        %v9866 = vadd.f32 0.0, %v9865
        %v9867 = vpop.f32.mrf.mxu0
        %9868 = vmatprep.mubr.bf16.mxu0 0
        %9869 = vmatmul.mubr.bf16.gmra.mxu0 %v9693
        %v9870 = vpop.f32.mrf.mxu0
        %v9871 = vadd.f32 0.0, %v9870
        %v9872 = vpop.f32.mrf.mxu0
        %v9873 = vpop.f32.mrf.mxu0
        %v9874 = vadd.f32 0.0, %v9873
        %v9875 = vpop.f32.mrf.mxu0
        %9876 = vmatprep.mubr.bf16.mxu0 0
        %9877 = vmatmul.mubr.bf16.gmra.mxu0 %v9694
        %v9878 = vpop.f32.mrf.mxu0
        %v9879 = vadd.f32 0.0, %v9878
        %v9880 = vpop.f32.mrf.mxu0
        %v9881 = vpop.f32.mrf.mxu0
        %v9882 = vadd.f32 0.0, %v9881
        %v9883 = vpop.f32.mrf.mxu0
        %9884 = vmatprep.mubr.bf16.mxu0 0
        %9885 = vmatmul.mubr.bf16.gmra.mxu0 %v9695
        %v9886 = vpop.f32.mrf.mxu0
        %v9887 = vadd.f32 0.0, %v9886
        %v9888 = vpop.f32.mrf.mxu0
        %v9889 = vpop.f32.mrf.mxu0
        %v9890 = vadd.f32 0.0, %v9889
        %v9891 = vpop.f32.mrf.mxu0
        %9892 = vmatprep.mubr.bf16.mxu0 0
        %9893 = vmatmul.mubr.bf16.gmra.mxu0 %v9696
        %v9894 = vpop.f32.mrf.mxu0
        %v9895 = vadd.f32 0.0, %v9894
        %v9896 = vpop.f32.mrf.mxu0
        %v9897 = vpop.f32.mrf.mxu0
        %v9898 = vadd.f32 0.0, %v9897
        %v9899 = vpop.f32.mrf.mxu0
        %9900 = vmatprep.mubr.bf16.mxu0 0
        %9901 = vmatmul.mubr.bf16.gmra.mxu0 %v9697
        %v9902 = vpop.f32.mrf.mxu0
        %v9903 = vadd.f32 0.0, %v9902
        %v9904 = vpop.f32.mrf.mxu0
        %v9905 = vpop.f32.mrf.mxu0
        %v9906 = vadd.f32 0.0, %v9905
        %v9907 = vpop.f32.mrf.mxu0
        %9908 = vmatprep.mubr.bf16.mxu0 0
        %9909 = vmatmul.mubr.bf16.gmra.mxu0 %v9698
        %v9910 = vpop.f32.mrf.mxu0
        %v9911 = vadd.f32 0.0, %v9910
        %v9912 = vpop.f32.mrf.mxu0
        %v9913 = vpop.f32.mrf.mxu0
        %v9914 = vadd.f32 0.0, %v9913
        %v9915 = vpop.f32.mrf.mxu0
        %9916 = vmatprep.mubr.bf16.mxu0 0
        %9917 = vmatmul.mubr.bf16.gmra.mxu0 %v9699
        %v9918 = vpop.f32.mrf.mxu0
        %v9919 = vadd.f32 0.0, %v9918
        %v9920 = vpop.f32.mrf.mxu0
        %v9921 = vpop.f32.mrf.mxu0
        %v9922 = vadd.f32 0.0, %v9921
        %v9923 = vpop.f32.mrf.mxu0
        %9924 = vdwg.mxu0
        %v9925 = vadd.f32 %v9171, %v9799
        %v9926 = vadd.f32 %v9172, %v9802
        %v9927 = vadd.f32 %v9173, %v9807
        %v9928 = vadd.f32 %v9174, %v9810
        %v9929 = vadd.f32 %v9175, %v9815
        %v9930 = vadd.f32 %v9176, %v9818
        %v9931 = vadd.f32 %v9177, %v9823
        %v9932 = vadd.f32 %v9178, %v9826
        %v9933 = vadd.f32 %v9179, %v9831
        %v9934 = vadd.f32 %v9180, %v9834
        %v9935 = vadd.f32 %v9181, %v9839
        %v9936 = vadd.f32 %v9182, %v9842
        %v9937 = vadd.f32 %v9183, %v9847
        %v9938 = vadd.f32 %v9184, %v9850
        %v9939 = vadd.f32 %v9185, %v9855
        %v9940 = vadd.f32 %v9186, %v9858
        %v9941 = vadd.f32 %v9187, %v9863
        %v9942 = vadd.f32 %v9188, %v9866
        %v9943 = vadd.f32 %v9189, %v9871
        %v9944 = vadd.f32 %v9190, %v9874
        %v9945 = vadd.f32 %v9191, %v9879
        %v9946 = vadd.f32 %v9192, %v9882
        %v9947 = vadd.f32 %v9193, %v9887
        %v9948 = vadd.f32 %v9194, %v9890
        %v9949 = vadd.f32 %v9195, %v9895
        %v9950 = vadd.f32 %v9196, %v9898
        %v9951 = vadd.f32 %v9197, %v9903
        %v9952 = vadd.f32 %v9198, %v9906
        %v9953 = vadd.f32 %v9199, %v9911
        %v9954 = vadd.f32 %v9200, %v9914
        %v9955 = vadd.f32 %v9201, %v9919
        %v9956 = vadd.f32 %v9202, %v9922
        %s9957 = scalar_lea.vmem [#allocation3], 32
        %v9958 = vld [vmem:[%s9957] sm:$0x8]
        %v9959 = vld [vmem:[%s9957 + $0x4] sm:$0xf]
        %v9960 = vld [vmem:[%s9957 + $0x8] sm:$0xf]
        %v9961 = vld [vmem:[%s9957 + $0x10] sm:$0x8]
        %v9962 = vld [vmem:[%s9957 + $0x14] sm:$0xf]
        %v9963 = vld [vmem:[%s9957 + $0x18] sm:$0xf]
        %v9964 = vld [vmem:[%s9957 + $0x20] sm:$0x8]
        %v9965 = vld [vmem:[%s9957 + $0x24] sm:$0xf]
        %v9966 = vld [vmem:[%s9957 + $0x28] sm:$0xf]
        %v9967 = vld [vmem:[%s9957 + $0x30] sm:$0x8]
        %v9968 = vld [vmem:[%s9957 + $0x34] sm:$0xf]
        %v9969 = vld [vmem:[%s9957 + $0x38] sm:$0xf]
        %v9970 = vld [vmem:[%s9957 + $0x40] sm:$0x8]
        %v9971 = vld [vmem:[%s9957 + $0x44] sm:$0xf]
        %v9972 = vld [vmem:[%s9957 + $0x48] sm:$0xf]
        %v9973 = vld [vmem:[%s9957 + $0x50] sm:$0x8]
        %v9974 = vld [vmem:[%s9957 + $0x54] sm:$0xf]
        %v9975 = vld [vmem:[%s9957 + $0x58] sm:$0xf]
        %v9976 = vld [vmem:[%s9957 + $0x60] sm:$0x8]
        %v9977 = vld [vmem:[%s9957 + $0x64] sm:$0xf]
        %v9978 = vld [vmem:[%s9957 + $0x68] sm:$0xf]
        %v9979 = vld [vmem:[%s9957 + $0x70] sm:$0x8]
        %v9980 = vld [vmem:[%s9957 + $0x74] sm:$0xf]
        %v9981 = vld [vmem:[%s9957 + $0x78] sm:$0xf]
        %v9982 = vld [vmem:[%s9957 + $0x80] sm:$0x8]
        %v9983 = vld [vmem:[%s9957 + $0x84] sm:$0xf]
        %v9984 = vld [vmem:[%s9957 + $0x88] sm:$0xf]
        %v9985 = vld [vmem:[%s9957 + $0x90] sm:$0x8]
        %v9986 = vld [vmem:[%s9957 + $0x94] sm:$0xf]
        %v9987 = vld [vmem:[%s9957 + $0x98] sm:$0xf]
        %v9988 = vld [vmem:[%s9957 + $0xa0] sm:$0x8]
        %v9989 = vld [vmem:[%s9957 + $0xa4] sm:$0xf]
        %v9990 = vld [vmem:[%s9957 + $0xa8] sm:$0xf]
        %v9991 = vld [vmem:[%s9957 + $0xb0] sm:$0x8]
        %v9992 = vld [vmem:[%s9957 + $0xb4] sm:$0xf]
        %v9993 = vld [vmem:[%s9957 + $0xb8] sm:$0xf]
        %v9994 = vld [vmem:[%s9957 + $0xc0] sm:$0x8]
        %v9995 = vld [vmem:[%s9957 + $0xc4] sm:$0xf]
        %v9996 = vld [vmem:[%s9957 + $0xc8] sm:$0xf]
        %v9997 = vld [vmem:[%s9957 + $0xd0] sm:$0x8]
        %v9998 = vld [vmem:[%s9957 + $0xd4] sm:$0xf]
        %v9999 = vld [vmem:[%s9957 + $0xd8] sm:$0xf]
        %v10000 = vld [vmem:[%s9957 + $0xe0] sm:$0x8]
        %v10001 = vld [vmem:[%s9957 + $0xe4] sm:$0xf]
        %v10002 = vld [vmem:[%s9957 + $0xe8] sm:$0xf]
        %v10003 = vld [vmem:[%s9957 + $0xf0] sm:$0x8]
        %v10004 = vld [vmem:[%s9957 + $0xf4] sm:$0xf]
        %v10005 = vld [vmem:[%s9957 + $0xf8] sm:$0xf]
        %v10007 = vshrl.u32 %v9958, 16
        %v10009 = vrot.slane %v10007, 7
        %v10010 = vrot.slane %v10009, 4
        %v10012 = vshrl.u32 %v9959, 16
        %v10014 = vrot.slane %v10012, 7
        %v10015 = vshll.u32 %v9959, 16
        %v10017 = vor.u32 %v10014, %v10015
        %v10018 = vsel %vm750, %v10010, %v10017
        %v10019 = vrot.slane %v10014, 4
        %v10021 = vshrl.u32 %v9960, 16
        %v10023 = vrot.slane %v10021, 7
        %v10024 = vshll.u32 %v9960, 16
        %v10026 = vor.u32 %v10023, %v10024
        %v10027 = vsel %vm750, %v10019, %v10026
        %v10029 = vshrl.u32 %v9961, 16
        %v10031 = vrot.slane %v10029, 7
        %v10032 = vrot.slane %v10031, 4
        %v10034 = vshrl.u32 %v9962, 16
        %v10036 = vrot.slane %v10034, 7
        %v10037 = vshll.u32 %v9962, 16
        %v10039 = vor.u32 %v10036, %v10037
        %v10040 = vsel %vm750, %v10032, %v10039
        %v10041 = vrot.slane %v10036, 4
        %v10043 = vshrl.u32 %v9963, 16
        %v10045 = vrot.slane %v10043, 7
        %v10046 = vshll.u32 %v9963, 16
        %v10048 = vor.u32 %v10045, %v10046
        %v10049 = vsel %vm750, %v10041, %v10048
        %v10051 = vshrl.u32 %v9964, 16
        %v10053 = vrot.slane %v10051, 7
        %v10054 = vrot.slane %v10053, 4
        %v10056 = vshrl.u32 %v9965, 16
        %v10058 = vrot.slane %v10056, 7
        %v10059 = vshll.u32 %v9965, 16
        %v10061 = vor.u32 %v10058, %v10059
        %v10062 = vsel %vm750, %v10054, %v10061
        %v10063 = vrot.slane %v10058, 4
        %v10065 = vshrl.u32 %v9966, 16
        %v10067 = vrot.slane %v10065, 7
        %v10068 = vshll.u32 %v9966, 16
        %v10070 = vor.u32 %v10067, %v10068
        %v10071 = vsel %vm750, %v10063, %v10070
        %v10073 = vshrl.u32 %v9967, 16
        %v10075 = vrot.slane %v10073, 7
        %v10076 = vrot.slane %v10075, 4
        %v10078 = vshrl.u32 %v9968, 16
        %v10080 = vrot.slane %v10078, 7
        %v10081 = vshll.u32 %v9968, 16
        %v10083 = vor.u32 %v10080, %v10081
        %v10084 = vsel %vm750, %v10076, %v10083
        %v10085 = vrot.slane %v10080, 4
        %v10087 = vshrl.u32 %v9969, 16
        %v10089 = vrot.slane %v10087, 7
        %v10090 = vshll.u32 %v9969, 16
        %v10092 = vor.u32 %v10089, %v10090
        %v10093 = vsel %vm750, %v10085, %v10092
        %v10095 = vshrl.u32 %v9970, 16
        %v10097 = vrot.slane %v10095, 7
        %v10098 = vrot.slane %v10097, 4
        %v10100 = vshrl.u32 %v9971, 16
        %v10102 = vrot.slane %v10100, 7
        %v10103 = vshll.u32 %v9971, 16
        %v10105 = vor.u32 %v10102, %v10103
        %v10106 = vsel %vm750, %v10098, %v10105
        %v10107 = vrot.slane %v10102, 4
        %v10109 = vshrl.u32 %v9972, 16
        %v10111 = vrot.slane %v10109, 7
        %v10112 = vshll.u32 %v9972, 16
        %v10114 = vor.u32 %v10111, %v10112
        %v10115 = vsel %vm750, %v10107, %v10114
        %v10117 = vshrl.u32 %v9973, 16
        %v10119 = vrot.slane %v10117, 7
        %v10120 = vrot.slane %v10119, 4
        %v10122 = vshrl.u32 %v9974, 16
        %v10124 = vrot.slane %v10122, 7
        %v10125 = vshll.u32 %v9974, 16
        %v10127 = vor.u32 %v10124, %v10125
        %v10128 = vsel %vm750, %v10120, %v10127
        %v10129 = vrot.slane %v10124, 4
        %v10131 = vshrl.u32 %v9975, 16
        %v10133 = vrot.slane %v10131, 7
        %v10134 = vshll.u32 %v9975, 16
        %v10136 = vor.u32 %v10133, %v10134
        %v10137 = vsel %vm750, %v10129, %v10136
        %v10139 = vshrl.u32 %v9976, 16
        %v10141 = vrot.slane %v10139, 7
        %v10142 = vrot.slane %v10141, 4
        %v10144 = vshrl.u32 %v9977, 16
        %v10146 = vrot.slane %v10144, 7
        %v10147 = vshll.u32 %v9977, 16
        %v10149 = vor.u32 %v10146, %v10147
        %v10150 = vsel %vm750, %v10142, %v10149
        %v10151 = vrot.slane %v10146, 4
        %v10153 = vshrl.u32 %v9978, 16
        %v10155 = vrot.slane %v10153, 7
        %v10156 = vshll.u32 %v9978, 16
        %v10158 = vor.u32 %v10155, %v10156
        %v10159 = vsel %vm750, %v10151, %v10158
        %v10161 = vshrl.u32 %v9979, 16
        %v10163 = vrot.slane %v10161, 7
        %v10164 = vrot.slane %v10163, 4
        %v10166 = vshrl.u32 %v9980, 16
        %v10168 = vrot.slane %v10166, 7
        %v10169 = vshll.u32 %v9980, 16
        %v10171 = vor.u32 %v10168, %v10169
        %v10172 = vsel %vm750, %v10164, %v10171
        %v10173 = vrot.slane %v10168, 4
        %v10175 = vshrl.u32 %v9981, 16
        %v10177 = vrot.slane %v10175, 7
        %v10178 = vshll.u32 %v9981, 16
        %v10180 = vor.u32 %v10177, %v10178
        %v10181 = vsel %vm750, %v10173, %v10180
        %v10183 = vshrl.u32 %v9982, 16
        %v10185 = vrot.slane %v10183, 7
        %v10186 = vrot.slane %v10185, 4
        %v10188 = vshrl.u32 %v9983, 16
        %v10190 = vrot.slane %v10188, 7
        %v10191 = vshll.u32 %v9983, 16
        %v10193 = vor.u32 %v10190, %v10191
        %v10194 = vsel %vm750, %v10186, %v10193
        %v10195 = vrot.slane %v10190, 4
        %v10197 = vshrl.u32 %v9984, 16
        %v10199 = vrot.slane %v10197, 7
        %v10200 = vshll.u32 %v9984, 16
        %v10202 = vor.u32 %v10199, %v10200
        %v10203 = vsel %vm750, %v10195, %v10202
        %v10205 = vshrl.u32 %v9985, 16
        %v10207 = vrot.slane %v10205, 7
        %v10208 = vrot.slane %v10207, 4
        %v10210 = vshrl.u32 %v9986, 16
        %v10212 = vrot.slane %v10210, 7
        %v10213 = vshll.u32 %v9986, 16
        %v10215 = vor.u32 %v10212, %v10213
        %v10216 = vsel %vm750, %v10208, %v10215
        %v10217 = vrot.slane %v10212, 4
        %v10219 = vshrl.u32 %v9987, 16
        %v10221 = vrot.slane %v10219, 7
        %v10222 = vshll.u32 %v9987, 16
        %v10224 = vor.u32 %v10221, %v10222
        %v10225 = vsel %vm750, %v10217, %v10224
        %v10227 = vshrl.u32 %v9988, 16
        %v10229 = vrot.slane %v10227, 7
        %v10230 = vrot.slane %v10229, 4
        %v10232 = vshrl.u32 %v9989, 16
        %v10234 = vrot.slane %v10232, 7
        %v10235 = vshll.u32 %v9989, 16
        %v10237 = vor.u32 %v10234, %v10235
        %v10238 = vsel %vm750, %v10230, %v10237
        %v10239 = vrot.slane %v10234, 4
        %v10241 = vshrl.u32 %v9990, 16
        %v10243 = vrot.slane %v10241, 7
        %v10244 = vshll.u32 %v9990, 16
        %v10246 = vor.u32 %v10243, %v10244
        %v10247 = vsel %vm750, %v10239, %v10246
        %v10249 = vshrl.u32 %v9991, 16
        %v10251 = vrot.slane %v10249, 7
        %v10252 = vrot.slane %v10251, 4
        %v10254 = vshrl.u32 %v9992, 16
        %v10256 = vrot.slane %v10254, 7
        %v10257 = vshll.u32 %v9992, 16
        %v10259 = vor.u32 %v10256, %v10257
        %v10260 = vsel %vm750, %v10252, %v10259
        %v10261 = vrot.slane %v10256, 4
        %v10263 = vshrl.u32 %v9993, 16
        %v10265 = vrot.slane %v10263, 7
        %v10266 = vshll.u32 %v9993, 16
        %v10268 = vor.u32 %v10265, %v10266
        %v10269 = vsel %vm750, %v10261, %v10268
        %v10271 = vshrl.u32 %v9994, 16
        %v10273 = vrot.slane %v10271, 7
        %v10274 = vrot.slane %v10273, 4
        %v10276 = vshrl.u32 %v9995, 16
        %v10278 = vrot.slane %v10276, 7
        %v10279 = vshll.u32 %v9995, 16
        %v10281 = vor.u32 %v10278, %v10279
        %v10282 = vsel %vm750, %v10274, %v10281
        %v10283 = vrot.slane %v10278, 4
        %v10285 = vshrl.u32 %v9996, 16
        %v10287 = vrot.slane %v10285, 7
        %v10288 = vshll.u32 %v9996, 16
        %v10290 = vor.u32 %v10287, %v10288
        %v10291 = vsel %vm750, %v10283, %v10290
        %v10293 = vshrl.u32 %v9997, 16
        %v10295 = vrot.slane %v10293, 7
        %v10296 = vrot.slane %v10295, 4
        %v10298 = vshrl.u32 %v9998, 16
        %v10300 = vrot.slane %v10298, 7
        %v10301 = vshll.u32 %v9998, 16
        %v10303 = vor.u32 %v10300, %v10301
        %v10304 = vsel %vm750, %v10296, %v10303
        %v10305 = vrot.slane %v10300, 4
        %v10307 = vshrl.u32 %v9999, 16
        %v10309 = vrot.slane %v10307, 7
        %v10310 = vshll.u32 %v9999, 16
        %v10312 = vor.u32 %v10309, %v10310
        %v10313 = vsel %vm750, %v10305, %v10312
        %v10315 = vshrl.u32 %v10000, 16
        %v10317 = vrot.slane %v10315, 7
        %v10318 = vrot.slane %v10317, 4
        %v10320 = vshrl.u32 %v10001, 16
        %v10322 = vrot.slane %v10320, 7
        %v10323 = vshll.u32 %v10001, 16
        %v10325 = vor.u32 %v10322, %v10323
        %v10326 = vsel %vm750, %v10318, %v10325
        %v10327 = vrot.slane %v10322, 4
        %v10329 = vshrl.u32 %v10002, 16
        %v10331 = vrot.slane %v10329, 7
        %v10332 = vshll.u32 %v10002, 16
        %v10334 = vor.u32 %v10331, %v10332
        %v10335 = vsel %vm750, %v10327, %v10334
        %v10337 = vshrl.u32 %v10003, 16
        %v10339 = vrot.slane %v10337, 7
        %v10340 = vrot.slane %v10339, 4
        %v10342 = vshrl.u32 %v10004, 16
        %v10344 = vrot.slane %v10342, 7
        %v10345 = vshll.u32 %v10004, 16
        %v10347 = vor.u32 %v10344, %v10345
        %v10348 = vsel %vm750, %v10340, %v10347
        %v10349 = vrot.slane %v10344, 4
        %v10351 = vshrl.u32 %v10005, 16
        %v10353 = vrot.slane %v10351, 7
        %v10354 = vshll.u32 %v10005, 16
        %v10356 = vor.u32 %v10353, %v10354
        %v10357 = vsel %vm750, %v10349, %v10356
        %s10358 = scalar_lea.vmem [#allocation9], 384
        %v10359 = vld [vmem:[%s10358] sm:$0xf]
        %v10360 = vld [vmem:[%s10358 + $0x4] sm:$0xf]
        %v10361 = vld [vmem:[%s10358 + $0x8] sm:$0xf]
        %v10362 = vld [vmem:[%s10358 + $0xc] sm:$0xf]
        %v10363 = vld [vmem:[%s10358 + $0x10] sm:$0xf]
        %v10364 = vld [vmem:[%s10358 + $0x14] sm:$0xf]
        %v10365 = vld [vmem:[%s10358 + $0x18] sm:$0xf]
        %v10366 = vld [vmem:[%s10358 + $0x1c] sm:$0xf]
        %v10367 = vld [vmem:[%s10358 + $0x20] sm:$0xf]
        %v10368 = vld [vmem:[%s10358 + $0x24] sm:$0xf]
        %v10369 = vld [vmem:[%s10358 + $0x28] sm:$0xf]
        %v10370 = vld [vmem:[%s10358 + $0x2c] sm:$0xf]
        %v10371 = vld [vmem:[%s10358 + $0x30] sm:$0xf]
        %v10372 = vld [vmem:[%s10358 + $0x34] sm:$0xf]
        %v10373 = vld [vmem:[%s10358 + $0x38] sm:$0xf]
        %v10374 = vld [vmem:[%s10358 + $0x3c] sm:$0xf]
        %v10375 = vunpack.c.l.b16 %v10018
        %v10376 = vunpack.c.l.b16 %v10027
        %v10377 = vunpack.c.l.b16 %v10040
        %v10378 = vunpack.c.l.b16 %v10049
        %v10379 = vunpack.c.l.b16 %v10062
        %v10380 = vunpack.c.l.b16 %v10071
        %v10381 = vunpack.c.l.b16 %v10084
        %v10382 = vunpack.c.l.b16 %v10093
        %v10383 = vunpack.c.l.b16 %v10106
        %v10384 = vunpack.c.l.b16 %v10115
        %v10385 = vunpack.c.l.b16 %v10128
        %v10386 = vunpack.c.l.b16 %v10137
        %v10387 = vunpack.c.l.b16 %v10150
        %v10388 = vunpack.c.l.b16 %v10159
        %v10389 = vunpack.c.l.b16 %v10172
        %v10390 = vunpack.c.l.b16 %v10181
        %v10391 = vunpack.c.l.b16 %v10194
        %v10392 = vunpack.c.l.b16 %v10203
        %v10393 = vunpack.c.l.b16 %v10216
        %v10394 = vunpack.c.l.b16 %v10225
        %v10395 = vunpack.c.l.b16 %v10238
        %v10396 = vunpack.c.l.b16 %v10247
        %v10397 = vunpack.c.l.b16 %v10260
        %v10398 = vunpack.c.l.b16 %v10269
        %v10399 = vunpack.c.l.b16 %v10282
        %v10400 = vunpack.c.l.b16 %v10291
        %v10401 = vunpack.c.l.b16 %v10304
        %v10402 = vunpack.c.l.b16 %v10313
        %v10403 = vunpack.c.l.b16 %v10326
        %v10404 = vunpack.c.l.b16 %v10335
        %v10405 = vunpack.c.l.b16 %v10348
        %v10406 = vunpack.c.l.b16 %v10357
        %v10407 = vpack.c.b16 %v10376, %v10375
        %v10408 = vpack.c.b16 %v10378, %v10377
        %v10409 = vpack.c.b16 %v10380, %v10379
        %v10410 = vpack.c.b16 %v10382, %v10381
        %v10411 = vpack.c.b16 %v10384, %v10383
        %v10412 = vpack.c.b16 %v10386, %v10385
        %v10413 = vpack.c.b16 %v10388, %v10387
        %v10414 = vpack.c.b16 %v10390, %v10389
        %v10415 = vpack.c.b16 %v10392, %v10391
        %v10416 = vpack.c.b16 %v10394, %v10393
        %v10417 = vpack.c.b16 %v10396, %v10395
        %v10418 = vpack.c.b16 %v10398, %v10397
        %v10419 = vpack.c.b16 %v10400, %v10399
        %v10420 = vpack.c.b16 %v10402, %v10401
        %v10421 = vpack.c.b16 %v10404, %v10403
        %v10422 = vpack.c.b16 %v10406, %v10405
        %v10455 = vunpack.c.l.b16 %v10359
        %v10456 = vunpack.c.l.b16 %v10360
        %v10457 = vunpack.c.l.b16 %v10361
        %v10458 = vunpack.c.l.b16 %v10362
        %v10459 = vunpack.c.l.b16 %v10363
        %v10460 = vunpack.c.l.b16 %v10364
        %v10461 = vunpack.c.l.b16 %v10365
        %v10462 = vunpack.c.l.b16 %v10366
        %v10463 = vunpack.c.l.b16 %v10367
        %v10464 = vunpack.c.l.b16 %v10368
        %v10465 = vunpack.c.l.b16 %v10369
        %v10466 = vunpack.c.l.b16 %v10370
        %v10467 = vunpack.c.l.b16 %v10371
        %v10468 = vunpack.c.l.b16 %v10372
        %v10469 = vunpack.c.l.b16 %v10373
        %v10470 = vunpack.c.l.b16 %v10374
        %v10471 = vpack.c.b16 %v10456, %v10455
        %v10472 = vpack.c.b16 %v10458, %v10457
        %v10473 = vpack.c.b16 %v10460, %v10459
        %v10474 = vpack.c.b16 %v10462, %v10461
        %v10475 = vpack.c.b16 %v10464, %v10463
        %v10476 = vpack.c.b16 %v10466, %v10465
        %v10477 = vpack.c.b16 %v10468, %v10467
        %v10478 = vpack.c.b16 %v10470, %v10469
        %10487 = vmatprep.subr.bf16.mxu0 0
        %10488 = vmatpush1.bf16.msra.mxu0 %v10478
        %10489 = vmatprep.subr.bf16.mxu0 0
        %10490 = vmatpush1.bf16.msra.mxu0 %v10477
        %10491 = vmatprep.subr.bf16.mxu0 0
        %10492 = vmatpush1.bf16.msra.mxu0 %v10476
        %10493 = vmatprep.subr.bf16.mxu0 0
        %10494 = vmatpush1.bf16.msra.mxu0 %v10475
        %10495 = vmatprep.subr.bf16.mxu0 0
        %10496 = vmatpush1.bf16.msra.mxu0 %v10474
        %10497 = vmatprep.subr.bf16.mxu0 0
        %10498 = vmatpush1.bf16.msra.mxu0 %v10473
        %10499 = vmatprep.subr.bf16.mxu0 0
        %10500 = vmatpush1.bf16.msra.mxu0 %v10472
        %10501 = vmatprep.subr.bf16.mxu0 0
        %10502 = vmatpush1.bf16.msra.mxu0 %v10471
        %10503 = vmatprep.subr.bf16.mxu0 0
        %10504 = vmatpush2.bf16.msra.mxu0 0
        %10505 = vmatprep.subr.bf16.mxu0 0
        %10506 = vmatpush2.bf16.msra.mxu0 0
        %10507 = vmatprep.subr.bf16.mxu0 0
        %10508 = vmatpush2.bf16.msra.mxu0 0
        %10509 = vmatprep.subr.bf16.mxu0 0
        %10510 = vmatpush2.bf16.msra.mxu0 0
        %10511 = vmatprep.subr.bf16.mxu0 0
        %10512 = vmatpush2.bf16.msra.mxu0 0
        %10513 = vmatprep.subr.bf16.mxu0 0
        %10514 = vmatpush2.bf16.msra.mxu0 0
        %10515 = vmatprep.subr.bf16.mxu0 0
        %10516 = vmatpush2.bf16.msra.mxu0 0
        %10517 = vmatprep.subr.bf16.mxu0 0
        %10518 = vmatpush2.bf16.msra.mxu0 0
        %10519 = vmatprep.mubr.bf16.mxu0 0
        %10520 = vmatmul.mubr.bf16.gmra.mxu0 %v10407
        %v10521 = vpop.f32.mrf.mxu0
        %v10522 = vadd.f32 0.0, %v10521
        %v10523 = vpop.f32.mrf.mxu0
        %v10524 = vpop.f32.mrf.mxu0
        %v10525 = vadd.f32 0.0, %v10524
        %v10526 = vpop.f32.mrf.mxu0
        %10527 = vmatprep.mubr.bf16.mxu0 0
        %10528 = vmatmul.mubr.bf16.gmra.mxu0 %v10408
        %v10529 = vpop.f32.mrf.mxu0
        %v10530 = vadd.f32 0.0, %v10529
        %v10531 = vpop.f32.mrf.mxu0
        %v10532 = vpop.f32.mrf.mxu0
        %v10533 = vadd.f32 0.0, %v10532
        %v10534 = vpop.f32.mrf.mxu0
        %10535 = vmatprep.mubr.bf16.mxu0 0
        %10536 = vmatmul.mubr.bf16.gmra.mxu0 %v10409
        %v10537 = vpop.f32.mrf.mxu0
        %v10538 = vadd.f32 0.0, %v10537
        %v10539 = vpop.f32.mrf.mxu0
        %v10540 = vpop.f32.mrf.mxu0
        %v10541 = vadd.f32 0.0, %v10540
        %v10542 = vpop.f32.mrf.mxu0
        %10543 = vmatprep.mubr.bf16.mxu0 0
        %10544 = vmatmul.mubr.bf16.gmra.mxu0 %v10410
        %v10545 = vpop.f32.mrf.mxu0
        %v10546 = vadd.f32 0.0, %v10545
        %v10547 = vpop.f32.mrf.mxu0
        %v10548 = vpop.f32.mrf.mxu0
        %v10549 = vadd.f32 0.0, %v10548
        %v10550 = vpop.f32.mrf.mxu0
        %10551 = vmatprep.mubr.bf16.mxu0 0
        %10552 = vmatmul.mubr.bf16.gmra.mxu0 %v10411
        %v10553 = vpop.f32.mrf.mxu0
        %v10554 = vadd.f32 0.0, %v10553
        %v10555 = vpop.f32.mrf.mxu0
        %v10556 = vpop.f32.mrf.mxu0
        %v10557 = vadd.f32 0.0, %v10556
        %v10558 = vpop.f32.mrf.mxu0
        %10559 = vmatprep.mubr.bf16.mxu0 0
        %10560 = vmatmul.mubr.bf16.gmra.mxu0 %v10412
        %v10561 = vpop.f32.mrf.mxu0
        %v10562 = vadd.f32 0.0, %v10561
        %v10563 = vpop.f32.mrf.mxu0
        %v10564 = vpop.f32.mrf.mxu0
        %v10565 = vadd.f32 0.0, %v10564
        %v10566 = vpop.f32.mrf.mxu0
        %10567 = vmatprep.mubr.bf16.mxu0 0
        %10568 = vmatmul.mubr.bf16.gmra.mxu0 %v10413
        %v10569 = vpop.f32.mrf.mxu0
        %v10570 = vadd.f32 0.0, %v10569
        %v10571 = vpop.f32.mrf.mxu0
        %v10572 = vpop.f32.mrf.mxu0
        %v10573 = vadd.f32 0.0, %v10572
        %v10574 = vpop.f32.mrf.mxu0
        %10575 = vmatprep.mubr.bf16.mxu0 0
        %10576 = vmatmul.mubr.bf16.gmra.mxu0 %v10414
        %v10577 = vpop.f32.mrf.mxu0
        %v10578 = vadd.f32 0.0, %v10577
        %v10579 = vpop.f32.mrf.mxu0
        %v10580 = vpop.f32.mrf.mxu0
        %v10581 = vadd.f32 0.0, %v10580
        %v10582 = vpop.f32.mrf.mxu0
        %10583 = vmatprep.mubr.bf16.mxu0 0
        %10584 = vmatmul.mubr.bf16.gmra.mxu0 %v10415
        %v10585 = vpop.f32.mrf.mxu0
        %v10586 = vadd.f32 0.0, %v10585
        %v10587 = vpop.f32.mrf.mxu0
        %v10588 = vpop.f32.mrf.mxu0
        %v10589 = vadd.f32 0.0, %v10588
        %v10590 = vpop.f32.mrf.mxu0
        %10591 = vmatprep.mubr.bf16.mxu0 0
        %10592 = vmatmul.mubr.bf16.gmra.mxu0 %v10416
        %v10593 = vpop.f32.mrf.mxu0
        %v10594 = vadd.f32 0.0, %v10593
        %v10595 = vpop.f32.mrf.mxu0
        %v10596 = vpop.f32.mrf.mxu0
        %v10597 = vadd.f32 0.0, %v10596
        %v10598 = vpop.f32.mrf.mxu0
        %10599 = vmatprep.mubr.bf16.mxu0 0
        %10600 = vmatmul.mubr.bf16.gmra.mxu0 %v10417
        %v10601 = vpop.f32.mrf.mxu0
        %v10602 = vadd.f32 0.0, %v10601
        %v10603 = vpop.f32.mrf.mxu0
        %v10604 = vpop.f32.mrf.mxu0
        %v10605 = vadd.f32 0.0, %v10604
        %v10606 = vpop.f32.mrf.mxu0
        %10607 = vmatprep.mubr.bf16.mxu0 0
        %10608 = vmatmul.mubr.bf16.gmra.mxu0 %v10418
        %v10609 = vpop.f32.mrf.mxu0
        %v10610 = vadd.f32 0.0, %v10609
        %v10611 = vpop.f32.mrf.mxu0
        %v10612 = vpop.f32.mrf.mxu0
        %v10613 = vadd.f32 0.0, %v10612
        %v10614 = vpop.f32.mrf.mxu0
        %10615 = vmatprep.mubr.bf16.mxu0 0
        %10616 = vmatmul.mubr.bf16.gmra.mxu0 %v10419
        %v10617 = vpop.f32.mrf.mxu0
        %v10618 = vadd.f32 0.0, %v10617
        %v10619 = vpop.f32.mrf.mxu0
        %v10620 = vpop.f32.mrf.mxu0
        %v10621 = vadd.f32 0.0, %v10620
        %v10622 = vpop.f32.mrf.mxu0
        %10623 = vmatprep.mubr.bf16.mxu0 0
        %10624 = vmatmul.mubr.bf16.gmra.mxu0 %v10420
        %v10625 = vpop.f32.mrf.mxu0
        %v10626 = vadd.f32 0.0, %v10625
        %v10627 = vpop.f32.mrf.mxu0
        %v10628 = vpop.f32.mrf.mxu0
        %v10629 = vadd.f32 0.0, %v10628
        %v10630 = vpop.f32.mrf.mxu0
        %10631 = vmatprep.mubr.bf16.mxu0 0
        %10632 = vmatmul.mubr.bf16.gmra.mxu0 %v10421
        %v10633 = vpop.f32.mrf.mxu0
        %v10634 = vadd.f32 0.0, %v10633
        %v10635 = vpop.f32.mrf.mxu0
        %v10636 = vpop.f32.mrf.mxu0
        %v10637 = vadd.f32 0.0, %v10636
        %v10638 = vpop.f32.mrf.mxu0
        %10639 = vmatprep.mubr.bf16.mxu0 0
        %10640 = vmatmul.mubr.bf16.gmra.mxu0 %v10422
        %v10641 = vpop.f32.mrf.mxu0
        %v10642 = vadd.f32 0.0, %v10641
        %v10643 = vpop.f32.mrf.mxu0
        %v10644 = vpop.f32.mrf.mxu0
        %v10645 = vadd.f32 0.0, %v10644
        %v10646 = vpop.f32.mrf.mxu0
        %10647 = vdwg.mxu0
        %v10648 = vadd.f32 %v9925, %v10522
        %v10649 = vadd.f32 %v9926, %v10525
        %v10650 = vadd.f32 %v9927, %v10530
        %v10651 = vadd.f32 %v9928, %v10533
        %v10652 = vadd.f32 %v9929, %v10538
        %v10653 = vadd.f32 %v9930, %v10541
        %v10654 = vadd.f32 %v9931, %v10546
        %v10655 = vadd.f32 %v9932, %v10549
        %v10656 = vadd.f32 %v9933, %v10554
        %v10657 = vadd.f32 %v9934, %v10557
        %v10658 = vadd.f32 %v9935, %v10562
        %v10659 = vadd.f32 %v9936, %v10565
        %v10660 = vadd.f32 %v9937, %v10570
        %v10661 = vadd.f32 %v9938, %v10573
        %v10662 = vadd.f32 %v9939, %v10578
        %v10663 = vadd.f32 %v9940, %v10581
        %v10664 = vadd.f32 %v9941, %v10586
        %v10665 = vadd.f32 %v9942, %v10589
        %v10666 = vadd.f32 %v9943, %v10594
        %v10667 = vadd.f32 %v9944, %v10597
        %v10668 = vadd.f32 %v9945, %v10602
        %v10669 = vadd.f32 %v9946, %v10605
        %v10670 = vadd.f32 %v9947, %v10610
        %v10671 = vadd.f32 %v9948, %v10613
        %v10672 = vadd.f32 %v9949, %v10618
        %v10673 = vadd.f32 %v9950, %v10621
        %v10674 = vadd.f32 %v9951, %v10626
        %v10675 = vadd.f32 %v9952, %v10629
        %v10676 = vadd.f32 %v9953, %v10634
        %v10677 = vadd.f32 %v9954, %v10637
        %v10678 = vadd.f32 %v9955, %v10642
        %v10679 = vadd.f32 %v9956, %v10645
        %s10680 = scalar_lea.vmem [#allocation9], 448
        %v10681 = vld [vmem:[%s10680] sm:$0xf]
        %v10682 = vld [vmem:[%s10680 + $0x4] sm:$0xf]
        %v10683 = vld [vmem:[%s10680 + $0x8] sm:$0xf]
        %v10684 = vld [vmem:[%s10680 + $0xc] sm:$0xf]
        %v10685 = vld [vmem:[%s10680 + $0x10] sm:$0xf]
        %v10686 = vld [vmem:[%s10680 + $0x14] sm:$0xf]
        %v10687 = vld [vmem:[%s10680 + $0x18] sm:$0xf]
        %v10688 = vld [vmem:[%s10680 + $0x1c] sm:$0xf]
        %v10689 = vld [vmem:[%s10680 + $0x20] sm:$0xf]
        %v10690 = vld [vmem:[%s10680 + $0x24] sm:$0xf]
        %v10691 = vld [vmem:[%s10680 + $0x28] sm:$0xf]
        %v10692 = vld [vmem:[%s10680 + $0x2c] sm:$0xf]
        %v10693 = vld [vmem:[%s10680 + $0x30] sm:$0xf]
        %v10694 = vld [vmem:[%s10680 + $0x34] sm:$0xf]
        %v10695 = vld [vmem:[%s10680 + $0x38] sm:$0xf]
        %v10696 = vld [vmem:[%s10680 + $0x3c] sm:$0xf]
        %v10729 = vunpack.c.l.b16 %v9959
        %v10730 = vunpack.c.l.b16 %v9960
        %v10731 = vunpack.c.l.b16 %v9962
        %v10732 = vunpack.c.l.b16 %v9963
        %v10733 = vunpack.c.l.b16 %v9965
        %v10734 = vunpack.c.l.b16 %v9966
        %v10735 = vunpack.c.l.b16 %v9968
        %v10736 = vunpack.c.l.b16 %v9969
        %v10737 = vunpack.c.l.b16 %v9971
        %v10738 = vunpack.c.l.b16 %v9972
        %v10739 = vunpack.c.l.b16 %v9974
        %v10740 = vunpack.c.l.b16 %v9975
        %v10741 = vunpack.c.l.b16 %v9977
        %v10742 = vunpack.c.l.b16 %v9978
        %v10743 = vunpack.c.l.b16 %v9980
        %v10744 = vunpack.c.l.b16 %v9981
        %v10745 = vunpack.c.l.b16 %v9983
        %v10746 = vunpack.c.l.b16 %v9984
        %v10747 = vunpack.c.l.b16 %v9986
        %v10748 = vunpack.c.l.b16 %v9987
        %v10749 = vunpack.c.l.b16 %v9989
        %v10750 = vunpack.c.l.b16 %v9990
        %v10751 = vunpack.c.l.b16 %v9992
        %v10752 = vunpack.c.l.b16 %v9993
        %v10753 = vunpack.c.l.b16 %v9995
        %v10754 = vunpack.c.l.b16 %v9996
        %v10755 = vunpack.c.l.b16 %v9998
        %v10756 = vunpack.c.l.b16 %v9999
        %v10757 = vunpack.c.l.b16 %v10001
        %v10758 = vunpack.c.l.b16 %v10002
        %v10759 = vunpack.c.l.b16 %v10004
        %v10760 = vunpack.c.l.b16 %v10005
        %v10761 = vpack.c.b16 %v10730, %v10729
        %v10762 = vpack.c.b16 %v10732, %v10731
        %v10763 = vpack.c.b16 %v10734, %v10733
        %v10764 = vpack.c.b16 %v10736, %v10735
        %v10765 = vpack.c.b16 %v10738, %v10737
        %v10766 = vpack.c.b16 %v10740, %v10739
        %v10767 = vpack.c.b16 %v10742, %v10741
        %v10768 = vpack.c.b16 %v10744, %v10743
        %v10769 = vpack.c.b16 %v10746, %v10745
        %v10770 = vpack.c.b16 %v10748, %v10747
        %v10771 = vpack.c.b16 %v10750, %v10749
        %v10772 = vpack.c.b16 %v10752, %v10751
        %v10773 = vpack.c.b16 %v10754, %v10753
        %v10774 = vpack.c.b16 %v10756, %v10755
        %v10775 = vpack.c.b16 %v10758, %v10757
        %v10776 = vpack.c.b16 %v10760, %v10759
        %v10809 = vunpack.c.l.b16 %v10681
        %v10810 = vunpack.c.l.b16 %v10682
        %v10811 = vunpack.c.l.b16 %v10683
        %v10812 = vunpack.c.l.b16 %v10684
        %v10813 = vunpack.c.l.b16 %v10685
        %v10814 = vunpack.c.l.b16 %v10686
        %v10815 = vunpack.c.l.b16 %v10687
        %v10816 = vunpack.c.l.b16 %v10688
        %v10817 = vunpack.c.l.b16 %v10689
        %v10818 = vunpack.c.l.b16 %v10690
        %v10819 = vunpack.c.l.b16 %v10691
        %v10820 = vunpack.c.l.b16 %v10692
        %v10821 = vunpack.c.l.b16 %v10693
        %v10822 = vunpack.c.l.b16 %v10694
        %v10823 = vunpack.c.l.b16 %v10695
        %v10824 = vunpack.c.l.b16 %v10696
        %v10825 = vpack.c.b16 %v10810, %v10809
        %v10826 = vpack.c.b16 %v10812, %v10811
        %v10827 = vpack.c.b16 %v10814, %v10813
        %v10828 = vpack.c.b16 %v10816, %v10815
        %v10829 = vpack.c.b16 %v10818, %v10817
        %v10830 = vpack.c.b16 %v10820, %v10819
        %v10831 = vpack.c.b16 %v10822, %v10821
        %v10832 = vpack.c.b16 %v10824, %v10823
        %10841 = vmatprep.subr.bf16.mxu0 0
        %10842 = vmatpush1.bf16.msra.mxu0 %v10832
        %10843 = vmatprep.subr.bf16.mxu0 0
        %10844 = vmatpush1.bf16.msra.mxu0 %v10831
        %10845 = vmatprep.subr.bf16.mxu0 0
        %10846 = vmatpush1.bf16.msra.mxu0 %v10830
        %10847 = vmatprep.subr.bf16.mxu0 0
        %10848 = vmatpush1.bf16.msra.mxu0 %v10829
        %10849 = vmatprep.subr.bf16.mxu0 0
        %10850 = vmatpush1.bf16.msra.mxu0 %v10828
        %10851 = vmatprep.subr.bf16.mxu0 0
        %10852 = vmatpush1.bf16.msra.mxu0 %v10827
        %10853 = vmatprep.subr.bf16.mxu0 0
        %10854 = vmatpush1.bf16.msra.mxu0 %v10826
        %10855 = vmatprep.subr.bf16.mxu0 0
        %10856 = vmatpush1.bf16.msra.mxu0 %v10825
        %10857 = vmatprep.subr.bf16.mxu0 0
        %10858 = vmatpush2.bf16.msra.mxu0 0
        %10859 = vmatprep.subr.bf16.mxu0 0
        %10860 = vmatpush2.bf16.msra.mxu0 0
        %10861 = vmatprep.subr.bf16.mxu0 0
        %10862 = vmatpush2.bf16.msra.mxu0 0
        %10863 = vmatprep.subr.bf16.mxu0 0
        %10864 = vmatpush2.bf16.msra.mxu0 0
        %10865 = vmatprep.subr.bf16.mxu0 0
        %10866 = vmatpush2.bf16.msra.mxu0 0
        %10867 = vmatprep.subr.bf16.mxu0 0
        %10868 = vmatpush2.bf16.msra.mxu0 0
        %10869 = vmatprep.subr.bf16.mxu0 0
        %10870 = vmatpush2.bf16.msra.mxu0 0
        %10871 = vmatprep.subr.bf16.mxu0 0
        %10872 = vmatpush2.bf16.msra.mxu0 0
        %10873 = vmatprep.mubr.bf16.mxu0 0
        %10874 = vmatmul.mubr.bf16.gmra.mxu0 %v10761
        %v10875 = vpop.f32.mrf.mxu0
        %v10876 = vadd.f32 0.0, %v10875
        %v10877 = vpop.f32.mrf.mxu0
        %v10878 = vpop.f32.mrf.mxu0
        %v10879 = vadd.f32 0.0, %v10878
        %v10880 = vpop.f32.mrf.mxu0
        %10881 = vmatprep.mubr.bf16.mxu0 0
        %10882 = vmatmul.mubr.bf16.gmra.mxu0 %v10762
        %v10883 = vpop.f32.mrf.mxu0
        %v10884 = vadd.f32 0.0, %v10883
        %v10885 = vpop.f32.mrf.mxu0
        %v10886 = vpop.f32.mrf.mxu0
        %v10887 = vadd.f32 0.0, %v10886
        %v10888 = vpop.f32.mrf.mxu0
        %10889 = vmatprep.mubr.bf16.mxu0 0
        %10890 = vmatmul.mubr.bf16.gmra.mxu0 %v10763
        %v10891 = vpop.f32.mrf.mxu0
        %v10892 = vadd.f32 0.0, %v10891
        %v10893 = vpop.f32.mrf.mxu0
        %v10894 = vpop.f32.mrf.mxu0
        %v10895 = vadd.f32 0.0, %v10894
        %v10896 = vpop.f32.mrf.mxu0
        %10897 = vmatprep.mubr.bf16.mxu0 0
        %10898 = vmatmul.mubr.bf16.gmra.mxu0 %v10764
        %v10899 = vpop.f32.mrf.mxu0
        %v10900 = vadd.f32 0.0, %v10899
        %v10901 = vpop.f32.mrf.mxu0
        %v10902 = vpop.f32.mrf.mxu0
        %v10903 = vadd.f32 0.0, %v10902
        %v10904 = vpop.f32.mrf.mxu0
        %10905 = vmatprep.mubr.bf16.mxu0 0
        %10906 = vmatmul.mubr.bf16.gmra.mxu0 %v10765
        %v10907 = vpop.f32.mrf.mxu0
        %v10908 = vadd.f32 0.0, %v10907
        %v10909 = vpop.f32.mrf.mxu0
        %v10910 = vpop.f32.mrf.mxu0
        %v10911 = vadd.f32 0.0, %v10910
        %v10912 = vpop.f32.mrf.mxu0
        %10913 = vmatprep.mubr.bf16.mxu0 0
        %10914 = vmatmul.mubr.bf16.gmra.mxu0 %v10766
        %v10915 = vpop.f32.mrf.mxu0
        %v10916 = vadd.f32 0.0, %v10915
        %v10917 = vpop.f32.mrf.mxu0
        %v10918 = vpop.f32.mrf.mxu0
        %v10919 = vadd.f32 0.0, %v10918
        %v10920 = vpop.f32.mrf.mxu0
        %10921 = vmatprep.mubr.bf16.mxu0 0
        %10922 = vmatmul.mubr.bf16.gmra.mxu0 %v10767
        %v10923 = vpop.f32.mrf.mxu0
        %v10924 = vadd.f32 0.0, %v10923
        %v10925 = vpop.f32.mrf.mxu0
        %v10926 = vpop.f32.mrf.mxu0
        %v10927 = vadd.f32 0.0, %v10926
        %v10928 = vpop.f32.mrf.mxu0
        %10929 = vmatprep.mubr.bf16.mxu0 0
        %10930 = vmatmul.mubr.bf16.gmra.mxu0 %v10768
        %v10931 = vpop.f32.mrf.mxu0
        %v10932 = vadd.f32 0.0, %v10931
        %v10933 = vpop.f32.mrf.mxu0
        %v10934 = vpop.f32.mrf.mxu0
        %v10935 = vadd.f32 0.0, %v10934
        %v10936 = vpop.f32.mrf.mxu0
        %10937 = vmatprep.mubr.bf16.mxu0 0
        %10938 = vmatmul.mubr.bf16.gmra.mxu0 %v10769
        %v10939 = vpop.f32.mrf.mxu0
        %v10940 = vadd.f32 0.0, %v10939
        %v10941 = vpop.f32.mrf.mxu0
        %v10942 = vpop.f32.mrf.mxu0
        %v10943 = vadd.f32 0.0, %v10942
        %v10944 = vpop.f32.mrf.mxu0
        %10945 = vmatprep.mubr.bf16.mxu0 0
        %10946 = vmatmul.mubr.bf16.gmra.mxu0 %v10770
        %v10947 = vpop.f32.mrf.mxu0
        %v10948 = vadd.f32 0.0, %v10947
        %v10949 = vpop.f32.mrf.mxu0
        %v10950 = vpop.f32.mrf.mxu0
        %v10951 = vadd.f32 0.0, %v10950
        %v10952 = vpop.f32.mrf.mxu0
        %10953 = vmatprep.mubr.bf16.mxu0 0
        %10954 = vmatmul.mubr.bf16.gmra.mxu0 %v10771
        %v10955 = vpop.f32.mrf.mxu0
        %v10956 = vadd.f32 0.0, %v10955
        %v10957 = vpop.f32.mrf.mxu0
        %v10958 = vpop.f32.mrf.mxu0
        %v10959 = vadd.f32 0.0, %v10958
        %v10960 = vpop.f32.mrf.mxu0
        %10961 = vmatprep.mubr.bf16.mxu0 0
        %10962 = vmatmul.mubr.bf16.gmra.mxu0 %v10772
        %v10963 = vpop.f32.mrf.mxu0
        %v10964 = vadd.f32 0.0, %v10963
        %v10965 = vpop.f32.mrf.mxu0
        %v10966 = vpop.f32.mrf.mxu0
        %v10967 = vadd.f32 0.0, %v10966
        %v10968 = vpop.f32.mrf.mxu0
        %10969 = vmatprep.mubr.bf16.mxu0 0
        %10970 = vmatmul.mubr.bf16.gmra.mxu0 %v10773
        %v10971 = vpop.f32.mrf.mxu0
        %v10972 = vadd.f32 0.0, %v10971
        %v10973 = vpop.f32.mrf.mxu0
        %v10974 = vpop.f32.mrf.mxu0
        %v10975 = vadd.f32 0.0, %v10974
        %v10976 = vpop.f32.mrf.mxu0
        %10977 = vmatprep.mubr.bf16.mxu0 0
        %10978 = vmatmul.mubr.bf16.gmra.mxu0 %v10774
        %v10979 = vpop.f32.mrf.mxu0
        %v10980 = vadd.f32 0.0, %v10979
        %v10981 = vpop.f32.mrf.mxu0
        %v10982 = vpop.f32.mrf.mxu0
        %v10983 = vadd.f32 0.0, %v10982
        %v10984 = vpop.f32.mrf.mxu0
        %10985 = vmatprep.mubr.bf16.mxu0 0
        %10986 = vmatmul.mubr.bf16.gmra.mxu0 %v10775
        %v10987 = vpop.f32.mrf.mxu0
        %v10988 = vadd.f32 0.0, %v10987
        %v10989 = vpop.f32.mrf.mxu0
        %v10990 = vpop.f32.mrf.mxu0
        %v10991 = vadd.f32 0.0, %v10990
        %v10992 = vpop.f32.mrf.mxu0
        %10993 = vmatprep.mubr.bf16.mxu0 0
        %10994 = vmatmul.mubr.bf16.gmra.mxu0 %v10776
        %v10995 = vpop.f32.mrf.mxu0
        %v10996 = vadd.f32 0.0, %v10995
        %v10997 = vpop.f32.mrf.mxu0
        %v10998 = vpop.f32.mrf.mxu0
        %v10999 = vadd.f32 0.0, %v10998
        %v11000 = vpop.f32.mrf.mxu0
        %11001 = vdwg.mxu0
        %v11002 = vadd.f32 %v10648, %v10876
        %v11003 = vadd.f32 %v10649, %v10879
        %v11004 = vadd.f32 %v10650, %v10884
        %v11005 = vadd.f32 %v10651, %v10887
        %v11006 = vadd.f32 %v10652, %v10892
        %v11007 = vadd.f32 %v10653, %v10895
        %v11008 = vadd.f32 %v10654, %v10900
        %v11009 = vadd.f32 %v10655, %v10903
        %v11010 = vadd.f32 %v10656, %v10908
        %v11011 = vadd.f32 %v10657, %v10911
        %v11012 = vadd.f32 %v10658, %v10916
        %v11013 = vadd.f32 %v10659, %v10919
        %v11014 = vadd.f32 %v10660, %v10924
        %v11015 = vadd.f32 %v10661, %v10927
        %v11016 = vadd.f32 %v10662, %v10932
        %v11017 = vadd.f32 %v10663, %v10935
        %v11018 = vadd.f32 %v10664, %v10940
        %v11019 = vadd.f32 %v10665, %v10943
        %v11020 = vadd.f32 %v10666, %v10948
        %v11021 = vadd.f32 %v10667, %v10951
        %v11022 = vadd.f32 %v10668, %v10956
        %v11023 = vadd.f32 %v10669, %v10959
        %v11024 = vadd.f32 %v10670, %v10964
        %v11025 = vadd.f32 %v10671, %v10967
        %v11026 = vadd.f32 %v10672, %v10972
        %v11027 = vadd.f32 %v10673, %v10975
        %v11028 = vadd.f32 %v10674, %v10980
        %v11029 = vadd.f32 %v10675, %v10983
        %v11030 = vadd.f32 %v10676, %v10988
        %v11031 = vadd.f32 %v10677, %v10991
        %v11032 = vadd.f32 %v10678, %v10996
        %v11033 = vadd.f32 %v10679, %v10999
        %v11034 = vld [vmem:[%s9957 + $0x4] sm:$0xf]
        %v11035 = vld [vmem:[%s9957 + $0x8] sm:$0xf]
        %v11036 = vld [vmem:[%s9957 + $0xc] sm:$0x1]
        %v11037 = vld [vmem:[%s9957 + $0x14] sm:$0xf]
        %v11038 = vld [vmem:[%s9957 + $0x18] sm:$0xf]
        %v11039 = vld [vmem:[%s9957 + $0x1c] sm:$0x1]
        %v11040 = vld [vmem:[%s9957 + $0x24] sm:$0xf]
        %v11041 = vld [vmem:[%s9957 + $0x28] sm:$0xf]
        %v11042 = vld [vmem:[%s9957 + $0x2c] sm:$0x1]
        %v11043 = vld [vmem:[%s9957 + $0x34] sm:$0xf]
        %v11044 = vld [vmem:[%s9957 + $0x38] sm:$0xf]
        %v11045 = vld [vmem:[%s9957 + $0x3c] sm:$0x1]
        %v11046 = vld [vmem:[%s9957 + $0x44] sm:$0xf]
        %v11047 = vld [vmem:[%s9957 + $0x48] sm:$0xf]
        %v11048 = vld [vmem:[%s9957 + $0x4c] sm:$0x1]
        %v11049 = vld [vmem:[%s9957 + $0x54] sm:$0xf]
        %v11050 = vld [vmem:[%s9957 + $0x58] sm:$0xf]
        %v11051 = vld [vmem:[%s9957 + $0x5c] sm:$0x1]
        %v11052 = vld [vmem:[%s9957 + $0x64] sm:$0xf]
        %v11053 = vld [vmem:[%s9957 + $0x68] sm:$0xf]
        %v11054 = vld [vmem:[%s9957 + $0x6c] sm:$0x1]
        %v11055 = vld [vmem:[%s9957 + $0x74] sm:$0xf]
        %v11056 = vld [vmem:[%s9957 + $0x78] sm:$0xf]
        %v11057 = vld [vmem:[%s9957 + $0x7c] sm:$0x1]
        %v11058 = vld [vmem:[%s9957 + $0x84] sm:$0xf]
        %v11059 = vld [vmem:[%s9957 + $0x88] sm:$0xf]
        %v11060 = vld [vmem:[%s9957 + $0x8c] sm:$0x1]
        %v11061 = vld [vmem:[%s9957 + $0x94] sm:$0xf]
        %v11062 = vld [vmem:[%s9957 + $0x98] sm:$0xf]
        %v11063 = vld [vmem:[%s9957 + $0x9c] sm:$0x1]
        %v11064 = vld [vmem:[%s9957 + $0xa4] sm:$0xf]
        %v11065 = vld [vmem:[%s9957 + $0xa8] sm:$0xf]
        %v11066 = vld [vmem:[%s9957 + $0xac] sm:$0x1]
        %v11067 = vld [vmem:[%s9957 + $0xb4] sm:$0xf]
        %v11068 = vld [vmem:[%s9957 + $0xb8] sm:$0xf]
        %v11069 = vld [vmem:[%s9957 + $0xbc] sm:$0x1]
        %v11070 = vld [vmem:[%s9957 + $0xc4] sm:$0xf]
        %v11071 = vld [vmem:[%s9957 + $0xc8] sm:$0xf]
        %v11072 = vld [vmem:[%s9957 + $0xcc] sm:$0x1]
        %v11073 = vld [vmem:[%s9957 + $0xd4] sm:$0xf]
        %v11074 = vld [vmem:[%s9957 + $0xd8] sm:$0xf]
        %v11075 = vld [vmem:[%s9957 + $0xdc] sm:$0x1]
        %v11076 = vld [vmem:[%s9957 + $0xe4] sm:$0xf]
        %v11077 = vld [vmem:[%s9957 + $0xe8] sm:$0xf]
        %v11078 = vld [vmem:[%s9957 + $0xec] sm:$0x1]
        %v11079 = vld [vmem:[%s9957 + $0xf4] sm:$0xf]
        %v11080 = vld [vmem:[%s9957 + $0xf8] sm:$0xf]
        %v11081 = vld [vmem:[%s9957 + $0xfc] sm:$0x1]
        %v11083 = vshrl.u32 %v11034, 16
        %v11085 = vrot.slane %v11083, 4
        %v11086 = vshll.u32 %v11034, 16
        %v11088 = vrot.slane %v11086, 5
        %v11089 = vor.u32 %v11085, %v11088
        %v11090 = vrot.slane %v11089, 4
        %v11092 = vshll.u32 %v11035, 16
        %v11094 = vrot.slane %v11092, 5
        %v11095 = vsel %vm1764, %v11090, %v11094
        %v11096 = vshrl.u32 %v11035, 16
        %v11098 = vrot.slane %v11096, 4
        %v11099 = vor.u32 %v11098, %v11094
        %v11100 = vrot.slane %v11099, 4
        %v11102 = vshll.u32 %v11036, 16
        %v11104 = vrot.slane %v11102, 5
        %v11105 = vsel %vm1764, %v11100, %v11104
        %v11107 = vshrl.u32 %v11037, 16
        %v11109 = vrot.slane %v11107, 4
        %v11110 = vshll.u32 %v11037, 16
        %v11112 = vrot.slane %v11110, 5
        %v11113 = vor.u32 %v11109, %v11112
        %v11114 = vrot.slane %v11113, 4
        %v11116 = vshll.u32 %v11038, 16
        %v11118 = vrot.slane %v11116, 5
        %v11119 = vsel %vm1764, %v11114, %v11118
        %v11120 = vshrl.u32 %v11038, 16
        %v11122 = vrot.slane %v11120, 4
        %v11123 = vor.u32 %v11122, %v11118
        %v11124 = vrot.slane %v11123, 4
        %v11126 = vshll.u32 %v11039, 16
        %v11128 = vrot.slane %v11126, 5
        %v11129 = vsel %vm1764, %v11124, %v11128
        %v11131 = vshrl.u32 %v11040, 16
        %v11133 = vrot.slane %v11131, 4
        %v11134 = vshll.u32 %v11040, 16
        %v11136 = vrot.slane %v11134, 5
        %v11137 = vor.u32 %v11133, %v11136
        %v11138 = vrot.slane %v11137, 4
        %v11140 = vshll.u32 %v11041, 16
        %v11142 = vrot.slane %v11140, 5
        %v11143 = vsel %vm1764, %v11138, %v11142
        %v11144 = vshrl.u32 %v11041, 16
        %v11146 = vrot.slane %v11144, 4
        %v11147 = vor.u32 %v11146, %v11142
        %v11148 = vrot.slane %v11147, 4
        %v11150 = vshll.u32 %v11042, 16
        %v11152 = vrot.slane %v11150, 5
        %v11153 = vsel %vm1764, %v11148, %v11152
        %v11155 = vshrl.u32 %v11043, 16
        %v11157 = vrot.slane %v11155, 4
        %v11158 = vshll.u32 %v11043, 16
        %v11160 = vrot.slane %v11158, 5
        %v11161 = vor.u32 %v11157, %v11160
        %v11162 = vrot.slane %v11161, 4
        %v11164 = vshll.u32 %v11044, 16
        %v11166 = vrot.slane %v11164, 5
        %v11167 = vsel %vm1764, %v11162, %v11166
        %v11168 = vshrl.u32 %v11044, 16
        %v11170 = vrot.slane %v11168, 4
        %v11171 = vor.u32 %v11170, %v11166
        %v11172 = vrot.slane %v11171, 4
        %v11174 = vshll.u32 %v11045, 16
        %v11176 = vrot.slane %v11174, 5
        %v11177 = vsel %vm1764, %v11172, %v11176
        %v11179 = vshrl.u32 %v11046, 16
        %v11181 = vrot.slane %v11179, 4
        %v11182 = vshll.u32 %v11046, 16
        %v11184 = vrot.slane %v11182, 5
        %v11185 = vor.u32 %v11181, %v11184
        %v11186 = vrot.slane %v11185, 4
        %v11188 = vshll.u32 %v11047, 16
        %v11190 = vrot.slane %v11188, 5
        %v11191 = vsel %vm1764, %v11186, %v11190
        %v11192 = vshrl.u32 %v11047, 16
        %v11194 = vrot.slane %v11192, 4
        %v11195 = vor.u32 %v11194, %v11190
        %v11196 = vrot.slane %v11195, 4
        %v11198 = vshll.u32 %v11048, 16
        %v11200 = vrot.slane %v11198, 5
        %v11201 = vsel %vm1764, %v11196, %v11200
        %v11203 = vshrl.u32 %v11049, 16
        %v11205 = vrot.slane %v11203, 4
        %v11206 = vshll.u32 %v11049, 16
        %v11208 = vrot.slane %v11206, 5
        %v11209 = vor.u32 %v11205, %v11208
        %v11210 = vrot.slane %v11209, 4
        %v11212 = vshll.u32 %v11050, 16
        %v11214 = vrot.slane %v11212, 5
        %v11215 = vsel %vm1764, %v11210, %v11214
        %v11216 = vshrl.u32 %v11050, 16
        %v11218 = vrot.slane %v11216, 4
        %v11219 = vor.u32 %v11218, %v11214
        %v11220 = vrot.slane %v11219, 4
        %v11222 = vshll.u32 %v11051, 16
        %v11224 = vrot.slane %v11222, 5
        %v11225 = vsel %vm1764, %v11220, %v11224
        %v11227 = vshrl.u32 %v11052, 16
        %v11229 = vrot.slane %v11227, 4
        %v11230 = vshll.u32 %v11052, 16
        %v11232 = vrot.slane %v11230, 5
        %v11233 = vor.u32 %v11229, %v11232
        %v11234 = vrot.slane %v11233, 4
        %v11236 = vshll.u32 %v11053, 16
        %v11238 = vrot.slane %v11236, 5
        %v11239 = vsel %vm1764, %v11234, %v11238
        %v11240 = vshrl.u32 %v11053, 16
        %v11242 = vrot.slane %v11240, 4
        %v11243 = vor.u32 %v11242, %v11238
        %v11244 = vrot.slane %v11243, 4
        %v11246 = vshll.u32 %v11054, 16
        %v11248 = vrot.slane %v11246, 5
        %v11249 = vsel %vm1764, %v11244, %v11248
        %v11251 = vshrl.u32 %v11055, 16
        %v11253 = vrot.slane %v11251, 4
        %v11254 = vshll.u32 %v11055, 16
        %v11256 = vrot.slane %v11254, 5
        %v11257 = vor.u32 %v11253, %v11256
        %v11258 = vrot.slane %v11257, 4
        %v11260 = vshll.u32 %v11056, 16
        %v11262 = vrot.slane %v11260, 5
        %v11263 = vsel %vm1764, %v11258, %v11262
        %v11264 = vshrl.u32 %v11056, 16
        %v11266 = vrot.slane %v11264, 4
        %v11267 = vor.u32 %v11266, %v11262
        %v11268 = vrot.slane %v11267, 4
        %v11270 = vshll.u32 %v11057, 16
        %v11272 = vrot.slane %v11270, 5
        %v11273 = vsel %vm1764, %v11268, %v11272
        %v11275 = vshrl.u32 %v11058, 16
        %v11277 = vrot.slane %v11275, 4
        %v11278 = vshll.u32 %v11058, 16
        %v11280 = vrot.slane %v11278, 5
        %v11281 = vor.u32 %v11277, %v11280
        %v11282 = vrot.slane %v11281, 4
        %v11284 = vshll.u32 %v11059, 16
        %v11286 = vrot.slane %v11284, 5
        %v11287 = vsel %vm1764, %v11282, %v11286
        %v11288 = vshrl.u32 %v11059, 16
        %v11290 = vrot.slane %v11288, 4
        %v11291 = vor.u32 %v11290, %v11286
        %v11292 = vrot.slane %v11291, 4
        %v11294 = vshll.u32 %v11060, 16
        %v11296 = vrot.slane %v11294, 5
        %v11297 = vsel %vm1764, %v11292, %v11296
        %v11299 = vshrl.u32 %v11061, 16
        %v11301 = vrot.slane %v11299, 4
        %v11302 = vshll.u32 %v11061, 16
        %v11304 = vrot.slane %v11302, 5
        %v11305 = vor.u32 %v11301, %v11304
        %v11306 = vrot.slane %v11305, 4
        %v11308 = vshll.u32 %v11062, 16
        %v11310 = vrot.slane %v11308, 5
        %v11311 = vsel %vm1764, %v11306, %v11310
        %v11312 = vshrl.u32 %v11062, 16
        %v11314 = vrot.slane %v11312, 4
        %v11315 = vor.u32 %v11314, %v11310
        %v11316 = vrot.slane %v11315, 4
        %v11318 = vshll.u32 %v11063, 16
        %v11320 = vrot.slane %v11318, 5
        %v11321 = vsel %vm1764, %v11316, %v11320
        %v11323 = vshrl.u32 %v11064, 16
        %v11325 = vrot.slane %v11323, 4
        %v11326 = vshll.u32 %v11064, 16
        %v11328 = vrot.slane %v11326, 5
        %v11329 = vor.u32 %v11325, %v11328
        %v11330 = vrot.slane %v11329, 4
        %v11332 = vshll.u32 %v11065, 16
        %v11334 = vrot.slane %v11332, 5
        %v11335 = vsel %vm1764, %v11330, %v11334
        %v11336 = vshrl.u32 %v11065, 16
        %v11338 = vrot.slane %v11336, 4
        %v11339 = vor.u32 %v11338, %v11334
        %v11340 = vrot.slane %v11339, 4
        %v11342 = vshll.u32 %v11066, 16
        %v11344 = vrot.slane %v11342, 5
        %v11345 = vsel %vm1764, %v11340, %v11344
        %v11347 = vshrl.u32 %v11067, 16
        %v11349 = vrot.slane %v11347, 4
        %v11350 = vshll.u32 %v11067, 16
        %v11352 = vrot.slane %v11350, 5
        %v11353 = vor.u32 %v11349, %v11352
        %v11354 = vrot.slane %v11353, 4
        %v11356 = vshll.u32 %v11068, 16
        %v11358 = vrot.slane %v11356, 5
        %v11359 = vsel %vm1764, %v11354, %v11358
        %v11360 = vshrl.u32 %v11068, 16
        %v11362 = vrot.slane %v11360, 4
        %v11363 = vor.u32 %v11362, %v11358
        %v11364 = vrot.slane %v11363, 4
        %v11366 = vshll.u32 %v11069, 16
        %v11368 = vrot.slane %v11366, 5
        %v11369 = vsel %vm1764, %v11364, %v11368
        %v11371 = vshrl.u32 %v11070, 16
        %v11373 = vrot.slane %v11371, 4
        %v11374 = vshll.u32 %v11070, 16
        %v11376 = vrot.slane %v11374, 5
        %v11377 = vor.u32 %v11373, %v11376
        %v11378 = vrot.slane %v11377, 4
        %v11380 = vshll.u32 %v11071, 16
        %v11382 = vrot.slane %v11380, 5
        %v11383 = vsel %vm1764, %v11378, %v11382
        %v11384 = vshrl.u32 %v11071, 16
        %v11386 = vrot.slane %v11384, 4
        %v11387 = vor.u32 %v11386, %v11382
        %v11388 = vrot.slane %v11387, 4
        %v11390 = vshll.u32 %v11072, 16
        %v11392 = vrot.slane %v11390, 5
        %v11393 = vsel %vm1764, %v11388, %v11392
        %v11395 = vshrl.u32 %v11073, 16
        %v11397 = vrot.slane %v11395, 4
        %v11398 = vshll.u32 %v11073, 16
        %v11400 = vrot.slane %v11398, 5
        %v11401 = vor.u32 %v11397, %v11400
        %v11402 = vrot.slane %v11401, 4
        %v11404 = vshll.u32 %v11074, 16
        %v11406 = vrot.slane %v11404, 5
        %v11407 = vsel %vm1764, %v11402, %v11406
        %v11408 = vshrl.u32 %v11074, 16
        %v11410 = vrot.slane %v11408, 4
        %v11411 = vor.u32 %v11410, %v11406
        %v11412 = vrot.slane %v11411, 4
        %v11414 = vshll.u32 %v11075, 16
        %v11416 = vrot.slane %v11414, 5
        %v11417 = vsel %vm1764, %v11412, %v11416
        %v11419 = vshrl.u32 %v11076, 16
        %v11421 = vrot.slane %v11419, 4
        %v11422 = vshll.u32 %v11076, 16
        %v11424 = vrot.slane %v11422, 5
        %v11425 = vor.u32 %v11421, %v11424
        %v11426 = vrot.slane %v11425, 4
        %v11428 = vshll.u32 %v11077, 16
        %v11430 = vrot.slane %v11428, 5
        %v11431 = vsel %vm1764, %v11426, %v11430
        %v11432 = vshrl.u32 %v11077, 16
        %v11434 = vrot.slane %v11432, 4
        %v11435 = vor.u32 %v11434, %v11430
        %v11436 = vrot.slane %v11435, 4
        %v11438 = vshll.u32 %v11078, 16
        %v11440 = vrot.slane %v11438, 5
        %v11441 = vsel %vm1764, %v11436, %v11440
        %v11443 = vshrl.u32 %v11079, 16
        %v11445 = vrot.slane %v11443, 4
        %v11446 = vshll.u32 %v11079, 16
        %v11448 = vrot.slane %v11446, 5
        %v11449 = vor.u32 %v11445, %v11448
        %v11450 = vrot.slane %v11449, 4
        %v11452 = vshll.u32 %v11080, 16
        %v11454 = vrot.slane %v11452, 5
        %v11455 = vsel %vm1764, %v11450, %v11454
        %v11456 = vshrl.u32 %v11080, 16
        %v11458 = vrot.slane %v11456, 4
        %v11459 = vor.u32 %v11458, %v11454
        %v11460 = vrot.slane %v11459, 4
        %v11462 = vshll.u32 %v11081, 16
        %v11464 = vrot.slane %v11462, 5
        %v11465 = vsel %vm1764, %v11460, %v11464
        %s11466 = scalar_lea.vmem [#allocation9], 512
        %v11467 = vld [vmem:[%s11466] sm:$0xf]
        %v11468 = vld [vmem:[%s11466 + $0x4] sm:$0xf]
        %v11469 = vld [vmem:[%s11466 + $0x8] sm:$0xf]
        %v11470 = vld [vmem:[%s11466 + $0xc] sm:$0xf]
        %v11471 = vld [vmem:[%s11466 + $0x10] sm:$0xf]
        %v11472 = vld [vmem:[%s11466 + $0x14] sm:$0xf]
        %v11473 = vld [vmem:[%s11466 + $0x18] sm:$0xf]
        %v11474 = vld [vmem:[%s11466 + $0x1c] sm:$0xf]
        %v11475 = vld [vmem:[%s11466 + $0x20] sm:$0xf]
        %v11476 = vld [vmem:[%s11466 + $0x24] sm:$0xf]
        %v11477 = vld [vmem:[%s11466 + $0x28] sm:$0xf]
        %v11478 = vld [vmem:[%s11466 + $0x2c] sm:$0xf]
        %v11479 = vld [vmem:[%s11466 + $0x30] sm:$0xf]
        %v11480 = vld [vmem:[%s11466 + $0x34] sm:$0xf]
        %v11481 = vld [vmem:[%s11466 + $0x38] sm:$0xf]
        %v11482 = vld [vmem:[%s11466 + $0x3c] sm:$0xf]
        %v11483 = vunpack.c.l.b16 %v11095
        %v11484 = vunpack.c.l.b16 %v11105
        %v11485 = vunpack.c.l.b16 %v11119
        %v11486 = vunpack.c.l.b16 %v11129
        %v11487 = vunpack.c.l.b16 %v11143
        %v11488 = vunpack.c.l.b16 %v11153
        %v11489 = vunpack.c.l.b16 %v11167
        %v11490 = vunpack.c.l.b16 %v11177
        %v11491 = vunpack.c.l.b16 %v11191
        %v11492 = vunpack.c.l.b16 %v11201
        %v11493 = vunpack.c.l.b16 %v11215
        %v11494 = vunpack.c.l.b16 %v11225
        %v11495 = vunpack.c.l.b16 %v11239
        %v11496 = vunpack.c.l.b16 %v11249
        %v11497 = vunpack.c.l.b16 %v11263
        %v11498 = vunpack.c.l.b16 %v11273
        %v11499 = vunpack.c.l.b16 %v11287
        %v11500 = vunpack.c.l.b16 %v11297
        %v11501 = vunpack.c.l.b16 %v11311
        %v11502 = vunpack.c.l.b16 %v11321
        %v11503 = vunpack.c.l.b16 %v11335
        %v11504 = vunpack.c.l.b16 %v11345
        %v11505 = vunpack.c.l.b16 %v11359
        %v11506 = vunpack.c.l.b16 %v11369
        %v11507 = vunpack.c.l.b16 %v11383
        %v11508 = vunpack.c.l.b16 %v11393
        %v11509 = vunpack.c.l.b16 %v11407
        %v11510 = vunpack.c.l.b16 %v11417
        %v11511 = vunpack.c.l.b16 %v11431
        %v11512 = vunpack.c.l.b16 %v11441
        %v11513 = vunpack.c.l.b16 %v11455
        %v11514 = vunpack.c.l.b16 %v11465
        %v11515 = vpack.c.b16 %v11484, %v11483
        %v11516 = vpack.c.b16 %v11486, %v11485
        %v11517 = vpack.c.b16 %v11488, %v11487
        %v11518 = vpack.c.b16 %v11490, %v11489
        %v11519 = vpack.c.b16 %v11492, %v11491
        %v11520 = vpack.c.b16 %v11494, %v11493
        %v11521 = vpack.c.b16 %v11496, %v11495
        %v11522 = vpack.c.b16 %v11498, %v11497
        %v11523 = vpack.c.b16 %v11500, %v11499
        %v11524 = vpack.c.b16 %v11502, %v11501
        %v11525 = vpack.c.b16 %v11504, %v11503
        %v11526 = vpack.c.b16 %v11506, %v11505
        %v11527 = vpack.c.b16 %v11508, %v11507
        %v11528 = vpack.c.b16 %v11510, %v11509
        %v11529 = vpack.c.b16 %v11512, %v11511
        %v11530 = vpack.c.b16 %v11514, %v11513
        %v11563 = vunpack.c.l.b16 %v11467
        %v11564 = vunpack.c.l.b16 %v11468
        %v11565 = vunpack.c.l.b16 %v11469
        %v11566 = vunpack.c.l.b16 %v11470
        %v11567 = vunpack.c.l.b16 %v11471
        %v11568 = vunpack.c.l.b16 %v11472
        %v11569 = vunpack.c.l.b16 %v11473
        %v11570 = vunpack.c.l.b16 %v11474
        %v11571 = vunpack.c.l.b16 %v11475
        %v11572 = vunpack.c.l.b16 %v11476
        %v11573 = vunpack.c.l.b16 %v11477
        %v11574 = vunpack.c.l.b16 %v11478
        %v11575 = vunpack.c.l.b16 %v11479
        %v11576 = vunpack.c.l.b16 %v11480
        %v11577 = vunpack.c.l.b16 %v11481
        %v11578 = vunpack.c.l.b16 %v11482
        %v11579 = vpack.c.b16 %v11564, %v11563
        %v11580 = vpack.c.b16 %v11566, %v11565
        %v11581 = vpack.c.b16 %v11568, %v11567
        %v11582 = vpack.c.b16 %v11570, %v11569
        %v11583 = vpack.c.b16 %v11572, %v11571
        %v11584 = vpack.c.b16 %v11574, %v11573
        %v11585 = vpack.c.b16 %v11576, %v11575
        %v11586 = vpack.c.b16 %v11578, %v11577
        %11595 = vmatprep.subr.bf16.mxu0 0
        %11596 = vmatpush1.bf16.msra.mxu0 %v11586
        %11597 = vmatprep.subr.bf16.mxu0 0
        %11598 = vmatpush1.bf16.msra.mxu0 %v11585
        %11599 = vmatprep.subr.bf16.mxu0 0
        %11600 = vmatpush1.bf16.msra.mxu0 %v11584
        %11601 = vmatprep.subr.bf16.mxu0 0
        %11602 = vmatpush1.bf16.msra.mxu0 %v11583
        %11603 = vmatprep.subr.bf16.mxu0 0
        %11604 = vmatpush1.bf16.msra.mxu0 %v11582
        %11605 = vmatprep.subr.bf16.mxu0 0
        %11606 = vmatpush1.bf16.msra.mxu0 %v11581
        %11607 = vmatprep.subr.bf16.mxu0 0
        %11608 = vmatpush1.bf16.msra.mxu0 %v11580
        %11609 = vmatprep.subr.bf16.mxu0 0
        %11610 = vmatpush1.bf16.msra.mxu0 %v11579
        %11611 = vmatprep.subr.bf16.mxu0 0
        %11612 = vmatpush2.bf16.msra.mxu0 0
        %11613 = vmatprep.subr.bf16.mxu0 0
        %11614 = vmatpush2.bf16.msra.mxu0 0
        %11615 = vmatprep.subr.bf16.mxu0 0
        %11616 = vmatpush2.bf16.msra.mxu0 0
        %11617 = vmatprep.subr.bf16.mxu0 0
        %11618 = vmatpush2.bf16.msra.mxu0 0
        %11619 = vmatprep.subr.bf16.mxu0 0
        %11620 = vmatpush2.bf16.msra.mxu0 0
        %11621 = vmatprep.subr.bf16.mxu0 0
        %11622 = vmatpush2.bf16.msra.mxu0 0
        %11623 = vmatprep.subr.bf16.mxu0 0
        %11624 = vmatpush2.bf16.msra.mxu0 0
        %11625 = vmatprep.subr.bf16.mxu0 0
        %11626 = vmatpush2.bf16.msra.mxu0 0
        %11627 = vmatprep.mubr.bf16.mxu0 0
        %11628 = vmatmul.mubr.bf16.gmra.mxu0 %v11515
        %v11629 = vpop.f32.mrf.mxu0
        %v11630 = vadd.f32 0.0, %v11629
        %v11631 = vpop.f32.mrf.mxu0
        %v11632 = vpop.f32.mrf.mxu0
        %v11633 = vadd.f32 0.0, %v11632
        %v11634 = vpop.f32.mrf.mxu0
        %11635 = vmatprep.mubr.bf16.mxu0 0
        %11636 = vmatmul.mubr.bf16.gmra.mxu0 %v11516
        %v11637 = vpop.f32.mrf.mxu0
        %v11638 = vadd.f32 0.0, %v11637
        %v11639 = vpop.f32.mrf.mxu0
        %v11640 = vpop.f32.mrf.mxu0
        %v11641 = vadd.f32 0.0, %v11640
        %v11642 = vpop.f32.mrf.mxu0
        %11643 = vmatprep.mubr.bf16.mxu0 0
        %11644 = vmatmul.mubr.bf16.gmra.mxu0 %v11517
        %v11645 = vpop.f32.mrf.mxu0
        %v11646 = vadd.f32 0.0, %v11645
        %v11647 = vpop.f32.mrf.mxu0
        %v11648 = vpop.f32.mrf.mxu0
        %v11649 = vadd.f32 0.0, %v11648
        %v11650 = vpop.f32.mrf.mxu0
        %11651 = vmatprep.mubr.bf16.mxu0 0
        %11652 = vmatmul.mubr.bf16.gmra.mxu0 %v11518
        %v11653 = vpop.f32.mrf.mxu0
        %v11654 = vadd.f32 0.0, %v11653
        %v11655 = vpop.f32.mrf.mxu0
        %v11656 = vpop.f32.mrf.mxu0
        %v11657 = vadd.f32 0.0, %v11656
        %v11658 = vpop.f32.mrf.mxu0
        %11659 = vmatprep.mubr.bf16.mxu0 0
        %11660 = vmatmul.mubr.bf16.gmra.mxu0 %v11519
        %v11661 = vpop.f32.mrf.mxu0
        %v11662 = vadd.f32 0.0, %v11661
        %v11663 = vpop.f32.mrf.mxu0
        %v11664 = vpop.f32.mrf.mxu0
        %v11665 = vadd.f32 0.0, %v11664
        %v11666 = vpop.f32.mrf.mxu0
        %11667 = vmatprep.mubr.bf16.mxu0 0
        %11668 = vmatmul.mubr.bf16.gmra.mxu0 %v11520
        %v11669 = vpop.f32.mrf.mxu0
        %v11670 = vadd.f32 0.0, %v11669
        %v11671 = vpop.f32.mrf.mxu0
        %v11672 = vpop.f32.mrf.mxu0
        %v11673 = vadd.f32 0.0, %v11672
        %v11674 = vpop.f32.mrf.mxu0
        %11675 = vmatprep.mubr.bf16.mxu0 0
        %11676 = vmatmul.mubr.bf16.gmra.mxu0 %v11521
        %v11677 = vpop.f32.mrf.mxu0
        %v11678 = vadd.f32 0.0, %v11677
        %v11679 = vpop.f32.mrf.mxu0
        %v11680 = vpop.f32.mrf.mxu0
        %v11681 = vadd.f32 0.0, %v11680
        %v11682 = vpop.f32.mrf.mxu0
        %11683 = vmatprep.mubr.bf16.mxu0 0
        %11684 = vmatmul.mubr.bf16.gmra.mxu0 %v11522
        %v11685 = vpop.f32.mrf.mxu0
        %v11686 = vadd.f32 0.0, %v11685
        %v11687 = vpop.f32.mrf.mxu0
        %v11688 = vpop.f32.mrf.mxu0
        %v11689 = vadd.f32 0.0, %v11688
        %v11690 = vpop.f32.mrf.mxu0
        %11691 = vmatprep.mubr.bf16.mxu0 0
        %11692 = vmatmul.mubr.bf16.gmra.mxu0 %v11523
        %v11693 = vpop.f32.mrf.mxu0
        %v11694 = vadd.f32 0.0, %v11693
        %v11695 = vpop.f32.mrf.mxu0
        %v11696 = vpop.f32.mrf.mxu0
        %v11697 = vadd.f32 0.0, %v11696
        %v11698 = vpop.f32.mrf.mxu0
        %11699 = vmatprep.mubr.bf16.mxu0 0
        %11700 = vmatmul.mubr.bf16.gmra.mxu0 %v11524
        %v11701 = vpop.f32.mrf.mxu0
        %v11702 = vadd.f32 0.0, %v11701
        %v11703 = vpop.f32.mrf.mxu0
        %v11704 = vpop.f32.mrf.mxu0
        %v11705 = vadd.f32 0.0, %v11704
        %v11706 = vpop.f32.mrf.mxu0
        %11707 = vmatprep.mubr.bf16.mxu0 0
        %11708 = vmatmul.mubr.bf16.gmra.mxu0 %v11525
        %v11709 = vpop.f32.mrf.mxu0
        %v11710 = vadd.f32 0.0, %v11709
        %v11711 = vpop.f32.mrf.mxu0
        %v11712 = vpop.f32.mrf.mxu0
        %v11713 = vadd.f32 0.0, %v11712
        %v11714 = vpop.f32.mrf.mxu0
        %11715 = vmatprep.mubr.bf16.mxu0 0
        %11716 = vmatmul.mubr.bf16.gmra.mxu0 %v11526
        %v11717 = vpop.f32.mrf.mxu0
        %v11718 = vadd.f32 0.0, %v11717
        %v11719 = vpop.f32.mrf.mxu0
        %v11720 = vpop.f32.mrf.mxu0
        %v11721 = vadd.f32 0.0, %v11720
        %v11722 = vpop.f32.mrf.mxu0
        %11723 = vmatprep.mubr.bf16.mxu0 0
        %11724 = vmatmul.mubr.bf16.gmra.mxu0 %v11527
        %v11725 = vpop.f32.mrf.mxu0
        %v11726 = vadd.f32 0.0, %v11725
        %v11727 = vpop.f32.mrf.mxu0
        %v11728 = vpop.f32.mrf.mxu0
        %v11729 = vadd.f32 0.0, %v11728
        %v11730 = vpop.f32.mrf.mxu0
        %11731 = vmatprep.mubr.bf16.mxu0 0
        %11732 = vmatmul.mubr.bf16.gmra.mxu0 %v11528
        %v11733 = vpop.f32.mrf.mxu0
        %v11734 = vadd.f32 0.0, %v11733
        %v11735 = vpop.f32.mrf.mxu0
        %v11736 = vpop.f32.mrf.mxu0
        %v11737 = vadd.f32 0.0, %v11736
        %v11738 = vpop.f32.mrf.mxu0
        %11739 = vmatprep.mubr.bf16.mxu0 0
        %11740 = vmatmul.mubr.bf16.gmra.mxu0 %v11529
        %v11741 = vpop.f32.mrf.mxu0
        %v11742 = vadd.f32 0.0, %v11741
        %v11743 = vpop.f32.mrf.mxu0
        %v11744 = vpop.f32.mrf.mxu0
        %v11745 = vadd.f32 0.0, %v11744
        %v11746 = vpop.f32.mrf.mxu0
        %11747 = vmatprep.mubr.bf16.mxu0 0
        %11748 = vmatmul.mubr.bf16.gmra.mxu0 %v11530
        %v11749 = vpop.f32.mrf.mxu0
        %v11750 = vadd.f32 0.0, %v11749
        %v11751 = vpop.f32.mrf.mxu0
        %v11752 = vpop.f32.mrf.mxu0
        %v11753 = vadd.f32 0.0, %v11752
        %v11754 = vpop.f32.mrf.mxu0
        %11755 = vdwg.mxu0
        %v11756 = vadd.f32 %v11002, %v11630
        %v11757 = vadd.f32 %v11003, %v11633
        %v11758 = vadd.f32 %v11004, %v11638
        %v11759 = vadd.f32 %v11005, %v11641
        %v11760 = vadd.f32 %v11006, %v11646
        %v11761 = vadd.f32 %v11007, %v11649
        %v11762 = vadd.f32 %v11008, %v11654
        %v11763 = vadd.f32 %v11009, %v11657
        %v11764 = vadd.f32 %v11010, %v11662
        %v11765 = vadd.f32 %v11011, %v11665
        %v11766 = vadd.f32 %v11012, %v11670
        %v11767 = vadd.f32 %v11013, %v11673
        %v11768 = vadd.f32 %v11014, %v11678
        %v11769 = vadd.f32 %v11015, %v11681
        %v11770 = vadd.f32 %v11016, %v11686
        %v11771 = vadd.f32 %v11017, %v11689
        %v11772 = vadd.f32 %v11018, %v11694
        %v11773 = vadd.f32 %v11019, %v11697
        %v11774 = vadd.f32 %v11020, %v11702
        %v11775 = vadd.f32 %v11021, %v11705
        %v11776 = vadd.f32 %v11022, %v11710
        %v11777 = vadd.f32 %v11023, %v11713
        %v11778 = vadd.f32 %v11024, %v11718
        %v11779 = vadd.f32 %v11025, %v11721
        %v11780 = vadd.f32 %v11026, %v11726
        %v11781 = vadd.f32 %v11027, %v11729
        %v11782 = vadd.f32 %v11028, %v11734
        %v11783 = vadd.f32 %v11029, %v11737
        %v11784 = vadd.f32 %v11030, %v11742
        %v11785 = vadd.f32 %v11031, %v11745
        %v11786 = vadd.f32 %v11032, %v11750
        %v11787 = vadd.f32 %v11033, %v11753
        %v11789 = vlaneseq
        %v11790 = vshrl.u32 %v11789, 7
        %v11791 = vsub.s32 0, %v11790
        %v11792 = vrot.slane %v700, %v11791
        %v11794 = vadd.f32 %v11756, %v11792
        %v11795 = vadd.f32 %v11757, %v11792
        %v11796 = vadd.f32 %v11758, %v11792
        %v11797 = vadd.f32 %v11759, %v11792
        %v11798 = vadd.f32 %v11760, %v11792
        %v11799 = vadd.f32 %v11761, %v11792
        %v11800 = vadd.f32 %v11762, %v11792
        %v11801 = vadd.f32 %v11763, %v11792
        %v11802 = vadd.f32 %v11764, %v11792
        %v11803 = vadd.f32 %v11765, %v11792
        %v11804 = vadd.f32 %v11766, %v11792
        %v11805 = vadd.f32 %v11767, %v11792
        %v11806 = vadd.f32 %v11768, %v11792
        %v11807 = vadd.f32 %v11769, %v11792
        %v11808 = vadd.f32 %v11770, %v11792
        %v11809 = vadd.f32 %v11771, %v11792
        %v11810 = vadd.f32 %v11772, %v11792
        %v11811 = vadd.f32 %v11773, %v11792
        %v11812 = vadd.f32 %v11774, %v11792
        %v11813 = vadd.f32 %v11775, %v11792
        %v11814 = vadd.f32 %v11776, %v11792
        %v11815 = vadd.f32 %v11777, %v11792
        %v11816 = vadd.f32 %v11778, %v11792
        %v11817 = vadd.f32 %v11779, %v11792
        %v11818 = vadd.f32 %v11780, %v11792
        %v11819 = vadd.f32 %v11781, %v11792
        %v11820 = vadd.f32 %v11782, %v11792
        %v11821 = vadd.f32 %v11783, %v11792
        %v11822 = vadd.f32 %v11784, %v11792
        %v11823 = vadd.f32 %v11785, %v11792
        %v11824 = vadd.f32 %v11786, %v11792
        %v11825 = vadd.f32 %v11787, %v11792
        %v11826 = vld [vmem:[%s237] sm:$0xff]
        %v11827 = vld [vmem:[%s237 + $0x8] sm:$0xff]
        %v11828 = vld [vmem:[%s237 + $0x10] sm:$0xff]
        %v11829 = vld [vmem:[%s237 + $0x18] sm:$0xff]
        %v11830 = vld [vmem:[%s237 + $0x20] sm:$0xff]
        %v11831 = vld [vmem:[%s237 + $0x28] sm:$0xff]
        %v11832 = vld [vmem:[%s237 + $0x30] sm:$0xff]
        %v11833 = vld [vmem:[%s237 + $0x38] sm:$0xff]
        %v11834 = vld [vmem:[%s237 + $0x40] sm:$0xff]
        %v11835 = vld [vmem:[%s237 + $0x48] sm:$0xff]
        %v11836 = vld [vmem:[%s237 + $0x50] sm:$0xff]
        %v11837 = vld [vmem:[%s237 + $0x58] sm:$0xff]
        %v11838 = vld [vmem:[%s237 + $0x60] sm:$0xff]
        %v11839 = vld [vmem:[%s237 + $0x68] sm:$0xff]
        %v11840 = vld [vmem:[%s237 + $0x70] sm:$0xff]
        %v11841 = vld [vmem:[%s237 + $0x78] sm:$0xff]
        %v11842 = vld [vmem:[%s237 + $0x80] sm:$0xff]
        %v11843 = vld [vmem:[%s237 + $0x88] sm:$0xff]
        %v11844 = vld [vmem:[%s237 + $0x90] sm:$0xff]
        %v11845 = vld [vmem:[%s237 + $0x98] sm:$0xff]
        %v11846 = vld [vmem:[%s237 + $0xa0] sm:$0xff]
        %v11847 = vld [vmem:[%s237 + $0xa8] sm:$0xff]
        %v11848 = vld [vmem:[%s237 + $0xb0] sm:$0xff]
        %v11849 = vld [vmem:[%s237 + $0xb8] sm:$0xff]
        %v11850 = vld [vmem:[%s237 + $0xc0] sm:$0xff]
        %v11851 = vld [vmem:[%s237 + $0xc8] sm:$0xff]
        %v11852 = vld [vmem:[%s237 + $0xd0] sm:$0xff]
        %v11853 = vld [vmem:[%s237 + $0xd8] sm:$0xff]
        %v11854 = vld [vmem:[%s237 + $0xe0] sm:$0xff]
        %v11855 = vld [vmem:[%s237 + $0xe8] sm:$0xff]
        %v11856 = vld [vmem:[%s237 + $0xf0] sm:$0xff]
        %v11857 = vld [vmem:[%s237 + $0xf8] sm:$0xff]
        %v11858 = vadd.f32 %v11794, %v11826
        %v11859 = vadd.f32 %v11795, %v11827
        %v11860 = vadd.f32 %v11796, %v11828
        %v11861 = vadd.f32 %v11797, %v11829
        %v11862 = vadd.f32 %v11798, %v11830
        %v11863 = vadd.f32 %v11799, %v11831
        %v11864 = vadd.f32 %v11800, %v11832
        %v11865 = vadd.f32 %v11801, %v11833
        %v11866 = vadd.f32 %v11802, %v11834
        %v11867 = vadd.f32 %v11803, %v11835
        %v11868 = vadd.f32 %v11804, %v11836
        %v11869 = vadd.f32 %v11805, %v11837
        %v11870 = vadd.f32 %v11806, %v11838
        %v11871 = vadd.f32 %v11807, %v11839
        %v11872 = vadd.f32 %v11808, %v11840
        %v11873 = vadd.f32 %v11809, %v11841
        %v11874 = vadd.f32 %v11810, %v11842
        %v11875 = vadd.f32 %v11811, %v11843
        %v11876 = vadd.f32 %v11812, %v11844
        %v11877 = vadd.f32 %v11813, %v11845
        %v11878 = vadd.f32 %v11814, %v11846
        %v11879 = vadd.f32 %v11815, %v11847
        %v11880 = vadd.f32 %v11816, %v11848
        %v11881 = vadd.f32 %v11817, %v11849
        %v11882 = vadd.f32 %v11818, %v11850
        %v11883 = vadd.f32 %v11819, %v11851
        %v11884 = vadd.f32 %v11820, %v11852
        %v11885 = vadd.f32 %v11821, %v11853
        %v11886 = vadd.f32 %v11822, %v11854
        %v11887 = vadd.f32 %v11823, %v11855
        %v11888 = vadd.f32 %v11824, %v11856
        %v11889 = vadd.f32 %v11825, %v11857
        %v11890 = vmax.f32 %v11858, 0.0
        %v11891 = vmax.f32 %v11859, 0.0
        %v11892 = vmax.f32 %v11860, 0.0
        %v11893 = vmax.f32 %v11861, 0.0
        %v11894 = vmax.f32 %v11862, 0.0
        %v11895 = vmax.f32 %v11863, 0.0
        %v11896 = vmax.f32 %v11864, 0.0
        %v11897 = vmax.f32 %v11865, 0.0
        %v11898 = vmax.f32 %v11866, 0.0
        %v11899 = vmax.f32 %v11867, 0.0
        %v11900 = vmax.f32 %v11868, 0.0
        %v11901 = vmax.f32 %v11869, 0.0
        %v11902 = vmax.f32 %v11870, 0.0
        %v11903 = vmax.f32 %v11871, 0.0
        %v11904 = vmax.f32 %v11872, 0.0
        %v11905 = vmax.f32 %v11873, 0.0
        %v11906 = vmax.f32 %v11874, 0.0
        %v11907 = vmax.f32 %v11875, 0.0
        %v11908 = vmax.f32 %v11876, 0.0
        %v11909 = vmax.f32 %v11877, 0.0
        %v11910 = vmax.f32 %v11878, 0.0
        %v11911 = vmax.f32 %v11879, 0.0
        %v11912 = vmax.f32 %v11880, 0.0
        %v11913 = vmax.f32 %v11881, 0.0
        %v11914 = vmax.f32 %v11882, 0.0
        %v11915 = vmax.f32 %v11883, 0.0
        %v11916 = vmax.f32 %v11884, 0.0
        %v11917 = vmax.f32 %v11885, 0.0
        %v11918 = vmax.f32 %v11886, 0.0
        %v11919 = vmax.f32 %v11887, 0.0
        %v11920 = vmax.f32 %v11888, 0.0
        %v11921 = vmax.f32 %v11889, 0.0
        %11922 = vst [vmem:[%s271] sm:$0xff] %v11890
        %11923 = vst [vmem:[%s271 + $0x8] sm:$0xff] %v11891
        %11924 = vst [vmem:[%s271 + $0x10] sm:$0xff] %v11892
        %11925 = vst [vmem:[%s271 + $0x18] sm:$0xff] %v11893
        %11926 = vst [vmem:[%s271 + $0x20] sm:$0xff] %v11894
        %11927 = vst [vmem:[%s271 + $0x28] sm:$0xff] %v11895
        %11928 = vst [vmem:[%s271 + $0x30] sm:$0xff] %v11896
        %11929 = vst [vmem:[%s271 + $0x38] sm:$0xff] %v11897
        %11930 = vst [vmem:[%s271 + $0x40] sm:$0xff] %v11898
        %11931 = vst [vmem:[%s271 + $0x48] sm:$0xff] %v11899
        %11932 = vst [vmem:[%s271 + $0x50] sm:$0xff] %v11900
        %11933 = vst [vmem:[%s271 + $0x58] sm:$0xff] %v11901
        %11934 = vst [vmem:[%s271 + $0x60] sm:$0xff] %v11902
        %11935 = vst [vmem:[%s271 + $0x68] sm:$0xff] %v11903
        %11936 = vst [vmem:[%s271 + $0x70] sm:$0xff] %v11904
        %11937 = vst [vmem:[%s271 + $0x78] sm:$0xff] %v11905
        %11938 = vst [vmem:[%s271 + $0x80] sm:$0xff] %v11906
        %11939 = vst [vmem:[%s271 + $0x88] sm:$0xff] %v11907
        %11940 = vst [vmem:[%s271 + $0x90] sm:$0xff] %v11908
        %11941 = vst [vmem:[%s271 + $0x98] sm:$0xff] %v11909
        %11942 = vst [vmem:[%s271 + $0xa0] sm:$0xff] %v11910
        %11943 = vst [vmem:[%s271 + $0xa8] sm:$0xff] %v11911
        %11944 = vst [vmem:[%s271 + $0xb0] sm:$0xff] %v11912
        %11945 = vst [vmem:[%s271 + $0xb8] sm:$0xff] %v11913
        %11946 = vst [vmem:[%s271 + $0xc0] sm:$0xff] %v11914
        %11947 = vst [vmem:[%s271 + $0xc8] sm:$0xff] %v11915
        %11948 = vst [vmem:[%s271 + $0xd0] sm:$0xff] %v11916
        %11949 = vst [vmem:[%s271 + $0xd8] sm:$0xff] %v11917
        %11950 = vst [vmem:[%s271 + $0xe0] sm:$0xff] %v11918
        %11951 = vst [vmem:[%s271 + $0xe8] sm:$0xff] %v11919
        %11952 = vst [vmem:[%s271 + $0xf0] sm:$0xff] %v11920
        %11953 = vst [vmem:[%s271 + $0xf8] sm:$0xff] %v11921
        %s11954 = sand.u32 %s141, 1
        %s11955 = scalar_lea.sflag [#allocation6], %s11954
        %s11956 = sand.u32 %s141, 1
        %s11957 = smul.addr %s11956, 256
        %s11958 = scalar_lea.vmem [#allocation10], %s11957
        // Predicated region
        $region53: #{tpu_custom_call.1} parent=39 // pred_check
          %p11959 = pneg %p151
        $region54: #{tpu_custom_call.1} parent=39 // pred_check_branch
          %11961 = sbr.rel (%p11959) target = $region56
        $region55: #{tpu_custom_call.1} parent=39 // pred_region
          %s11963 = ssub.s32 4096, 4096
          %11964 = vsyncadd %s11955, %s11963
          %s11965 = smul.addr %s23, 32
          %s11966 = smul.addr %s11965, 128
          %s11967 = scalar_lea.hbm %s5, %s11966
          %s11968 = sshll.u32 %s11958, 4
          %s11969 = int_to_ptr.vmem [resolvable:$true] %s11968
          %11974 = dma.vmem_to_hbm [thread:$0]  %s11969, 4096, %s11967, %s11955, 128, 128, 8
        $region56: #{tpu_custom_call.1} parent=39 // pred_fallthru
          _
      $region40: #{tpu_custom_call.1} parent=5 // pred_fallthru
        _
      %p11975 = scmp.le.s32.totalorder 2, %s18
      // Predicated region
      $region57: #{tpu_custom_call.1} parent=5 // pred_check
        %p11976 = pneg %p11975
      $region58: #{tpu_custom_call.1} parent=5 // pred_check_branch
        %11978 = sbr.rel (%p11976) target = $region60
      $region59: #{tpu_custom_call.1} parent=5 // pred_region
        %s11979 = ssub.s32 %s18, 2
        // Predicated region
        $region61: #{tpu_custom_call.1} parent=59 // pred_check
          %p11980 = pneg %p157
        $region62: #{tpu_custom_call.1} parent=59 // pred_check_branch
          %11982 = sbr.rel (%p11980) target = $region64
        $region63: #{tpu_custom_call.1} parent=59 // pred_region
          %s11983 = sand.u32 %s142, 1
          %s11984 = scalar_lea.sflag [#allocation6], %s11983
          %s11985 = sand.u32 %s142, 1
          %s11986 = smul.addr %s11985, 256
          %s11987 = scalar_lea.vmem [#allocation10], %s11986
          %11988 = dma.done %s11984, 4096
        $region64: #{tpu_custom_call.1} parent=59 // pred_fallthru
          _
      $region60: #{tpu_custom_call.1} parent=5 // pred_fallthru
        _
    $region6: #{tpu_custom_call.1} parent=1 // loop_footer
      %s22 = sadd.s32 1, %s18
    $region7: #{tpu_custom_call.1} parent=1 // loop_footer_branch
      %17 = sbr.rel target = $region3
    $region8: #{tpu_custom_call.1} parent=1 // loop_exit
      _
    %11989 = vsyncpa [#allocation5], 1
    %s11990 = scalar_lea.sflag [#allocation5], 1
    %11991 = vsyncpa %s11990, 1
    %11992 = vsyncpa [#allocation8], 1
    %11993 = vsyncpa [#allocation6], 1
    %s11994 = scalar_lea.sflag [#allocation6], 1
    %11995 = vsyncpa %s11994, 1

</llo_original>
